<compile_context>
chip_gen: v6e
topology: v6e:2x2x1
jax: 0.10.0
libtpu: 0.0.40
codegen_flags: <defaults>
</compile_context>

<pallas_src>
import functools

import jax
import jax.numpy as jnp
import numpy as np
from jax.experimental import pallas as pl
from jax.experimental.pallas import tpu as pltpu

EPS = 1e-5                      # nn.LayerNorm default eps
INV_SQRT2 = 0.7071067811865475
SQRT_2_OVER_PI = 0.7978845608028654
GELU_TANH_C = 0.044715


def _gelu_exact(x):
    # PyTorch nn.GELU default = exact (erf-based) GELU.
    return 0.5 * x * (1.0 + jax.lax.erf(x * INV_SQRT2))


def _gelu_tanh(x):
    # tanh-approx GELU: the transcendental runs on the EUP (its own VLIW slot)
    # instead of a long erf polynomial on the saturated 4-wide VALU.
    return 0.5 * x * (1.0 + jnp.tanh(SQRT_2_OVER_PI * (x + GELU_TANH_C * x * x * x)))


def mixer_block_kernel(x_ref, wcol_ref, cb_ref, sg_ref, sb_ref,
                       w1t_ref, b1_ref, w2t_ref, b2_ref, lg_ref, lb_ref,
                       o_ref, *, matmul_dtype, exact_gelu):
    x = x_ref[...]                                        # (BB, T, F) f32

    # --- masked 1x1 conv over channels (rank-1) + residual ------------------
    # conv[b, t, o] = x[b, t, 0] * wcol[o] + cb[o]
    conv = x[:, :, 0:1] * wcol_ref[...] + cb_ref[...]     # (BB,T,1)*(1,F)+(1,F)
    z = conv + x                                          # residual

    # --- seq_layernorm: LayerNorm(length) -> normalize over T (axis=1) ------
    mean_t = jnp.mean(z, axis=1, keepdims=True)           # (BB, 1, F)
    ct = z - mean_t                                       # reused for var & norm
    var_t = jnp.mean(ct * ct, axis=1, keepdims=True)
    zn = ct * jax.lax.rsqrt(var_t + EPS)
    zn = zn * sg_ref[...] + sb_ref[...]                   # (T,1) bcast over BB,F

    bb, t, f = zn.shape
    zn2 = zn.reshape(bb * t, f)                           # big M for the MXU

    # --- patch FF: Linear(F->I), GELU, Linear(I->F) + residual ---------------
    # Matmul operands in matmul_dtype (bf16 perf path), f32 accumulation.
    h = jnp.dot(zn2.astype(matmul_dtype), w1t_ref[...],
                preferred_element_type=jnp.float32) + b1_ref[...]
    h = _gelu_exact(h) if exact_gelu else _gelu_tanh(h)
    ff = jnp.dot(h.astype(matmul_dtype), w2t_ref[...],
                 preferred_element_type=jnp.float32) + b2_ref[...]
    y = ff + zn2

    # --- final layernorm: LayerNorm(dim) -> normalize over F (last axis) ----
    mean_f = jnp.mean(y, axis=-1, keepdims=True)
    cf = y - mean_f
    var_f = jnp.mean(cf * cf, axis=-1, keepdims=True)
    yn = cf * jax.lax.rsqrt(var_f + EPS) * lg_ref[...] + lb_ref[...]

    o_ref[...] = yn.reshape(bb, t, f)


# ----------------------------- wrapper helpers -------------------------------

def _tpu_vmem_capacity_bytes():
    try:
        return int(pltpu.get_tpu_info().vmem_capacity_bytes)
    except Exception:
        return 64 << 20          # conservative fallback (v7x per-TC physical)


def _tensorcores_per_device():
    # v7x (and v4/v5p megacore-style chips) put 2 TensorCores behind one JAX
    # device; "parallel" grid axes are sharded across them, so prefer a grid
    # divisible by the TC count.  Misclassification only affects the BB
    # heuristic, never correctness.
    try:
        kind = jax.devices()[0].device_kind.lower()
    except Exception:
        return 1
    return 2 if ("7x" in kind or "v4" in kind or "v5p" in kind) else 1


def _vmem_bytes_per_step(bb, T, F, I, wt_itemsize=2):
    f32 = 4
    io = 2 * 2 * bb * T * F * f32                          # x + out, double-buffered
    weights = 2 * F * I * wt_itemsize                      # w1t + w2t, single-buffered
    vectors = 2 * (4 * F + 2 * I + 2 * T) * f32            # biases / LN params
    live = bb * T * (I * (f32 + wt_itemsize)               # h + its matmul-dtype cast
                     + F * (4 * f32 + 2 * wt_itemsize))    # z/zn/y temps + casts
    return io + weights + vectors + live


def _pick_block_batch(B, T, F, I, vmem_budget, n_cores, wt_itemsize):
    divisors = [d for d in range(1, B + 1) if B % d == 0]
    fits = [d for d in divisors
            if _vmem_bytes_per_step(d, T, F, I, wt_itemsize) <= vmem_budget] or [1]
    # Keep every TensorCore busy when possible (even grid on 2-TC chips).
    sharded = [d for d in fits if (B // d) % n_cores == 0] or fits
    # Largest BB amortizes the ~0.35 us per-grid-step overhead; soft-cap the
    # MXU row count so the live (BB*T, I) f32 intermediate stays modest.
    capped = [d for d in sharded if d * T <= 4096] or [min(sharded)]
    return max(capped)


def mixer_block(x, params, *, block_batch=None, matmul_dtype=jnp.bfloat16,
                exact_gelu=None):
    """x: (B, T, F) float32 (or (B, P, T, F), flattened like the torch code).

    matmul_dtype=bfloat16 is the performance path (bf16 MXU operands, f32
    accumulation) and uses tanh-approx GELU unless exact_gelu=True.
    matmul_dtype=float32 reproduces the module's exact semantics (erf GELU).
    """
    if x.ndim > 3:
        x = x.reshape((-1,) + x.shape[-2:])
    B, T, F = x.shape
    I = params["w1t"].shape[1]
    if exact_gelu is None:
        exact_gelu = (np.dtype(matmul_dtype) == np.dtype(np.float32))
    wt_itemsize = np.dtype(matmul_dtype).itemsize

    vmem_cap = _tpu_vmem_capacity_bytes()
    n_cores = _tensorcores_per_device()
    if block_batch is None:
        block_batch = _pick_block_batch(B, T, F, I, (vmem_cap * 3) // 5,
                                        n_cores, wt_itemsize)
    BB = block_batch
    assert B % BB == 0, "batch must be divisible by block_batch"
    vmem_limit = int(min(vmem_cap * 3 // 4,
                         max(32 << 20,
                             2 * _vmem_bytes_per_step(BB, T, F, I, wt_itemsize))))

    wcol = params["wcol"]                       # (1, F)  masked conv column 0
    cb = params["cb"]                           # (1, F)
    sg, sb = params["sg"], params["sb"]         # (T, 1) each
    w1t = params["w1t"].astype(matmul_dtype)    # (F, I)
    b1 = params["b1"]                           # (1, I)
    w2t = params["w2t"].astype(matmul_dtype)    # (I, F)
    b2 = params["b2"]                           # (1, F)
    lg, lb = params["lg"], params["lb"]         # (1, F) each

    const2d = lambda shape: pl.BlockSpec(shape, lambda b: (0, 0))
    # Constant index map -> fetched once; single-buffer the two big weights so
    # the default double buffer does not waste VMEM.
    weight_spec = lambda shape: pl.BlockSpec(shape, lambda b: (0, 0),
                                             pipeline_mode=pl.Buffered(1))
    kernel = functools.partial(mixer_block_kernel, matmul_dtype=matmul_dtype,
                               exact_gelu=exact_gelu)

    return pl.pallas_call(
        kernel,
        out_shape=jax.ShapeDtypeStruct((B, T, F), jnp.float32),
        grid=(B // BB,),
        in_specs=[
            pl.BlockSpec((BB, T, F), lambda b: (b, 0, 0)),   # x
            const2d((1, F)),                                 # wcol
            const2d((1, F)),                                 # cb
            const2d((T, 1)),                                 # sg
            const2d((T, 1)),                                 # sb
            weight_spec((F, I)),                             # w1t
            const2d((1, I)),                                 # b1
            weight_spec((I, F)),                             # w2t
            const2d((1, F)),                                 # b2
            const2d((1, F)),                                 # lg
            const2d((1, F)),                                 # lb
        ],
        out_specs=pl.BlockSpec((BB, T, F), lambda b: (b, 0, 0)),
        compiler_params=pltpu.CompilerParams(
            dimension_semantics=("parallel",),
            vmem_limit_bytes=vmem_limit),
    )(x, wcol, cb, sg, sb, w1t, b1, w2t, b2, lg, lb)


def make_mixer_params(conv_w, conv_b, seq_g, seq_b, w1, b1, w2, b2, ln_g, ln_b):
    """Build kernel params from torch-layout tensors; returns (params, Wm)."""
    Fo, Fi, K = conv_w.shape
    # mixer_mask: torch.triu over the trailing (F_in, 1) matrices keeps only
    # rows <= col, i.e. only in_channel 0 survives -> rank-1 conv.
    triu = (jnp.arange(Fi)[:, None] <= jnp.arange(K)[None, :]).astype(conv_w.dtype)
    Wm = (conv_w * triu[None, :, :])[:, :, 0]               # (F_out, F_in), masked
    # Guard the rank-1 shortcut: if the mask or kernel size ever changes, the
    # column extraction below would silently be wrong.
    assert K == 1 and not np.any(np.asarray(Wm[:, 1:])), \
        "rank-1 conv shortcut requires the triu mask to keep only in_channel 0"
    T = seq_g.shape[0]
    I = w1.shape[0]
    F = w2.shape[0]
    params = dict(
        wcol=Wm[:, 0].reshape(1, F),     # only surviving column of the masked conv
        cb=conv_b.reshape(1, F),
        sg=seq_g.reshape(T, 1),
        sb=seq_b.reshape(T, 1),
        w1t=w1.T,
        b1=b1.reshape(1, I),
        w2t=w2.T,
        b2=b2.reshape(1, F),
        lg=ln_g.reshape(1, F),
        lb=ln_b.reshape(1, F),
    )
    return params, Wm


def ref_forward(x, Wm, cb, sg, sb, w1, b1, w2, b2, lg, lb):
    """Pure-JAX reference mirroring the PyTorch forward exactly (full (F,F)
    masked conv weight, f32 everywhere, exact erf GELU)."""
    xt = jnp.swapaxes(x, 1, 2)                                 # b t f -> b f t
    conv = jnp.einsum("oi,bit->bot", Wm, xt) + cb[None, :, None]
    z = conv + xt
    m = z.mean(-1, keepdims=True)
    v = ((z - m) ** 2).mean(-1, keepdims=True)
    zn = (z - m) / jnp.sqrt(v + EPS) * sg + sb                 # LayerNorm(length)
    x2 = jnp.swapaxes(zn, 1, 2)                                # b f t -> b t f
    h = x2 @ w1.T + b1
    h = 0.5 * h * (1.0 + jax.lax.erf(h * INV_SQRT2))
    ff = h @ w2.T + b2
    y = ff + x2
    m2 = y.mean(-1, keepdims=True)
    v2 = ((y - m2) ** 2).mean(-1, keepdims=True)
    return (y - m2) / jnp.sqrt(v2 + EPS) * lg + lb             # LayerNorm(dim)


if __name__ == "__main__":
    # Small shapes consistent with the module: dim F = 256 (as in the spec),
    # length T = 128, expansion 4 -> inner I = 1024.  F and I are lane-dense
    # (multiples of 128), T is sublane-aligned.  block_batch is auto-picked:
    # BB=4 / grid=1 on single-TC chips (v5e/v6e), BB=2 / even grid on 2-TC
    # chips (v7x), both well inside the VMEM budget.
    B, T, F = 4, 128, 256
    EXPANSION = 4
    I = F * EXPANSION

    key = jax.random.PRNGKey(0)
    k = jax.random.split(key, 8)

    # Parameters (shapes match the torch module's __init__).
    conv_w = 0.05 * jax.random.normal(k[0], (F, F, 1), jnp.float32)   # Conv1d(dim, dim, 1).weight
    conv_b = 0.05 * jax.random.normal(k[1], (F,), jnp.float32)
    w1 = 0.05 * jax.random.normal(k[2], (I, F), jnp.float32)          # Linear(dim, inner).weight
    b1 = 0.05 * jax.random.normal(k[3], (I,), jnp.float32)
    w2 = 0.05 * jax.random.normal(k[4], (F, I), jnp.float32)          # Linear(inner, dim).weight
    b2 = 0.05 * jax.random.normal(k[5], (F,), jnp.float32)
    seq_g = jnp.ones((T,), jnp.float32)                               # LayerNorm(length) init
    seq_b = jnp.zeros((T,), jnp.float32)
    ln_g = jnp.ones((F,), jnp.float32)                                # LayerNorm(dim) init
    ln_b = jnp.zeros((F,), jnp.float32)

    x = jax.random.normal(k[6], (B, T, F), jnp.float32)

    params, Wm = make_mixer_params(conv_w, conv_b, seq_g, seq_b,
                                   w1, b1, w2, b2, ln_g, ln_b)

    ref = ref_forward(x, Wm, conv_b, seq_g, seq_b, w1, b1, w2, b2, ln_g, ln_b)

    # Exact-semantics check: f32 matmuls + erf GELU must match the reference tightly.
    out_f32 = jax.block_until_ready(mixer_block(x, params, matmul_dtype=jnp.float32))
    np.testing.assert_allclose(np.asarray(out_f32), np.asarray(ref),
                               rtol=2e-4, atol=2e-4)

    # Performance path: bf16 MXU operands, f32 accumulation, tanh-approx GELU
    # (documented deviation from exact erf GELU; covered by loose tolerance).
    out = jax.block_until_ready(mixer_block(x, params))
    np.testing.assert_allclose(np.asarray(out), np.asarray(ref),
                               rtol=5e-2, atol=5e-2)

    print("KERNEL_OK")
</pallas_src>

<mosaic_0001>
module attributes {stable_mosaic.version = 11 : i64} {
  func.func @mixer_block_kernel(%arg0: i32, %arg1: memref<4x128x256xf32, #tpu.memory_space<vmem>>, %arg2: memref<1x256xf32, #tpu.memory_space<vmem>>, %arg3: memref<1x256xf32, #tpu.memory_space<vmem>>, %arg4: memref<128x1xf32, #tpu.memory_space<vmem>>, %arg5: memref<128x1xf32, #tpu.memory_space<vmem>>, %arg6: memref<256x1024xf32, #tpu.memory_space<vmem>>, %arg7: memref<1x1024xf32, #tpu.memory_space<vmem>>, %arg8: memref<1024x256xf32, #tpu.memory_space<vmem>>, %arg9: memref<1x256xf32, #tpu.memory_space<vmem>>, %arg10: memref<1x256xf32, #tpu.memory_space<vmem>>, %arg11: memref<1x256xf32, #tpu.memory_space<vmem>>, %arg12: memref<4x128x256xf32, #tpu.memory_space<vmem>>) attributes {dimension_semantics = [#tpu.dimension_semantics<parallel>], iteration_bounds = array<i64: 1>, scalar_prefetch = 0 : i64, scratch_operands = 0 : i64, tpu.core_type = #tpu.core_type<tc>, window_params = [{transform_indices = @transform_0, window_bounds = array<i64: 4, 128, 256>}, {pipeline_mode = #tpu.pipeline_mode<synchronous>, transform_indices = @transform_1, window_bounds = array<i64: 1, 256>}, {pipeline_mode = #tpu.pipeline_mode<synchronous>, transform_indices = @transform_2, window_bounds = array<i64: 1, 256>}, {pipeline_mode = #tpu.pipeline_mode<synchronous>, transform_indices = @transform_3, window_bounds = array<i64: 128, 1>}, {pipeline_mode = #tpu.pipeline_mode<synchronous>, transform_indices = @transform_4, window_bounds = array<i64: 128, 1>}, {pipeline_mode = #tpu.pipeline_mode<synchronous>, transform_indices = @transform_5, window_bounds = array<i64: 256, 1024>}, {pipeline_mode = #tpu.pipeline_mode<synchronous>, transform_indices = @transform_6, window_bounds = array<i64: 1, 1024>}, {pipeline_mode = #tpu.pipeline_mode<synchronous>, transform_indices = @transform_7, window_bounds = array<i64: 1024, 256>}, {pipeline_mode = #tpu.pipeline_mode<synchronous>, transform_indices = @transform_8, window_bounds = array<i64: 1, 256>}, {pipeline_mode = #tpu.pipeline_mode<synchronous>, transform_indices = @transform_9, window_bounds = array<i64: 1, 256>}, {pipeline_mode = #tpu.pipeline_mode<synchronous>, transform_indices = @transform_10, window_bounds = array<i64: 1, 256>}, {transform_indices = @transform_11, window_bounds = array<i64: 4, 128, 256>}]} {
    %c0 = arith.constant 0 : index
    %c0_0 = arith.constant 0 : index
    %c0_1 = arith.constant 0 : index
    %0 = vector.load %arg1[%c0, %c0_0, %c0_1] : memref<4x128x256xf32, #tpu.memory_space<vmem>>, vector<4x128x256xf32>
    %1 = vector.extract_strided_slice %0 {offsets = [0, 0, 0], sizes = [4, 128, 1], strides = [1, 1, 1]} : vector<4x128x256xf32> to vector<4x128x1xf32>
    %c0_2 = arith.constant 0 : index
    %c0_3 = arith.constant 0 : index
    %2 = vector.load %arg2[%c0_2, %c0_3] : memref<1x256xf32, #tpu.memory_space<vmem>>, vector<1x256xf32>
    %3 = vector.shape_cast %2 : vector<1x256xf32> to vector<1x1x256xf32>
    %4 = vector.broadcast %1 : vector<4x128x1xf32> to vector<4x128x256xf32>
    %5 = vector.broadcast %3 : vector<1x1x256xf32> to vector<4x128x256xf32>
    %6 = arith.mulf %4, %5 : vector<4x128x256xf32>
    %c0_4 = arith.constant 0 : index
    %c0_5 = arith.constant 0 : index
    %7 = vector.load %arg3[%c0_4, %c0_5] : memref<1x256xf32, #tpu.memory_space<vmem>>, vector<1x256xf32>
    %8 = vector.shape_cast %7 : vector<1x256xf32> to vector<1x1x256xf32>
    %9 = vector.broadcast %8 : vector<1x1x256xf32> to vector<4x128x256xf32>
    %10 = arith.addf %6, %9 : vector<4x128x256xf32>
    %11 = arith.addf %10, %0 : vector<4x128x256xf32>
    %cst = arith.constant dense<0.000000e+00> : vector<4x256xf32>
    %12 = vector.multi_reduction <add>, %11, %cst [1] : vector<4x128x256xf32> to vector<4x256xf32>
    %13 = vector.shape_cast %12 : vector<4x256xf32> to vector<4x1x256xf32>
    %cst_6 = arith.constant 1.280000e+02 : f32
    %14 = vector.broadcast %cst_6 : f32 to vector<4x1x256xf32>
    %15 = arith.divf %13, %14 : vector<4x1x256xf32>
    %16 = vector.broadcast %15 : vector<4x1x256xf32> to vector<4x128x256xf32>
    %17 = arith.subf %11, %16 : vector<4x128x256xf32>
    %18 = arith.mulf %17, %17 : vector<4x128x256xf32>
    %cst_7 = arith.constant dense<0.000000e+00> : vector<4x256xf32>
    %19 = vector.multi_reduction <add>, %18, %cst_7 [1] : vector<4x128x256xf32> to vector<4x256xf32>
    %20 = vector.shape_cast %19 : vector<4x256xf32> to vector<4x1x256xf32>
    %cst_8 = arith.constant 1.280000e+02 : f32
    %21 = vector.broadcast %cst_8 : f32 to vector<4x1x256xf32>
    %22 = arith.divf %20, %21 : vector<4x1x256xf32>
    %cst_9 = arith.constant 9.99999974E-6 : f32
    %23 = vector.broadcast %cst_9 : f32 to vector<4x1x256xf32>
    %24 = arith.addf %22, %23 : vector<4x1x256xf32>
    %25 = math.rsqrt %24 : vector<4x1x256xf32>
    %26 = vector.broadcast %25 : vector<4x1x256xf32> to vector<4x128x256xf32>
    %27 = arith.mulf %17, %26 : vector<4x128x256xf32>
    %c0_10 = arith.constant 0 : index
    %c0_11 = arith.constant 0 : index
    %28 = vector.load %arg4[%c0_10, %c0_11] : memref<128x1xf32, #tpu.memory_space<vmem>>, vector<128x1xf32>
    %29 = vector.shape_cast %28 : vector<128x1xf32> to vector<1x128x1xf32>
    %30 = vector.broadcast %29 : vector<1x128x1xf32> to vector<4x128x256xf32>
    %31 = arith.mulf %27, %30 : vector<4x128x256xf32>
    %c0_12 = arith.constant 0 : index
    %c0_13 = arith.constant 0 : index
    %32 = vector.load %arg5[%c0_12, %c0_13] : memref<128x1xf32, #tpu.memory_space<vmem>>, vector<128x1xf32>
    %33 = vector.shape_cast %32 : vector<128x1xf32> to vector<1x128x1xf32>
    %34 = vector.broadcast %33 : vector<1x128x1xf32> to vector<4x128x256xf32>
    %35 = arith.addf %31, %34 : vector<4x128x256xf32>
    %36 = vector.shape_cast %35 : vector<4x128x256xf32> to vector<512x256xf32>
    %c0_14 = arith.constant 0 : index
    %c0_15 = arith.constant 0 : index
    %37 = vector.load %arg6[%c0_14, %c0_15] : memref<256x1024xf32, #tpu.memory_space<vmem>>, vector<256x1024xf32>
    %cst_16 = arith.constant dense<0.000000e+00> : vector<512x1024xf32>
    %38 = tpu.matmul %36, %37, %cst_16 {dimension_numbers = #tpu.dot_dimension_numbers<[1], [0], [0], [1], [0, 0, 1, 1], [], []>} : vector<512x256xf32>, vector<256x1024xf32>, vector<512x1024xf32> -> vector<512x1024xf32>
    %c0_17 = arith.constant 0 : index
    %c0_18 = arith.constant 0 : index
    %39 = vector.load %arg7[%c0_17, %c0_18] : memref<1x1024xf32, #tpu.memory_space<vmem>>, vector<1x1024xf32>
    %40 = vector.broadcast %39 : vector<1x1024xf32> to vector<512x1024xf32>
    %41 = arith.addf %38, %40 : vector<512x1024xf32>
    %cst_19 = arith.constant 5.000000e-01 : f32
    %42 = vector.broadcast %cst_19 : f32 to vector<512x1024xf32>
    %43 = arith.mulf %42, %41 : vector<512x1024xf32>
    %cst_20 = arith.constant 0.707106769 : f32
    %44 = vector.broadcast %cst_20 : f32 to vector<512x1024xf32>
    %45 = arith.mulf %41, %44 : vector<512x1024xf32>
    %46 = math.erf %45 : vector<512x1024xf32>
    %cst_21 = arith.constant 1.000000e+00 : f32
    %47 = vector.broadcast %cst_21 : f32 to vector<512x1024xf32>
    %48 = arith.addf %47, %46 : vector<512x1024xf32>
    %49 = arith.mulf %43, %48 : vector<512x1024xf32>
    %c0_22 = arith.constant 0 : index
    %c0_23 = arith.constant 0 : index
    %50 = vector.load %arg8[%c0_22, %c0_23] : memref<1024x256xf32, #tpu.memory_space<vmem>>, vector<1024x256xf32>
    %cst_24 = arith.constant dense<0.000000e+00> : vector<512x256xf32>
    %51 = tpu.matmul %49, %50, %cst_24 {dimension_numbers = #tpu.dot_dimension_numbers<[1], [0], [0], [1], [0, 0, 1, 1], [], []>} : vector<512x1024xf32>, vector<1024x256xf32>, vector<512x256xf32> -> vector<512x256xf32>
    %c0_25 = arith.constant 0 : index
    %c0_26 = arith.constant 0 : index
    %52 = vector.load %arg9[%c0_25, %c0_26] : memref<1x256xf32, #tpu.memory_space<vmem>>, vector<1x256xf32>
    %53 = vector.broadcast %52 : vector<1x256xf32> to vector<512x256xf32>
    %54 = arith.addf %51, %53 : vector<512x256xf32>
    %55 = arith.addf %54, %36 : vector<512x256xf32>
    %cst_27 = arith.constant dense<0.000000e+00> : vector<512xf32>
    %56 = vector.multi_reduction <add>, %55, %cst_27 [1] : vector<512x256xf32> to vector<512xf32>
    %57 = vector.shape_cast %56 : vector<512xf32> to vector<512x1xf32>
    %cst_28 = arith.constant 2.560000e+02 : f32
    %58 = vector.broadcast %cst_28 : f32 to vector<512x1xf32>
    %59 = arith.divf %57, %58 : vector<512x1xf32>
    %60 = vector.broadcast %59 : vector<512x1xf32> to vector<512x256xf32>
    %61 = arith.subf %55, %60 : vector<512x256xf32>
    %62 = arith.mulf %61, %61 : vector<512x256xf32>
    %cst_29 = arith.constant dense<0.000000e+00> : vector<512xf32>
    %63 = vector.multi_reduction <add>, %62, %cst_29 [1] : vector<512x256xf32> to vector<512xf32>
    %64 = vector.shape_cast %63 : vector<512xf32> to vector<512x1xf32>
    %cst_30 = arith.constant 2.560000e+02 : f32
    %65 = vector.broadcast %cst_30 : f32 to vector<512x1xf32>
    %66 = arith.divf %64, %65 : vector<512x1xf32>
    %cst_31 = arith.constant 9.99999974E-6 : f32
    %67 = vector.broadcast %cst_31 : f32 to vector<512x1xf32>
    %68 = arith.addf %66, %67 : vector<512x1xf32>
    %69 = math.rsqrt %68 : vector<512x1xf32>
    %70 = vector.broadcast %69 : vector<512x1xf32> to vector<512x256xf32>
    %71 = arith.mulf %61, %70 : vector<512x256xf32>
    %c0_32 = arith.constant 0 : index
    %c0_33 = arith.constant 0 : index
    %72 = vector.load %arg10[%c0_32, %c0_33] : memref<1x256xf32, #tpu.memory_space<vmem>>, vector<1x256xf32>
    %73 = vector.broadcast %72 : vector<1x256xf32> to vector<512x256xf32>
    %74 = arith.mulf %71, %73 : vector<512x256xf32>
    %c0_34 = arith.constant 0 : index
    %c0_35 = arith.constant 0 : index
    %75 = vector.load %arg11[%c0_34, %c0_35] : memref<1x256xf32, #tpu.memory_space<vmem>>, vector<1x256xf32>
    %76 = vector.broadcast %75 : vector<1x256xf32> to vector<512x256xf32>
    %77 = arith.addf %74, %76 : vector<512x256xf32>
    %78 = vector.shape_cast %77 : vector<512x256xf32> to vector<4x128x256xf32>
    %c0_36 = arith.constant 0 : index
    %c0_37 = arith.constant 0 : index
    %c0_38 = arith.constant 0 : index
    %79 = vector.load %arg12[%c0_36, %c0_37, %c0_38] : memref<4x128x256xf32, #tpu.memory_space<vmem>>, vector<4x128x256xf32>
    tpu.vector_store %arg12[%c0_36, %c0_37, %c0_38], %78 {strides = array<i32>} : memref<4x128x256xf32, #tpu.memory_space<vmem>>, vector<4x128x256xf32>,
    return
  }
  func.func @transform_0(%arg0: i32) -> (i32, i32, i32) {
    %c0_i32 = arith.constant 0 : i32
    %c0_i32_0 = arith.constant 0 : i32
    %c0_i32_1 = arith.constant 0 : i32
    return %arg0, %c0_i32, %c0_i32_0 : i32, i32, i32
  }
  func.func @transform_1(%arg0: i32) -> (i32, i32) {
    %c0_i32 = arith.constant 0 : i32
    %c0_i32_0 = arith.constant 0 : i32
    %c0_i32_1 = arith.constant 0 : i32
    return %c0_i32, %c0_i32_0 : i32, i32
  }
  func.func @transform_2(%arg0: i32) -> (i32, i32) {
    %c0_i32 = arith.constant 0 : i32
    %c0_i32_0 = arith.constant 0 : i32
    %c0_i32_1 = arith.constant 0 : i32
    return %c0_i32, %c0_i32_0 : i32, i32
  }
  func.func @transform_3(%arg0: i32) -> (i32, i32) {
    %c0_i32 = arith.constant 0 : i32
    %c0_i32_0 = arith.constant 0 : i32
    %c0_i32_1 = arith.constant 0 : i32
    return %c0_i32, %c0_i32_0 : i32, i32
  }
  func.func @transform_4(%arg0: i32) -> (i32, i32) {
    %c0_i32 = arith.constant 0 : i32
    %c0_i32_0 = arith.constant 0 : i32
    %c0_i32_1 = arith.constant 0 : i32
    return %c0_i32, %c0_i32_0 : i32, i32
  }
  func.func @transform_5(%arg0: i32) -> (i32, i32) {
    %c0_i32 = arith.constant 0 : i32
    %c0_i32_0 = arith.constant 0 : i32
    %c0_i32_1 = arith.constant 0 : i32
    return %c0_i32, %c0_i32_0 : i32, i32
  }
  func.func @transform_6(%arg0: i32) -> (i32, i32) {
    %c0_i32 = arith.constant 0 : i32
    %c0_i32_0 = arith.constant 0 : i32
    %c0_i32_1 = arith.constant 0 : i32
    return %c0_i32, %c0_i32_0 : i32, i32
  }
  func.func @transform_7(%arg0: i32) -> (i32, i32) {
    %c0_i32 = arith.constant 0 : i32
    %c0_i32_0 = arith.constant 0 : i32
    %c0_i32_1 = arith.constant 0 : i32
    return %c0_i32, %c0_i32_0 : i32, i32
  }
  func.func @transform_8(%arg0: i32) -> (i32, i32) {
    %c0_i32 = arith.constant 0 : i32
    %c0_i32_0 = arith.constant 0 : i32
    %c0_i32_1 = arith.constant 0 : i32
    return %c0_i32, %c0_i32_0 : i32, i32
  }
  func.func @transform_9(%arg0: i32) -> (i32, i32) {
    %c0_i32 = arith.constant 0 : i32
    %c0_i32_0 = arith.constant 0 : i32
    %c0_i32_1 = arith.constant 0 : i32
    return %c0_i32, %c0_i32_0 : i32, i32
  }
  func.func @transform_10(%arg0: i32) -> (i32, i32) {
    %c0_i32 = arith.constant 0 : i32
    %c0_i32_0 = arith.constant 0 : i32
    %c0_i32_1 = arith.constant 0 : i32
    return %c0_i32, %c0_i32_0 : i32, i32
  }
  func.func @transform_11(%arg0: i32) -> (i32, i32, i32) {
    %c0_i32 = arith.constant 0 : i32
    %c0_i32_0 = arith.constant 0 : i32
    %c0_i32_1 = arith.constant 0 : i32
    return %arg0, %c0_i32, %c0_i32_0 : i32, i32, i32
  }
}

</mosaic_0001>

<llo_original>
// kernel: tpu_custom_call.1
$region0: #{tpu_custom_call.1}
  #allocation0 [shape = 'u32[]', space=smem, size = 0x4, offset = 0x4, fixed_abs, tag = 'smem constant byte address 0x4 - core index']
  #allocation1 [shape = 'u32[144,128]{1,0:T(1,128)}', space=vmem, size = 0x12000, scoped, tag = 'internal scratch']
  %s0 = inlined_call_operand.hbm [shape: f32[4,128,256], index: 0, kind: input, shape index: {}]
  %s1 = inlined_call_operand.vmem [shape: f32[1,256], index: 1, kind: input, shape index: {}]
  %s2 = inlined_call_operand.vmem [shape: f32[1,256], index: 2, kind: input, shape index: {}]
  %s3 = inlined_call_operand.vmem [shape: f32[128,1], index: 3, kind: input, shape index: {}]
  %s4 = inlined_call_operand.vmem [shape: f32[128,1], index: 4, kind: input, shape index: {}]
  %s5 = inlined_call_operand.hbm [shape: f32[256,1024], index: 5, kind: input, shape index: {}]
  %s6 = inlined_call_operand.vmem [shape: f32[1,1024], index: 6, kind: input, shape index: {}]
  %s7 = inlined_call_operand.hbm [shape: f32[1024,256], index: 7, kind: input, shape index: {}]
  %s8 = inlined_call_operand.vmem [shape: f32[1,256], index: 8, kind: input, shape index: {}]
  %s9 = inlined_call_operand.vmem [shape: f32[1,256], index: 9, kind: input, shape index: {}]
  %s10 = inlined_call_operand.vmem [shape: f32[1,256], index: 10, kind: input, shape index: {}]
  %s11 = inlined_call_operand.hbm [shape: f32[4,128,256], index: 11, kind: output, shape index: {}]
  %s12 = sld [smem:[#allocation0]]
  $region66: #{tpu_custom_call.1} parent=0
    _
  %s14 = ssub.s32 1, %s12
  %s15 = scalar_select 0, %s14, %s12
  $region1: #{tpu_custom_call.1} parent=0
    #allocation2 [shape = 'u8[524288]{0}', space=vmem, size = 0x80000, scoped, tag = 'input window, operand 0, single buffered']
    #allocation3 [shape = 's32[1]{0}', space=sflag, size = 0x4, scoped, tag = 'scoped memory for tpu_custom_call.1']
    #allocation4 [shape = 's32[1]{0}', space=sflag, size = 0x4, scoped, tag = 'scoped memory for tpu_custom_call.1']
    #allocation5 [shape = 'u8[1048576]{0}', space=vmem, size = 0x100000, scoped, tag = 'input window, operand 5, single buffered']
    #allocation6 [shape = 's32[1]{0}', space=sflag, size = 0x4, scoped, tag = 'scoped memory for tpu_custom_call.1']
    #allocation7 [shape = 'u8[1048576]{0}', space=vmem, size = 0x100000, scoped, tag = 'input window, operand 7, single buffered']
    #allocation8 [shape = 'u8[524288]{0}', space=vmem, size = 0x80000, scoped, tag = 'output window, operand 0, single buffered']
    %16 = vsyncpa [#allocation3], 0
    %17 = vsyncpa [#allocation6], 0
    %18 = vsyncpa [#allocation4], 0
    // Predicated region
    $region2: #{tpu_custom_call.1} parent=1 // pred_check
      _
    $region3: #{tpu_custom_call.1} parent=1 // pred_check_branch
      %20 = sbr.rel (0) target = $region5
    $region4: #{tpu_custom_call.1} parent=1 // pred_region
      %s22 = ssub.s32 16384, 16384
      %23 = vsyncadd [#allocation3], %s22
      %s24 = sshll.u32 [#allocation2], 4
      %s25 = int_to_ptr.vmem [resolvable:$true] %s24
      %30 = dma.hbm_to_vmem [thread:$0]  %s0, 16384, %s25, [#allocation3], 256, 256, 16
    $region5: #{tpu_custom_call.1} parent=1 // pred_fallthru
      _
    // Predicated region
    $region6: #{tpu_custom_call.1} parent=1 // pred_check
      _
    $region7: #{tpu_custom_call.1} parent=1 // pred_check_branch
      %32 = sbr.rel (0) target = $region9
    $region8: #{tpu_custom_call.1} parent=1 // pred_region
      _
    $region9: #{tpu_custom_call.1} parent=1 // pred_fallthru
      _
    // Predicated region
    $region10: #{tpu_custom_call.1} parent=1 // pred_check
      _
    $region11: #{tpu_custom_call.1} parent=1 // pred_check_branch
      %34 = sbr.rel (0) target = $region13
    $region12: #{tpu_custom_call.1} parent=1 // pred_region
      _
    $region13: #{tpu_custom_call.1} parent=1 // pred_fallthru
      _
    // Predicated region
    $region14: #{tpu_custom_call.1} parent=1 // pred_check
      _
    $region15: #{tpu_custom_call.1} parent=1 // pred_check_branch
      %36 = sbr.rel (0) target = $region17
    $region16: #{tpu_custom_call.1} parent=1 // pred_region
      _
    $region17: #{tpu_custom_call.1} parent=1 // pred_fallthru
      _
    // Predicated region
    $region18: #{tpu_custom_call.1} parent=1 // pred_check
      _
    $region19: #{tpu_custom_call.1} parent=1 // pred_check_branch
      %38 = sbr.rel (0) target = $region21
    $region20: #{tpu_custom_call.1} parent=1 // pred_region
      _
    $region21: #{tpu_custom_call.1} parent=1 // pred_fallthru
      _
    // Predicated region
    $region22: #{tpu_custom_call.1} parent=1 // pred_check
      _
    $region23: #{tpu_custom_call.1} parent=1 // pred_check_branch
      %40 = sbr.rel (0) target = $region25
    $region24: #{tpu_custom_call.1} parent=1 // pred_region
      %s42 = ssub.s32 32768, 32768
      %43 = vsyncadd [#allocation6], %s42
      %s44 = sshll.u32 [#allocation5], 4
      %s45 = int_to_ptr.vmem [resolvable:$true] %s44
      %50 = dma.hbm_to_vmem [thread:$0]  %s5, 32768, %s45, [#allocation6], 1024, 1024, 64
    $region25: #{tpu_custom_call.1} parent=1 // pred_fallthru
      _
    // Predicated region
    $region26: #{tpu_custom_call.1} parent=1 // pred_check
      _
    $region27: #{tpu_custom_call.1} parent=1 // pred_check_branch
      %52 = sbr.rel (0) target = $region29
    $region28: #{tpu_custom_call.1} parent=1 // pred_region
      _
    $region29: #{tpu_custom_call.1} parent=1 // pred_fallthru
      _
    // Predicated region
    $region30: #{tpu_custom_call.1} parent=1 // pred_check
      _
    $region31: #{tpu_custom_call.1} parent=1 // pred_check_branch
      %54 = sbr.rel (0) target = $region33
    $region32: #{tpu_custom_call.1} parent=1 // pred_region
      %s56 = ssub.s32 32768, 32768
      %57 = vsyncadd [#allocation6], %s56
      %s58 = sshll.u32 [#allocation7], 4
      %s59 = int_to_ptr.vmem [resolvable:$true] %s58
      %64 = dma.hbm_to_vmem [thread:$0]  %s7, 32768, %s59, [#allocation6], 256, 256, 16
    $region33: #{tpu_custom_call.1} parent=1 // pred_fallthru
      _
    // Predicated region
    $region34: #{tpu_custom_call.1} parent=1 // pred_check
      _
    $region35: #{tpu_custom_call.1} parent=1 // pred_check_branch
      %66 = sbr.rel (0) target = $region37
    $region36: #{tpu_custom_call.1} parent=1 // pred_region
      _
    $region37: #{tpu_custom_call.1} parent=1 // pred_fallthru
      _
    // Predicated region
    $region38: #{tpu_custom_call.1} parent=1 // pred_check
      _
    $region39: #{tpu_custom_call.1} parent=1 // pred_check_branch
      %68 = sbr.rel (0) target = $region41
    $region40: #{tpu_custom_call.1} parent=1 // pred_region
      _
    $region41: #{tpu_custom_call.1} parent=1 // pred_fallthru
      _
    // Predicated region
    $region42: #{tpu_custom_call.1} parent=1 // pred_check
      _
    $region43: #{tpu_custom_call.1} parent=1 // pred_check_branch
      %70 = sbr.rel (0) target = $region45
    $region44: #{tpu_custom_call.1} parent=1 // pred_region
      _
    $region45: #{tpu_custom_call.1} parent=1 // pred_fallthru
      _
    // Predicated region
    $region46: #{tpu_custom_call.1} parent=1 // pred_check
      _
    $region47: #{tpu_custom_call.1} parent=1 // pred_check_branch
      %72 = sbr.rel (0) target = $region49
    $region48: #{tpu_custom_call.1} parent=1 // pred_region
      %73 = dma.done [#allocation3], 16384
    $region49: #{tpu_custom_call.1} parent=1 // pred_fallthru
      _
    // Predicated region
    $region50: #{tpu_custom_call.1} parent=1 // pred_check
      _
    $region51: #{tpu_custom_call.1} parent=1 // pred_check_branch
      %75 = sbr.rel (0) target = $region53
    $region52: #{tpu_custom_call.1} parent=1 // pred_region
      %76 = dma.done [#allocation6], 32768
    $region53: #{tpu_custom_call.1} parent=1 // pred_fallthru
      _
    // Predicated region
    $region54: #{tpu_custom_call.1} parent=1 // pred_check
      _
    $region55: #{tpu_custom_call.1} parent=1 // pred_check_branch
      %78 = sbr.rel (0) target = $region57
    $region56: #{tpu_custom_call.1} parent=1 // pred_region
      %79 = dma.done [#allocation6], 32768
    $region57: #{tpu_custom_call.1} parent=1 // pred_fallthru
      _
    %v80 = vld [vmem:[#allocation2] sm:$0xff]
    %v81 = vld [vmem:[#allocation2 + $0x8] sm:$0xff]
    %v82 = vld [vmem:[#allocation2 + $0x10] sm:$0xff]
    %v83 = vld [vmem:[#allocation2 + $0x18] sm:$0xff]
    %v84 = vld [vmem:[#allocation2 + $0x20] sm:$0xff]
    %v85 = vld [vmem:[#allocation2 + $0x28] sm:$0xff]
    %v86 = vld [vmem:[#allocation2 + $0x30] sm:$0xff]
    %v87 = vld [vmem:[#allocation2 + $0x38] sm:$0xff]
    %v88 = vld [vmem:[#allocation2 + $0x40] sm:$0xff]
    %v89 = vld [vmem:[#allocation2 + $0x48] sm:$0xff]
    %v90 = vld [vmem:[#allocation2 + $0x50] sm:$0xff]
    %v91 = vld [vmem:[#allocation2 + $0x58] sm:$0xff]
    %v92 = vld [vmem:[#allocation2 + $0x60] sm:$0xff]
    %v93 = vld [vmem:[#allocation2 + $0x68] sm:$0xff]
    %v94 = vld [vmem:[#allocation2 + $0x70] sm:$0xff]
    %v95 = vld [vmem:[#allocation2 + $0x78] sm:$0xff]
    %v96 = vld [vmem:[#allocation2 + $0x80] sm:$0xff]
    %v97 = vld [vmem:[#allocation2 + $0x88] sm:$0xff]
    %v98 = vld [vmem:[#allocation2 + $0x90] sm:$0xff]
    %v99 = vld [vmem:[#allocation2 + $0x98] sm:$0xff]
    %v100 = vld [vmem:[#allocation2 + $0xa0] sm:$0xff]
    %v101 = vld [vmem:[#allocation2 + $0xa8] sm:$0xff]
    %v102 = vld [vmem:[#allocation2 + $0xb0] sm:$0xff]
    %v103 = vld [vmem:[#allocation2 + $0xb8] sm:$0xff]
    %v104 = vld [vmem:[#allocation2 + $0xc0] sm:$0xff]
    %v105 = vld [vmem:[#allocation2 + $0xc8] sm:$0xff]
    %v106 = vld [vmem:[#allocation2 + $0xd0] sm:$0xff]
    %v107 = vld [vmem:[#allocation2 + $0xd8] sm:$0xff]
    %v108 = vld [vmem:[#allocation2 + $0xe0] sm:$0xff]
    %v109 = vld [vmem:[#allocation2 + $0xe8] sm:$0xff]
    %v110 = vld [vmem:[#allocation2 + $0xf0] sm:$0xff]
    %v111 = vld [vmem:[#allocation2 + $0xf8] sm:$0xff]
    %v112 = vld [vmem:[#allocation2 + $0x100] sm:$0xff]
    %v113 = vld [vmem:[#allocation2 + $0x108] sm:$0xff]
    %v114 = vld [vmem:[#allocation2 + $0x110] sm:$0xff]
    %v115 = vld [vmem:[#allocation2 + $0x118] sm:$0xff]
    %v116 = vld [vmem:[#allocation2 + $0x120] sm:$0xff]
    %v117 = vld [vmem:[#allocation2 + $0x128] sm:$0xff]
    %v118 = vld [vmem:[#allocation2 + $0x130] sm:$0xff]
    %v119 = vld [vmem:[#allocation2 + $0x138] sm:$0xff]
    %v120 = vld [vmem:[#allocation2 + $0x140] sm:$0xff]
    %v121 = vld [vmem:[#allocation2 + $0x148] sm:$0xff]
    %v122 = vld [vmem:[#allocation2 + $0x150] sm:$0xff]
    %v123 = vld [vmem:[#allocation2 + $0x158] sm:$0xff]
    %v124 = vld [vmem:[#allocation2 + $0x160] sm:$0xff]
    %v125 = vld [vmem:[#allocation2 + $0x168] sm:$0xff]
    %v126 = vld [vmem:[#allocation2 + $0x170] sm:$0xff]
    %v127 = vld [vmem:[#allocation2 + $0x178] sm:$0xff]
    %v128 = vld [vmem:[#allocation2 + $0x180] sm:$0xff]
    %v129 = vld [vmem:[#allocation2 + $0x188] sm:$0xff]
    %v130 = vld [vmem:[#allocation2 + $0x190] sm:$0xff]
    %v131 = vld [vmem:[#allocation2 + $0x198] sm:$0xff]
    %v132 = vld [vmem:[#allocation2 + $0x1a0] sm:$0xff]
    %v133 = vld [vmem:[#allocation2 + $0x1a8] sm:$0xff]
    %v134 = vld [vmem:[#allocation2 + $0x1b0] sm:$0xff]
    %v135 = vld [vmem:[#allocation2 + $0x1b8] sm:$0xff]
    %v136 = vld [vmem:[#allocation2 + $0x1c0] sm:$0xff]
    %v137 = vld [vmem:[#allocation2 + $0x1c8] sm:$0xff]
    %v138 = vld [vmem:[#allocation2 + $0x1d0] sm:$0xff]
    %v139 = vld [vmem:[#allocation2 + $0x1d8] sm:$0xff]
    %v140 = vld [vmem:[#allocation2 + $0x1e0] sm:$0xff]
    %v141 = vld [vmem:[#allocation2 + $0x1e8] sm:$0xff]
    %v142 = vld [vmem:[#allocation2 + $0x1f0] sm:$0xff]
    %v143 = vld [vmem:[#allocation2 + $0x1f8] sm:$0xff]
    %v144 = vld [vmem:[#allocation2 + $0x200] sm:$0xff]
    %v145 = vld [vmem:[#allocation2 + $0x208] sm:$0xff]
    %v146 = vld [vmem:[#allocation2 + $0x210] sm:$0xff]
    %v147 = vld [vmem:[#allocation2 + $0x218] sm:$0xff]
    %v148 = vld [vmem:[#allocation2 + $0x220] sm:$0xff]
    %v149 = vld [vmem:[#allocation2 + $0x228] sm:$0xff]
    %v150 = vld [vmem:[#allocation2 + $0x230] sm:$0xff]
    %v151 = vld [vmem:[#allocation2 + $0x238] sm:$0xff]
    %v152 = vld [vmem:[#allocation2 + $0x240] sm:$0xff]
    %v153 = vld [vmem:[#allocation2 + $0x248] sm:$0xff]
    %v154 = vld [vmem:[#allocation2 + $0x250] sm:$0xff]
    %v155 = vld [vmem:[#allocation2 + $0x258] sm:$0xff]
    %v156 = vld [vmem:[#allocation2 + $0x260] sm:$0xff]
    %v157 = vld [vmem:[#allocation2 + $0x268] sm:$0xff]
    %v158 = vld [vmem:[#allocation2 + $0x270] sm:$0xff]
    %v159 = vld [vmem:[#allocation2 + $0x278] sm:$0xff]
    %v160 = vld [vmem:[#allocation2 + $0x280] sm:$0xff]
    %v161 = vld [vmem:[#allocation2 + $0x288] sm:$0xff]
    %v162 = vld [vmem:[#allocation2 + $0x290] sm:$0xff]
    %v163 = vld [vmem:[#allocation2 + $0x298] sm:$0xff]
    %v164 = vld [vmem:[#allocation2 + $0x2a0] sm:$0xff]
    %v165 = vld [vmem:[#allocation2 + $0x2a8] sm:$0xff]
    %v166 = vld [vmem:[#allocation2 + $0x2b0] sm:$0xff]
    %v167 = vld [vmem:[#allocation2 + $0x2b8] sm:$0xff]
    %v168 = vld [vmem:[#allocation2 + $0x2c0] sm:$0xff]
    %v169 = vld [vmem:[#allocation2 + $0x2c8] sm:$0xff]
    %v170 = vld [vmem:[#allocation2 + $0x2d0] sm:$0xff]
    %v171 = vld [vmem:[#allocation2 + $0x2d8] sm:$0xff]
    %v172 = vld [vmem:[#allocation2 + $0x2e0] sm:$0xff]
    %v173 = vld [vmem:[#allocation2 + $0x2e8] sm:$0xff]
    %v174 = vld [vmem:[#allocation2 + $0x2f0] sm:$0xff]
    %v175 = vld [vmem:[#allocation2 + $0x2f8] sm:$0xff]
    %v176 = vld [vmem:[#allocation2 + $0x300] sm:$0xff]
    %v177 = vld [vmem:[#allocation2 + $0x308] sm:$0xff]
    %v178 = vld [vmem:[#allocation2 + $0x310] sm:$0xff]
    %v179 = vld [vmem:[#allocation2 + $0x318] sm:$0xff]
    %v180 = vld [vmem:[#allocation2 + $0x320] sm:$0xff]
    %v181 = vld [vmem:[#allocation2 + $0x328] sm:$0xff]
    %v182 = vld [vmem:[#allocation2 + $0x330] sm:$0xff]
    %v183 = vld [vmem:[#allocation2 + $0x338] sm:$0xff]
    %v184 = vld [vmem:[#allocation2 + $0x340] sm:$0xff]
    %v185 = vld [vmem:[#allocation2 + $0x348] sm:$0xff]
    %v186 = vld [vmem:[#allocation2 + $0x350] sm:$0xff]
    %v187 = vld [vmem:[#allocation2 + $0x358] sm:$0xff]
    %v188 = vld [vmem:[#allocation2 + $0x360] sm:$0xff]
    %v189 = vld [vmem:[#allocation2 + $0x368] sm:$0xff]
    %v190 = vld [vmem:[#allocation2 + $0x370] sm:$0xff]
    %v191 = vld [vmem:[#allocation2 + $0x378] sm:$0xff]
    %v192 = vld [vmem:[#allocation2 + $0x380] sm:$0xff]
    %v193 = vld [vmem:[#allocation2 + $0x388] sm:$0xff]
    %v194 = vld [vmem:[#allocation2 + $0x390] sm:$0xff]
    %v195 = vld [vmem:[#allocation2 + $0x398] sm:$0xff]
    %v196 = vld [vmem:[#allocation2 + $0x3a0] sm:$0xff]
    %v197 = vld [vmem:[#allocation2 + $0x3a8] sm:$0xff]
    %v198 = vld [vmem:[#allocation2 + $0x3b0] sm:$0xff]
    %v199 = vld [vmem:[#allocation2 + $0x3b8] sm:$0xff]
    %v200 = vld [vmem:[#allocation2 + $0x3c0] sm:$0xff]
    %v201 = vld [vmem:[#allocation2 + $0x3c8] sm:$0xff]
    %v202 = vld [vmem:[#allocation2 + $0x3d0] sm:$0xff]
    %v203 = vld [vmem:[#allocation2 + $0x3d8] sm:$0xff]
    %v204 = vld [vmem:[#allocation2 + $0x3e0] sm:$0xff]
    %v205 = vld [vmem:[#allocation2 + $0x3e8] sm:$0xff]
    %v206 = vld [vmem:[#allocation2 + $0x3f0] sm:$0xff]
    %v207 = vld [vmem:[#allocation2 + $0x3f8] sm:$0xff]
    %v208 = vld [vmem:[%s1] sm:$0x3]
    %210 = vset.pattern.permute.xlu0 0
    %211 = vperm.xlu0 %210, %v80
    %v212 = vpop.permute.xlu0 %211
    %215 = vset.pattern.permute.xlu0 0
    %216 = vperm.xlu0 %215, %v82
    %v217 = vpop.permute.xlu0 %216
    %220 = vset.pattern.permute.xlu0 0
    %221 = vperm.xlu0 %220, %v84
    %v222 = vpop.permute.xlu0 %221
    %225 = vset.pattern.permute.xlu0 0
    %226 = vperm.xlu0 %225, %v86
    %v227 = vpop.permute.xlu0 %226
    %230 = vset.pattern.permute.xlu0 0
    %231 = vperm.xlu0 %230, %v88
    %v232 = vpop.permute.xlu0 %231
    %235 = vset.pattern.permute.xlu0 0
    %236 = vperm.xlu0 %235, %v90
    %v237 = vpop.permute.xlu0 %236
    %240 = vset.pattern.permute.xlu0 0
    %241 = vperm.xlu0 %240, %v92
    %v242 = vpop.permute.xlu0 %241
    %245 = vset.pattern.permute.xlu0 0
    %246 = vperm.xlu0 %245, %v94
    %v247 = vpop.permute.xlu0 %246
    %250 = vset.pattern.permute.xlu0 0
    %251 = vperm.xlu0 %250, %v96
    %v252 = vpop.permute.xlu0 %251
    %255 = vset.pattern.permute.xlu0 0
    %256 = vperm.xlu0 %255, %v98
    %v257 = vpop.permute.xlu0 %256
    %260 = vset.pattern.permute.xlu0 0
    %261 = vperm.xlu0 %260, %v100
    %v262 = vpop.permute.xlu0 %261
    %265 = vset.pattern.permute.xlu0 0
    %266 = vperm.xlu0 %265, %v102
    %v267 = vpop.permute.xlu0 %266
    %270 = vset.pattern.permute.xlu0 0
    %271 = vperm.xlu0 %270, %v104
    %v272 = vpop.permute.xlu0 %271
    %275 = vset.pattern.permute.xlu0 0
    %276 = vperm.xlu0 %275, %v106
    %v277 = vpop.permute.xlu0 %276
    %280 = vset.pattern.permute.xlu0 0
    %281 = vperm.xlu0 %280, %v108
    %v282 = vpop.permute.xlu0 %281
    %285 = vset.pattern.permute.xlu0 0
    %286 = vperm.xlu0 %285, %v110
    %v287 = vpop.permute.xlu0 %286
    %290 = vset.pattern.permute.xlu0 0
    %291 = vperm.xlu0 %290, %v112
    %v292 = vpop.permute.xlu0 %291
    %295 = vset.pattern.permute.xlu0 0
    %296 = vperm.xlu0 %295, %v114
    %v297 = vpop.permute.xlu0 %296
    %300 = vset.pattern.permute.xlu0 0
    %301 = vperm.xlu0 %300, %v116
    %v302 = vpop.permute.xlu0 %301
    %305 = vset.pattern.permute.xlu0 0
    %306 = vperm.xlu0 %305, %v118
    %v307 = vpop.permute.xlu0 %306
    %310 = vset.pattern.permute.xlu0 0
    %311 = vperm.xlu0 %310, %v120
    %v312 = vpop.permute.xlu0 %311
    %315 = vset.pattern.permute.xlu0 0
    %316 = vperm.xlu0 %315, %v122
    %v317 = vpop.permute.xlu0 %316
    %320 = vset.pattern.permute.xlu0 0
    %321 = vperm.xlu0 %320, %v124
    %v322 = vpop.permute.xlu0 %321
    %325 = vset.pattern.permute.xlu0 0
    %326 = vperm.xlu0 %325, %v126
    %v327 = vpop.permute.xlu0 %326
    %330 = vset.pattern.permute.xlu0 0
    %331 = vperm.xlu0 %330, %v128
    %v332 = vpop.permute.xlu0 %331
    %335 = vset.pattern.permute.xlu0 0
    %336 = vperm.xlu0 %335, %v130
    %v337 = vpop.permute.xlu0 %336
    %340 = vset.pattern.permute.xlu0 0
    %341 = vperm.xlu0 %340, %v132
    %v342 = vpop.permute.xlu0 %341
    %345 = vset.pattern.permute.xlu0 0
    %346 = vperm.xlu0 %345, %v134
    %v347 = vpop.permute.xlu0 %346
    %350 = vset.pattern.permute.xlu0 0
    %351 = vperm.xlu0 %350, %v136
    %v352 = vpop.permute.xlu0 %351
    %355 = vset.pattern.permute.xlu0 0
    %356 = vperm.xlu0 %355, %v138
    %v357 = vpop.permute.xlu0 %356
    %360 = vset.pattern.permute.xlu0 0
    %361 = vperm.xlu0 %360, %v140
    %v362 = vpop.permute.xlu0 %361
    %365 = vset.pattern.permute.xlu0 0
    %366 = vperm.xlu0 %365, %v142
    %v367 = vpop.permute.xlu0 %366
    %370 = vset.pattern.permute.xlu0 0
    %371 = vperm.xlu0 %370, %v144
    %v372 = vpop.permute.xlu0 %371
    %375 = vset.pattern.permute.xlu0 0
    %376 = vperm.xlu0 %375, %v146
    %v377 = vpop.permute.xlu0 %376
    %380 = vset.pattern.permute.xlu0 0
    %381 = vperm.xlu0 %380, %v148
    %v382 = vpop.permute.xlu0 %381
    %385 = vset.pattern.permute.xlu0 0
    %386 = vperm.xlu0 %385, %v150
    %v387 = vpop.permute.xlu0 %386
    %390 = vset.pattern.permute.xlu0 0
    %391 = vperm.xlu0 %390, %v152
    %v392 = vpop.permute.xlu0 %391
    %395 = vset.pattern.permute.xlu0 0
    %396 = vperm.xlu0 %395, %v154
    %v397 = vpop.permute.xlu0 %396
    %400 = vset.pattern.permute.xlu0 0
    %401 = vperm.xlu0 %400, %v156
    %v402 = vpop.permute.xlu0 %401
    %405 = vset.pattern.permute.xlu0 0
    %406 = vperm.xlu0 %405, %v158
    %v407 = vpop.permute.xlu0 %406
    %410 = vset.pattern.permute.xlu0 0
    %411 = vperm.xlu0 %410, %v160
    %v412 = vpop.permute.xlu0 %411
    %415 = vset.pattern.permute.xlu0 0
    %416 = vperm.xlu0 %415, %v162
    %v417 = vpop.permute.xlu0 %416
    %420 = vset.pattern.permute.xlu0 0
    %421 = vperm.xlu0 %420, %v164
    %v422 = vpop.permute.xlu0 %421
    %425 = vset.pattern.permute.xlu0 0
    %426 = vperm.xlu0 %425, %v166
    %v427 = vpop.permute.xlu0 %426
    %430 = vset.pattern.permute.xlu0 0
    %431 = vperm.xlu0 %430, %v168
    %v432 = vpop.permute.xlu0 %431
    %435 = vset.pattern.permute.xlu0 0
    %436 = vperm.xlu0 %435, %v170
    %v437 = vpop.permute.xlu0 %436
    %440 = vset.pattern.permute.xlu0 0
    %441 = vperm.xlu0 %440, %v172
    %v442 = vpop.permute.xlu0 %441
    %445 = vset.pattern.permute.xlu0 0
    %446 = vperm.xlu0 %445, %v174
    %v447 = vpop.permute.xlu0 %446
    %450 = vset.pattern.permute.xlu0 0
    %451 = vperm.xlu0 %450, %v176
    %v452 = vpop.permute.xlu0 %451
    %455 = vset.pattern.permute.xlu0 0
    %456 = vperm.xlu0 %455, %v178
    %v457 = vpop.permute.xlu0 %456
    %460 = vset.pattern.permute.xlu0 0
    %461 = vperm.xlu0 %460, %v180
    %v462 = vpop.permute.xlu0 %461
    %465 = vset.pattern.permute.xlu0 0
    %466 = vperm.xlu0 %465, %v182
    %v467 = vpop.permute.xlu0 %466
    %470 = vset.pattern.permute.xlu0 0
    %471 = vperm.xlu0 %470, %v184
    %v472 = vpop.permute.xlu0 %471
    %475 = vset.pattern.permute.xlu0 0
    %476 = vperm.xlu0 %475, %v186
    %v477 = vpop.permute.xlu0 %476
    %480 = vset.pattern.permute.xlu0 0
    %481 = vperm.xlu0 %480, %v188
    %v482 = vpop.permute.xlu0 %481
    %485 = vset.pattern.permute.xlu0 0
    %486 = vperm.xlu0 %485, %v190
    %v487 = vpop.permute.xlu0 %486
    %490 = vset.pattern.permute.xlu0 0
    %491 = vperm.xlu0 %490, %v192
    %v492 = vpop.permute.xlu0 %491
    %495 = vset.pattern.permute.xlu0 0
    %496 = vperm.xlu0 %495, %v194
    %v497 = vpop.permute.xlu0 %496
    %500 = vset.pattern.permute.xlu0 0
    %501 = vperm.xlu0 %500, %v196
    %v502 = vpop.permute.xlu0 %501
    %505 = vset.pattern.permute.xlu0 0
    %506 = vperm.xlu0 %505, %v198
    %v507 = vpop.permute.xlu0 %506
    %510 = vset.pattern.permute.xlu0 0
    %511 = vperm.xlu0 %510, %v200
    %v512 = vpop.permute.xlu0 %511
    %515 = vset.pattern.permute.xlu0 0
    %516 = vperm.xlu0 %515, %v202
    %v517 = vpop.permute.xlu0 %516
    %520 = vset.pattern.permute.xlu0 0
    %521 = vperm.xlu0 %520, %v204
    %v522 = vpop.permute.xlu0 %521
    %525 = vset.pattern.permute.xlu0 0
    %526 = vperm.xlu0 %525, %v206
    %v527 = vpop.permute.xlu0 %526
    %v530 = vlaneseq
    %v531 = vshrl.u32 %v530, 7
    %v532 = vsub.s32 0, %v531
    %v533 = vrot.slane %v208, %v532
    %v534 = vlaneseq
    %v535 = vshrl.u32 %v534, 7
    %v536 = vsub.s32 1, %v535
    %v537 = vrot.slane %v208, %v536
    %v540 = vmul.f32 %v212, %v533
    %v541 = vmul.f32 %v212, %v537
    %v542 = vmul.f32 %v217, %v533
    %v543 = vmul.f32 %v217, %v537
    %v544 = vmul.f32 %v222, %v533
    %v545 = vmul.f32 %v222, %v537
    %v546 = vmul.f32 %v227, %v533
    %v547 = vmul.f32 %v227, %v537
    %v548 = vmul.f32 %v232, %v533
    %v549 = vmul.f32 %v232, %v537
    %v550 = vmul.f32 %v237, %v533
    %v551 = vmul.f32 %v237, %v537
    %v552 = vmul.f32 %v242, %v533
    %v553 = vmul.f32 %v242, %v537
    %v554 = vmul.f32 %v247, %v533
    %v555 = vmul.f32 %v247, %v537
    %v556 = vmul.f32 %v252, %v533
    %v557 = vmul.f32 %v252, %v537
    %v558 = vmul.f32 %v257, %v533
    %v559 = vmul.f32 %v257, %v537
    %v560 = vmul.f32 %v262, %v533
    %v561 = vmul.f32 %v262, %v537
    %v562 = vmul.f32 %v267, %v533
    %v563 = vmul.f32 %v267, %v537
    %v564 = vmul.f32 %v272, %v533
    %v565 = vmul.f32 %v272, %v537
    %v566 = vmul.f32 %v277, %v533
    %v567 = vmul.f32 %v277, %v537
    %v568 = vmul.f32 %v282, %v533
    %v569 = vmul.f32 %v282, %v537
    %v570 = vmul.f32 %v287, %v533
    %v571 = vmul.f32 %v287, %v537
    %v572 = vmul.f32 %v292, %v533
    %v573 = vmul.f32 %v292, %v537
    %v574 = vmul.f32 %v297, %v533
    %v575 = vmul.f32 %v297, %v537
    %v576 = vmul.f32 %v302, %v533
    %v577 = vmul.f32 %v302, %v537
    %v578 = vmul.f32 %v307, %v533
    %v579 = vmul.f32 %v307, %v537
    %v580 = vmul.f32 %v312, %v533
    %v581 = vmul.f32 %v312, %v537
    %v582 = vmul.f32 %v317, %v533
    %v583 = vmul.f32 %v317, %v537
    %v584 = vmul.f32 %v322, %v533
    %v585 = vmul.f32 %v322, %v537
    %v586 = vmul.f32 %v327, %v533
    %v587 = vmul.f32 %v327, %v537
    %v588 = vmul.f32 %v332, %v533
    %v589 = vmul.f32 %v332, %v537
    %v590 = vmul.f32 %v337, %v533
    %v591 = vmul.f32 %v337, %v537
    %v592 = vmul.f32 %v342, %v533
    %v593 = vmul.f32 %v342, %v537
    %v594 = vmul.f32 %v347, %v533
    %v595 = vmul.f32 %v347, %v537
    %v596 = vmul.f32 %v352, %v533
    %v597 = vmul.f32 %v352, %v537
    %v598 = vmul.f32 %v357, %v533
    %v599 = vmul.f32 %v357, %v537
    %v600 = vmul.f32 %v362, %v533
    %v601 = vmul.f32 %v362, %v537
    %v602 = vmul.f32 %v367, %v533
    %v603 = vmul.f32 %v367, %v537
    %v604 = vmul.f32 %v372, %v533
    %v605 = vmul.f32 %v372, %v537
    %v606 = vmul.f32 %v377, %v533
    %v607 = vmul.f32 %v377, %v537
    %v608 = vmul.f32 %v382, %v533
    %v609 = vmul.f32 %v382, %v537
    %v610 = vmul.f32 %v387, %v533
    %v611 = vmul.f32 %v387, %v537
    %v612 = vmul.f32 %v392, %v533
    %v613 = vmul.f32 %v392, %v537
    %v614 = vmul.f32 %v397, %v533
    %v615 = vmul.f32 %v397, %v537
    %v616 = vmul.f32 %v402, %v533
    %v617 = vmul.f32 %v402, %v537
    %v618 = vmul.f32 %v407, %v533
    %v619 = vmul.f32 %v407, %v537
    %v620 = vmul.f32 %v412, %v533
    %v621 = vmul.f32 %v412, %v537
    %v622 = vmul.f32 %v417, %v533
    %v623 = vmul.f32 %v417, %v537
    %v624 = vmul.f32 %v422, %v533
    %v625 = vmul.f32 %v422, %v537
    %v626 = vmul.f32 %v427, %v533
    %v627 = vmul.f32 %v427, %v537
    %v628 = vmul.f32 %v432, %v533
    %v629 = vmul.f32 %v432, %v537
    %v630 = vmul.f32 %v437, %v533
    %v631 = vmul.f32 %v437, %v537
    %v632 = vmul.f32 %v442, %v533
    %v633 = vmul.f32 %v442, %v537
    %v634 = vmul.f32 %v447, %v533
    %v635 = vmul.f32 %v447, %v537
    %v636 = vmul.f32 %v452, %v533
    %v637 = vmul.f32 %v452, %v537
    %v638 = vmul.f32 %v457, %v533
    %v639 = vmul.f32 %v457, %v537
    %v640 = vmul.f32 %v462, %v533
    %v641 = vmul.f32 %v462, %v537
    %v642 = vmul.f32 %v467, %v533
    %v643 = vmul.f32 %v467, %v537
    %v644 = vmul.f32 %v472, %v533
    %v645 = vmul.f32 %v472, %v537
    %v646 = vmul.f32 %v477, %v533
    %v647 = vmul.f32 %v477, %v537
    %v648 = vmul.f32 %v482, %v533
    %v649 = vmul.f32 %v482, %v537
    %v650 = vmul.f32 %v487, %v533
    %v651 = vmul.f32 %v487, %v537
    %v652 = vmul.f32 %v492, %v533
    %v653 = vmul.f32 %v492, %v537
    %v654 = vmul.f32 %v497, %v533
    %v655 = vmul.f32 %v497, %v537
    %v656 = vmul.f32 %v502, %v533
    %v657 = vmul.f32 %v502, %v537
    %v658 = vmul.f32 %v507, %v533
    %v659 = vmul.f32 %v507, %v537
    %v660 = vmul.f32 %v512, %v533
    %v661 = vmul.f32 %v512, %v537
    %v662 = vmul.f32 %v517, %v533
    %v663 = vmul.f32 %v517, %v537
    %v664 = vmul.f32 %v522, %v533
    %v665 = vmul.f32 %v522, %v537
    %v666 = vmul.f32 %v527, %v533
    %v667 = vmul.f32 %v527, %v537
    %v668 = vld [vmem:[%s2] sm:$0x3]
    %v670 = vlaneseq
    %v671 = vshrl.u32 %v670, 7
    %v672 = vsub.s32 0, %v671
    %v673 = vrot.slane %v668, %v672
    %v674 = vlaneseq
    %v675 = vshrl.u32 %v674, 7
    %v676 = vsub.s32 1, %v675
    %v677 = vrot.slane %v668, %v676
    %v680 = vadd.f32 %v540, %v673
    %v681 = vadd.f32 %v541, %v677
    %v682 = vadd.f32 %v542, %v673
    %v683 = vadd.f32 %v543, %v677
    %v684 = vadd.f32 %v544, %v673
    %v685 = vadd.f32 %v545, %v677
    %v686 = vadd.f32 %v546, %v673
    %v687 = vadd.f32 %v547, %v677
    %v688 = vadd.f32 %v548, %v673
    %v689 = vadd.f32 %v549, %v677
    %v690 = vadd.f32 %v550, %v673
    %v691 = vadd.f32 %v551, %v677
    %v692 = vadd.f32 %v552, %v673
    %v693 = vadd.f32 %v553, %v677
    %v694 = vadd.f32 %v554, %v673
    %v695 = vadd.f32 %v555, %v677
    %v696 = vadd.f32 %v556, %v673
    %v697 = vadd.f32 %v557, %v677
    %v698 = vadd.f32 %v558, %v673
    %v699 = vadd.f32 %v559, %v677
    %v700 = vadd.f32 %v560, %v673
    %v701 = vadd.f32 %v561, %v677
    %v702 = vadd.f32 %v562, %v673
    %v703 = vadd.f32 %v563, %v677
    %v704 = vadd.f32 %v564, %v673
    %v705 = vadd.f32 %v565, %v677
    %v706 = vadd.f32 %v566, %v673
    %v707 = vadd.f32 %v567, %v677
    %v708 = vadd.f32 %v568, %v673
    %v709 = vadd.f32 %v569, %v677
    %v710 = vadd.f32 %v570, %v673
    %v711 = vadd.f32 %v571, %v677
    %v712 = vadd.f32 %v572, %v673
    %v713 = vadd.f32 %v573, %v677
    %v714 = vadd.f32 %v574, %v673
    %v715 = vadd.f32 %v575, %v677
    %v716 = vadd.f32 %v576, %v673
    %v717 = vadd.f32 %v577, %v677
    %v718 = vadd.f32 %v578, %v673
    %v719 = vadd.f32 %v579, %v677
    %v720 = vadd.f32 %v580, %v673
    %v721 = vadd.f32 %v581, %v677
    %v722 = vadd.f32 %v582, %v673
    %v723 = vadd.f32 %v583, %v677
    %v724 = vadd.f32 %v584, %v673
    %v725 = vadd.f32 %v585, %v677
    %v726 = vadd.f32 %v586, %v673
    %v727 = vadd.f32 %v587, %v677
    %v728 = vadd.f32 %v588, %v673
    %v729 = vadd.f32 %v589, %v677
    %v730 = vadd.f32 %v590, %v673
    %v731 = vadd.f32 %v591, %v677
    %v732 = vadd.f32 %v592, %v673
    %v733 = vadd.f32 %v593, %v677
    %v734 = vadd.f32 %v594, %v673
    %v735 = vadd.f32 %v595, %v677
    %v736 = vadd.f32 %v596, %v673
    %v737 = vadd.f32 %v597, %v677
    %v738 = vadd.f32 %v598, %v673
    %v739 = vadd.f32 %v599, %v677
    %v740 = vadd.f32 %v600, %v673
    %v741 = vadd.f32 %v601, %v677
    %v742 = vadd.f32 %v602, %v673
    %v743 = vadd.f32 %v603, %v677
    %v744 = vadd.f32 %v604, %v673
    %v745 = vadd.f32 %v605, %v677
    %v746 = vadd.f32 %v606, %v673
    %v747 = vadd.f32 %v607, %v677
    %v748 = vadd.f32 %v608, %v673
    %v749 = vadd.f32 %v609, %v677
    %v750 = vadd.f32 %v610, %v673
    %v751 = vadd.f32 %v611, %v677
    %v752 = vadd.f32 %v612, %v673
    %v753 = vadd.f32 %v613, %v677
    %v754 = vadd.f32 %v614, %v673
    %v755 = vadd.f32 %v615, %v677
    %v756 = vadd.f32 %v616, %v673
    %v757 = vadd.f32 %v617, %v677
    %v758 = vadd.f32 %v618, %v673
    %v759 = vadd.f32 %v619, %v677
    %v760 = vadd.f32 %v620, %v673
    %v761 = vadd.f32 %v621, %v677
    %v762 = vadd.f32 %v622, %v673
    %v763 = vadd.f32 %v623, %v677
    %v764 = vadd.f32 %v624, %v673
    %v765 = vadd.f32 %v625, %v677
    %v766 = vadd.f32 %v626, %v673
    %v767 = vadd.f32 %v627, %v677
    %v768 = vadd.f32 %v628, %v673
    %v769 = vadd.f32 %v629, %v677
    %v770 = vadd.f32 %v630, %v673
    %v771 = vadd.f32 %v631, %v677
    %v772 = vadd.f32 %v632, %v673
    %v773 = vadd.f32 %v633, %v677
    %v774 = vadd.f32 %v634, %v673
    %v775 = vadd.f32 %v635, %v677
    %v776 = vadd.f32 %v636, %v673
    %v777 = vadd.f32 %v637, %v677
    %v778 = vadd.f32 %v638, %v673
    %v779 = vadd.f32 %v639, %v677
    %v780 = vadd.f32 %v640, %v673
    %v781 = vadd.f32 %v641, %v677
    %v782 = vadd.f32 %v642, %v673
    %v783 = vadd.f32 %v643, %v677
    %v784 = vadd.f32 %v644, %v673
    %v785 = vadd.f32 %v645, %v677
    %v786 = vadd.f32 %v646, %v673
    %v787 = vadd.f32 %v647, %v677
    %v788 = vadd.f32 %v648, %v673
    %v789 = vadd.f32 %v649, %v677
    %v790 = vadd.f32 %v650, %v673
    %v791 = vadd.f32 %v651, %v677
    %v792 = vadd.f32 %v652, %v673
    %v793 = vadd.f32 %v653, %v677
    %v794 = vadd.f32 %v654, %v673
    %v795 = vadd.f32 %v655, %v677
    %v796 = vadd.f32 %v656, %v673
    %v797 = vadd.f32 %v657, %v677
    %v798 = vadd.f32 %v658, %v673
    %v799 = vadd.f32 %v659, %v677
    %v800 = vadd.f32 %v660, %v673
    %v801 = vadd.f32 %v661, %v677
    %v802 = vadd.f32 %v662, %v673
    %v803 = vadd.f32 %v663, %v677
    %v804 = vadd.f32 %v664, %v673
    %v805 = vadd.f32 %v665, %v677
    %v806 = vadd.f32 %v666, %v673
    %v807 = vadd.f32 %v667, %v677
    %v808 = vadd.f32 %v680, %v80
    %v809 = vadd.f32 %v681, %v81
    %v810 = vadd.f32 %v682, %v82
    %v811 = vadd.f32 %v683, %v83
    %v812 = vadd.f32 %v684, %v84
    %v813 = vadd.f32 %v685, %v85
    %v814 = vadd.f32 %v686, %v86
    %v815 = vadd.f32 %v687, %v87
    %v816 = vadd.f32 %v688, %v88
    %v817 = vadd.f32 %v689, %v89
    %v818 = vadd.f32 %v690, %v90
    %v819 = vadd.f32 %v691, %v91
    %v820 = vadd.f32 %v692, %v92
    %v821 = vadd.f32 %v693, %v93
    %v822 = vadd.f32 %v694, %v94
    %v823 = vadd.f32 %v695, %v95
    %v824 = vadd.f32 %v696, %v96
    %v825 = vadd.f32 %v697, %v97
    %v826 = vadd.f32 %v698, %v98
    %v827 = vadd.f32 %v699, %v99
    %v828 = vadd.f32 %v700, %v100
    %v829 = vadd.f32 %v701, %v101
    %v830 = vadd.f32 %v702, %v102
    %v831 = vadd.f32 %v703, %v103
    %v832 = vadd.f32 %v704, %v104
    %v833 = vadd.f32 %v705, %v105
    %v834 = vadd.f32 %v706, %v106
    %v835 = vadd.f32 %v707, %v107
    %v836 = vadd.f32 %v708, %v108
    %v837 = vadd.f32 %v709, %v109
    %v838 = vadd.f32 %v710, %v110
    %v839 = vadd.f32 %v711, %v111
    %v840 = vadd.f32 %v712, %v112
    %v841 = vadd.f32 %v713, %v113
    %v842 = vadd.f32 %v714, %v114
    %v843 = vadd.f32 %v715, %v115
    %v844 = vadd.f32 %v716, %v116
    %v845 = vadd.f32 %v717, %v117
    %v846 = vadd.f32 %v718, %v118
    %v847 = vadd.f32 %v719, %v119
    %v848 = vadd.f32 %v720, %v120
    %v849 = vadd.f32 %v721, %v121
    %v850 = vadd.f32 %v722, %v122
    %v851 = vadd.f32 %v723, %v123
    %v852 = vadd.f32 %v724, %v124
    %v853 = vadd.f32 %v725, %v125
    %v854 = vadd.f32 %v726, %v126
    %v855 = vadd.f32 %v727, %v127
    %v856 = vadd.f32 %v728, %v128
    %v857 = vadd.f32 %v729, %v129
    %v858 = vadd.f32 %v730, %v130
    %v859 = vadd.f32 %v731, %v131
    %v860 = vadd.f32 %v732, %v132
    %v861 = vadd.f32 %v733, %v133
    %v862 = vadd.f32 %v734, %v134
    %v863 = vadd.f32 %v735, %v135
    %v864 = vadd.f32 %v736, %v136
    %v865 = vadd.f32 %v737, %v137
    %v866 = vadd.f32 %v738, %v138
    %v867 = vadd.f32 %v739, %v139
    %v868 = vadd.f32 %v740, %v140
    %v869 = vadd.f32 %v741, %v141
    %v870 = vadd.f32 %v742, %v142
    %v871 = vadd.f32 %v743, %v143
    %v872 = vadd.f32 %v744, %v144
    %v873 = vadd.f32 %v745, %v145
    %v874 = vadd.f32 %v746, %v146
    %v875 = vadd.f32 %v747, %v147
    %v876 = vadd.f32 %v748, %v148
    %v877 = vadd.f32 %v749, %v149
    %v878 = vadd.f32 %v750, %v150
    %v879 = vadd.f32 %v751, %v151
    %v880 = vadd.f32 %v752, %v152
    %v881 = vadd.f32 %v753, %v153
    %v882 = vadd.f32 %v754, %v154
    %v883 = vadd.f32 %v755, %v155
    %v884 = vadd.f32 %v756, %v156
    %v885 = vadd.f32 %v757, %v157
    %v886 = vadd.f32 %v758, %v158
    %v887 = vadd.f32 %v759, %v159
    %v888 = vadd.f32 %v760, %v160
    %v889 = vadd.f32 %v761, %v161
    %v890 = vadd.f32 %v762, %v162
    %v891 = vadd.f32 %v763, %v163
    %v892 = vadd.f32 %v764, %v164
    %v893 = vadd.f32 %v765, %v165
    %v894 = vadd.f32 %v766, %v166
    %v895 = vadd.f32 %v767, %v167
    %v896 = vadd.f32 %v768, %v168
    %v897 = vadd.f32 %v769, %v169
    %v898 = vadd.f32 %v770, %v170
    %v899 = vadd.f32 %v771, %v171
    %v900 = vadd.f32 %v772, %v172
    %v901 = vadd.f32 %v773, %v173
    %v902 = vadd.f32 %v774, %v174
    %v903 = vadd.f32 %v775, %v175
    %v904 = vadd.f32 %v776, %v176
    %v905 = vadd.f32 %v777, %v177
    %v906 = vadd.f32 %v778, %v178
    %v907 = vadd.f32 %v779, %v179
    %v908 = vadd.f32 %v780, %v180
    %v909 = vadd.f32 %v781, %v181
    %v910 = vadd.f32 %v782, %v182
    %v911 = vadd.f32 %v783, %v183
    %v912 = vadd.f32 %v784, %v184
    %v913 = vadd.f32 %v785, %v185
    %v914 = vadd.f32 %v786, %v186
    %v915 = vadd.f32 %v787, %v187
    %v916 = vadd.f32 %v788, %v188
    %v917 = vadd.f32 %v789, %v189
    %v918 = vadd.f32 %v790, %v190
    %v919 = vadd.f32 %v791, %v191
    %v920 = vadd.f32 %v792, %v192
    %v921 = vadd.f32 %v793, %v193
    %v922 = vadd.f32 %v794, %v194
    %v923 = vadd.f32 %v795, %v195
    %v924 = vadd.f32 %v796, %v196
    %v925 = vadd.f32 %v797, %v197
    %v926 = vadd.f32 %v798, %v198
    %v927 = vadd.f32 %v799, %v199
    %v928 = vadd.f32 %v800, %v200
    %v929 = vadd.f32 %v801, %v201
    %v930 = vadd.f32 %v802, %v202
    %v931 = vadd.f32 %v803, %v203
    %v932 = vadd.f32 %v804, %v204
    %v933 = vadd.f32 %v805, %v205
    %v934 = vadd.f32 %v806, %v206
    %v935 = vadd.f32 %v807, %v207
    %v936 = vadd.f32 %v808, %v810
    %v937 = vadd.f32 %v936, %v812
    %v938 = vadd.f32 %v937, %v814
    %v939 = vadd.f32 %v938, %v816
    %v940 = vadd.f32 %v939, %v818
    %v941 = vadd.f32 %v940, %v820
    %v942 = vadd.f32 %v941, %v822
    %v943 = vadd.f32 %v942, %v824
    %v944 = vadd.f32 %v943, %v826
    %v945 = vadd.f32 %v944, %v828
    %v946 = vadd.f32 %v945, %v830
    %v947 = vadd.f32 %v946, %v832
    %v948 = vadd.f32 %v947, %v834
    %v949 = vadd.f32 %v948, %v836
    %v950 = vadd.f32 %v949, %v838
    %v951 = vrot.slane %v950, 4
    %v952 = vadd.f32 %v950, %v951
    %v953 = vrot.slane %v952, 2
    %v954 = vadd.f32 %v952, %v953
    %v955 = vrot.slane %v954, 1
    %v956 = vadd.f32 %v954, %v955
    %v957 = vadd.f32 %v809, %v811
    %v958 = vadd.f32 %v957, %v813
    %v959 = vadd.f32 %v958, %v815
    %v960 = vadd.f32 %v959, %v817
    %v961 = vadd.f32 %v960, %v819
    %v962 = vadd.f32 %v961, %v821
    %v963 = vadd.f32 %v962, %v823
    %v964 = vadd.f32 %v963, %v825
    %v965 = vadd.f32 %v964, %v827
    %v966 = vadd.f32 %v965, %v829
    %v967 = vadd.f32 %v966, %v831
    %v968 = vadd.f32 %v967, %v833
    %v969 = vadd.f32 %v968, %v835
    %v970 = vadd.f32 %v969, %v837
    %v971 = vadd.f32 %v970, %v839
    %v972 = vrot.slane %v971, 4
    %v973 = vadd.f32 %v971, %v972
    %v974 = vrot.slane %v973, 2
    %v975 = vadd.f32 %v973, %v974
    %v976 = vrot.slane %v975, 1
    %v977 = vadd.f32 %v975, %v976
    %v978 = vadd.f32 %v840, %v842
    %v979 = vadd.f32 %v978, %v844
    %v980 = vadd.f32 %v979, %v846
    %v981 = vadd.f32 %v980, %v848
    %v982 = vadd.f32 %v981, %v850
    %v983 = vadd.f32 %v982, %v852
    %v984 = vadd.f32 %v983, %v854
    %v985 = vadd.f32 %v984, %v856
    %v986 = vadd.f32 %v985, %v858
    %v987 = vadd.f32 %v986, %v860
    %v988 = vadd.f32 %v987, %v862
    %v989 = vadd.f32 %v988, %v864
    %v990 = vadd.f32 %v989, %v866
    %v991 = vadd.f32 %v990, %v868
    %v992 = vadd.f32 %v991, %v870
    %v993 = vrot.slane %v992, 4
    %v994 = vadd.f32 %v992, %v993
    %v995 = vrot.slane %v994, 2
    %v996 = vadd.f32 %v994, %v995
    %v997 = vrot.slane %v996, 1
    %v998 = vadd.f32 %v996, %v997
    %v999 = vadd.f32 %v841, %v843
    %v1000 = vadd.f32 %v999, %v845
    %v1001 = vadd.f32 %v1000, %v847
    %v1002 = vadd.f32 %v1001, %v849
    %v1003 = vadd.f32 %v1002, %v851
    %v1004 = vadd.f32 %v1003, %v853
    %v1005 = vadd.f32 %v1004, %v855
    %v1006 = vadd.f32 %v1005, %v857
    %v1007 = vadd.f32 %v1006, %v859
    %v1008 = vadd.f32 %v1007, %v861
    %v1009 = vadd.f32 %v1008, %v863
    %v1010 = vadd.f32 %v1009, %v865
    %v1011 = vadd.f32 %v1010, %v867
    %v1012 = vadd.f32 %v1011, %v869
    %v1013 = vadd.f32 %v1012, %v871
    %v1014 = vrot.slane %v1013, 4
    %v1015 = vadd.f32 %v1013, %v1014
    %v1016 = vrot.slane %v1015, 2
    %v1017 = vadd.f32 %v1015, %v1016
    %v1018 = vrot.slane %v1017, 1
    %v1019 = vadd.f32 %v1017, %v1018
    %v1020 = vadd.f32 %v872, %v874
    %v1021 = vadd.f32 %v1020, %v876
    %v1022 = vadd.f32 %v1021, %v878
    %v1023 = vadd.f32 %v1022, %v880
    %v1024 = vadd.f32 %v1023, %v882
    %v1025 = vadd.f32 %v1024, %v884
    %v1026 = vadd.f32 %v1025, %v886
    %v1027 = vadd.f32 %v1026, %v888
    %v1028 = vadd.f32 %v1027, %v890
    %v1029 = vadd.f32 %v1028, %v892
    %v1030 = vadd.f32 %v1029, %v894
    %v1031 = vadd.f32 %v1030, %v896
    %v1032 = vadd.f32 %v1031, %v898
    %v1033 = vadd.f32 %v1032, %v900
    %v1034 = vadd.f32 %v1033, %v902
    %v1035 = vrot.slane %v1034, 4
    %v1036 = vadd.f32 %v1034, %v1035
    %v1037 = vrot.slane %v1036, 2
    %v1038 = vadd.f32 %v1036, %v1037
    %v1039 = vrot.slane %v1038, 1
    %v1040 = vadd.f32 %v1038, %v1039
    %v1041 = vadd.f32 %v873, %v875
    %v1042 = vadd.f32 %v1041, %v877
    %v1043 = vadd.f32 %v1042, %v879
    %v1044 = vadd.f32 %v1043, %v881
    %v1045 = vadd.f32 %v1044, %v883
    %v1046 = vadd.f32 %v1045, %v885
    %v1047 = vadd.f32 %v1046, %v887
    %v1048 = vadd.f32 %v1047, %v889
    %v1049 = vadd.f32 %v1048, %v891
    %v1050 = vadd.f32 %v1049, %v893
    %v1051 = vadd.f32 %v1050, %v895
    %v1052 = vadd.f32 %v1051, %v897
    %v1053 = vadd.f32 %v1052, %v899
    %v1054 = vadd.f32 %v1053, %v901
    %v1055 = vadd.f32 %v1054, %v903
    %v1056 = vrot.slane %v1055, 4
    %v1057 = vadd.f32 %v1055, %v1056
    %v1058 = vrot.slane %v1057, 2
    %v1059 = vadd.f32 %v1057, %v1058
    %v1060 = vrot.slane %v1059, 1
    %v1061 = vadd.f32 %v1059, %v1060
    %v1062 = vadd.f32 %v904, %v906
    %v1063 = vadd.f32 %v1062, %v908
    %v1064 = vadd.f32 %v1063, %v910
    %v1065 = vadd.f32 %v1064, %v912
    %v1066 = vadd.f32 %v1065, %v914
    %v1067 = vadd.f32 %v1066, %v916
    %v1068 = vadd.f32 %v1067, %v918
    %v1069 = vadd.f32 %v1068, %v920
    %v1070 = vadd.f32 %v1069, %v922
    %v1071 = vadd.f32 %v1070, %v924
    %v1072 = vadd.f32 %v1071, %v926
    %v1073 = vadd.f32 %v1072, %v928
    %v1074 = vadd.f32 %v1073, %v930
    %v1075 = vadd.f32 %v1074, %v932
    %v1076 = vadd.f32 %v1075, %v934
    %v1077 = vrot.slane %v1076, 4
    %v1078 = vadd.f32 %v1076, %v1077
    %v1079 = vrot.slane %v1078, 2
    %v1080 = vadd.f32 %v1078, %v1079
    %v1081 = vrot.slane %v1080, 1
    %v1082 = vadd.f32 %v1080, %v1081
    %v1083 = vadd.f32 %v905, %v907
    %v1084 = vadd.f32 %v1083, %v909
    %v1085 = vadd.f32 %v1084, %v911
    %v1086 = vadd.f32 %v1085, %v913
    %v1087 = vadd.f32 %v1086, %v915
    %v1088 = vadd.f32 %v1087, %v917
    %v1089 = vadd.f32 %v1088, %v919
    %v1090 = vadd.f32 %v1089, %v921
    %v1091 = vadd.f32 %v1090, %v923
    %v1092 = vadd.f32 %v1091, %v925
    %v1093 = vadd.f32 %v1092, %v927
    %v1094 = vadd.f32 %v1093, %v929
    %v1095 = vadd.f32 %v1094, %v931
    %v1096 = vadd.f32 %v1095, %v933
    %v1097 = vadd.f32 %v1096, %v935
    %v1098 = vrot.slane %v1097, 4
    %v1099 = vadd.f32 %v1097, %v1098
    %v1100 = vrot.slane %v1099, 2
    %v1101 = vadd.f32 %v1099, %v1100
    %v1102 = vrot.slane %v1101, 1
    %v1103 = vadd.f32 %v1101, %v1102
    %v1104 = vrcp.pop 128.0
    %v1105 = vmul.f32 %v956, %v1104
    %v1106 = vmul.f32 %v977, %v1104
    %v1107 = vmul.f32 %v998, %v1104
    %v1108 = vmul.f32 %v1019, %v1104
    %v1109 = vmul.f32 %v1040, %v1104
    %v1110 = vmul.f32 %v1061, %v1104
    %v1111 = vmul.f32 %v1082, %v1104
    %v1112 = vmul.f32 %v1103, %v1104
    %v1113 = vsub.f32 %v808, %v1105
    %v1114 = vsub.f32 %v809, %v1106
    %v1115 = vsub.f32 %v810, %v1105
    %v1116 = vsub.f32 %v811, %v1106
    %v1117 = vsub.f32 %v812, %v1105
    %v1118 = vsub.f32 %v813, %v1106
    %v1119 = vsub.f32 %v814, %v1105
    %v1120 = vsub.f32 %v815, %v1106
    %v1121 = vsub.f32 %v816, %v1105
    %v1122 = vsub.f32 %v817, %v1106
    %v1123 = vsub.f32 %v818, %v1105
    %v1124 = vsub.f32 %v819, %v1106
    %v1125 = vsub.f32 %v820, %v1105
    %v1126 = vsub.f32 %v821, %v1106
    %v1127 = vsub.f32 %v822, %v1105
    %v1128 = vsub.f32 %v823, %v1106
    %v1129 = vsub.f32 %v824, %v1105
    %v1130 = vsub.f32 %v825, %v1106
    %v1131 = vsub.f32 %v826, %v1105
    %v1132 = vsub.f32 %v827, %v1106
    %v1133 = vsub.f32 %v828, %v1105
    %v1134 = vsub.f32 %v829, %v1106
    %v1135 = vsub.f32 %v830, %v1105
    %v1136 = vsub.f32 %v831, %v1106
    %v1137 = vsub.f32 %v832, %v1105
    %v1138 = vsub.f32 %v833, %v1106
    %v1139 = vsub.f32 %v834, %v1105
    %v1140 = vsub.f32 %v835, %v1106
    %v1141 = vsub.f32 %v836, %v1105
    %v1142 = vsub.f32 %v837, %v1106
    %v1143 = vsub.f32 %v838, %v1105
    %v1144 = vsub.f32 %v839, %v1106
    %v1145 = vsub.f32 %v840, %v1107
    %v1146 = vsub.f32 %v841, %v1108
    %v1147 = vsub.f32 %v842, %v1107
    %v1148 = vsub.f32 %v843, %v1108
    %v1149 = vsub.f32 %v844, %v1107
    %v1150 = vsub.f32 %v845, %v1108
    %v1151 = vsub.f32 %v846, %v1107
    %v1152 = vsub.f32 %v847, %v1108
    %v1153 = vsub.f32 %v848, %v1107
    %v1154 = vsub.f32 %v849, %v1108
    %v1155 = vsub.f32 %v850, %v1107
    %v1156 = vsub.f32 %v851, %v1108
    %v1157 = vsub.f32 %v852, %v1107
    %v1158 = vsub.f32 %v853, %v1108
    %v1159 = vsub.f32 %v854, %v1107
    %v1160 = vsub.f32 %v855, %v1108
    %v1161 = vsub.f32 %v856, %v1107
    %v1162 = vsub.f32 %v857, %v1108
    %v1163 = vsub.f32 %v858, %v1107
    %v1164 = vsub.f32 %v859, %v1108
    %v1165 = vsub.f32 %v860, %v1107
    %v1166 = vsub.f32 %v861, %v1108
    %v1167 = vsub.f32 %v862, %v1107
    %v1168 = vsub.f32 %v863, %v1108
    %v1169 = vsub.f32 %v864, %v1107
    %v1170 = vsub.f32 %v865, %v1108
    %v1171 = vsub.f32 %v866, %v1107
    %v1172 = vsub.f32 %v867, %v1108
    %v1173 = vsub.f32 %v868, %v1107
    %v1174 = vsub.f32 %v869, %v1108
    %v1175 = vsub.f32 %v870, %v1107
    %v1176 = vsub.f32 %v871, %v1108
    %v1177 = vsub.f32 %v872, %v1109
    %v1178 = vsub.f32 %v873, %v1110
    %v1179 = vsub.f32 %v874, %v1109
    %v1180 = vsub.f32 %v875, %v1110
    %v1181 = vsub.f32 %v876, %v1109
    %v1182 = vsub.f32 %v877, %v1110
    %v1183 = vsub.f32 %v878, %v1109
    %v1184 = vsub.f32 %v879, %v1110
    %v1185 = vsub.f32 %v880, %v1109
    %v1186 = vsub.f32 %v881, %v1110
    %v1187 = vsub.f32 %v882, %v1109
    %v1188 = vsub.f32 %v883, %v1110
    %v1189 = vsub.f32 %v884, %v1109
    %v1190 = vsub.f32 %v885, %v1110
    %v1191 = vsub.f32 %v886, %v1109
    %v1192 = vsub.f32 %v887, %v1110
    %v1193 = vsub.f32 %v888, %v1109
    %v1194 = vsub.f32 %v889, %v1110
    %v1195 = vsub.f32 %v890, %v1109
    %v1196 = vsub.f32 %v891, %v1110
    %v1197 = vsub.f32 %v892, %v1109
    %v1198 = vsub.f32 %v893, %v1110
    %v1199 = vsub.f32 %v894, %v1109
    %v1200 = vsub.f32 %v895, %v1110
    %v1201 = vsub.f32 %v896, %v1109
    %v1202 = vsub.f32 %v897, %v1110
    %v1203 = vsub.f32 %v898, %v1109
    %v1204 = vsub.f32 %v899, %v1110
    %v1205 = vsub.f32 %v900, %v1109
    %v1206 = vsub.f32 %v901, %v1110
    %v1207 = vsub.f32 %v902, %v1109
    %v1208 = vsub.f32 %v903, %v1110
    %v1209 = vsub.f32 %v904, %v1111
    %v1210 = vsub.f32 %v905, %v1112
    %v1211 = vsub.f32 %v906, %v1111
    %v1212 = vsub.f32 %v907, %v1112
    %v1213 = vsub.f32 %v908, %v1111
    %v1214 = vsub.f32 %v909, %v1112
    %v1215 = vsub.f32 %v910, %v1111
    %v1216 = vsub.f32 %v911, %v1112
    %v1217 = vsub.f32 %v912, %v1111
    %v1218 = vsub.f32 %v913, %v1112
    %v1219 = vsub.f32 %v914, %v1111
    %v1220 = vsub.f32 %v915, %v1112
    %v1221 = vsub.f32 %v916, %v1111
    %v1222 = vsub.f32 %v917, %v1112
    %v1223 = vsub.f32 %v918, %v1111
    %v1224 = vsub.f32 %v919, %v1112
    %v1225 = vsub.f32 %v920, %v1111
    %v1226 = vsub.f32 %v921, %v1112
    %v1227 = vsub.f32 %v922, %v1111
    %v1228 = vsub.f32 %v923, %v1112
    %v1229 = vsub.f32 %v924, %v1111
    %v1230 = vsub.f32 %v925, %v1112
    %v1231 = vsub.f32 %v926, %v1111
    %v1232 = vsub.f32 %v927, %v1112
    %v1233 = vsub.f32 %v928, %v1111
    %v1234 = vsub.f32 %v929, %v1112
    %v1235 = vsub.f32 %v930, %v1111
    %v1236 = vsub.f32 %v931, %v1112
    %v1237 = vsub.f32 %v932, %v1111
    %v1238 = vsub.f32 %v933, %v1112
    %v1239 = vsub.f32 %v934, %v1111
    %v1240 = vsub.f32 %v935, %v1112
    %v1241 = vmul.f32 %v1113, %v1113
    %v1242 = vmul.f32 %v1114, %v1114
    %v1243 = vmul.f32 %v1115, %v1115
    %v1244 = vmul.f32 %v1116, %v1116
    %v1245 = vmul.f32 %v1117, %v1117
    %v1246 = vmul.f32 %v1118, %v1118
    %v1247 = vmul.f32 %v1119, %v1119
    %v1248 = vmul.f32 %v1120, %v1120
    %v1249 = vmul.f32 %v1121, %v1121
    %v1250 = vmul.f32 %v1122, %v1122
    %v1251 = vmul.f32 %v1123, %v1123
    %v1252 = vmul.f32 %v1124, %v1124
    %v1253 = vmul.f32 %v1125, %v1125
    %v1254 = vmul.f32 %v1126, %v1126
    %v1255 = vmul.f32 %v1127, %v1127
    %v1256 = vmul.f32 %v1128, %v1128
    %v1257 = vmul.f32 %v1129, %v1129
    %v1258 = vmul.f32 %v1130, %v1130
    %v1259 = vmul.f32 %v1131, %v1131
    %v1260 = vmul.f32 %v1132, %v1132
    %v1261 = vmul.f32 %v1133, %v1133
    %v1262 = vmul.f32 %v1134, %v1134
    %v1263 = vmul.f32 %v1135, %v1135
    %v1264 = vmul.f32 %v1136, %v1136
    %v1265 = vmul.f32 %v1137, %v1137
    %v1266 = vmul.f32 %v1138, %v1138
    %v1267 = vmul.f32 %v1139, %v1139
    %v1268 = vmul.f32 %v1140, %v1140
    %v1269 = vmul.f32 %v1141, %v1141
    %v1270 = vmul.f32 %v1142, %v1142
    %v1271 = vmul.f32 %v1143, %v1143
    %v1272 = vmul.f32 %v1144, %v1144
    %v1273 = vmul.f32 %v1145, %v1145
    %v1274 = vmul.f32 %v1146, %v1146
    %v1275 = vmul.f32 %v1147, %v1147
    %v1276 = vmul.f32 %v1148, %v1148
    %v1277 = vmul.f32 %v1149, %v1149
    %v1278 = vmul.f32 %v1150, %v1150
    %v1279 = vmul.f32 %v1151, %v1151
    %v1280 = vmul.f32 %v1152, %v1152
    %v1281 = vmul.f32 %v1153, %v1153
    %v1282 = vmul.f32 %v1154, %v1154
    %v1283 = vmul.f32 %v1155, %v1155
    %v1284 = vmul.f32 %v1156, %v1156
    %v1285 = vmul.f32 %v1157, %v1157
    %v1286 = vmul.f32 %v1158, %v1158
    %v1287 = vmul.f32 %v1159, %v1159
    %v1288 = vmul.f32 %v1160, %v1160
    %v1289 = vmul.f32 %v1161, %v1161
    %v1290 = vmul.f32 %v1162, %v1162
    %v1291 = vmul.f32 %v1163, %v1163
    %v1292 = vmul.f32 %v1164, %v1164
    %v1293 = vmul.f32 %v1165, %v1165
    %v1294 = vmul.f32 %v1166, %v1166
    %v1295 = vmul.f32 %v1167, %v1167
    %v1296 = vmul.f32 %v1168, %v1168
    %v1297 = vmul.f32 %v1169, %v1169
    %v1298 = vmul.f32 %v1170, %v1170
    %v1299 = vmul.f32 %v1171, %v1171
    %v1300 = vmul.f32 %v1172, %v1172
    %v1301 = vmul.f32 %v1173, %v1173
    %v1302 = vmul.f32 %v1174, %v1174
    %v1303 = vmul.f32 %v1175, %v1175
    %v1304 = vmul.f32 %v1176, %v1176
    %v1305 = vmul.f32 %v1177, %v1177
    %v1306 = vmul.f32 %v1178, %v1178
    %v1307 = vmul.f32 %v1179, %v1179
    %v1308 = vmul.f32 %v1180, %v1180
    %v1309 = vmul.f32 %v1181, %v1181
    %v1310 = vmul.f32 %v1182, %v1182
    %v1311 = vmul.f32 %v1183, %v1183
    %v1312 = vmul.f32 %v1184, %v1184
    %v1313 = vmul.f32 %v1185, %v1185
    %v1314 = vmul.f32 %v1186, %v1186
    %v1315 = vmul.f32 %v1187, %v1187
    %v1316 = vmul.f32 %v1188, %v1188
    %v1317 = vmul.f32 %v1189, %v1189
    %v1318 = vmul.f32 %v1190, %v1190
    %v1319 = vmul.f32 %v1191, %v1191
    %v1320 = vmul.f32 %v1192, %v1192
    %v1321 = vmul.f32 %v1193, %v1193
    %v1322 = vmul.f32 %v1194, %v1194
    %v1323 = vmul.f32 %v1195, %v1195
    %v1324 = vmul.f32 %v1196, %v1196
    %v1325 = vmul.f32 %v1197, %v1197
    %v1326 = vmul.f32 %v1198, %v1198
    %v1327 = vmul.f32 %v1199, %v1199
    %v1328 = vmul.f32 %v1200, %v1200
    %v1329 = vmul.f32 %v1201, %v1201
    %v1330 = vmul.f32 %v1202, %v1202
    %v1331 = vmul.f32 %v1203, %v1203
    %v1332 = vmul.f32 %v1204, %v1204
    %v1333 = vmul.f32 %v1205, %v1205
    %v1334 = vmul.f32 %v1206, %v1206
    %v1335 = vmul.f32 %v1207, %v1207
    %v1336 = vmul.f32 %v1208, %v1208
    %v1337 = vmul.f32 %v1209, %v1209
    %v1338 = vmul.f32 %v1210, %v1210
    %v1339 = vmul.f32 %v1211, %v1211
    %v1340 = vmul.f32 %v1212, %v1212
    %v1341 = vmul.f32 %v1213, %v1213
    %v1342 = vmul.f32 %v1214, %v1214
    %v1343 = vmul.f32 %v1215, %v1215
    %v1344 = vmul.f32 %v1216, %v1216
    %v1345 = vmul.f32 %v1217, %v1217
    %v1346 = vmul.f32 %v1218, %v1218
    %v1347 = vmul.f32 %v1219, %v1219
    %v1348 = vmul.f32 %v1220, %v1220
    %v1349 = vmul.f32 %v1221, %v1221
    %v1350 = vmul.f32 %v1222, %v1222
    %v1351 = vmul.f32 %v1223, %v1223
    %v1352 = vmul.f32 %v1224, %v1224
    %v1353 = vmul.f32 %v1225, %v1225
    %v1354 = vmul.f32 %v1226, %v1226
    %v1355 = vmul.f32 %v1227, %v1227
    %v1356 = vmul.f32 %v1228, %v1228
    %v1357 = vmul.f32 %v1229, %v1229
    %v1358 = vmul.f32 %v1230, %v1230
    %v1359 = vmul.f32 %v1231, %v1231
    %v1360 = vmul.f32 %v1232, %v1232
    %v1361 = vmul.f32 %v1233, %v1233
    %v1362 = vmul.f32 %v1234, %v1234
    %v1363 = vmul.f32 %v1235, %v1235
    %v1364 = vmul.f32 %v1236, %v1236
    %v1365 = vmul.f32 %v1237, %v1237
    %v1366 = vmul.f32 %v1238, %v1238
    %v1367 = vmul.f32 %v1239, %v1239
    %v1368 = vmul.f32 %v1240, %v1240
    %v1369 = vadd.f32 %v1241, %v1243
    %v1370 = vadd.f32 %v1369, %v1245
    %v1371 = vadd.f32 %v1370, %v1247
    %v1372 = vadd.f32 %v1371, %v1249
    %v1373 = vadd.f32 %v1372, %v1251
    %v1374 = vadd.f32 %v1373, %v1253
    %v1375 = vadd.f32 %v1374, %v1255
    %v1376 = vadd.f32 %v1375, %v1257
    %v1377 = vadd.f32 %v1376, %v1259
    %v1378 = vadd.f32 %v1377, %v1261
    %v1379 = vadd.f32 %v1378, %v1263
    %v1380 = vadd.f32 %v1379, %v1265
    %v1381 = vadd.f32 %v1380, %v1267
    %v1382 = vadd.f32 %v1381, %v1269
    %v1383 = vadd.f32 %v1382, %v1271
    %v1384 = vrot.slane %v1383, 4
    %v1385 = vadd.f32 %v1383, %v1384
    %v1386 = vrot.slane %v1385, 2
    %v1387 = vadd.f32 %v1385, %v1386
    %v1388 = vrot.slane %v1387, 1
    %v1389 = vadd.f32 %v1387, %v1388
    %v1390 = vadd.f32 %v1242, %v1244
    %v1391 = vadd.f32 %v1390, %v1246
    %v1392 = vadd.f32 %v1391, %v1248
    %v1393 = vadd.f32 %v1392, %v1250
    %v1394 = vadd.f32 %v1393, %v1252
    %v1395 = vadd.f32 %v1394, %v1254
    %v1396 = vadd.f32 %v1395, %v1256
    %v1397 = vadd.f32 %v1396, %v1258
    %v1398 = vadd.f32 %v1397, %v1260
    %v1399 = vadd.f32 %v1398, %v1262
    %v1400 = vadd.f32 %v1399, %v1264
    %v1401 = vadd.f32 %v1400, %v1266
    %v1402 = vadd.f32 %v1401, %v1268
    %v1403 = vadd.f32 %v1402, %v1270
    %v1404 = vadd.f32 %v1403, %v1272
    %v1405 = vrot.slane %v1404, 4
    %v1406 = vadd.f32 %v1404, %v1405
    %v1407 = vrot.slane %v1406, 2
    %v1408 = vadd.f32 %v1406, %v1407
    %v1409 = vrot.slane %v1408, 1
    %v1410 = vadd.f32 %v1408, %v1409
    %v1411 = vadd.f32 %v1273, %v1275
    %v1412 = vadd.f32 %v1411, %v1277
    %v1413 = vadd.f32 %v1412, %v1279
    %v1414 = vadd.f32 %v1413, %v1281
    %v1415 = vadd.f32 %v1414, %v1283
    %v1416 = vadd.f32 %v1415, %v1285
    %v1417 = vadd.f32 %v1416, %v1287
    %v1418 = vadd.f32 %v1417, %v1289
    %v1419 = vadd.f32 %v1418, %v1291
    %v1420 = vadd.f32 %v1419, %v1293
    %v1421 = vadd.f32 %v1420, %v1295
    %v1422 = vadd.f32 %v1421, %v1297
    %v1423 = vadd.f32 %v1422, %v1299
    %v1424 = vadd.f32 %v1423, %v1301
    %v1425 = vadd.f32 %v1424, %v1303
    %v1426 = vrot.slane %v1425, 4
    %v1427 = vadd.f32 %v1425, %v1426
    %v1428 = vrot.slane %v1427, 2
    %v1429 = vadd.f32 %v1427, %v1428
    %v1430 = vrot.slane %v1429, 1
    %v1431 = vadd.f32 %v1429, %v1430
    %v1432 = vadd.f32 %v1274, %v1276
    %v1433 = vadd.f32 %v1432, %v1278
    %v1434 = vadd.f32 %v1433, %v1280
    %v1435 = vadd.f32 %v1434, %v1282
    %v1436 = vadd.f32 %v1435, %v1284
    %v1437 = vadd.f32 %v1436, %v1286
    %v1438 = vadd.f32 %v1437, %v1288
    %v1439 = vadd.f32 %v1438, %v1290
    %v1440 = vadd.f32 %v1439, %v1292
    %v1441 = vadd.f32 %v1440, %v1294
    %v1442 = vadd.f32 %v1441, %v1296
    %v1443 = vadd.f32 %v1442, %v1298
    %v1444 = vadd.f32 %v1443, %v1300
    %v1445 = vadd.f32 %v1444, %v1302
    %v1446 = vadd.f32 %v1445, %v1304
    %v1447 = vrot.slane %v1446, 4
    %v1448 = vadd.f32 %v1446, %v1447
    %v1449 = vrot.slane %v1448, 2
    %v1450 = vadd.f32 %v1448, %v1449
    %v1451 = vrot.slane %v1450, 1
    %v1452 = vadd.f32 %v1450, %v1451
    %v1453 = vadd.f32 %v1305, %v1307
    %v1454 = vadd.f32 %v1453, %v1309
    %v1455 = vadd.f32 %v1454, %v1311
    %v1456 = vadd.f32 %v1455, %v1313
    %v1457 = vadd.f32 %v1456, %v1315
    %v1458 = vadd.f32 %v1457, %v1317
    %v1459 = vadd.f32 %v1458, %v1319
    %v1460 = vadd.f32 %v1459, %v1321
    %v1461 = vadd.f32 %v1460, %v1323
    %v1462 = vadd.f32 %v1461, %v1325
    %v1463 = vadd.f32 %v1462, %v1327
    %v1464 = vadd.f32 %v1463, %v1329
    %v1465 = vadd.f32 %v1464, %v1331
    %v1466 = vadd.f32 %v1465, %v1333
    %v1467 = vadd.f32 %v1466, %v1335
    %v1468 = vrot.slane %v1467, 4
    %v1469 = vadd.f32 %v1467, %v1468
    %v1470 = vrot.slane %v1469, 2
    %v1471 = vadd.f32 %v1469, %v1470
    %v1472 = vrot.slane %v1471, 1
    %v1473 = vadd.f32 %v1471, %v1472
    %v1474 = vadd.f32 %v1306, %v1308
    %v1475 = vadd.f32 %v1474, %v1310
    %v1476 = vadd.f32 %v1475, %v1312
    %v1477 = vadd.f32 %v1476, %v1314
    %v1478 = vadd.f32 %v1477, %v1316
    %v1479 = vadd.f32 %v1478, %v1318
    %v1480 = vadd.f32 %v1479, %v1320
    %v1481 = vadd.f32 %v1480, %v1322
    %v1482 = vadd.f32 %v1481, %v1324
    %v1483 = vadd.f32 %v1482, %v1326
    %v1484 = vadd.f32 %v1483, %v1328
    %v1485 = vadd.f32 %v1484, %v1330
    %v1486 = vadd.f32 %v1485, %v1332
    %v1487 = vadd.f32 %v1486, %v1334
    %v1488 = vadd.f32 %v1487, %v1336
    %v1489 = vrot.slane %v1488, 4
    %v1490 = vadd.f32 %v1488, %v1489
    %v1491 = vrot.slane %v1490, 2
    %v1492 = vadd.f32 %v1490, %v1491
    %v1493 = vrot.slane %v1492, 1
    %v1494 = vadd.f32 %v1492, %v1493
    %v1495 = vadd.f32 %v1337, %v1339
    %v1496 = vadd.f32 %v1495, %v1341
    %v1497 = vadd.f32 %v1496, %v1343
    %v1498 = vadd.f32 %v1497, %v1345
    %v1499 = vadd.f32 %v1498, %v1347
    %v1500 = vadd.f32 %v1499, %v1349
    %v1501 = vadd.f32 %v1500, %v1351
    %v1502 = vadd.f32 %v1501, %v1353
    %v1503 = vadd.f32 %v1502, %v1355
    %v1504 = vadd.f32 %v1503, %v1357
    %v1505 = vadd.f32 %v1504, %v1359
    %v1506 = vadd.f32 %v1505, %v1361
    %v1507 = vadd.f32 %v1506, %v1363
    %v1508 = vadd.f32 %v1507, %v1365
    %v1509 = vadd.f32 %v1508, %v1367
    %v1510 = vrot.slane %v1509, 4
    %v1511 = vadd.f32 %v1509, %v1510
    %v1512 = vrot.slane %v1511, 2
    %v1513 = vadd.f32 %v1511, %v1512
    %v1514 = vrot.slane %v1513, 1
    %v1515 = vadd.f32 %v1513, %v1514
    %v1516 = vadd.f32 %v1338, %v1340
    %v1517 = vadd.f32 %v1516, %v1342
    %v1518 = vadd.f32 %v1517, %v1344
    %v1519 = vadd.f32 %v1518, %v1346
    %v1520 = vadd.f32 %v1519, %v1348
    %v1521 = vadd.f32 %v1520, %v1350
    %v1522 = vadd.f32 %v1521, %v1352
    %v1523 = vadd.f32 %v1522, %v1354
    %v1524 = vadd.f32 %v1523, %v1356
    %v1525 = vadd.f32 %v1524, %v1358
    %v1526 = vadd.f32 %v1525, %v1360
    %v1527 = vadd.f32 %v1526, %v1362
    %v1528 = vadd.f32 %v1527, %v1364
    %v1529 = vadd.f32 %v1528, %v1366
    %v1530 = vadd.f32 %v1529, %v1368
    %v1531 = vrot.slane %v1530, 4
    %v1532 = vadd.f32 %v1530, %v1531
    %v1533 = vrot.slane %v1532, 2
    %v1534 = vadd.f32 %v1532, %v1533
    %v1535 = vrot.slane %v1534, 1
    %v1536 = vadd.f32 %v1534, %v1535
    %v1537 = vmul.f32 %v1389, %v1104
    %v1538 = vmul.f32 %v1410, %v1104
    %v1539 = vmul.f32 %v1431, %v1104
    %v1540 = vmul.f32 %v1452, %v1104
    %v1541 = vmul.f32 %v1473, %v1104
    %v1542 = vmul.f32 %v1494, %v1104
    %v1543 = vmul.f32 %v1515, %v1104
    %v1544 = vmul.f32 %v1536, %v1104
    %v1545 = vadd.f32 %v1537, 1e-05
    %v1546 = vadd.f32 %v1538, 1e-05
    %v1547 = vadd.f32 %v1539, 1e-05
    %v1548 = vadd.f32 %v1540, 1e-05
    %v1549 = vadd.f32 %v1541, 1e-05
    %v1550 = vadd.f32 %v1542, 1e-05
    %v1551 = vadd.f32 %v1543, 1e-05
    %v1552 = vadd.f32 %v1544, 1e-05
    %v1553 = vrsqrt.pop %v1545
    %v1554 = vrsqrt.pop %v1546
    %v1555 = vrsqrt.pop %v1547
    %v1556 = vrsqrt.pop %v1548
    %v1557 = vrsqrt.pop %v1549
    %v1558 = vrsqrt.pop %v1550
    %v1559 = vrsqrt.pop %v1551
    %v1560 = vrsqrt.pop %v1552
    %v1561 = vmul.f32 %v1113, %v1553
    %v1562 = vmul.f32 %v1114, %v1554
    %v1563 = vmul.f32 %v1115, %v1553
    %v1564 = vmul.f32 %v1116, %v1554
    %v1565 = vmul.f32 %v1117, %v1553
    %v1566 = vmul.f32 %v1118, %v1554
    %v1567 = vmul.f32 %v1119, %v1553
    %v1568 = vmul.f32 %v1120, %v1554
    %v1569 = vmul.f32 %v1121, %v1553
    %v1570 = vmul.f32 %v1122, %v1554
    %v1571 = vmul.f32 %v1123, %v1553
    %v1572 = vmul.f32 %v1124, %v1554
    %v1573 = vmul.f32 %v1125, %v1553
    %v1574 = vmul.f32 %v1126, %v1554
    %v1575 = vmul.f32 %v1127, %v1553
    %v1576 = vmul.f32 %v1128, %v1554
    %v1577 = vmul.f32 %v1129, %v1553
    %v1578 = vmul.f32 %v1130, %v1554
    %v1579 = vmul.f32 %v1131, %v1553
    %v1580 = vmul.f32 %v1132, %v1554
    %v1581 = vmul.f32 %v1133, %v1553
    %v1582 = vmul.f32 %v1134, %v1554
    %v1583 = vmul.f32 %v1135, %v1553
    %v1584 = vmul.f32 %v1136, %v1554
    %v1585 = vmul.f32 %v1137, %v1553
    %v1586 = vmul.f32 %v1138, %v1554
    %v1587 = vmul.f32 %v1139, %v1553
    %v1588 = vmul.f32 %v1140, %v1554
    %v1589 = vmul.f32 %v1141, %v1553
    %v1590 = vmul.f32 %v1142, %v1554
    %v1591 = vmul.f32 %v1143, %v1553
    %v1592 = vmul.f32 %v1144, %v1554
    %v1593 = vmul.f32 %v1145, %v1555
    %v1594 = vmul.f32 %v1146, %v1556
    %v1595 = vmul.f32 %v1147, %v1555
    %v1596 = vmul.f32 %v1148, %v1556
    %v1597 = vmul.f32 %v1149, %v1555
    %v1598 = vmul.f32 %v1150, %v1556
    %v1599 = vmul.f32 %v1151, %v1555
    %v1600 = vmul.f32 %v1152, %v1556
    %v1601 = vmul.f32 %v1153, %v1555
    %v1602 = vmul.f32 %v1154, %v1556
    %v1603 = vmul.f32 %v1155, %v1555
    %v1604 = vmul.f32 %v1156, %v1556
    %v1605 = vmul.f32 %v1157, %v1555
    %v1606 = vmul.f32 %v1158, %v1556
    %v1607 = vmul.f32 %v1159, %v1555
    %v1608 = vmul.f32 %v1160, %v1556
    %v1609 = vmul.f32 %v1161, %v1555
    %v1610 = vmul.f32 %v1162, %v1556
    %v1611 = vmul.f32 %v1163, %v1555
    %v1612 = vmul.f32 %v1164, %v1556
    %v1613 = vmul.f32 %v1165, %v1555
    %v1614 = vmul.f32 %v1166, %v1556
    %v1615 = vmul.f32 %v1167, %v1555
    %v1616 = vmul.f32 %v1168, %v1556
    %v1617 = vmul.f32 %v1169, %v1555
    %v1618 = vmul.f32 %v1170, %v1556
    %v1619 = vmul.f32 %v1171, %v1555
    %v1620 = vmul.f32 %v1172, %v1556
    %v1621 = vmul.f32 %v1173, %v1555
    %v1622 = vmul.f32 %v1174, %v1556
    %v1623 = vmul.f32 %v1175, %v1555
    %v1624 = vmul.f32 %v1176, %v1556
    %v1625 = vmul.f32 %v1177, %v1557
    %v1626 = vmul.f32 %v1178, %v1558
    %v1627 = vmul.f32 %v1179, %v1557
    %v1628 = vmul.f32 %v1180, %v1558
    %v1629 = vmul.f32 %v1181, %v1557
    %v1630 = vmul.f32 %v1182, %v1558
    %v1631 = vmul.f32 %v1183, %v1557
    %v1632 = vmul.f32 %v1184, %v1558
    %v1633 = vmul.f32 %v1185, %v1557
    %v1634 = vmul.f32 %v1186, %v1558
    %v1635 = vmul.f32 %v1187, %v1557
    %v1636 = vmul.f32 %v1188, %v1558
    %v1637 = vmul.f32 %v1189, %v1557
    %v1638 = vmul.f32 %v1190, %v1558
    %v1639 = vmul.f32 %v1191, %v1557
    %v1640 = vmul.f32 %v1192, %v1558
    %v1641 = vmul.f32 %v1193, %v1557
    %v1642 = vmul.f32 %v1194, %v1558
    %v1643 = vmul.f32 %v1195, %v1557
    %v1644 = vmul.f32 %v1196, %v1558
    %v1645 = vmul.f32 %v1197, %v1557
    %v1646 = vmul.f32 %v1198, %v1558
    %v1647 = vmul.f32 %v1199, %v1557
    %v1648 = vmul.f32 %v1200, %v1558
    %v1649 = vmul.f32 %v1201, %v1557
    %v1650 = vmul.f32 %v1202, %v1558
    %v1651 = vmul.f32 %v1203, %v1557
    %v1652 = vmul.f32 %v1204, %v1558
    %v1653 = vmul.f32 %v1205, %v1557
    %v1654 = vmul.f32 %v1206, %v1558
    %v1655 = vmul.f32 %v1207, %v1557
    %v1656 = vmul.f32 %v1208, %v1558
    %v1657 = vmul.f32 %v1209, %v1559
    %v1658 = vmul.f32 %v1210, %v1560
    %v1659 = vmul.f32 %v1211, %v1559
    %v1660 = vmul.f32 %v1212, %v1560
    %v1661 = vmul.f32 %v1213, %v1559
    %v1662 = vmul.f32 %v1214, %v1560
    %v1663 = vmul.f32 %v1215, %v1559
    %v1664 = vmul.f32 %v1216, %v1560
    %v1665 = vmul.f32 %v1217, %v1559
    %v1666 = vmul.f32 %v1218, %v1560
    %v1667 = vmul.f32 %v1219, %v1559
    %v1668 = vmul.f32 %v1220, %v1560
    %v1669 = vmul.f32 %v1221, %v1559
    %v1670 = vmul.f32 %v1222, %v1560
    %v1671 = vmul.f32 %v1223, %v1559
    %v1672 = vmul.f32 %v1224, %v1560
    %v1673 = vmul.f32 %v1225, %v1559
    %v1674 = vmul.f32 %v1226, %v1560
    %v1675 = vmul.f32 %v1227, %v1559
    %v1676 = vmul.f32 %v1228, %v1560
    %v1677 = vmul.f32 %v1229, %v1559
    %v1678 = vmul.f32 %v1230, %v1560
    %v1679 = vmul.f32 %v1231, %v1559
    %v1680 = vmul.f32 %v1232, %v1560
    %v1681 = vmul.f32 %v1233, %v1559
    %v1682 = vmul.f32 %v1234, %v1560
    %v1683 = vmul.f32 %v1235, %v1559
    %v1684 = vmul.f32 %v1236, %v1560
    %v1685 = vmul.f32 %v1237, %v1559
    %v1686 = vmul.f32 %v1238, %v1560
    %v1687 = vmul.f32 %v1239, %v1559
    %v1688 = vmul.f32 %v1240, %v1560
    %v1689 = vld [vmem:[%s3] sm:$0xff]
    %v1690 = vld [vmem:[%s3 + $0x8] sm:$0xff]
    %v1691 = vld [vmem:[%s3 + $0x10] sm:$0xff]
    %v1692 = vld [vmem:[%s3 + $0x18] sm:$0xff]
    %v1693 = vld [vmem:[%s3 + $0x20] sm:$0xff]
    %v1694 = vld [vmem:[%s3 + $0x28] sm:$0xff]
    %v1695 = vld [vmem:[%s3 + $0x30] sm:$0xff]
    %v1696 = vld [vmem:[%s3 + $0x38] sm:$0xff]
    %v1697 = vld [vmem:[%s3 + $0x40] sm:$0xff]
    %v1698 = vld [vmem:[%s3 + $0x48] sm:$0xff]
    %v1699 = vld [vmem:[%s3 + $0x50] sm:$0xff]
    %v1700 = vld [vmem:[%s3 + $0x58] sm:$0xff]
    %v1701 = vld [vmem:[%s3 + $0x60] sm:$0xff]
    %v1702 = vld [vmem:[%s3 + $0x68] sm:$0xff]
    %v1703 = vld [vmem:[%s3 + $0x70] sm:$0xff]
    %v1704 = vld [vmem:[%s3 + $0x78] sm:$0xff]
    %1706 = vset.pattern.permute.xlu0 0
    %1707 = vperm.xlu0 %1706, %v1689
    %v1708 = vpop.permute.xlu0 %1707
    %1711 = vset.pattern.permute.xlu0 0
    %1712 = vperm.xlu0 %1711, %v1690
    %v1713 = vpop.permute.xlu0 %1712
    %1716 = vset.pattern.permute.xlu0 0
    %1717 = vperm.xlu0 %1716, %v1691
    %v1718 = vpop.permute.xlu0 %1717
    %1721 = vset.pattern.permute.xlu0 0
    %1722 = vperm.xlu0 %1721, %v1692
    %v1723 = vpop.permute.xlu0 %1722
    %1726 = vset.pattern.permute.xlu0 0
    %1727 = vperm.xlu0 %1726, %v1693
    %v1728 = vpop.permute.xlu0 %1727
    %1731 = vset.pattern.permute.xlu0 0
    %1732 = vperm.xlu0 %1731, %v1694
    %v1733 = vpop.permute.xlu0 %1732
    %1736 = vset.pattern.permute.xlu0 0
    %1737 = vperm.xlu0 %1736, %v1695
    %v1738 = vpop.permute.xlu0 %1737
    %1741 = vset.pattern.permute.xlu0 0
    %1742 = vperm.xlu0 %1741, %v1696
    %v1743 = vpop.permute.xlu0 %1742
    %1746 = vset.pattern.permute.xlu0 0
    %1747 = vperm.xlu0 %1746, %v1697
    %v1748 = vpop.permute.xlu0 %1747
    %1751 = vset.pattern.permute.xlu0 0
    %1752 = vperm.xlu0 %1751, %v1698
    %v1753 = vpop.permute.xlu0 %1752
    %1756 = vset.pattern.permute.xlu0 0
    %1757 = vperm.xlu0 %1756, %v1699
    %v1758 = vpop.permute.xlu0 %1757
    %1761 = vset.pattern.permute.xlu0 0
    %1762 = vperm.xlu0 %1761, %v1700
    %v1763 = vpop.permute.xlu0 %1762
    %1766 = vset.pattern.permute.xlu0 0
    %1767 = vperm.xlu0 %1766, %v1701
    %v1768 = vpop.permute.xlu0 %1767
    %1771 = vset.pattern.permute.xlu0 0
    %1772 = vperm.xlu0 %1771, %v1702
    %v1773 = vpop.permute.xlu0 %1772
    %1776 = vset.pattern.permute.xlu0 0
    %1777 = vperm.xlu0 %1776, %v1703
    %v1778 = vpop.permute.xlu0 %1777
    %1781 = vset.pattern.permute.xlu0 0
    %1782 = vperm.xlu0 %1781, %v1704
    %v1783 = vpop.permute.xlu0 %1782
    %v1785 = vmul.f32 %v1561, %v1708
    %v1786 = vmul.f32 %v1562, %v1708
    %v1787 = vmul.f32 %v1563, %v1713
    %v1788 = vmul.f32 %v1564, %v1713
    %v1789 = vmul.f32 %v1565, %v1718
    %v1790 = vmul.f32 %v1566, %v1718
    %v1791 = vmul.f32 %v1567, %v1723
    %v1792 = vmul.f32 %v1568, %v1723
    %v1793 = vmul.f32 %v1569, %v1728
    %v1794 = vmul.f32 %v1570, %v1728
    %v1795 = vmul.f32 %v1571, %v1733
    %v1796 = vmul.f32 %v1572, %v1733
    %v1797 = vmul.f32 %v1573, %v1738
    %v1798 = vmul.f32 %v1574, %v1738
    %v1799 = vmul.f32 %v1575, %v1743
    %v1800 = vmul.f32 %v1576, %v1743
    %v1801 = vmul.f32 %v1577, %v1748
    %v1802 = vmul.f32 %v1578, %v1748
    %v1803 = vmul.f32 %v1579, %v1753
    %v1804 = vmul.f32 %v1580, %v1753
    %v1805 = vmul.f32 %v1581, %v1758
    %v1806 = vmul.f32 %v1582, %v1758
    %v1807 = vmul.f32 %v1583, %v1763
    %v1808 = vmul.f32 %v1584, %v1763
    %v1809 = vmul.f32 %v1585, %v1768
    %v1810 = vmul.f32 %v1586, %v1768
    %v1811 = vmul.f32 %v1587, %v1773
    %v1812 = vmul.f32 %v1588, %v1773
    %v1813 = vmul.f32 %v1589, %v1778
    %v1814 = vmul.f32 %v1590, %v1778
    %v1815 = vmul.f32 %v1591, %v1783
    %v1816 = vmul.f32 %v1592, %v1783
    %v1817 = vmul.f32 %v1593, %v1708
    %v1818 = vmul.f32 %v1594, %v1708
    %v1819 = vmul.f32 %v1595, %v1713
    %v1820 = vmul.f32 %v1596, %v1713
    %v1821 = vmul.f32 %v1597, %v1718
    %v1822 = vmul.f32 %v1598, %v1718
    %v1823 = vmul.f32 %v1599, %v1723
    %v1824 = vmul.f32 %v1600, %v1723
    %v1825 = vmul.f32 %v1601, %v1728
    %v1826 = vmul.f32 %v1602, %v1728
    %v1827 = vmul.f32 %v1603, %v1733
    %v1828 = vmul.f32 %v1604, %v1733
    %v1829 = vmul.f32 %v1605, %v1738
    %v1830 = vmul.f32 %v1606, %v1738
    %v1831 = vmul.f32 %v1607, %v1743
    %v1832 = vmul.f32 %v1608, %v1743
    %v1833 = vmul.f32 %v1609, %v1748
    %v1834 = vmul.f32 %v1610, %v1748
    %v1835 = vmul.f32 %v1611, %v1753
    %v1836 = vmul.f32 %v1612, %v1753
    %v1837 = vmul.f32 %v1613, %v1758
    %v1838 = vmul.f32 %v1614, %v1758
    %v1839 = vmul.f32 %v1615, %v1763
    %v1840 = vmul.f32 %v1616, %v1763
    %v1841 = vmul.f32 %v1617, %v1768
    %v1842 = vmul.f32 %v1618, %v1768
    %v1843 = vmul.f32 %v1619, %v1773
    %v1844 = vmul.f32 %v1620, %v1773
    %v1845 = vmul.f32 %v1621, %v1778
    %v1846 = vmul.f32 %v1622, %v1778
    %v1847 = vmul.f32 %v1623, %v1783
    %v1848 = vmul.f32 %v1624, %v1783
    %v1849 = vmul.f32 %v1625, %v1708
    %v1850 = vmul.f32 %v1626, %v1708
    %v1851 = vmul.f32 %v1627, %v1713
    %v1852 = vmul.f32 %v1628, %v1713
    %v1853 = vmul.f32 %v1629, %v1718
    %v1854 = vmul.f32 %v1630, %v1718
    %v1855 = vmul.f32 %v1631, %v1723
    %v1856 = vmul.f32 %v1632, %v1723
    %v1857 = vmul.f32 %v1633, %v1728
    %v1858 = vmul.f32 %v1634, %v1728
    %v1859 = vmul.f32 %v1635, %v1733
    %v1860 = vmul.f32 %v1636, %v1733
    %v1861 = vmul.f32 %v1637, %v1738
    %v1862 = vmul.f32 %v1638, %v1738
    %v1863 = vmul.f32 %v1639, %v1743
    %v1864 = vmul.f32 %v1640, %v1743
    %v1865 = vmul.f32 %v1641, %v1748
    %v1866 = vmul.f32 %v1642, %v1748
    %v1867 = vmul.f32 %v1643, %v1753
    %v1868 = vmul.f32 %v1644, %v1753
    %v1869 = vmul.f32 %v1645, %v1758
    %v1870 = vmul.f32 %v1646, %v1758
    %v1871 = vmul.f32 %v1647, %v1763
    %v1872 = vmul.f32 %v1648, %v1763
    %v1873 = vmul.f32 %v1649, %v1768
    %v1874 = vmul.f32 %v1650, %v1768
    %v1875 = vmul.f32 %v1651, %v1773
    %v1876 = vmul.f32 %v1652, %v1773
    %v1877 = vmul.f32 %v1653, %v1778
    %v1878 = vmul.f32 %v1654, %v1778
    %v1879 = vmul.f32 %v1655, %v1783
    %v1880 = vmul.f32 %v1656, %v1783
    %v1881 = vmul.f32 %v1657, %v1708
    %v1882 = vmul.f32 %v1658, %v1708
    %v1883 = vmul.f32 %v1659, %v1713
    %v1884 = vmul.f32 %v1660, %v1713
    %v1885 = vmul.f32 %v1661, %v1718
    %v1886 = vmul.f32 %v1662, %v1718
    %v1887 = vmul.f32 %v1663, %v1723
    %v1888 = vmul.f32 %v1664, %v1723
    %v1889 = vmul.f32 %v1665, %v1728
    %v1890 = vmul.f32 %v1666, %v1728
    %v1891 = vmul.f32 %v1667, %v1733
    %v1892 = vmul.f32 %v1668, %v1733
    %v1893 = vmul.f32 %v1669, %v1738
    %v1894 = vmul.f32 %v1670, %v1738
    %v1895 = vmul.f32 %v1671, %v1743
    %v1896 = vmul.f32 %v1672, %v1743
    %v1897 = vmul.f32 %v1673, %v1748
    %v1898 = vmul.f32 %v1674, %v1748
    %v1899 = vmul.f32 %v1675, %v1753
    %v1900 = vmul.f32 %v1676, %v1753
    %v1901 = vmul.f32 %v1677, %v1758
    %v1902 = vmul.f32 %v1678, %v1758
    %v1903 = vmul.f32 %v1679, %v1763
    %v1904 = vmul.f32 %v1680, %v1763
    %v1905 = vmul.f32 %v1681, %v1768
    %v1906 = vmul.f32 %v1682, %v1768
    %v1907 = vmul.f32 %v1683, %v1773
    %v1908 = vmul.f32 %v1684, %v1773
    %v1909 = vmul.f32 %v1685, %v1778
    %v1910 = vmul.f32 %v1686, %v1778
    %v1911 = vmul.f32 %v1687, %v1783
    %v1912 = vmul.f32 %v1688, %v1783
    %v1913 = vld [vmem:[%s4] sm:$0xff]
    %v1914 = vld [vmem:[%s4 + $0x8] sm:$0xff]
    %v1915 = vld [vmem:[%s4 + $0x10] sm:$0xff]
    %v1916 = vld [vmem:[%s4 + $0x18] sm:$0xff]
    %v1917 = vld [vmem:[%s4 + $0x20] sm:$0xff]
    %v1918 = vld [vmem:[%s4 + $0x28] sm:$0xff]
    %v1919 = vld [vmem:[%s4 + $0x30] sm:$0xff]
    %v1920 = vld [vmem:[%s4 + $0x38] sm:$0xff]
    %v1921 = vld [vmem:[%s4 + $0x40] sm:$0xff]
    %v1922 = vld [vmem:[%s4 + $0x48] sm:$0xff]
    %v1923 = vld [vmem:[%s4 + $0x50] sm:$0xff]
    %v1924 = vld [vmem:[%s4 + $0x58] sm:$0xff]
    %v1925 = vld [vmem:[%s4 + $0x60] sm:$0xff]
    %v1926 = vld [vmem:[%s4 + $0x68] sm:$0xff]
    %v1927 = vld [vmem:[%s4 + $0x70] sm:$0xff]
    %v1928 = vld [vmem:[%s4 + $0x78] sm:$0xff]
    %1930 = vset.pattern.permute.xlu0 0
    %1931 = vperm.xlu0 %1930, %v1913
    %v1932 = vpop.permute.xlu0 %1931
    %1935 = vset.pattern.permute.xlu0 0
    %1936 = vperm.xlu0 %1935, %v1914
    %v1937 = vpop.permute.xlu0 %1936
    %1940 = vset.pattern.permute.xlu0 0
    %1941 = vperm.xlu0 %1940, %v1915
    %v1942 = vpop.permute.xlu0 %1941
    %1945 = vset.pattern.permute.xlu0 0
    %1946 = vperm.xlu0 %1945, %v1916
    %v1947 = vpop.permute.xlu0 %1946
    %1950 = vset.pattern.permute.xlu0 0
    %1951 = vperm.xlu0 %1950, %v1917
    %v1952 = vpop.permute.xlu0 %1951
    %1955 = vset.pattern.permute.xlu0 0
    %1956 = vperm.xlu0 %1955, %v1918
    %v1957 = vpop.permute.xlu0 %1956
    %1960 = vset.pattern.permute.xlu0 0
    %1961 = vperm.xlu0 %1960, %v1919
    %v1962 = vpop.permute.xlu0 %1961
    %1965 = vset.pattern.permute.xlu0 0
    %1966 = vperm.xlu0 %1965, %v1920
    %v1967 = vpop.permute.xlu0 %1966
    %1970 = vset.pattern.permute.xlu0 0
    %1971 = vperm.xlu0 %1970, %v1921
    %v1972 = vpop.permute.xlu0 %1971
    %1975 = vset.pattern.permute.xlu0 0
    %1976 = vperm.xlu0 %1975, %v1922
    %v1977 = vpop.permute.xlu0 %1976
    %1980 = vset.pattern.permute.xlu0 0
    %1981 = vperm.xlu0 %1980, %v1923
    %v1982 = vpop.permute.xlu0 %1981
    %1985 = vset.pattern.permute.xlu0 0
    %1986 = vperm.xlu0 %1985, %v1924
    %v1987 = vpop.permute.xlu0 %1986
    %1990 = vset.pattern.permute.xlu0 0
    %1991 = vperm.xlu0 %1990, %v1925
    %v1992 = vpop.permute.xlu0 %1991
    %1995 = vset.pattern.permute.xlu0 0
    %1996 = vperm.xlu0 %1995, %v1926
    %v1997 = vpop.permute.xlu0 %1996
    %2000 = vset.pattern.permute.xlu0 0
    %2001 = vperm.xlu0 %2000, %v1927
    %v2002 = vpop.permute.xlu0 %2001
    %2005 = vset.pattern.permute.xlu0 0
    %2006 = vperm.xlu0 %2005, %v1928
    %v2007 = vpop.permute.xlu0 %2006
    %v2009 = vadd.f32 %v1785, %v1932
    %v2010 = vadd.f32 %v1786, %v1932
    %v2011 = vadd.f32 %v1787, %v1937
    %v2012 = vadd.f32 %v1788, %v1937
    %v2013 = vadd.f32 %v1789, %v1942
    %v2014 = vadd.f32 %v1790, %v1942
    %v2015 = vadd.f32 %v1791, %v1947
    %v2016 = vadd.f32 %v1792, %v1947
    %v2017 = vadd.f32 %v1793, %v1952
    %v2018 = vadd.f32 %v1794, %v1952
    %v2019 = vadd.f32 %v1795, %v1957
    %v2020 = vadd.f32 %v1796, %v1957
    %v2021 = vadd.f32 %v1797, %v1962
    %v2022 = vadd.f32 %v1798, %v1962
    %v2023 = vadd.f32 %v1799, %v1967
    %v2024 = vadd.f32 %v1800, %v1967
    %v2025 = vadd.f32 %v1801, %v1972
    %v2026 = vadd.f32 %v1802, %v1972
    %v2027 = vadd.f32 %v1803, %v1977
    %v2028 = vadd.f32 %v1804, %v1977
    %v2029 = vadd.f32 %v1805, %v1982
    %v2030 = vadd.f32 %v1806, %v1982
    %v2031 = vadd.f32 %v1807, %v1987
    %v2032 = vadd.f32 %v1808, %v1987
    %v2033 = vadd.f32 %v1809, %v1992
    %v2034 = vadd.f32 %v1810, %v1992
    %v2035 = vadd.f32 %v1811, %v1997
    %v2036 = vadd.f32 %v1812, %v1997
    %v2037 = vadd.f32 %v1813, %v2002
    %v2038 = vadd.f32 %v1814, %v2002
    %v2039 = vadd.f32 %v1815, %v2007
    %v2040 = vadd.f32 %v1816, %v2007
    %v2041 = vadd.f32 %v1817, %v1932
    %v2042 = vadd.f32 %v1818, %v1932
    %v2043 = vadd.f32 %v1819, %v1937
    %v2044 = vadd.f32 %v1820, %v1937
    %v2045 = vadd.f32 %v1821, %v1942
    %v2046 = vadd.f32 %v1822, %v1942
    %v2047 = vadd.f32 %v1823, %v1947
    %v2048 = vadd.f32 %v1824, %v1947
    %v2049 = vadd.f32 %v1825, %v1952
    %v2050 = vadd.f32 %v1826, %v1952
    %v2051 = vadd.f32 %v1827, %v1957
    %v2052 = vadd.f32 %v1828, %v1957
    %v2053 = vadd.f32 %v1829, %v1962
    %v2054 = vadd.f32 %v1830, %v1962
    %v2055 = vadd.f32 %v1831, %v1967
    %v2056 = vadd.f32 %v1832, %v1967
    %v2057 = vadd.f32 %v1833, %v1972
    %v2058 = vadd.f32 %v1834, %v1972
    %v2059 = vadd.f32 %v1835, %v1977
    %v2060 = vadd.f32 %v1836, %v1977
    %v2061 = vadd.f32 %v1837, %v1982
    %v2062 = vadd.f32 %v1838, %v1982
    %v2063 = vadd.f32 %v1839, %v1987
    %v2064 = vadd.f32 %v1840, %v1987
    %v2065 = vadd.f32 %v1841, %v1992
    %v2066 = vadd.f32 %v1842, %v1992
    %v2067 = vadd.f32 %v1843, %v1997
    %v2068 = vadd.f32 %v1844, %v1997
    %v2069 = vadd.f32 %v1845, %v2002
    %v2070 = vadd.f32 %v1846, %v2002
    %v2071 = vadd.f32 %v1847, %v2007
    %v2072 = vadd.f32 %v1848, %v2007
    %v2073 = vadd.f32 %v1849, %v1932
    %v2074 = vadd.f32 %v1850, %v1932
    %v2075 = vadd.f32 %v1851, %v1937
    %v2076 = vadd.f32 %v1852, %v1937
    %v2077 = vadd.f32 %v1853, %v1942
    %v2078 = vadd.f32 %v1854, %v1942
    %v2079 = vadd.f32 %v1855, %v1947
    %v2080 = vadd.f32 %v1856, %v1947
    %v2081 = vadd.f32 %v1857, %v1952
    %v2082 = vadd.f32 %v1858, %v1952
    %v2083 = vadd.f32 %v1859, %v1957
    %v2084 = vadd.f32 %v1860, %v1957
    %v2085 = vadd.f32 %v1861, %v1962
    %v2086 = vadd.f32 %v1862, %v1962
    %v2087 = vadd.f32 %v1863, %v1967
    %v2088 = vadd.f32 %v1864, %v1967
    %v2089 = vadd.f32 %v1865, %v1972
    %v2090 = vadd.f32 %v1866, %v1972
    %v2091 = vadd.f32 %v1867, %v1977
    %v2092 = vadd.f32 %v1868, %v1977
    %v2093 = vadd.f32 %v1869, %v1982
    %v2094 = vadd.f32 %v1870, %v1982
    %v2095 = vadd.f32 %v1871, %v1987
    %v2096 = vadd.f32 %v1872, %v1987
    %v2097 = vadd.f32 %v1873, %v1992
    %v2098 = vadd.f32 %v1874, %v1992
    %v2099 = vadd.f32 %v1875, %v1997
    %v2100 = vadd.f32 %v1876, %v1997
    %v2101 = vadd.f32 %v1877, %v2002
    %v2102 = vadd.f32 %v1878, %v2002
    %v2103 = vadd.f32 %v1879, %v2007
    %v2104 = vadd.f32 %v1880, %v2007
    %v2105 = vadd.f32 %v1881, %v1932
    %v2106 = vadd.f32 %v1882, %v1932
    %v2107 = vadd.f32 %v1883, %v1937
    %v2108 = vadd.f32 %v1884, %v1937
    %v2109 = vadd.f32 %v1885, %v1942
    %v2110 = vadd.f32 %v1886, %v1942
    %v2111 = vadd.f32 %v1887, %v1947
    %v2112 = vadd.f32 %v1888, %v1947
    %v2113 = vadd.f32 %v1889, %v1952
    %v2114 = vadd.f32 %v1890, %v1952
    %v2115 = vadd.f32 %v1891, %v1957
    %v2116 = vadd.f32 %v1892, %v1957
    %v2117 = vadd.f32 %v1893, %v1962
    %v2118 = vadd.f32 %v1894, %v1962
    %v2119 = vadd.f32 %v1895, %v1967
    %v2120 = vadd.f32 %v1896, %v1967
    %v2121 = vadd.f32 %v1897, %v1972
    %v2122 = vadd.f32 %v1898, %v1972
    %v2123 = vadd.f32 %v1899, %v1977
    %v2124 = vadd.f32 %v1900, %v1977
    %v2125 = vadd.f32 %v1901, %v1982
    %v2126 = vadd.f32 %v1902, %v1982
    %v2127 = vadd.f32 %v1903, %v1987
    %v2128 = vadd.f32 %v1904, %v1987
    %v2129 = vadd.f32 %v1905, %v1992
    %v2130 = vadd.f32 %v1906, %v1992
    %v2131 = vadd.f32 %v1907, %v1997
    %v2132 = vadd.f32 %v1908, %v1997
    %v2133 = vadd.f32 %v1909, %v2002
    %v2134 = vadd.f32 %v1910, %v2002
    %v2135 = vadd.f32 %v1911, %v2007
    %v2136 = vadd.f32 %v1912, %v2007
    %v2137 = vld [vmem:[#allocation5] sm:$0xff]
    %v2138 = vld [vmem:[#allocation5 + $0x8] sm:$0xff]
    %v2139 = vld [vmem:[#allocation5 + $0x10] sm:$0xff]
    %v2140 = vld [vmem:[#allocation5 + $0x18] sm:$0xff]
    %v2141 = vld [vmem:[#allocation5 + $0x20] sm:$0xff]
    %v2142 = vld [vmem:[#allocation5 + $0x28] sm:$0xff]
    %v2143 = vld [vmem:[#allocation5 + $0x30] sm:$0xff]
    %v2144 = vld [vmem:[#allocation5 + $0x38] sm:$0xff]
    %v2145 = vld [vmem:[#allocation5 + $0x40] sm:$0xff]
    %v2146 = vld [vmem:[#allocation5 + $0x48] sm:$0xff]
    %v2147 = vld [vmem:[#allocation5 + $0x50] sm:$0xff]
    %v2148 = vld [vmem:[#allocation5 + $0x58] sm:$0xff]
    %v2149 = vld [vmem:[#allocation5 + $0x60] sm:$0xff]
    %v2150 = vld [vmem:[#allocation5 + $0x68] sm:$0xff]
    %v2151 = vld [vmem:[#allocation5 + $0x70] sm:$0xff]
    %v2152 = vld [vmem:[#allocation5 + $0x78] sm:$0xff]
    %v2153 = vld [vmem:[#allocation5 + $0x80] sm:$0xff]
    %v2154 = vld [vmem:[#allocation5 + $0x88] sm:$0xff]
    %v2155 = vld [vmem:[#allocation5 + $0x90] sm:$0xff]
    %v2156 = vld [vmem:[#allocation5 + $0x98] sm:$0xff]
    %v2157 = vld [vmem:[#allocation5 + $0xa0] sm:$0xff]
    %v2158 = vld [vmem:[#allocation5 + $0xa8] sm:$0xff]
    %v2159 = vld [vmem:[#allocation5 + $0xb0] sm:$0xff]
    %v2160 = vld [vmem:[#allocation5 + $0xb8] sm:$0xff]
    %v2161 = vld [vmem:[#allocation5 + $0xc0] sm:$0xff]
    %v2162 = vld [vmem:[#allocation5 + $0xc8] sm:$0xff]
    %v2163 = vld [vmem:[#allocation5 + $0xd0] sm:$0xff]
    %v2164 = vld [vmem:[#allocation5 + $0xd8] sm:$0xff]
    %v2165 = vld [vmem:[#allocation5 + $0xe0] sm:$0xff]
    %v2166 = vld [vmem:[#allocation5 + $0xe8] sm:$0xff]
    %v2167 = vld [vmem:[#allocation5 + $0xf0] sm:$0xff]
    %v2168 = vld [vmem:[#allocation5 + $0xf8] sm:$0xff]
    %v2169 = vld [vmem:[#allocation5 + $0x100] sm:$0xff]
    %v2170 = vld [vmem:[#allocation5 + $0x108] sm:$0xff]
    %v2171 = vld [vmem:[#allocation5 + $0x110] sm:$0xff]
    %v2172 = vld [vmem:[#allocation5 + $0x118] sm:$0xff]
    %v2173 = vld [vmem:[#allocation5 + $0x120] sm:$0xff]
    %v2174 = vld [vmem:[#allocation5 + $0x128] sm:$0xff]
    %v2175 = vld [vmem:[#allocation5 + $0x130] sm:$0xff]
    %v2176 = vld [vmem:[#allocation5 + $0x138] sm:$0xff]
    %v2177 = vld [vmem:[#allocation5 + $0x140] sm:$0xff]
    %v2178 = vld [vmem:[#allocation5 + $0x148] sm:$0xff]
    %v2179 = vld [vmem:[#allocation5 + $0x150] sm:$0xff]
    %v2180 = vld [vmem:[#allocation5 + $0x158] sm:$0xff]
    %v2181 = vld [vmem:[#allocation5 + $0x160] sm:$0xff]
    %v2182 = vld [vmem:[#allocation5 + $0x168] sm:$0xff]
    %v2183 = vld [vmem:[#allocation5 + $0x170] sm:$0xff]
    %v2184 = vld [vmem:[#allocation5 + $0x178] sm:$0xff]
    %v2185 = vld [vmem:[#allocation5 + $0x180] sm:$0xff]
    %v2186 = vld [vmem:[#allocation5 + $0x188] sm:$0xff]
    %v2187 = vld [vmem:[#allocation5 + $0x190] sm:$0xff]
    %v2188 = vld [vmem:[#allocation5 + $0x198] sm:$0xff]
    %v2189 = vld [vmem:[#allocation5 + $0x1a0] sm:$0xff]
    %v2190 = vld [vmem:[#allocation5 + $0x1a8] sm:$0xff]
    %v2191 = vld [vmem:[#allocation5 + $0x1b0] sm:$0xff]
    %v2192 = vld [vmem:[#allocation5 + $0x1b8] sm:$0xff]
    %v2193 = vld [vmem:[#allocation5 + $0x1c0] sm:$0xff]
    %v2194 = vld [vmem:[#allocation5 + $0x1c8] sm:$0xff]
    %v2195 = vld [vmem:[#allocation5 + $0x1d0] sm:$0xff]
    %v2196 = vld [vmem:[#allocation5 + $0x1d8] sm:$0xff]
    %v2197 = vld [vmem:[#allocation5 + $0x1e0] sm:$0xff]
    %v2198 = vld [vmem:[#allocation5 + $0x1e8] sm:$0xff]
    %v2199 = vld [vmem:[#allocation5 + $0x1f0] sm:$0xff]
    %v2200 = vld [vmem:[#allocation5 + $0x1f8] sm:$0xff]
    %v2201 = vld [vmem:[#allocation5 + $0x200] sm:$0xff]
    %v2202 = vld [vmem:[#allocation5 + $0x208] sm:$0xff]
    %v2203 = vld [vmem:[#allocation5 + $0x210] sm:$0xff]
    %v2204 = vld [vmem:[#allocation5 + $0x218] sm:$0xff]
    %v2205 = vld [vmem:[#allocation5 + $0x220] sm:$0xff]
    %v2206 = vld [vmem:[#allocation5 + $0x228] sm:$0xff]
    %v2207 = vld [vmem:[#allocation5 + $0x230] sm:$0xff]
    %v2208 = vld [vmem:[#allocation5 + $0x238] sm:$0xff]
    %v2209 = vld [vmem:[#allocation5 + $0x240] sm:$0xff]
    %v2210 = vld [vmem:[#allocation5 + $0x248] sm:$0xff]
    %v2211 = vld [vmem:[#allocation5 + $0x250] sm:$0xff]
    %v2212 = vld [vmem:[#allocation5 + $0x258] sm:$0xff]
    %v2213 = vld [vmem:[#allocation5 + $0x260] sm:$0xff]
    %v2214 = vld [vmem:[#allocation5 + $0x268] sm:$0xff]
    %v2215 = vld [vmem:[#allocation5 + $0x270] sm:$0xff]
    %v2216 = vld [vmem:[#allocation5 + $0x278] sm:$0xff]
    %v2217 = vld [vmem:[#allocation5 + $0x280] sm:$0xff]
    %v2218 = vld [vmem:[#allocation5 + $0x288] sm:$0xff]
    %v2219 = vld [vmem:[#allocation5 + $0x290] sm:$0xff]
    %v2220 = vld [vmem:[#allocation5 + $0x298] sm:$0xff]
    %v2221 = vld [vmem:[#allocation5 + $0x2a0] sm:$0xff]
    %v2222 = vld [vmem:[#allocation5 + $0x2a8] sm:$0xff]
    %v2223 = vld [vmem:[#allocation5 + $0x2b0] sm:$0xff]
    %v2224 = vld [vmem:[#allocation5 + $0x2b8] sm:$0xff]
    %v2225 = vld [vmem:[#allocation5 + $0x2c0] sm:$0xff]
    %v2226 = vld [vmem:[#allocation5 + $0x2c8] sm:$0xff]
    %v2227 = vld [vmem:[#allocation5 + $0x2d0] sm:$0xff]
    %v2228 = vld [vmem:[#allocation5 + $0x2d8] sm:$0xff]
    %v2229 = vld [vmem:[#allocation5 + $0x2e0] sm:$0xff]
    %v2230 = vld [vmem:[#allocation5 + $0x2e8] sm:$0xff]
    %v2231 = vld [vmem:[#allocation5 + $0x2f0] sm:$0xff]
    %v2232 = vld [vmem:[#allocation5 + $0x2f8] sm:$0xff]
    %v2233 = vld [vmem:[#allocation5 + $0x300] sm:$0xff]
    %v2234 = vld [vmem:[#allocation5 + $0x308] sm:$0xff]
    %v2235 = vld [vmem:[#allocation5 + $0x310] sm:$0xff]
    %v2236 = vld [vmem:[#allocation5 + $0x318] sm:$0xff]
    %v2237 = vld [vmem:[#allocation5 + $0x320] sm:$0xff]
    %v2238 = vld [vmem:[#allocation5 + $0x328] sm:$0xff]
    %v2239 = vld [vmem:[#allocation5 + $0x330] sm:$0xff]
    %v2240 = vld [vmem:[#allocation5 + $0x338] sm:$0xff]
    %v2241 = vld [vmem:[#allocation5 + $0x340] sm:$0xff]
    %v2242 = vld [vmem:[#allocation5 + $0x348] sm:$0xff]
    %v2243 = vld [vmem:[#allocation5 + $0x350] sm:$0xff]
    %v2244 = vld [vmem:[#allocation5 + $0x358] sm:$0xff]
    %v2245 = vld [vmem:[#allocation5 + $0x360] sm:$0xff]
    %v2246 = vld [vmem:[#allocation5 + $0x368] sm:$0xff]
    %v2247 = vld [vmem:[#allocation5 + $0x370] sm:$0xff]
    %v2248 = vld [vmem:[#allocation5 + $0x378] sm:$0xff]
    %v2249 = vld [vmem:[#allocation5 + $0x380] sm:$0xff]
    %v2250 = vld [vmem:[#allocation5 + $0x388] sm:$0xff]
    %v2251 = vld [vmem:[#allocation5 + $0x390] sm:$0xff]
    %v2252 = vld [vmem:[#allocation5 + $0x398] sm:$0xff]
    %v2253 = vld [vmem:[#allocation5 + $0x3a0] sm:$0xff]
    %v2254 = vld [vmem:[#allocation5 + $0x3a8] sm:$0xff]
    %v2255 = vld [vmem:[#allocation5 + $0x3b0] sm:$0xff]
    %v2256 = vld [vmem:[#allocation5 + $0x3b8] sm:$0xff]
    %v2257 = vld [vmem:[#allocation5 + $0x3c0] sm:$0xff]
    %v2258 = vld [vmem:[#allocation5 + $0x3c8] sm:$0xff]
    %v2259 = vld [vmem:[#allocation5 + $0x3d0] sm:$0xff]
    %v2260 = vld [vmem:[#allocation5 + $0x3d8] sm:$0xff]
    %v2261 = vld [vmem:[#allocation5 + $0x3e0] sm:$0xff]
    %v2262 = vld [vmem:[#allocation5 + $0x3e8] sm:$0xff]
    %v2263 = vld [vmem:[#allocation5 + $0x3f0] sm:$0xff]
    %v2264 = vld [vmem:[#allocation5 + $0x3f8] sm:$0xff]
    %v2265 = vld [vmem:[#allocation5 + $0x400] sm:$0xff]
    %v2266 = vld [vmem:[#allocation5 + $0x408] sm:$0xff]
    %v2267 = vld [vmem:[#allocation5 + $0x410] sm:$0xff]
    %v2268 = vld [vmem:[#allocation5 + $0x418] sm:$0xff]
    %v2269 = vld [vmem:[#allocation5 + $0x420] sm:$0xff]
    %v2270 = vld [vmem:[#allocation5 + $0x428] sm:$0xff]
    %v2271 = vld [vmem:[#allocation5 + $0x430] sm:$0xff]
    %v2272 = vld [vmem:[#allocation5 + $0x438] sm:$0xff]
    %v2273 = vld [vmem:[#allocation5 + $0x440] sm:$0xff]
    %v2274 = vld [vmem:[#allocation5 + $0x448] sm:$0xff]
    %v2275 = vld [vmem:[#allocation5 + $0x450] sm:$0xff]
    %v2276 = vld [vmem:[#allocation5 + $0x458] sm:$0xff]
    %v2277 = vld [vmem:[#allocation5 + $0x460] sm:$0xff]
    %v2278 = vld [vmem:[#allocation5 + $0x468] sm:$0xff]
    %v2279 = vld [vmem:[#allocation5 + $0x470] sm:$0xff]
    %v2280 = vld [vmem:[#allocation5 + $0x478] sm:$0xff]
    %v2281 = vld [vmem:[#allocation5 + $0x480] sm:$0xff]
    %v2282 = vld [vmem:[#allocation5 + $0x488] sm:$0xff]
    %v2283 = vld [vmem:[#allocation5 + $0x490] sm:$0xff]
    %v2284 = vld [vmem:[#allocation5 + $0x498] sm:$0xff]
    %v2285 = vld [vmem:[#allocation5 + $0x4a0] sm:$0xff]
    %v2286 = vld [vmem:[#allocation5 + $0x4a8] sm:$0xff]
    %v2287 = vld [vmem:[#allocation5 + $0x4b0] sm:$0xff]
    %v2288 = vld [vmem:[#allocation5 + $0x4b8] sm:$0xff]
    %v2289 = vld [vmem:[#allocation5 + $0x4c0] sm:$0xff]
    %v2290 = vld [vmem:[#allocation5 + $0x4c8] sm:$0xff]
    %v2291 = vld [vmem:[#allocation5 + $0x4d0] sm:$0xff]
    %v2292 = vld [vmem:[#allocation5 + $0x4d8] sm:$0xff]
    %v2293 = vld [vmem:[#allocation5 + $0x4e0] sm:$0xff]
    %v2294 = vld [vmem:[#allocation5 + $0x4e8] sm:$0xff]
    %v2295 = vld [vmem:[#allocation5 + $0x4f0] sm:$0xff]
    %v2296 = vld [vmem:[#allocation5 + $0x4f8] sm:$0xff]
    %v2297 = vld [vmem:[#allocation5 + $0x500] sm:$0xff]
    %v2298 = vld [vmem:[#allocation5 + $0x508] sm:$0xff]
    %v2299 = vld [vmem:[#allocation5 + $0x510] sm:$0xff]
    %v2300 = vld [vmem:[#allocation5 + $0x518] sm:$0xff]
    %v2301 = vld [vmem:[#allocation5 + $0x520] sm:$0xff]
    %v2302 = vld [vmem:[#allocation5 + $0x528] sm:$0xff]
    %v2303 = vld [vmem:[#allocation5 + $0x530] sm:$0xff]
    %v2304 = vld [vmem:[#allocation5 + $0x538] sm:$0xff]
    %v2305 = vld [vmem:[#allocation5 + $0x540] sm:$0xff]
    %v2306 = vld [vmem:[#allocation5 + $0x548] sm:$0xff]
    %v2307 = vld [vmem:[#allocation5 + $0x550] sm:$0xff]
    %v2308 = vld [vmem:[#allocation5 + $0x558] sm:$0xff]
    %v2309 = vld [vmem:[#allocation5 + $0x560] sm:$0xff]
    %v2310 = vld [vmem:[#allocation5 + $0x568] sm:$0xff]
    %v2311 = vld [vmem:[#allocation5 + $0x570] sm:$0xff]
    %v2312 = vld [vmem:[#allocation5 + $0x578] sm:$0xff]
    %v2313 = vld [vmem:[#allocation5 + $0x580] sm:$0xff]
    %v2314 = vld [vmem:[#allocation5 + $0x588] sm:$0xff]
    %v2315 = vld [vmem:[#allocation5 + $0x590] sm:$0xff]
    %v2316 = vld [vmem:[#allocation5 + $0x598] sm:$0xff]
    %v2317 = vld [vmem:[#allocation5 + $0x5a0] sm:$0xff]
    %v2318 = vld [vmem:[#allocation5 + $0x5a8] sm:$0xff]
    %v2319 = vld [vmem:[#allocation5 + $0x5b0] sm:$0xff]
    %v2320 = vld [vmem:[#allocation5 + $0x5b8] sm:$0xff]
    %v2321 = vld [vmem:[#allocation5 + $0x5c0] sm:$0xff]
    %v2322 = vld [vmem:[#allocation5 + $0x5c8] sm:$0xff]
    %v2323 = vld [vmem:[#allocation5 + $0x5d0] sm:$0xff]
    %v2324 = vld [vmem:[#allocation5 + $0x5d8] sm:$0xff]
    %v2325 = vld [vmem:[#allocation5 + $0x5e0] sm:$0xff]
    %v2326 = vld [vmem:[#allocation5 + $0x5e8] sm:$0xff]
    %v2327 = vld [vmem:[#allocation5 + $0x5f0] sm:$0xff]
    %v2328 = vld [vmem:[#allocation5 + $0x5f8] sm:$0xff]
    %v2329 = vld [vmem:[#allocation5 + $0x600] sm:$0xff]
    %v2330 = vld [vmem:[#allocation5 + $0x608] sm:$0xff]
    %v2331 = vld [vmem:[#allocation5 + $0x610] sm:$0xff]
    %v2332 = vld [vmem:[#allocation5 + $0x618] sm:$0xff]
    %v2333 = vld [vmem:[#allocation5 + $0x620] sm:$0xff]
    %v2334 = vld [vmem:[#allocation5 + $0x628] sm:$0xff]
    %v2335 = vld [vmem:[#allocation5 + $0x630] sm:$0xff]
    %v2336 = vld [vmem:[#allocation5 + $0x638] sm:$0xff]
    %v2337 = vld [vmem:[#allocation5 + $0x640] sm:$0xff]
    %v2338 = vld [vmem:[#allocation5 + $0x648] sm:$0xff]
    %v2339 = vld [vmem:[#allocation5 + $0x650] sm:$0xff]
    %v2340 = vld [vmem:[#allocation5 + $0x658] sm:$0xff]
    %v2341 = vld [vmem:[#allocation5 + $0x660] sm:$0xff]
    %v2342 = vld [vmem:[#allocation5 + $0x668] sm:$0xff]
    %v2343 = vld [vmem:[#allocation5 + $0x670] sm:$0xff]
    %v2344 = vld [vmem:[#allocation5 + $0x678] sm:$0xff]
    %v2345 = vld [vmem:[#allocation5 + $0x680] sm:$0xff]
    %v2346 = vld [vmem:[#allocation5 + $0x688] sm:$0xff]
    %v2347 = vld [vmem:[#allocation5 + $0x690] sm:$0xff]
    %v2348 = vld [vmem:[#allocation5 + $0x698] sm:$0xff]
    %v2349 = vld [vmem:[#allocation5 + $0x6a0] sm:$0xff]
    %v2350 = vld [vmem:[#allocation5 + $0x6a8] sm:$0xff]
    %v2351 = vld [vmem:[#allocation5 + $0x6b0] sm:$0xff]
    %v2352 = vld [vmem:[#allocation5 + $0x6b8] sm:$0xff]
    %v2353 = vld [vmem:[#allocation5 + $0x6c0] sm:$0xff]
    %v2354 = vld [vmem:[#allocation5 + $0x6c8] sm:$0xff]
    %v2355 = vld [vmem:[#allocation5 + $0x6d0] sm:$0xff]
    %v2356 = vld [vmem:[#allocation5 + $0x6d8] sm:$0xff]
    %v2357 = vld [vmem:[#allocation5 + $0x6e0] sm:$0xff]
    %v2358 = vld [vmem:[#allocation5 + $0x6e8] sm:$0xff]
    %v2359 = vld [vmem:[#allocation5 + $0x6f0] sm:$0xff]
    %v2360 = vld [vmem:[#allocation5 + $0x6f8] sm:$0xff]
    %v2361 = vld [vmem:[#allocation5 + $0x700] sm:$0xff]
    %v2362 = vld [vmem:[#allocation5 + $0x708] sm:$0xff]
    %v2363 = vld [vmem:[#allocation5 + $0x710] sm:$0xff]
    %v2364 = vld [vmem:[#allocation5 + $0x718] sm:$0xff]
    %v2365 = vld [vmem:[#allocation5 + $0x720] sm:$0xff]
    %v2366 = vld [vmem:[#allocation5 + $0x728] sm:$0xff]
    %v2367 = vld [vmem:[#allocation5 + $0x730] sm:$0xff]
    %v2368 = vld [vmem:[#allocation5 + $0x738] sm:$0xff]
    %v2369 = vld [vmem:[#allocation5 + $0x740] sm:$0xff]
    %v2370 = vld [vmem:[#allocation5 + $0x748] sm:$0xff]
    %v2371 = vld [vmem:[#allocation5 + $0x750] sm:$0xff]
    %v2372 = vld [vmem:[#allocation5 + $0x758] sm:$0xff]
    %v2373 = vld [vmem:[#allocation5 + $0x760] sm:$0xff]
    %v2374 = vld [vmem:[#allocation5 + $0x768] sm:$0xff]
    %v2375 = vld [vmem:[#allocation5 + $0x770] sm:$0xff]
    %v2376 = vld [vmem:[#allocation5 + $0x778] sm:$0xff]
    %v2377 = vld [vmem:[#allocation5 + $0x780] sm:$0xff]
    %v2378 = vld [vmem:[#allocation5 + $0x788] sm:$0xff]
    %v2379 = vld [vmem:[#allocation5 + $0x790] sm:$0xff]
    %v2380 = vld [vmem:[#allocation5 + $0x798] sm:$0xff]
    %v2381 = vld [vmem:[#allocation5 + $0x7a0] sm:$0xff]
    %v2382 = vld [vmem:[#allocation5 + $0x7a8] sm:$0xff]
    %v2383 = vld [vmem:[#allocation5 + $0x7b0] sm:$0xff]
    %v2384 = vld [vmem:[#allocation5 + $0x7b8] sm:$0xff]
    %v2385 = vld [vmem:[#allocation5 + $0x7c0] sm:$0xff]
    %v2386 = vld [vmem:[#allocation5 + $0x7c8] sm:$0xff]
    %v2387 = vld [vmem:[#allocation5 + $0x7d0] sm:$0xff]
    %v2388 = vld [vmem:[#allocation5 + $0x7d8] sm:$0xff]
    %v2389 = vld [vmem:[#allocation5 + $0x7e0] sm:$0xff]
    %v2390 = vld [vmem:[#allocation5 + $0x7e8] sm:$0xff]
    %v2391 = vld [vmem:[#allocation5 + $0x7f0] sm:$0xff]
    %v2392 = vld [vmem:[#allocation5 + $0x7f8] sm:$0xff]
    %v2393 = vld [vmem:[%s6] sm:$0xff]
    %v2395 = vlaneseq
    %v2396 = vshrl.u32 %v2395, 7
    %v2397 = vsub.s32 0, %v2396
    %v2398 = vrot.slane %v2393, %v2397
    %v2399 = vlaneseq
    %v2400 = vshrl.u32 %v2399, 7
    %v2401 = vsub.s32 1, %v2400
    %v2402 = vrot.slane %v2393, %v2401
    %v2403 = vlaneseq
    %v2404 = vshrl.u32 %v2403, 7
    %v2405 = vsub.s32 2, %v2404
    %v2406 = vrot.slane %v2393, %v2405
    %v2407 = vlaneseq
    %v2408 = vshrl.u32 %v2407, 7
    %v2409 = vsub.s32 3, %v2408
    %v2410 = vrot.slane %v2393, %v2409
    %v2411 = vlaneseq
    %v2412 = vshrl.u32 %v2411, 7
    %v2413 = vsub.s32 4, %v2412
    %v2414 = vrot.slane %v2393, %v2413
    %v2415 = vlaneseq
    %v2416 = vshrl.u32 %v2415, 7
    %v2417 = vsub.s32 5, %v2416
    %v2418 = vrot.slane %v2393, %v2417
    %v2419 = vlaneseq
    %v2420 = vshrl.u32 %v2419, 7
    %v2421 = vsub.s32 6, %v2420
    %v2422 = vrot.slane %v2393, %v2421
    %v2423 = vlaneseq
    %v2424 = vshrl.u32 %v2423, 7
    %v2425 = vsub.s32 7, %v2424
    %v2426 = vrot.slane %v2393, %v2425
    %2435 = vmatprep.subr.mxu0 %v2258
    %2436 = vmatpush1.msra.mxu0 %v2257
    %2437 = vmatprep.subr.mxu0 %v2250
    %2438 = vmatpush1.msra.mxu0 %v2249
    %2439 = vmatprep.subr.mxu0 %v2242
    %2440 = vmatpush1.msra.mxu0 %v2241
    %2441 = vmatprep.subr.mxu0 %v2234
    %2442 = vmatpush1.msra.mxu0 %v2233
    %2443 = vmatprep.subr.mxu0 %v2226
    %2444 = vmatpush1.msra.mxu0 %v2225
    %2445 = vmatprep.subr.mxu0 %v2218
    %2446 = vmatpush1.msra.mxu0 %v2217
    %2447 = vmatprep.subr.mxu0 %v2210
    %2448 = vmatpush1.msra.mxu0 %v2209
    %2449 = vmatprep.subr.mxu0 %v2202
    %2450 = vmatpush1.msra.mxu0 %v2201
    %2451 = vmatprep.subr.mxu0 %v2194
    %2452 = vmatpush1.msra.mxu0 %v2193
    %2453 = vmatprep.subr.mxu0 %v2186
    %2454 = vmatpush1.msra.mxu0 %v2185
    %2455 = vmatprep.subr.mxu0 %v2178
    %2456 = vmatpush1.msra.mxu0 %v2177
    %2457 = vmatprep.subr.mxu0 %v2170
    %2458 = vmatpush1.msra.mxu0 %v2169
    %2459 = vmatprep.subr.mxu0 %v2162
    %2460 = vmatpush1.msra.mxu0 %v2161
    %2461 = vmatprep.subr.mxu0 %v2154
    %2462 = vmatpush1.msra.mxu0 %v2153
    %2463 = vmatprep.subr.mxu0 %v2146
    %2464 = vmatpush1.msra.mxu0 %v2145
    %2465 = vmatprep.subr.mxu0 %v2138
    %2466 = vmatpush1.msra.mxu0 %v2137
    %2467 = vmatprep.subr.mxu0 %v2386
    %2468 = vmatpush2.msra.mxu0 %v2385
    %2469 = vmatprep.subr.mxu0 %v2378
    %2470 = vmatpush2.msra.mxu0 %v2377
    %2471 = vmatprep.subr.mxu0 %v2370
    %2472 = vmatpush2.msra.mxu0 %v2369
    %2473 = vmatprep.subr.mxu0 %v2362
    %2474 = vmatpush2.msra.mxu0 %v2361
    %2475 = vmatprep.subr.mxu0 %v2354
    %2476 = vmatpush2.msra.mxu0 %v2353
    %2477 = vmatprep.subr.mxu0 %v2346
    %2478 = vmatpush2.msra.mxu0 %v2345
    %2479 = vmatprep.subr.mxu0 %v2338
    %2480 = vmatpush2.msra.mxu0 %v2337
    %2481 = vmatprep.subr.mxu0 %v2330
    %2482 = vmatpush2.msra.mxu0 %v2329
    %2483 = vmatprep.subr.mxu0 %v2322
    %2484 = vmatpush2.msra.mxu0 %v2321
    %2485 = vmatprep.subr.mxu0 %v2314
    %2486 = vmatpush2.msra.mxu0 %v2313
    %2487 = vmatprep.subr.mxu0 %v2306
    %2488 = vmatpush2.msra.mxu0 %v2305
    %2489 = vmatprep.subr.mxu0 %v2298
    %2490 = vmatpush2.msra.mxu0 %v2297
    %2491 = vmatprep.subr.mxu0 %v2290
    %2492 = vmatpush2.msra.mxu0 %v2289
    %2493 = vmatprep.subr.mxu0 %v2282
    %2494 = vmatpush2.msra.mxu0 %v2281
    %2495 = vmatprep.subr.mxu0 %v2274
    %2496 = vmatpush2.msra.mxu0 %v2273
    %2497 = vmatprep.subr.mxu0 %v2266
    %2498 = vmatpush2.msra.mxu0 %v2265
    %2499 = vmatprep.mubr.f32.mxu0 %v2010
    %2500 = vmatmul.mubr.f32.gmra.mxu0 %v2009
    %v2501 = vpop.f32.mrf.mxu0
    %v2502 = vadd.f32 %v2398, %v2501
    %v2503 = vpop.f32.mrf.mxu0
    %v2504 = vadd.f32 %v2402, %v2503
    %2505 = vmatprep.mubr.f32.mxu0 %v2012
    %2506 = vmatmul.mubr.f32.gmra.mxu0 %v2011
    %v2507 = vpop.f32.mrf.mxu0
    %v2508 = vadd.f32 %v2398, %v2507
    %v2509 = vpop.f32.mrf.mxu0
    %v2510 = vadd.f32 %v2402, %v2509
    %2511 = vmatprep.mubr.f32.mxu0 %v2014
    %2512 = vmatmul.mubr.f32.gmra.mxu0 %v2013
    %v2513 = vpop.f32.mrf.mxu0
    %v2514 = vadd.f32 %v2398, %v2513
    %v2515 = vpop.f32.mrf.mxu0
    %v2516 = vadd.f32 %v2402, %v2515
    %2517 = vmatprep.mubr.f32.mxu0 %v2016
    %2518 = vmatmul.mubr.f32.gmra.mxu0 %v2015
    %v2519 = vpop.f32.mrf.mxu0
    %v2520 = vadd.f32 %v2398, %v2519
    %v2521 = vpop.f32.mrf.mxu0
    %v2522 = vadd.f32 %v2402, %v2521
    %2523 = vmatprep.mubr.f32.mxu0 %v2018
    %2524 = vmatmul.mubr.f32.gmra.mxu0 %v2017
    %v2525 = vpop.f32.mrf.mxu0
    %v2526 = vadd.f32 %v2398, %v2525
    %v2527 = vpop.f32.mrf.mxu0
    %v2528 = vadd.f32 %v2402, %v2527
    %2529 = vmatprep.mubr.f32.mxu0 %v2020
    %2530 = vmatmul.mubr.f32.gmra.mxu0 %v2019
    %v2531 = vpop.f32.mrf.mxu0
    %v2532 = vadd.f32 %v2398, %v2531
    %v2533 = vpop.f32.mrf.mxu0
    %v2534 = vadd.f32 %v2402, %v2533
    %2535 = vmatprep.mubr.f32.mxu0 %v2022
    %2536 = vmatmul.mubr.f32.gmra.mxu0 %v2021
    %v2537 = vpop.f32.mrf.mxu0
    %v2538 = vadd.f32 %v2398, %v2537
    %v2539 = vpop.f32.mrf.mxu0
    %v2540 = vadd.f32 %v2402, %v2539
    %2541 = vmatprep.mubr.f32.mxu0 %v2024
    %2542 = vmatmul.mubr.f32.gmra.mxu0 %v2023
    %v2543 = vpop.f32.mrf.mxu0
    %v2544 = vadd.f32 %v2398, %v2543
    %v2545 = vpop.f32.mrf.mxu0
    %v2546 = vadd.f32 %v2402, %v2545
    %2547 = vmatprep.mubr.f32.mxu0 %v2026
    %2548 = vmatmul.mubr.f32.gmra.mxu0 %v2025
    %v2549 = vpop.f32.mrf.mxu0
    %v2550 = vadd.f32 %v2398, %v2549
    %v2551 = vpop.f32.mrf.mxu0
    %v2552 = vadd.f32 %v2402, %v2551
    %2553 = vmatprep.mubr.f32.mxu0 %v2028
    %2554 = vmatmul.mubr.f32.gmra.mxu0 %v2027
    %v2555 = vpop.f32.mrf.mxu0
    %v2556 = vadd.f32 %v2398, %v2555
    %v2557 = vpop.f32.mrf.mxu0
    %v2558 = vadd.f32 %v2402, %v2557
    %2559 = vmatprep.mubr.f32.mxu0 %v2030
    %2560 = vmatmul.mubr.f32.gmra.mxu0 %v2029
    %v2561 = vpop.f32.mrf.mxu0
    %v2562 = vadd.f32 %v2398, %v2561
    %v2563 = vpop.f32.mrf.mxu0
    %v2564 = vadd.f32 %v2402, %v2563
    %2565 = vmatprep.mubr.f32.mxu0 %v2032
    %2566 = vmatmul.mubr.f32.gmra.mxu0 %v2031
    %v2567 = vpop.f32.mrf.mxu0
    %v2568 = vadd.f32 %v2398, %v2567
    %v2569 = vpop.f32.mrf.mxu0
    %v2570 = vadd.f32 %v2402, %v2569
    %2571 = vmatprep.mubr.f32.mxu0 %v2034
    %2572 = vmatmul.mubr.f32.gmra.mxu0 %v2033
    %v2573 = vpop.f32.mrf.mxu0
    %v2574 = vadd.f32 %v2398, %v2573
    %v2575 = vpop.f32.mrf.mxu0
    %v2576 = vadd.f32 %v2402, %v2575
    %2577 = vmatprep.mubr.f32.mxu0 %v2036
    %2578 = vmatmul.mubr.f32.gmra.mxu0 %v2035
    %v2579 = vpop.f32.mrf.mxu0
    %v2580 = vadd.f32 %v2398, %v2579
    %v2581 = vpop.f32.mrf.mxu0
    %v2582 = vadd.f32 %v2402, %v2581
    %2583 = vmatprep.mubr.f32.mxu0 %v2038
    %2584 = vmatmul.mubr.f32.gmra.mxu0 %v2037
    %v2585 = vpop.f32.mrf.mxu0
    %v2586 = vadd.f32 %v2398, %v2585
    %v2587 = vpop.f32.mrf.mxu0
    %v2588 = vadd.f32 %v2402, %v2587
    %2589 = vmatprep.mubr.f32.mxu0 %v2040
    %2590 = vmatmul.mubr.f32.gmra.mxu0 %v2039
    %v2591 = vpop.f32.mrf.mxu0
    %v2592 = vadd.f32 %v2398, %v2591
    %v2593 = vpop.f32.mrf.mxu0
    %v2594 = vadd.f32 %v2402, %v2593
    %2595 = vmatprep.mubr.f32.mxu0 %v2042
    %2596 = vmatmul.mubr.f32.gmra.mxu0 %v2041
    %v2597 = vpop.f32.mrf.mxu0
    %v2598 = vadd.f32 %v2398, %v2597
    %v2599 = vpop.f32.mrf.mxu0
    %v2600 = vadd.f32 %v2402, %v2599
    %2601 = vmatprep.mubr.f32.mxu0 %v2044
    %2602 = vmatmul.mubr.f32.gmra.mxu0 %v2043
    %v2603 = vpop.f32.mrf.mxu0
    %v2604 = vadd.f32 %v2398, %v2603
    %v2605 = vpop.f32.mrf.mxu0
    %v2606 = vadd.f32 %v2402, %v2605
    %2607 = vmatprep.mubr.f32.mxu0 %v2046
    %2608 = vmatmul.mubr.f32.gmra.mxu0 %v2045
    %v2609 = vpop.f32.mrf.mxu0
    %v2610 = vadd.f32 %v2398, %v2609
    %v2611 = vpop.f32.mrf.mxu0
    %v2612 = vadd.f32 %v2402, %v2611
    %2613 = vmatprep.mubr.f32.mxu0 %v2048
    %2614 = vmatmul.mubr.f32.gmra.mxu0 %v2047
    %v2615 = vpop.f32.mrf.mxu0
    %v2616 = vadd.f32 %v2398, %v2615
    %v2617 = vpop.f32.mrf.mxu0
    %v2618 = vadd.f32 %v2402, %v2617
    %2619 = vmatprep.mubr.f32.mxu0 %v2050
    %2620 = vmatmul.mubr.f32.gmra.mxu0 %v2049
    %v2621 = vpop.f32.mrf.mxu0
    %v2622 = vadd.f32 %v2398, %v2621
    %v2623 = vpop.f32.mrf.mxu0
    %v2624 = vadd.f32 %v2402, %v2623
    %2625 = vmatprep.mubr.f32.mxu0 %v2052
    %2626 = vmatmul.mubr.f32.gmra.mxu0 %v2051
    %v2627 = vpop.f32.mrf.mxu0
    %v2628 = vadd.f32 %v2398, %v2627
    %v2629 = vpop.f32.mrf.mxu0
    %v2630 = vadd.f32 %v2402, %v2629
    %2631 = vmatprep.mubr.f32.mxu0 %v2054
    %2632 = vmatmul.mubr.f32.gmra.mxu0 %v2053
    %v2633 = vpop.f32.mrf.mxu0
    %v2634 = vadd.f32 %v2398, %v2633
    %v2635 = vpop.f32.mrf.mxu0
    %v2636 = vadd.f32 %v2402, %v2635
    %2637 = vmatprep.mubr.f32.mxu0 %v2056
    %2638 = vmatmul.mubr.f32.gmra.mxu0 %v2055
    %v2639 = vpop.f32.mrf.mxu0
    %v2640 = vadd.f32 %v2398, %v2639
    %v2641 = vpop.f32.mrf.mxu0
    %v2642 = vadd.f32 %v2402, %v2641
    %2643 = vmatprep.mubr.f32.mxu0 %v2058
    %2644 = vmatmul.mubr.f32.gmra.mxu0 %v2057
    %v2645 = vpop.f32.mrf.mxu0
    %v2646 = vadd.f32 %v2398, %v2645
    %v2647 = vpop.f32.mrf.mxu0
    %v2648 = vadd.f32 %v2402, %v2647
    %2649 = vmatprep.mubr.f32.mxu0 %v2060
    %2650 = vmatmul.mubr.f32.gmra.mxu0 %v2059
    %v2651 = vpop.f32.mrf.mxu0
    %v2652 = vadd.f32 %v2398, %v2651
    %v2653 = vpop.f32.mrf.mxu0
    %v2654 = vadd.f32 %v2402, %v2653
    %2655 = vmatprep.mubr.f32.mxu0 %v2062
    %2656 = vmatmul.mubr.f32.gmra.mxu0 %v2061
    %v2657 = vpop.f32.mrf.mxu0
    %v2658 = vadd.f32 %v2398, %v2657
    %v2659 = vpop.f32.mrf.mxu0
    %v2660 = vadd.f32 %v2402, %v2659
    %2661 = vmatprep.mubr.f32.mxu0 %v2064
    %2662 = vmatmul.mubr.f32.gmra.mxu0 %v2063
    %v2663 = vpop.f32.mrf.mxu0
    %v2664 = vadd.f32 %v2398, %v2663
    %v2665 = vpop.f32.mrf.mxu0
    %v2666 = vadd.f32 %v2402, %v2665
    %2667 = vmatprep.mubr.f32.mxu0 %v2066
    %2668 = vmatmul.mubr.f32.gmra.mxu0 %v2065
    %v2669 = vpop.f32.mrf.mxu0
    %v2670 = vadd.f32 %v2398, %v2669
    %v2671 = vpop.f32.mrf.mxu0
    %v2672 = vadd.f32 %v2402, %v2671
    %2673 = vmatprep.mubr.f32.mxu0 %v2068
    %2674 = vmatmul.mubr.f32.gmra.mxu0 %v2067
    %v2675 = vpop.f32.mrf.mxu0
    %v2676 = vadd.f32 %v2398, %v2675
    %v2677 = vpop.f32.mrf.mxu0
    %v2678 = vadd.f32 %v2402, %v2677
    %2679 = vmatprep.mubr.f32.mxu0 %v2070
    %2680 = vmatmul.mubr.f32.gmra.mxu0 %v2069
    %v2681 = vpop.f32.mrf.mxu0
    %v2682 = vadd.f32 %v2398, %v2681
    %v2683 = vpop.f32.mrf.mxu0
    %v2684 = vadd.f32 %v2402, %v2683
    %2685 = vmatprep.mubr.f32.mxu0 %v2072
    %2686 = vmatmul.mubr.f32.gmra.mxu0 %v2071
    %v2687 = vpop.f32.mrf.mxu0
    %v2688 = vadd.f32 %v2398, %v2687
    %v2689 = vpop.f32.mrf.mxu0
    %v2690 = vadd.f32 %v2402, %v2689
    %2691 = vmatprep.mubr.f32.mxu0 %v2074
    %2692 = vmatmul.mubr.f32.gmra.mxu0 %v2073
    %v2693 = vpop.f32.mrf.mxu0
    %v2694 = vadd.f32 %v2398, %v2693
    %v2695 = vpop.f32.mrf.mxu0
    %v2696 = vadd.f32 %v2402, %v2695
    %2697 = vmatprep.mubr.f32.mxu0 %v2076
    %2698 = vmatmul.mubr.f32.gmra.mxu0 %v2075
    %v2699 = vpop.f32.mrf.mxu0
    %v2700 = vadd.f32 %v2398, %v2699
    %v2701 = vpop.f32.mrf.mxu0
    %v2702 = vadd.f32 %v2402, %v2701
    %2703 = vmatprep.mubr.f32.mxu0 %v2078
    %2704 = vmatmul.mubr.f32.gmra.mxu0 %v2077
    %v2705 = vpop.f32.mrf.mxu0
    %v2706 = vadd.f32 %v2398, %v2705
    %v2707 = vpop.f32.mrf.mxu0
    %v2708 = vadd.f32 %v2402, %v2707
    %2709 = vmatprep.mubr.f32.mxu0 %v2080
    %2710 = vmatmul.mubr.f32.gmra.mxu0 %v2079
    %v2711 = vpop.f32.mrf.mxu0
    %v2712 = vadd.f32 %v2398, %v2711
    %v2713 = vpop.f32.mrf.mxu0
    %v2714 = vadd.f32 %v2402, %v2713
    %2715 = vmatprep.mubr.f32.mxu0 %v2082
    %2716 = vmatmul.mubr.f32.gmra.mxu0 %v2081
    %v2717 = vpop.f32.mrf.mxu0
    %v2718 = vadd.f32 %v2398, %v2717
    %v2719 = vpop.f32.mrf.mxu0
    %v2720 = vadd.f32 %v2402, %v2719
    %2721 = vmatprep.mubr.f32.mxu0 %v2084
    %2722 = vmatmul.mubr.f32.gmra.mxu0 %v2083
    %v2723 = vpop.f32.mrf.mxu0
    %v2724 = vadd.f32 %v2398, %v2723
    %v2725 = vpop.f32.mrf.mxu0
    %v2726 = vadd.f32 %v2402, %v2725
    %2727 = vmatprep.mubr.f32.mxu0 %v2086
    %2728 = vmatmul.mubr.f32.gmra.mxu0 %v2085
    %v2729 = vpop.f32.mrf.mxu0
    %v2730 = vadd.f32 %v2398, %v2729
    %v2731 = vpop.f32.mrf.mxu0
    %v2732 = vadd.f32 %v2402, %v2731
    %2733 = vmatprep.mubr.f32.mxu0 %v2088
    %2734 = vmatmul.mubr.f32.gmra.mxu0 %v2087
    %v2735 = vpop.f32.mrf.mxu0
    %v2736 = vadd.f32 %v2398, %v2735
    %v2737 = vpop.f32.mrf.mxu0
    %v2738 = vadd.f32 %v2402, %v2737
    %2739 = vmatprep.mubr.f32.mxu0 %v2090
    %2740 = vmatmul.mubr.f32.gmra.mxu0 %v2089
    %v2741 = vpop.f32.mrf.mxu0
    %v2742 = vadd.f32 %v2398, %v2741
    %v2743 = vpop.f32.mrf.mxu0
    %v2744 = vadd.f32 %v2402, %v2743
    %2745 = vmatprep.mubr.f32.mxu0 %v2092
    %2746 = vmatmul.mubr.f32.gmra.mxu0 %v2091
    %v2747 = vpop.f32.mrf.mxu0
    %v2748 = vadd.f32 %v2398, %v2747
    %v2749 = vpop.f32.mrf.mxu0
    %v2750 = vadd.f32 %v2402, %v2749
    %2751 = vmatprep.mubr.f32.mxu0 %v2094
    %2752 = vmatmul.mubr.f32.gmra.mxu0 %v2093
    %v2753 = vpop.f32.mrf.mxu0
    %v2754 = vadd.f32 %v2398, %v2753
    %v2755 = vpop.f32.mrf.mxu0
    %v2756 = vadd.f32 %v2402, %v2755
    %2757 = vmatprep.mubr.f32.mxu0 %v2096
    %2758 = vmatmul.mubr.f32.gmra.mxu0 %v2095
    %v2759 = vpop.f32.mrf.mxu0
    %v2760 = vadd.f32 %v2398, %v2759
    %v2761 = vpop.f32.mrf.mxu0
    %v2762 = vadd.f32 %v2402, %v2761
    %2763 = vmatprep.mubr.f32.mxu0 %v2098
    %2764 = vmatmul.mubr.f32.gmra.mxu0 %v2097
    %v2765 = vpop.f32.mrf.mxu0
    %v2766 = vadd.f32 %v2398, %v2765
    %v2767 = vpop.f32.mrf.mxu0
    %v2768 = vadd.f32 %v2402, %v2767
    %2769 = vmatprep.mubr.f32.mxu0 %v2100
    %2770 = vmatmul.mubr.f32.gmra.mxu0 %v2099
    %v2771 = vpop.f32.mrf.mxu0
    %v2772 = vadd.f32 %v2398, %v2771
    %v2773 = vpop.f32.mrf.mxu0
    %v2774 = vadd.f32 %v2402, %v2773
    %2775 = vmatprep.mubr.f32.mxu0 %v2102
    %2776 = vmatmul.mubr.f32.gmra.mxu0 %v2101
    %v2777 = vpop.f32.mrf.mxu0
    %v2778 = vadd.f32 %v2398, %v2777
    %v2779 = vpop.f32.mrf.mxu0
    %v2780 = vadd.f32 %v2402, %v2779
    %2781 = vmatprep.mubr.f32.mxu0 %v2104
    %2782 = vmatmul.mubr.f32.gmra.mxu0 %v2103
    %v2783 = vpop.f32.mrf.mxu0
    %v2784 = vadd.f32 %v2398, %v2783
    %v2785 = vpop.f32.mrf.mxu0
    %v2786 = vadd.f32 %v2402, %v2785
    %2787 = vmatprep.mubr.f32.mxu0 %v2106
    %2788 = vmatmul.mubr.f32.gmra.mxu0 %v2105
    %v2789 = vpop.f32.mrf.mxu0
    %v2790 = vadd.f32 %v2398, %v2789
    %v2791 = vpop.f32.mrf.mxu0
    %v2792 = vadd.f32 %v2402, %v2791
    %2793 = vmatprep.mubr.f32.mxu0 %v2108
    %2794 = vmatmul.mubr.f32.gmra.mxu0 %v2107
    %v2795 = vpop.f32.mrf.mxu0
    %v2796 = vadd.f32 %v2398, %v2795
    %v2797 = vpop.f32.mrf.mxu0
    %v2798 = vadd.f32 %v2402, %v2797
    %2799 = vmatprep.mubr.f32.mxu0 %v2110
    %2800 = vmatmul.mubr.f32.gmra.mxu0 %v2109
    %v2801 = vpop.f32.mrf.mxu0
    %v2802 = vadd.f32 %v2398, %v2801
    %v2803 = vpop.f32.mrf.mxu0
    %v2804 = vadd.f32 %v2402, %v2803
    %2805 = vmatprep.mubr.f32.mxu0 %v2112
    %2806 = vmatmul.mubr.f32.gmra.mxu0 %v2111
    %v2807 = vpop.f32.mrf.mxu0
    %v2808 = vadd.f32 %v2398, %v2807
    %v2809 = vpop.f32.mrf.mxu0
    %v2810 = vadd.f32 %v2402, %v2809
    %2811 = vmatprep.mubr.f32.mxu0 %v2114
    %2812 = vmatmul.mubr.f32.gmra.mxu0 %v2113
    %v2813 = vpop.f32.mrf.mxu0
    %v2814 = vadd.f32 %v2398, %v2813
    %v2815 = vpop.f32.mrf.mxu0
    %v2816 = vadd.f32 %v2402, %v2815
    %2817 = vmatprep.mubr.f32.mxu0 %v2116
    %2818 = vmatmul.mubr.f32.gmra.mxu0 %v2115
    %v2819 = vpop.f32.mrf.mxu0
    %v2820 = vadd.f32 %v2398, %v2819
    %v2821 = vpop.f32.mrf.mxu0
    %v2822 = vadd.f32 %v2402, %v2821
    %2823 = vmatprep.mubr.f32.mxu0 %v2118
    %2824 = vmatmul.mubr.f32.gmra.mxu0 %v2117
    %v2825 = vpop.f32.mrf.mxu0
    %v2826 = vadd.f32 %v2398, %v2825
    %v2827 = vpop.f32.mrf.mxu0
    %v2828 = vadd.f32 %v2402, %v2827
    %2829 = vmatprep.mubr.f32.mxu0 %v2120
    %2830 = vmatmul.mubr.f32.gmra.mxu0 %v2119
    %v2831 = vpop.f32.mrf.mxu0
    %v2832 = vadd.f32 %v2398, %v2831
    %v2833 = vpop.f32.mrf.mxu0
    %v2834 = vadd.f32 %v2402, %v2833
    %2835 = vmatprep.mubr.f32.mxu0 %v2122
    %2836 = vmatmul.mubr.f32.gmra.mxu0 %v2121
    %v2837 = vpop.f32.mrf.mxu0
    %v2838 = vadd.f32 %v2398, %v2837
    %v2839 = vpop.f32.mrf.mxu0
    %v2840 = vadd.f32 %v2402, %v2839
    %2841 = vmatprep.mubr.f32.mxu0 %v2124
    %2842 = vmatmul.mubr.f32.gmra.mxu0 %v2123
    %v2843 = vpop.f32.mrf.mxu0
    %v2844 = vadd.f32 %v2398, %v2843
    %v2845 = vpop.f32.mrf.mxu0
    %v2846 = vadd.f32 %v2402, %v2845
    %2847 = vmatprep.mubr.f32.mxu0 %v2126
    %2848 = vmatmul.mubr.f32.gmra.mxu0 %v2125
    %v2849 = vpop.f32.mrf.mxu0
    %v2850 = vadd.f32 %v2398, %v2849
    %v2851 = vpop.f32.mrf.mxu0
    %v2852 = vadd.f32 %v2402, %v2851
    %2853 = vmatprep.mubr.f32.mxu0 %v2128
    %2854 = vmatmul.mubr.f32.gmra.mxu0 %v2127
    %v2855 = vpop.f32.mrf.mxu0
    %v2856 = vadd.f32 %v2398, %v2855
    %v2857 = vpop.f32.mrf.mxu0
    %v2858 = vadd.f32 %v2402, %v2857
    %2859 = vmatprep.mubr.f32.mxu0 %v2130
    %2860 = vmatmul.mubr.f32.gmra.mxu0 %v2129
    %v2861 = vpop.f32.mrf.mxu0
    %v2862 = vadd.f32 %v2398, %v2861
    %v2863 = vpop.f32.mrf.mxu0
    %v2864 = vadd.f32 %v2402, %v2863
    %2865 = vmatprep.mubr.f32.mxu0 %v2132
    %2866 = vmatmul.mubr.f32.gmra.mxu0 %v2131
    %v2867 = vpop.f32.mrf.mxu0
    %v2868 = vadd.f32 %v2398, %v2867
    %v2869 = vpop.f32.mrf.mxu0
    %v2870 = vadd.f32 %v2402, %v2869
    %2871 = vmatprep.mubr.f32.mxu0 %v2134
    %2872 = vmatmul.mubr.f32.gmra.mxu0 %v2133
    %v2873 = vpop.f32.mrf.mxu0
    %v2874 = vadd.f32 %v2398, %v2873
    %v2875 = vpop.f32.mrf.mxu0
    %v2876 = vadd.f32 %v2402, %v2875
    %2877 = vmatprep.mubr.f32.mxu0 %v2136
    %2878 = vmatmul.mubr.f32.gmra.mxu0 %v2135
    %v2879 = vpop.f32.mrf.mxu0
    %v2880 = vadd.f32 %v2398, %v2879
    %v2881 = vpop.f32.mrf.mxu0
    %v2882 = vadd.f32 %v2402, %v2881
    %2883 = vdwg.mxu0
    %2884 = vmatprep.subr.mxu0 %v2260
    %2885 = vmatpush1.msra.mxu0 %v2259
    %2886 = vmatprep.subr.mxu0 %v2252
    %2887 = vmatpush1.msra.mxu0 %v2251
    %2888 = vmatprep.subr.mxu0 %v2244
    %2889 = vmatpush1.msra.mxu0 %v2243
    %2890 = vmatprep.subr.mxu0 %v2236
    %2891 = vmatpush1.msra.mxu0 %v2235
    %2892 = vmatprep.subr.mxu0 %v2228
    %2893 = vmatpush1.msra.mxu0 %v2227
    %2894 = vmatprep.subr.mxu0 %v2220
    %2895 = vmatpush1.msra.mxu0 %v2219
    %2896 = vmatprep.subr.mxu0 %v2212
    %2897 = vmatpush1.msra.mxu0 %v2211
    %2898 = vmatprep.subr.mxu0 %v2204
    %2899 = vmatpush1.msra.mxu0 %v2203
    %2900 = vmatprep.subr.mxu0 %v2196
    %2901 = vmatpush1.msra.mxu0 %v2195
    %2902 = vmatprep.subr.mxu0 %v2188
    %2903 = vmatpush1.msra.mxu0 %v2187
    %2904 = vmatprep.subr.mxu0 %v2180
    %2905 = vmatpush1.msra.mxu0 %v2179
    %2906 = vmatprep.subr.mxu0 %v2172
    %2907 = vmatpush1.msra.mxu0 %v2171
    %2908 = vmatprep.subr.mxu0 %v2164
    %2909 = vmatpush1.msra.mxu0 %v2163
    %2910 = vmatprep.subr.mxu0 %v2156
    %2911 = vmatpush1.msra.mxu0 %v2155
    %2912 = vmatprep.subr.mxu0 %v2148
    %2913 = vmatpush1.msra.mxu0 %v2147
    %2914 = vmatprep.subr.mxu0 %v2140
    %2915 = vmatpush1.msra.mxu0 %v2139
    %2916 = vmatprep.subr.mxu0 %v2388
    %2917 = vmatpush2.msra.mxu0 %v2387
    %2918 = vmatprep.subr.mxu0 %v2380
    %2919 = vmatpush2.msra.mxu0 %v2379
    %2920 = vmatprep.subr.mxu0 %v2372
    %2921 = vmatpush2.msra.mxu0 %v2371
    %2922 = vmatprep.subr.mxu0 %v2364
    %2923 = vmatpush2.msra.mxu0 %v2363
    %2924 = vmatprep.subr.mxu0 %v2356
    %2925 = vmatpush2.msra.mxu0 %v2355
    %2926 = vmatprep.subr.mxu0 %v2348
    %2927 = vmatpush2.msra.mxu0 %v2347
    %2928 = vmatprep.subr.mxu0 %v2340
    %2929 = vmatpush2.msra.mxu0 %v2339
    %2930 = vmatprep.subr.mxu0 %v2332
    %2931 = vmatpush2.msra.mxu0 %v2331
    %2932 = vmatprep.subr.mxu0 %v2324
    %2933 = vmatpush2.msra.mxu0 %v2323
    %2934 = vmatprep.subr.mxu0 %v2316
    %2935 = vmatpush2.msra.mxu0 %v2315
    %2936 = vmatprep.subr.mxu0 %v2308
    %2937 = vmatpush2.msra.mxu0 %v2307
    %2938 = vmatprep.subr.mxu0 %v2300
    %2939 = vmatpush2.msra.mxu0 %v2299
    %2940 = vmatprep.subr.mxu0 %v2292
    %2941 = vmatpush2.msra.mxu0 %v2291
    %2942 = vmatprep.subr.mxu0 %v2284
    %2943 = vmatpush2.msra.mxu0 %v2283
    %2944 = vmatprep.subr.mxu0 %v2276
    %2945 = vmatpush2.msra.mxu0 %v2275
    %2946 = vmatprep.subr.mxu0 %v2268
    %2947 = vmatpush2.msra.mxu0 %v2267
    %2948 = vmatprep.mubr.f32.mxu0 %v2010
    %2949 = vmatmul.mubr.f32.gmra.mxu0 %v2009
    %v2950 = vpop.f32.mrf.mxu0
    %v2951 = vadd.f32 %v2406, %v2950
    %v2952 = vpop.f32.mrf.mxu0
    %v2953 = vadd.f32 %v2410, %v2952
    %2954 = vmatprep.mubr.f32.mxu0 %v2012
    %2955 = vmatmul.mubr.f32.gmra.mxu0 %v2011
    %v2956 = vpop.f32.mrf.mxu0
    %v2957 = vadd.f32 %v2406, %v2956
    %v2958 = vpop.f32.mrf.mxu0
    %v2959 = vadd.f32 %v2410, %v2958
    %2960 = vmatprep.mubr.f32.mxu0 %v2014
    %2961 = vmatmul.mubr.f32.gmra.mxu0 %v2013
    %v2962 = vpop.f32.mrf.mxu0
    %v2963 = vadd.f32 %v2406, %v2962
    %v2964 = vpop.f32.mrf.mxu0
    %v2965 = vadd.f32 %v2410, %v2964
    %2966 = vmatprep.mubr.f32.mxu0 %v2016
    %2967 = vmatmul.mubr.f32.gmra.mxu0 %v2015
    %v2968 = vpop.f32.mrf.mxu0
    %v2969 = vadd.f32 %v2406, %v2968
    %v2970 = vpop.f32.mrf.mxu0
    %v2971 = vadd.f32 %v2410, %v2970
    %2972 = vmatprep.mubr.f32.mxu0 %v2018
    %2973 = vmatmul.mubr.f32.gmra.mxu0 %v2017
    %v2974 = vpop.f32.mrf.mxu0
    %v2975 = vadd.f32 %v2406, %v2974
    %v2976 = vpop.f32.mrf.mxu0
    %v2977 = vadd.f32 %v2410, %v2976
    %2978 = vmatprep.mubr.f32.mxu0 %v2020
    %2979 = vmatmul.mubr.f32.gmra.mxu0 %v2019
    %v2980 = vpop.f32.mrf.mxu0
    %v2981 = vadd.f32 %v2406, %v2980
    %v2982 = vpop.f32.mrf.mxu0
    %v2983 = vadd.f32 %v2410, %v2982
    %2984 = vmatprep.mubr.f32.mxu0 %v2022
    %2985 = vmatmul.mubr.f32.gmra.mxu0 %v2021
    %v2986 = vpop.f32.mrf.mxu0
    %v2987 = vadd.f32 %v2406, %v2986
    %v2988 = vpop.f32.mrf.mxu0
    %v2989 = vadd.f32 %v2410, %v2988
    %2990 = vmatprep.mubr.f32.mxu0 %v2024
    %2991 = vmatmul.mubr.f32.gmra.mxu0 %v2023
    %v2992 = vpop.f32.mrf.mxu0
    %v2993 = vadd.f32 %v2406, %v2992
    %v2994 = vpop.f32.mrf.mxu0
    %v2995 = vadd.f32 %v2410, %v2994
    %2996 = vmatprep.mubr.f32.mxu0 %v2026
    %2997 = vmatmul.mubr.f32.gmra.mxu0 %v2025
    %v2998 = vpop.f32.mrf.mxu0
    %v2999 = vadd.f32 %v2406, %v2998
    %v3000 = vpop.f32.mrf.mxu0
    %v3001 = vadd.f32 %v2410, %v3000
    %3002 = vmatprep.mubr.f32.mxu0 %v2028
    %3003 = vmatmul.mubr.f32.gmra.mxu0 %v2027
    %v3004 = vpop.f32.mrf.mxu0
    %v3005 = vadd.f32 %v2406, %v3004
    %v3006 = vpop.f32.mrf.mxu0
    %v3007 = vadd.f32 %v2410, %v3006
    %3008 = vmatprep.mubr.f32.mxu0 %v2030
    %3009 = vmatmul.mubr.f32.gmra.mxu0 %v2029
    %v3010 = vpop.f32.mrf.mxu0
    %v3011 = vadd.f32 %v2406, %v3010
    %v3012 = vpop.f32.mrf.mxu0
    %v3013 = vadd.f32 %v2410, %v3012
    %3014 = vmatprep.mubr.f32.mxu0 %v2032
    %3015 = vmatmul.mubr.f32.gmra.mxu0 %v2031
    %v3016 = vpop.f32.mrf.mxu0
    %v3017 = vadd.f32 %v2406, %v3016
    %v3018 = vpop.f32.mrf.mxu0
    %v3019 = vadd.f32 %v2410, %v3018
    %3020 = vmatprep.mubr.f32.mxu0 %v2034
    %3021 = vmatmul.mubr.f32.gmra.mxu0 %v2033
    %v3022 = vpop.f32.mrf.mxu0
    %v3023 = vadd.f32 %v2406, %v3022
    %v3024 = vpop.f32.mrf.mxu0
    %v3025 = vadd.f32 %v2410, %v3024
    %3026 = vmatprep.mubr.f32.mxu0 %v2036
    %3027 = vmatmul.mubr.f32.gmra.mxu0 %v2035
    %v3028 = vpop.f32.mrf.mxu0
    %v3029 = vadd.f32 %v2406, %v3028
    %v3030 = vpop.f32.mrf.mxu0
    %v3031 = vadd.f32 %v2410, %v3030
    %3032 = vmatprep.mubr.f32.mxu0 %v2038
    %3033 = vmatmul.mubr.f32.gmra.mxu0 %v2037
    %v3034 = vpop.f32.mrf.mxu0
    %v3035 = vadd.f32 %v2406, %v3034
    %v3036 = vpop.f32.mrf.mxu0
    %v3037 = vadd.f32 %v2410, %v3036
    %3038 = vmatprep.mubr.f32.mxu0 %v2040
    %3039 = vmatmul.mubr.f32.gmra.mxu0 %v2039
    %v3040 = vpop.f32.mrf.mxu0
    %v3041 = vadd.f32 %v2406, %v3040
    %v3042 = vpop.f32.mrf.mxu0
    %v3043 = vadd.f32 %v2410, %v3042
    %3044 = vmatprep.mubr.f32.mxu0 %v2042
    %3045 = vmatmul.mubr.f32.gmra.mxu0 %v2041
    %v3046 = vpop.f32.mrf.mxu0
    %v3047 = vadd.f32 %v2406, %v3046
    %v3048 = vpop.f32.mrf.mxu0
    %v3049 = vadd.f32 %v2410, %v3048
    %3050 = vmatprep.mubr.f32.mxu0 %v2044
    %3051 = vmatmul.mubr.f32.gmra.mxu0 %v2043
    %v3052 = vpop.f32.mrf.mxu0
    %v3053 = vadd.f32 %v2406, %v3052
    %v3054 = vpop.f32.mrf.mxu0
    %v3055 = vadd.f32 %v2410, %v3054
    %3056 = vmatprep.mubr.f32.mxu0 %v2046
    %3057 = vmatmul.mubr.f32.gmra.mxu0 %v2045
    %v3058 = vpop.f32.mrf.mxu0
    %v3059 = vadd.f32 %v2406, %v3058
    %v3060 = vpop.f32.mrf.mxu0
    %v3061 = vadd.f32 %v2410, %v3060
    %3062 = vmatprep.mubr.f32.mxu0 %v2048
    %3063 = vmatmul.mubr.f32.gmra.mxu0 %v2047
    %v3064 = vpop.f32.mrf.mxu0
    %v3065 = vadd.f32 %v2406, %v3064
    %v3066 = vpop.f32.mrf.mxu0
    %v3067 = vadd.f32 %v2410, %v3066
    %3068 = vmatprep.mubr.f32.mxu0 %v2050
    %3069 = vmatmul.mubr.f32.gmra.mxu0 %v2049
    %v3070 = vpop.f32.mrf.mxu0
    %v3071 = vadd.f32 %v2406, %v3070
    %v3072 = vpop.f32.mrf.mxu0
    %v3073 = vadd.f32 %v2410, %v3072
    %3074 = vmatprep.mubr.f32.mxu0 %v2052
    %3075 = vmatmul.mubr.f32.gmra.mxu0 %v2051
    %v3076 = vpop.f32.mrf.mxu0
    %v3077 = vadd.f32 %v2406, %v3076
    %v3078 = vpop.f32.mrf.mxu0
    %v3079 = vadd.f32 %v2410, %v3078
    %3080 = vmatprep.mubr.f32.mxu0 %v2054
    %3081 = vmatmul.mubr.f32.gmra.mxu0 %v2053
    %v3082 = vpop.f32.mrf.mxu0
    %v3083 = vadd.f32 %v2406, %v3082
    %v3084 = vpop.f32.mrf.mxu0
    %v3085 = vadd.f32 %v2410, %v3084
    %3086 = vmatprep.mubr.f32.mxu0 %v2056
    %3087 = vmatmul.mubr.f32.gmra.mxu0 %v2055
    %v3088 = vpop.f32.mrf.mxu0
    %v3089 = vadd.f32 %v2406, %v3088
    %v3090 = vpop.f32.mrf.mxu0
    %v3091 = vadd.f32 %v2410, %v3090
    %3092 = vmatprep.mubr.f32.mxu0 %v2058
    %3093 = vmatmul.mubr.f32.gmra.mxu0 %v2057
    %v3094 = vpop.f32.mrf.mxu0
    %v3095 = vadd.f32 %v2406, %v3094
    %v3096 = vpop.f32.mrf.mxu0
    %v3097 = vadd.f32 %v2410, %v3096
    %3098 = vmatprep.mubr.f32.mxu0 %v2060
    %3099 = vmatmul.mubr.f32.gmra.mxu0 %v2059
    %v3100 = vpop.f32.mrf.mxu0
    %v3101 = vadd.f32 %v2406, %v3100
    %v3102 = vpop.f32.mrf.mxu0
    %v3103 = vadd.f32 %v2410, %v3102
    %3104 = vmatprep.mubr.f32.mxu0 %v2062
    %3105 = vmatmul.mubr.f32.gmra.mxu0 %v2061
    %v3106 = vpop.f32.mrf.mxu0
    %v3107 = vadd.f32 %v2406, %v3106
    %v3108 = vpop.f32.mrf.mxu0
    %v3109 = vadd.f32 %v2410, %v3108
    %3110 = vmatprep.mubr.f32.mxu0 %v2064
    %3111 = vmatmul.mubr.f32.gmra.mxu0 %v2063
    %v3112 = vpop.f32.mrf.mxu0
    %v3113 = vadd.f32 %v2406, %v3112
    %v3114 = vpop.f32.mrf.mxu0
    %v3115 = vadd.f32 %v2410, %v3114
    %3116 = vmatprep.mubr.f32.mxu0 %v2066
    %3117 = vmatmul.mubr.f32.gmra.mxu0 %v2065
    %v3118 = vpop.f32.mrf.mxu0
    %v3119 = vadd.f32 %v2406, %v3118
    %v3120 = vpop.f32.mrf.mxu0
    %v3121 = vadd.f32 %v2410, %v3120
    %3122 = vmatprep.mubr.f32.mxu0 %v2068
    %3123 = vmatmul.mubr.f32.gmra.mxu0 %v2067
    %v3124 = vpop.f32.mrf.mxu0
    %v3125 = vadd.f32 %v2406, %v3124
    %v3126 = vpop.f32.mrf.mxu0
    %v3127 = vadd.f32 %v2410, %v3126
    %3128 = vmatprep.mubr.f32.mxu0 %v2070
    %3129 = vmatmul.mubr.f32.gmra.mxu0 %v2069
    %v3130 = vpop.f32.mrf.mxu0
    %v3131 = vadd.f32 %v2406, %v3130
    %v3132 = vpop.f32.mrf.mxu0
    %v3133 = vadd.f32 %v2410, %v3132
    %3134 = vmatprep.mubr.f32.mxu0 %v2072
    %3135 = vmatmul.mubr.f32.gmra.mxu0 %v2071
    %v3136 = vpop.f32.mrf.mxu0
    %v3137 = vadd.f32 %v2406, %v3136
    %v3138 = vpop.f32.mrf.mxu0
    %v3139 = vadd.f32 %v2410, %v3138
    %3140 = vmatprep.mubr.f32.mxu0 %v2074
    %3141 = vmatmul.mubr.f32.gmra.mxu0 %v2073
    %v3142 = vpop.f32.mrf.mxu0
    %v3143 = vadd.f32 %v2406, %v3142
    %v3144 = vpop.f32.mrf.mxu0
    %v3145 = vadd.f32 %v2410, %v3144
    %3146 = vmatprep.mubr.f32.mxu0 %v2076
    %3147 = vmatmul.mubr.f32.gmra.mxu0 %v2075
    %v3148 = vpop.f32.mrf.mxu0
    %v3149 = vadd.f32 %v2406, %v3148
    %v3150 = vpop.f32.mrf.mxu0
    %v3151 = vadd.f32 %v2410, %v3150
    %3152 = vmatprep.mubr.f32.mxu0 %v2078
    %3153 = vmatmul.mubr.f32.gmra.mxu0 %v2077
    %v3154 = vpop.f32.mrf.mxu0
    %v3155 = vadd.f32 %v2406, %v3154
    %v3156 = vpop.f32.mrf.mxu0
    %v3157 = vadd.f32 %v2410, %v3156
    %3158 = vmatprep.mubr.f32.mxu0 %v2080
    %3159 = vmatmul.mubr.f32.gmra.mxu0 %v2079
    %v3160 = vpop.f32.mrf.mxu0
    %v3161 = vadd.f32 %v2406, %v3160
    %v3162 = vpop.f32.mrf.mxu0
    %v3163 = vadd.f32 %v2410, %v3162
    %3164 = vmatprep.mubr.f32.mxu0 %v2082
    %3165 = vmatmul.mubr.f32.gmra.mxu0 %v2081
    %v3166 = vpop.f32.mrf.mxu0
    %v3167 = vadd.f32 %v2406, %v3166
    %v3168 = vpop.f32.mrf.mxu0
    %v3169 = vadd.f32 %v2410, %v3168
    %3170 = vmatprep.mubr.f32.mxu0 %v2084
    %3171 = vmatmul.mubr.f32.gmra.mxu0 %v2083
    %v3172 = vpop.f32.mrf.mxu0
    %v3173 = vadd.f32 %v2406, %v3172
    %v3174 = vpop.f32.mrf.mxu0
    %v3175 = vadd.f32 %v2410, %v3174
    %3176 = vmatprep.mubr.f32.mxu0 %v2086
    %3177 = vmatmul.mubr.f32.gmra.mxu0 %v2085
    %v3178 = vpop.f32.mrf.mxu0
    %v3179 = vadd.f32 %v2406, %v3178
    %v3180 = vpop.f32.mrf.mxu0
    %v3181 = vadd.f32 %v2410, %v3180
    %3182 = vmatprep.mubr.f32.mxu0 %v2088
    %3183 = vmatmul.mubr.f32.gmra.mxu0 %v2087
    %v3184 = vpop.f32.mrf.mxu0
    %v3185 = vadd.f32 %v2406, %v3184
    %v3186 = vpop.f32.mrf.mxu0
    %v3187 = vadd.f32 %v2410, %v3186
    %3188 = vmatprep.mubr.f32.mxu0 %v2090
    %3189 = vmatmul.mubr.f32.gmra.mxu0 %v2089
    %v3190 = vpop.f32.mrf.mxu0
    %v3191 = vadd.f32 %v2406, %v3190
    %v3192 = vpop.f32.mrf.mxu0
    %v3193 = vadd.f32 %v2410, %v3192
    %3194 = vmatprep.mubr.f32.mxu0 %v2092
    %3195 = vmatmul.mubr.f32.gmra.mxu0 %v2091
    %v3196 = vpop.f32.mrf.mxu0
    %v3197 = vadd.f32 %v2406, %v3196
    %v3198 = vpop.f32.mrf.mxu0
    %v3199 = vadd.f32 %v2410, %v3198
    %3200 = vmatprep.mubr.f32.mxu0 %v2094
    %3201 = vmatmul.mubr.f32.gmra.mxu0 %v2093
    %v3202 = vpop.f32.mrf.mxu0
    %v3203 = vadd.f32 %v2406, %v3202
    %v3204 = vpop.f32.mrf.mxu0
    %v3205 = vadd.f32 %v2410, %v3204
    %3206 = vmatprep.mubr.f32.mxu0 %v2096
    %3207 = vmatmul.mubr.f32.gmra.mxu0 %v2095
    %v3208 = vpop.f32.mrf.mxu0
    %v3209 = vadd.f32 %v2406, %v3208
    %v3210 = vpop.f32.mrf.mxu0
    %v3211 = vadd.f32 %v2410, %v3210
    %3212 = vmatprep.mubr.f32.mxu0 %v2098
    %3213 = vmatmul.mubr.f32.gmra.mxu0 %v2097
    %v3214 = vpop.f32.mrf.mxu0
    %v3215 = vadd.f32 %v2406, %v3214
    %v3216 = vpop.f32.mrf.mxu0
    %v3217 = vadd.f32 %v2410, %v3216
    %3218 = vmatprep.mubr.f32.mxu0 %v2100
    %3219 = vmatmul.mubr.f32.gmra.mxu0 %v2099
    %v3220 = vpop.f32.mrf.mxu0
    %v3221 = vadd.f32 %v2406, %v3220
    %v3222 = vpop.f32.mrf.mxu0
    %v3223 = vadd.f32 %v2410, %v3222
    %3224 = vmatprep.mubr.f32.mxu0 %v2102
    %3225 = vmatmul.mubr.f32.gmra.mxu0 %v2101
    %v3226 = vpop.f32.mrf.mxu0
    %v3227 = vadd.f32 %v2406, %v3226
    %v3228 = vpop.f32.mrf.mxu0
    %v3229 = vadd.f32 %v2410, %v3228
    %3230 = vmatprep.mubr.f32.mxu0 %v2104
    %3231 = vmatmul.mubr.f32.gmra.mxu0 %v2103
    %v3232 = vpop.f32.mrf.mxu0
    %v3233 = vadd.f32 %v2406, %v3232
    %v3234 = vpop.f32.mrf.mxu0
    %v3235 = vadd.f32 %v2410, %v3234
    %3236 = vmatprep.mubr.f32.mxu0 %v2106
    %3237 = vmatmul.mubr.f32.gmra.mxu0 %v2105
    %v3238 = vpop.f32.mrf.mxu0
    %v3239 = vadd.f32 %v2406, %v3238
    %v3240 = vpop.f32.mrf.mxu0
    %v3241 = vadd.f32 %v2410, %v3240
    %3242 = vmatprep.mubr.f32.mxu0 %v2108
    %3243 = vmatmul.mubr.f32.gmra.mxu0 %v2107
    %v3244 = vpop.f32.mrf.mxu0
    %v3245 = vadd.f32 %v2406, %v3244
    %v3246 = vpop.f32.mrf.mxu0
    %v3247 = vadd.f32 %v2410, %v3246
    %3248 = vmatprep.mubr.f32.mxu0 %v2110
    %3249 = vmatmul.mubr.f32.gmra.mxu0 %v2109
    %v3250 = vpop.f32.mrf.mxu0
    %v3251 = vadd.f32 %v2406, %v3250
    %v3252 = vpop.f32.mrf.mxu0
    %v3253 = vadd.f32 %v2410, %v3252
    %3254 = vmatprep.mubr.f32.mxu0 %v2112
    %3255 = vmatmul.mubr.f32.gmra.mxu0 %v2111
    %v3256 = vpop.f32.mrf.mxu0
    %v3257 = vadd.f32 %v2406, %v3256
    %v3258 = vpop.f32.mrf.mxu0
    %v3259 = vadd.f32 %v2410, %v3258
    %3260 = vmatprep.mubr.f32.mxu0 %v2114
    %3261 = vmatmul.mubr.f32.gmra.mxu0 %v2113
    %v3262 = vpop.f32.mrf.mxu0
    %v3263 = vadd.f32 %v2406, %v3262
    %v3264 = vpop.f32.mrf.mxu0
    %v3265 = vadd.f32 %v2410, %v3264
    %3266 = vmatprep.mubr.f32.mxu0 %v2116
    %3267 = vmatmul.mubr.f32.gmra.mxu0 %v2115
    %v3268 = vpop.f32.mrf.mxu0
    %v3269 = vadd.f32 %v2406, %v3268
    %v3270 = vpop.f32.mrf.mxu0
    %v3271 = vadd.f32 %v2410, %v3270
    %3272 = vmatprep.mubr.f32.mxu0 %v2118
    %3273 = vmatmul.mubr.f32.gmra.mxu0 %v2117
    %v3274 = vpop.f32.mrf.mxu0
    %v3275 = vadd.f32 %v2406, %v3274
    %v3276 = vpop.f32.mrf.mxu0
    %v3277 = vadd.f32 %v2410, %v3276
    %3278 = vmatprep.mubr.f32.mxu0 %v2120
    %3279 = vmatmul.mubr.f32.gmra.mxu0 %v2119
    %v3280 = vpop.f32.mrf.mxu0
    %v3281 = vadd.f32 %v2406, %v3280
    %v3282 = vpop.f32.mrf.mxu0
    %v3283 = vadd.f32 %v2410, %v3282
    %3284 = vmatprep.mubr.f32.mxu0 %v2122
    %3285 = vmatmul.mubr.f32.gmra.mxu0 %v2121
    %v3286 = vpop.f32.mrf.mxu0
    %v3287 = vadd.f32 %v2406, %v3286
    %v3288 = vpop.f32.mrf.mxu0
    %v3289 = vadd.f32 %v2410, %v3288
    %3290 = vmatprep.mubr.f32.mxu0 %v2124
    %3291 = vmatmul.mubr.f32.gmra.mxu0 %v2123
    %v3292 = vpop.f32.mrf.mxu0
    %v3293 = vadd.f32 %v2406, %v3292
    %v3294 = vpop.f32.mrf.mxu0
    %v3295 = vadd.f32 %v2410, %v3294
    %3296 = vmatprep.mubr.f32.mxu0 %v2126
    %3297 = vmatmul.mubr.f32.gmra.mxu0 %v2125
    %v3298 = vpop.f32.mrf.mxu0
    %v3299 = vadd.f32 %v2406, %v3298
    %v3300 = vpop.f32.mrf.mxu0
    %v3301 = vadd.f32 %v2410, %v3300
    %3302 = vmatprep.mubr.f32.mxu0 %v2128
    %3303 = vmatmul.mubr.f32.gmra.mxu0 %v2127
    %v3304 = vpop.f32.mrf.mxu0
    %v3305 = vadd.f32 %v2406, %v3304
    %v3306 = vpop.f32.mrf.mxu0
    %v3307 = vadd.f32 %v2410, %v3306
    %3308 = vmatprep.mubr.f32.mxu0 %v2130
    %3309 = vmatmul.mubr.f32.gmra.mxu0 %v2129
    %v3310 = vpop.f32.mrf.mxu0
    %v3311 = vadd.f32 %v2406, %v3310
    %v3312 = vpop.f32.mrf.mxu0
    %v3313 = vadd.f32 %v2410, %v3312
    %3314 = vmatprep.mubr.f32.mxu0 %v2132
    %3315 = vmatmul.mubr.f32.gmra.mxu0 %v2131
    %v3316 = vpop.f32.mrf.mxu0
    %v3317 = vadd.f32 %v2406, %v3316
    %v3318 = vpop.f32.mrf.mxu0
    %v3319 = vadd.f32 %v2410, %v3318
    %3320 = vmatprep.mubr.f32.mxu0 %v2134
    %3321 = vmatmul.mubr.f32.gmra.mxu0 %v2133
    %v3322 = vpop.f32.mrf.mxu0
    %v3323 = vadd.f32 %v2406, %v3322
    %v3324 = vpop.f32.mrf.mxu0
    %v3325 = vadd.f32 %v2410, %v3324
    %3326 = vmatprep.mubr.f32.mxu0 %v2136
    %3327 = vmatmul.mubr.f32.gmra.mxu0 %v2135
    %v3328 = vpop.f32.mrf.mxu0
    %v3329 = vadd.f32 %v2406, %v3328
    %v3330 = vpop.f32.mrf.mxu0
    %v3331 = vadd.f32 %v2410, %v3330
    %3332 = vdwg.mxu0
    %3333 = vmatprep.subr.mxu0 %v2262
    %3334 = vmatpush1.msra.mxu0 %v2261
    %3335 = vmatprep.subr.mxu0 %v2254
    %3336 = vmatpush1.msra.mxu0 %v2253
    %3337 = vmatprep.subr.mxu0 %v2246
    %3338 = vmatpush1.msra.mxu0 %v2245
    %3339 = vmatprep.subr.mxu0 %v2238
    %3340 = vmatpush1.msra.mxu0 %v2237
    %3341 = vmatprep.subr.mxu0 %v2230
    %3342 = vmatpush1.msra.mxu0 %v2229
    %3343 = vmatprep.subr.mxu0 %v2222
    %3344 = vmatpush1.msra.mxu0 %v2221
    %3345 = vmatprep.subr.mxu0 %v2214
    %3346 = vmatpush1.msra.mxu0 %v2213
    %3347 = vmatprep.subr.mxu0 %v2206
    %3348 = vmatpush1.msra.mxu0 %v2205
    %3349 = vmatprep.subr.mxu0 %v2198
    %3350 = vmatpush1.msra.mxu0 %v2197
    %3351 = vmatprep.subr.mxu0 %v2190
    %3352 = vmatpush1.msra.mxu0 %v2189
    %3353 = vmatprep.subr.mxu0 %v2182
    %3354 = vmatpush1.msra.mxu0 %v2181
    %3355 = vmatprep.subr.mxu0 %v2174
    %3356 = vmatpush1.msra.mxu0 %v2173
    %3357 = vmatprep.subr.mxu0 %v2166
    %3358 = vmatpush1.msra.mxu0 %v2165
    %3359 = vmatprep.subr.mxu0 %v2158
    %3360 = vmatpush1.msra.mxu0 %v2157
    %3361 = vmatprep.subr.mxu0 %v2150
    %3362 = vmatpush1.msra.mxu0 %v2149
    %3363 = vmatprep.subr.mxu0 %v2142
    %3364 = vmatpush1.msra.mxu0 %v2141
    %3365 = vmatprep.subr.mxu0 %v2390
    %3366 = vmatpush2.msra.mxu0 %v2389
    %3367 = vmatprep.subr.mxu0 %v2382
    %3368 = vmatpush2.msra.mxu0 %v2381
    %3369 = vmatprep.subr.mxu0 %v2374
    %3370 = vmatpush2.msra.mxu0 %v2373
    %3371 = vmatprep.subr.mxu0 %v2366
    %3372 = vmatpush2.msra.mxu0 %v2365
    %3373 = vmatprep.subr.mxu0 %v2358
    %3374 = vmatpush2.msra.mxu0 %v2357
    %3375 = vmatprep.subr.mxu0 %v2350
    %3376 = vmatpush2.msra.mxu0 %v2349
    %3377 = vmatprep.subr.mxu0 %v2342
    %3378 = vmatpush2.msra.mxu0 %v2341
    %3379 = vmatprep.subr.mxu0 %v2334
    %3380 = vmatpush2.msra.mxu0 %v2333
    %3381 = vmatprep.subr.mxu0 %v2326
    %3382 = vmatpush2.msra.mxu0 %v2325
    %3383 = vmatprep.subr.mxu0 %v2318
    %3384 = vmatpush2.msra.mxu0 %v2317
    %3385 = vmatprep.subr.mxu0 %v2310
    %3386 = vmatpush2.msra.mxu0 %v2309
    %3387 = vmatprep.subr.mxu0 %v2302
    %3388 = vmatpush2.msra.mxu0 %v2301
    %3389 = vmatprep.subr.mxu0 %v2294
    %3390 = vmatpush2.msra.mxu0 %v2293
    %3391 = vmatprep.subr.mxu0 %v2286
    %3392 = vmatpush2.msra.mxu0 %v2285
    %3393 = vmatprep.subr.mxu0 %v2278
    %3394 = vmatpush2.msra.mxu0 %v2277
    %3395 = vmatprep.subr.mxu0 %v2270
    %3396 = vmatpush2.msra.mxu0 %v2269
    %3397 = vmatprep.mubr.f32.mxu0 %v2010
    %3398 = vmatmul.mubr.f32.gmra.mxu0 %v2009
    %v3399 = vpop.f32.mrf.mxu0
    %v3400 = vadd.f32 %v2414, %v3399
    %v3401 = vpop.f32.mrf.mxu0
    %v3402 = vadd.f32 %v2418, %v3401
    %3403 = vmatprep.mubr.f32.mxu0 %v2012
    %3404 = vmatmul.mubr.f32.gmra.mxu0 %v2011
    %v3405 = vpop.f32.mrf.mxu0
    %v3406 = vadd.f32 %v2414, %v3405
    %v3407 = vpop.f32.mrf.mxu0
    %v3408 = vadd.f32 %v2418, %v3407
    %3409 = vmatprep.mubr.f32.mxu0 %v2014
    %3410 = vmatmul.mubr.f32.gmra.mxu0 %v2013
    %v3411 = vpop.f32.mrf.mxu0
    %v3412 = vadd.f32 %v2414, %v3411
    %v3413 = vpop.f32.mrf.mxu0
    %v3414 = vadd.f32 %v2418, %v3413
    %3415 = vmatprep.mubr.f32.mxu0 %v2016
    %3416 = vmatmul.mubr.f32.gmra.mxu0 %v2015
    %v3417 = vpop.f32.mrf.mxu0
    %v3418 = vadd.f32 %v2414, %v3417
    %v3419 = vpop.f32.mrf.mxu0
    %v3420 = vadd.f32 %v2418, %v3419
    %3421 = vmatprep.mubr.f32.mxu0 %v2018
    %3422 = vmatmul.mubr.f32.gmra.mxu0 %v2017
    %v3423 = vpop.f32.mrf.mxu0
    %v3424 = vadd.f32 %v2414, %v3423
    %v3425 = vpop.f32.mrf.mxu0
    %v3426 = vadd.f32 %v2418, %v3425
    %3427 = vmatprep.mubr.f32.mxu0 %v2020
    %3428 = vmatmul.mubr.f32.gmra.mxu0 %v2019
    %v3429 = vpop.f32.mrf.mxu0
    %v3430 = vadd.f32 %v2414, %v3429
    %v3431 = vpop.f32.mrf.mxu0
    %v3432 = vadd.f32 %v2418, %v3431
    %3433 = vmatprep.mubr.f32.mxu0 %v2022
    %3434 = vmatmul.mubr.f32.gmra.mxu0 %v2021
    %v3435 = vpop.f32.mrf.mxu0
    %v3436 = vadd.f32 %v2414, %v3435
    %v3437 = vpop.f32.mrf.mxu0
    %v3438 = vadd.f32 %v2418, %v3437
    %3439 = vmatprep.mubr.f32.mxu0 %v2024
    %3440 = vmatmul.mubr.f32.gmra.mxu0 %v2023
    %v3441 = vpop.f32.mrf.mxu0
    %v3442 = vadd.f32 %v2414, %v3441
    %v3443 = vpop.f32.mrf.mxu0
    %v3444 = vadd.f32 %v2418, %v3443
    %3445 = vmatprep.mubr.f32.mxu0 %v2026
    %3446 = vmatmul.mubr.f32.gmra.mxu0 %v2025
    %v3447 = vpop.f32.mrf.mxu0
    %v3448 = vadd.f32 %v2414, %v3447
    %v3449 = vpop.f32.mrf.mxu0
    %v3450 = vadd.f32 %v2418, %v3449
    %3451 = vmatprep.mubr.f32.mxu0 %v2028
    %3452 = vmatmul.mubr.f32.gmra.mxu0 %v2027
    %v3453 = vpop.f32.mrf.mxu0
    %v3454 = vadd.f32 %v2414, %v3453
    %v3455 = vpop.f32.mrf.mxu0
    %v3456 = vadd.f32 %v2418, %v3455
    %3457 = vmatprep.mubr.f32.mxu0 %v2030
    %3458 = vmatmul.mubr.f32.gmra.mxu0 %v2029
    %v3459 = vpop.f32.mrf.mxu0
    %v3460 = vadd.f32 %v2414, %v3459
    %v3461 = vpop.f32.mrf.mxu0
    %v3462 = vadd.f32 %v2418, %v3461
    %3463 = vmatprep.mubr.f32.mxu0 %v2032
    %3464 = vmatmul.mubr.f32.gmra.mxu0 %v2031
    %v3465 = vpop.f32.mrf.mxu0
    %v3466 = vadd.f32 %v2414, %v3465
    %v3467 = vpop.f32.mrf.mxu0
    %v3468 = vadd.f32 %v2418, %v3467
    %3469 = vmatprep.mubr.f32.mxu0 %v2034
    %3470 = vmatmul.mubr.f32.gmra.mxu0 %v2033
    %v3471 = vpop.f32.mrf.mxu0
    %v3472 = vadd.f32 %v2414, %v3471
    %v3473 = vpop.f32.mrf.mxu0
    %v3474 = vadd.f32 %v2418, %v3473
    %3475 = vmatprep.mubr.f32.mxu0 %v2036
    %3476 = vmatmul.mubr.f32.gmra.mxu0 %v2035
    %v3477 = vpop.f32.mrf.mxu0
    %v3478 = vadd.f32 %v2414, %v3477
    %v3479 = vpop.f32.mrf.mxu0
    %v3480 = vadd.f32 %v2418, %v3479
    %3481 = vmatprep.mubr.f32.mxu0 %v2038
    %3482 = vmatmul.mubr.f32.gmra.mxu0 %v2037
    %v3483 = vpop.f32.mrf.mxu0
    %v3484 = vadd.f32 %v2414, %v3483
    %v3485 = vpop.f32.mrf.mxu0
    %v3486 = vadd.f32 %v2418, %v3485
    %3487 = vmatprep.mubr.f32.mxu0 %v2040
    %3488 = vmatmul.mubr.f32.gmra.mxu0 %v2039
    %v3489 = vpop.f32.mrf.mxu0
    %v3490 = vadd.f32 %v2414, %v3489
    %v3491 = vpop.f32.mrf.mxu0
    %v3492 = vadd.f32 %v2418, %v3491
    %3493 = vmatprep.mubr.f32.mxu0 %v2042
    %3494 = vmatmul.mubr.f32.gmra.mxu0 %v2041
    %v3495 = vpop.f32.mrf.mxu0
    %v3496 = vadd.f32 %v2414, %v3495
    %v3497 = vpop.f32.mrf.mxu0
    %v3498 = vadd.f32 %v2418, %v3497
    %3499 = vmatprep.mubr.f32.mxu0 %v2044
    %3500 = vmatmul.mubr.f32.gmra.mxu0 %v2043
    %v3501 = vpop.f32.mrf.mxu0
    %v3502 = vadd.f32 %v2414, %v3501
    %v3503 = vpop.f32.mrf.mxu0
    %v3504 = vadd.f32 %v2418, %v3503
    %3505 = vmatprep.mubr.f32.mxu0 %v2046
    %3506 = vmatmul.mubr.f32.gmra.mxu0 %v2045
    %v3507 = vpop.f32.mrf.mxu0
    %v3508 = vadd.f32 %v2414, %v3507
    %v3509 = vpop.f32.mrf.mxu0
    %v3510 = vadd.f32 %v2418, %v3509
    %3511 = vmatprep.mubr.f32.mxu0 %v2048
    %3512 = vmatmul.mubr.f32.gmra.mxu0 %v2047
    %v3513 = vpop.f32.mrf.mxu0
    %v3514 = vadd.f32 %v2414, %v3513
    %v3515 = vpop.f32.mrf.mxu0
    %v3516 = vadd.f32 %v2418, %v3515
    %3517 = vmatprep.mubr.f32.mxu0 %v2050
    %3518 = vmatmul.mubr.f32.gmra.mxu0 %v2049
    %v3519 = vpop.f32.mrf.mxu0
    %v3520 = vadd.f32 %v2414, %v3519
    %v3521 = vpop.f32.mrf.mxu0
    %v3522 = vadd.f32 %v2418, %v3521
    %3523 = vmatprep.mubr.f32.mxu0 %v2052
    %3524 = vmatmul.mubr.f32.gmra.mxu0 %v2051
    %v3525 = vpop.f32.mrf.mxu0
    %v3526 = vadd.f32 %v2414, %v3525
    %v3527 = vpop.f32.mrf.mxu0
    %v3528 = vadd.f32 %v2418, %v3527
    %3529 = vmatprep.mubr.f32.mxu0 %v2054
    %3530 = vmatmul.mubr.f32.gmra.mxu0 %v2053
    %v3531 = vpop.f32.mrf.mxu0
    %v3532 = vadd.f32 %v2414, %v3531
    %v3533 = vpop.f32.mrf.mxu0
    %v3534 = vadd.f32 %v2418, %v3533
    %3535 = vmatprep.mubr.f32.mxu0 %v2056
    %3536 = vmatmul.mubr.f32.gmra.mxu0 %v2055
    %v3537 = vpop.f32.mrf.mxu0
    %v3538 = vadd.f32 %v2414, %v3537
    %v3539 = vpop.f32.mrf.mxu0
    %v3540 = vadd.f32 %v2418, %v3539
    %3541 = vmatprep.mubr.f32.mxu0 %v2058
    %3542 = vmatmul.mubr.f32.gmra.mxu0 %v2057
    %v3543 = vpop.f32.mrf.mxu0
    %v3544 = vadd.f32 %v2414, %v3543
    %v3545 = vpop.f32.mrf.mxu0
    %v3546 = vadd.f32 %v2418, %v3545
    %3547 = vmatprep.mubr.f32.mxu0 %v2060
    %3548 = vmatmul.mubr.f32.gmra.mxu0 %v2059
    %v3549 = vpop.f32.mrf.mxu0
    %v3550 = vadd.f32 %v2414, %v3549
    %v3551 = vpop.f32.mrf.mxu0
    %v3552 = vadd.f32 %v2418, %v3551
    %3553 = vmatprep.mubr.f32.mxu0 %v2062
    %3554 = vmatmul.mubr.f32.gmra.mxu0 %v2061
    %v3555 = vpop.f32.mrf.mxu0
    %v3556 = vadd.f32 %v2414, %v3555
    %v3557 = vpop.f32.mrf.mxu0
    %v3558 = vadd.f32 %v2418, %v3557
    %3559 = vmatprep.mubr.f32.mxu0 %v2064
    %3560 = vmatmul.mubr.f32.gmra.mxu0 %v2063
    %v3561 = vpop.f32.mrf.mxu0
    %v3562 = vadd.f32 %v2414, %v3561
    %v3563 = vpop.f32.mrf.mxu0
    %v3564 = vadd.f32 %v2418, %v3563
    %3565 = vmatprep.mubr.f32.mxu0 %v2066
    %3566 = vmatmul.mubr.f32.gmra.mxu0 %v2065
    %v3567 = vpop.f32.mrf.mxu0
    %v3568 = vadd.f32 %v2414, %v3567
    %v3569 = vpop.f32.mrf.mxu0
    %v3570 = vadd.f32 %v2418, %v3569
    %3571 = vmatprep.mubr.f32.mxu0 %v2068
    %3572 = vmatmul.mubr.f32.gmra.mxu0 %v2067
    %v3573 = vpop.f32.mrf.mxu0
    %v3574 = vadd.f32 %v2414, %v3573
    %v3575 = vpop.f32.mrf.mxu0
    %v3576 = vadd.f32 %v2418, %v3575
    %3577 = vmatprep.mubr.f32.mxu0 %v2070
    %3578 = vmatmul.mubr.f32.gmra.mxu0 %v2069
    %v3579 = vpop.f32.mrf.mxu0
    %v3580 = vadd.f32 %v2414, %v3579
    %v3581 = vpop.f32.mrf.mxu0
    %v3582 = vadd.f32 %v2418, %v3581
    %3583 = vmatprep.mubr.f32.mxu0 %v2072
    %3584 = vmatmul.mubr.f32.gmra.mxu0 %v2071
    %v3585 = vpop.f32.mrf.mxu0
    %v3586 = vadd.f32 %v2414, %v3585
    %v3587 = vpop.f32.mrf.mxu0
    %v3588 = vadd.f32 %v2418, %v3587
    %3589 = vmatprep.mubr.f32.mxu0 %v2074
    %3590 = vmatmul.mubr.f32.gmra.mxu0 %v2073
    %v3591 = vpop.f32.mrf.mxu0
    %v3592 = vadd.f32 %v2414, %v3591
    %v3593 = vpop.f32.mrf.mxu0
    %v3594 = vadd.f32 %v2418, %v3593
    %3595 = vmatprep.mubr.f32.mxu0 %v2076
    %3596 = vmatmul.mubr.f32.gmra.mxu0 %v2075
    %v3597 = vpop.f32.mrf.mxu0
    %v3598 = vadd.f32 %v2414, %v3597
    %v3599 = vpop.f32.mrf.mxu0
    %v3600 = vadd.f32 %v2418, %v3599
    %3601 = vmatprep.mubr.f32.mxu0 %v2078
    %3602 = vmatmul.mubr.f32.gmra.mxu0 %v2077
    %v3603 = vpop.f32.mrf.mxu0
    %v3604 = vadd.f32 %v2414, %v3603
    %v3605 = vpop.f32.mrf.mxu0
    %v3606 = vadd.f32 %v2418, %v3605
    %3607 = vmatprep.mubr.f32.mxu0 %v2080
    %3608 = vmatmul.mubr.f32.gmra.mxu0 %v2079
    %v3609 = vpop.f32.mrf.mxu0
    %v3610 = vadd.f32 %v2414, %v3609
    %v3611 = vpop.f32.mrf.mxu0
    %v3612 = vadd.f32 %v2418, %v3611
    %3613 = vmatprep.mubr.f32.mxu0 %v2082
    %3614 = vmatmul.mubr.f32.gmra.mxu0 %v2081
    %v3615 = vpop.f32.mrf.mxu0
    %v3616 = vadd.f32 %v2414, %v3615
    %v3617 = vpop.f32.mrf.mxu0
    %v3618 = vadd.f32 %v2418, %v3617
    %3619 = vmatprep.mubr.f32.mxu0 %v2084
    %3620 = vmatmul.mubr.f32.gmra.mxu0 %v2083
    %v3621 = vpop.f32.mrf.mxu0
    %v3622 = vadd.f32 %v2414, %v3621
    %v3623 = vpop.f32.mrf.mxu0
    %v3624 = vadd.f32 %v2418, %v3623
    %3625 = vmatprep.mubr.f32.mxu0 %v2086
    %3626 = vmatmul.mubr.f32.gmra.mxu0 %v2085
    %v3627 = vpop.f32.mrf.mxu0
    %v3628 = vadd.f32 %v2414, %v3627
    %v3629 = vpop.f32.mrf.mxu0
    %v3630 = vadd.f32 %v2418, %v3629
    %3631 = vmatprep.mubr.f32.mxu0 %v2088
    %3632 = vmatmul.mubr.f32.gmra.mxu0 %v2087
    %v3633 = vpop.f32.mrf.mxu0
    %v3634 = vadd.f32 %v2414, %v3633
    %v3635 = vpop.f32.mrf.mxu0
    %v3636 = vadd.f32 %v2418, %v3635
    %3637 = vmatprep.mubr.f32.mxu0 %v2090
    %3638 = vmatmul.mubr.f32.gmra.mxu0 %v2089
    %v3639 = vpop.f32.mrf.mxu0
    %v3640 = vadd.f32 %v2414, %v3639
    %v3641 = vpop.f32.mrf.mxu0
    %v3642 = vadd.f32 %v2418, %v3641
    %3643 = vmatprep.mubr.f32.mxu0 %v2092
    %3644 = vmatmul.mubr.f32.gmra.mxu0 %v2091
    %v3645 = vpop.f32.mrf.mxu0
    %v3646 = vadd.f32 %v2414, %v3645
    %v3647 = vpop.f32.mrf.mxu0
    %v3648 = vadd.f32 %v2418, %v3647
    %3649 = vmatprep.mubr.f32.mxu0 %v2094
    %3650 = vmatmul.mubr.f32.gmra.mxu0 %v2093
    %v3651 = vpop.f32.mrf.mxu0
    %v3652 = vadd.f32 %v2414, %v3651
    %v3653 = vpop.f32.mrf.mxu0
    %v3654 = vadd.f32 %v2418, %v3653
    %3655 = vmatprep.mubr.f32.mxu0 %v2096
    %3656 = vmatmul.mubr.f32.gmra.mxu0 %v2095
    %v3657 = vpop.f32.mrf.mxu0
    %v3658 = vadd.f32 %v2414, %v3657
    %v3659 = vpop.f32.mrf.mxu0
    %v3660 = vadd.f32 %v2418, %v3659
    %3661 = vmatprep.mubr.f32.mxu0 %v2098
    %3662 = vmatmul.mubr.f32.gmra.mxu0 %v2097
    %v3663 = vpop.f32.mrf.mxu0
    %v3664 = vadd.f32 %v2414, %v3663
    %v3665 = vpop.f32.mrf.mxu0
    %v3666 = vadd.f32 %v2418, %v3665
    %3667 = vmatprep.mubr.f32.mxu0 %v2100
    %3668 = vmatmul.mubr.f32.gmra.mxu0 %v2099
    %v3669 = vpop.f32.mrf.mxu0
    %v3670 = vadd.f32 %v2414, %v3669
    %v3671 = vpop.f32.mrf.mxu0
    %v3672 = vadd.f32 %v2418, %v3671
    %3673 = vmatprep.mubr.f32.mxu0 %v2102
    %3674 = vmatmul.mubr.f32.gmra.mxu0 %v2101
    %v3675 = vpop.f32.mrf.mxu0
    %v3676 = vadd.f32 %v2414, %v3675
    %v3677 = vpop.f32.mrf.mxu0
    %v3678 = vadd.f32 %v2418, %v3677
    %3679 = vmatprep.mubr.f32.mxu0 %v2104
    %3680 = vmatmul.mubr.f32.gmra.mxu0 %v2103
    %v3681 = vpop.f32.mrf.mxu0
    %v3682 = vadd.f32 %v2414, %v3681
    %v3683 = vpop.f32.mrf.mxu0
    %v3684 = vadd.f32 %v2418, %v3683
    %3685 = vmatprep.mubr.f32.mxu0 %v2106
    %3686 = vmatmul.mubr.f32.gmra.mxu0 %v2105
    %v3687 = vpop.f32.mrf.mxu0
    %v3688 = vadd.f32 %v2414, %v3687
    %v3689 = vpop.f32.mrf.mxu0
    %v3690 = vadd.f32 %v2418, %v3689
    %3691 = vmatprep.mubr.f32.mxu0 %v2108
    %3692 = vmatmul.mubr.f32.gmra.mxu0 %v2107
    %v3693 = vpop.f32.mrf.mxu0
    %v3694 = vadd.f32 %v2414, %v3693
    %v3695 = vpop.f32.mrf.mxu0
    %v3696 = vadd.f32 %v2418, %v3695
    %3697 = vmatprep.mubr.f32.mxu0 %v2110
    %3698 = vmatmul.mubr.f32.gmra.mxu0 %v2109
    %v3699 = vpop.f32.mrf.mxu0
    %v3700 = vadd.f32 %v2414, %v3699
    %v3701 = vpop.f32.mrf.mxu0
    %v3702 = vadd.f32 %v2418, %v3701
    %3703 = vmatprep.mubr.f32.mxu0 %v2112
    %3704 = vmatmul.mubr.f32.gmra.mxu0 %v2111
    %v3705 = vpop.f32.mrf.mxu0
    %v3706 = vadd.f32 %v2414, %v3705
    %v3707 = vpop.f32.mrf.mxu0
    %v3708 = vadd.f32 %v2418, %v3707
    %3709 = vmatprep.mubr.f32.mxu0 %v2114
    %3710 = vmatmul.mubr.f32.gmra.mxu0 %v2113
    %v3711 = vpop.f32.mrf.mxu0
    %v3712 = vadd.f32 %v2414, %v3711
    %v3713 = vpop.f32.mrf.mxu0
    %v3714 = vadd.f32 %v2418, %v3713
    %3715 = vmatprep.mubr.f32.mxu0 %v2116
    %3716 = vmatmul.mubr.f32.gmra.mxu0 %v2115
    %v3717 = vpop.f32.mrf.mxu0
    %v3718 = vadd.f32 %v2414, %v3717
    %v3719 = vpop.f32.mrf.mxu0
    %v3720 = vadd.f32 %v2418, %v3719
    %3721 = vmatprep.mubr.f32.mxu0 %v2118
    %3722 = vmatmul.mubr.f32.gmra.mxu0 %v2117
    %v3723 = vpop.f32.mrf.mxu0
    %v3724 = vadd.f32 %v2414, %v3723
    %v3725 = vpop.f32.mrf.mxu0
    %v3726 = vadd.f32 %v2418, %v3725
    %3727 = vmatprep.mubr.f32.mxu0 %v2120
    %3728 = vmatmul.mubr.f32.gmra.mxu0 %v2119
    %v3729 = vpop.f32.mrf.mxu0
    %v3730 = vadd.f32 %v2414, %v3729
    %v3731 = vpop.f32.mrf.mxu0
    %v3732 = vadd.f32 %v2418, %v3731
    %3733 = vmatprep.mubr.f32.mxu0 %v2122
    %3734 = vmatmul.mubr.f32.gmra.mxu0 %v2121
    %v3735 = vpop.f32.mrf.mxu0
    %v3736 = vadd.f32 %v2414, %v3735
    %v3737 = vpop.f32.mrf.mxu0
    %v3738 = vadd.f32 %v2418, %v3737
    %3739 = vmatprep.mubr.f32.mxu0 %v2124
    %3740 = vmatmul.mubr.f32.gmra.mxu0 %v2123
    %v3741 = vpop.f32.mrf.mxu0
    %v3742 = vadd.f32 %v2414, %v3741
    %v3743 = vpop.f32.mrf.mxu0
    %v3744 = vadd.f32 %v2418, %v3743
    %3745 = vmatprep.mubr.f32.mxu0 %v2126
    %3746 = vmatmul.mubr.f32.gmra.mxu0 %v2125
    %v3747 = vpop.f32.mrf.mxu0
    %v3748 = vadd.f32 %v2414, %v3747
    %v3749 = vpop.f32.mrf.mxu0
    %v3750 = vadd.f32 %v2418, %v3749
    %3751 = vmatprep.mubr.f32.mxu0 %v2128
    %3752 = vmatmul.mubr.f32.gmra.mxu0 %v2127
    %v3753 = vpop.f32.mrf.mxu0
    %v3754 = vadd.f32 %v2414, %v3753
    %v3755 = vpop.f32.mrf.mxu0
    %v3756 = vadd.f32 %v2418, %v3755
    %3757 = vmatprep.mubr.f32.mxu0 %v2130
    %3758 = vmatmul.mubr.f32.gmra.mxu0 %v2129
    %v3759 = vpop.f32.mrf.mxu0
    %v3760 = vadd.f32 %v2414, %v3759
    %v3761 = vpop.f32.mrf.mxu0
    %v3762 = vadd.f32 %v2418, %v3761
    %3763 = vmatprep.mubr.f32.mxu0 %v2132
    %3764 = vmatmul.mubr.f32.gmra.mxu0 %v2131
    %v3765 = vpop.f32.mrf.mxu0
    %v3766 = vadd.f32 %v2414, %v3765
    %v3767 = vpop.f32.mrf.mxu0
    %v3768 = vadd.f32 %v2418, %v3767
    %3769 = vmatprep.mubr.f32.mxu0 %v2134
    %3770 = vmatmul.mubr.f32.gmra.mxu0 %v2133
    %v3771 = vpop.f32.mrf.mxu0
    %v3772 = vadd.f32 %v2414, %v3771
    %v3773 = vpop.f32.mrf.mxu0
    %v3774 = vadd.f32 %v2418, %v3773
    %3775 = vmatprep.mubr.f32.mxu0 %v2136
    %3776 = vmatmul.mubr.f32.gmra.mxu0 %v2135
    %v3777 = vpop.f32.mrf.mxu0
    %v3778 = vadd.f32 %v2414, %v3777
    %v3779 = vpop.f32.mrf.mxu0
    %v3780 = vadd.f32 %v2418, %v3779
    %3781 = vdwg.mxu0
    %3782 = vmatprep.subr.mxu0 %v2264
    %3783 = vmatpush1.msra.mxu0 %v2263
    %3784 = vmatprep.subr.mxu0 %v2256
    %3785 = vmatpush1.msra.mxu0 %v2255
    %3786 = vmatprep.subr.mxu0 %v2248
    %3787 = vmatpush1.msra.mxu0 %v2247
    %3788 = vmatprep.subr.mxu0 %v2240
    %3789 = vmatpush1.msra.mxu0 %v2239
    %3790 = vmatprep.subr.mxu0 %v2232
    %3791 = vmatpush1.msra.mxu0 %v2231
    %3792 = vmatprep.subr.mxu0 %v2224
    %3793 = vmatpush1.msra.mxu0 %v2223
    %3794 = vmatprep.subr.mxu0 %v2216
    %3795 = vmatpush1.msra.mxu0 %v2215
    %3796 = vmatprep.subr.mxu0 %v2208
    %3797 = vmatpush1.msra.mxu0 %v2207
    %3798 = vmatprep.subr.mxu0 %v2200
    %3799 = vmatpush1.msra.mxu0 %v2199
    %3800 = vmatprep.subr.mxu0 %v2192
    %3801 = vmatpush1.msra.mxu0 %v2191
    %3802 = vmatprep.subr.mxu0 %v2184
    %3803 = vmatpush1.msra.mxu0 %v2183
    %3804 = vmatprep.subr.mxu0 %v2176
    %3805 = vmatpush1.msra.mxu0 %v2175
    %3806 = vmatprep.subr.mxu0 %v2168
    %3807 = vmatpush1.msra.mxu0 %v2167
    %3808 = vmatprep.subr.mxu0 %v2160
    %3809 = vmatpush1.msra.mxu0 %v2159
    %3810 = vmatprep.subr.mxu0 %v2152
    %3811 = vmatpush1.msra.mxu0 %v2151
    %3812 = vmatprep.subr.mxu0 %v2144
    %3813 = vmatpush1.msra.mxu0 %v2143
    %3814 = vmatprep.subr.mxu0 %v2392
    %3815 = vmatpush2.msra.mxu0 %v2391
    %3816 = vmatprep.subr.mxu0 %v2384
    %3817 = vmatpush2.msra.mxu0 %v2383
    %3818 = vmatprep.subr.mxu0 %v2376
    %3819 = vmatpush2.msra.mxu0 %v2375
    %3820 = vmatprep.subr.mxu0 %v2368
    %3821 = vmatpush2.msra.mxu0 %v2367
    %3822 = vmatprep.subr.mxu0 %v2360
    %3823 = vmatpush2.msra.mxu0 %v2359
    %3824 = vmatprep.subr.mxu0 %v2352
    %3825 = vmatpush2.msra.mxu0 %v2351
    %3826 = vmatprep.subr.mxu0 %v2344
    %3827 = vmatpush2.msra.mxu0 %v2343
    %3828 = vmatprep.subr.mxu0 %v2336
    %3829 = vmatpush2.msra.mxu0 %v2335
    %3830 = vmatprep.subr.mxu0 %v2328
    %3831 = vmatpush2.msra.mxu0 %v2327
    %3832 = vmatprep.subr.mxu0 %v2320
    %3833 = vmatpush2.msra.mxu0 %v2319
    %3834 = vmatprep.subr.mxu0 %v2312
    %3835 = vmatpush2.msra.mxu0 %v2311
    %3836 = vmatprep.subr.mxu0 %v2304
    %3837 = vmatpush2.msra.mxu0 %v2303
    %3838 = vmatprep.subr.mxu0 %v2296
    %3839 = vmatpush2.msra.mxu0 %v2295
    %3840 = vmatprep.subr.mxu0 %v2288
    %3841 = vmatpush2.msra.mxu0 %v2287
    %3842 = vmatprep.subr.mxu0 %v2280
    %3843 = vmatpush2.msra.mxu0 %v2279
    %3844 = vmatprep.subr.mxu0 %v2272
    %3845 = vmatpush2.msra.mxu0 %v2271
    %3846 = vmatprep.mubr.f32.mxu0 %v2010
    %3847 = vmatmul.mubr.f32.gmra.mxu0 %v2009
    %v3848 = vpop.f32.mrf.mxu0
    %v3849 = vadd.f32 %v2422, %v3848
    %v3850 = vpop.f32.mrf.mxu0
    %v3851 = vadd.f32 %v2426, %v3850
    %3852 = vmatprep.mubr.f32.mxu0 %v2012
    %3853 = vmatmul.mubr.f32.gmra.mxu0 %v2011
    %v3854 = vpop.f32.mrf.mxu0
    %v3855 = vadd.f32 %v2422, %v3854
    %v3856 = vpop.f32.mrf.mxu0
    %v3857 = vadd.f32 %v2426, %v3856
    %3858 = vmatprep.mubr.f32.mxu0 %v2014
    %3859 = vmatmul.mubr.f32.gmra.mxu0 %v2013
    %v3860 = vpop.f32.mrf.mxu0
    %v3861 = vadd.f32 %v2422, %v3860
    %v3862 = vpop.f32.mrf.mxu0
    %v3863 = vadd.f32 %v2426, %v3862
    %3864 = vmatprep.mubr.f32.mxu0 %v2016
    %3865 = vmatmul.mubr.f32.gmra.mxu0 %v2015
    %v3866 = vpop.f32.mrf.mxu0
    %v3867 = vadd.f32 %v2422, %v3866
    %v3868 = vpop.f32.mrf.mxu0
    %v3869 = vadd.f32 %v2426, %v3868
    %3870 = vmatprep.mubr.f32.mxu0 %v2018
    %3871 = vmatmul.mubr.f32.gmra.mxu0 %v2017
    %v3872 = vpop.f32.mrf.mxu0
    %v3873 = vadd.f32 %v2422, %v3872
    %v3874 = vpop.f32.mrf.mxu0
    %v3875 = vadd.f32 %v2426, %v3874
    %3876 = vmatprep.mubr.f32.mxu0 %v2020
    %3877 = vmatmul.mubr.f32.gmra.mxu0 %v2019
    %v3878 = vpop.f32.mrf.mxu0
    %v3879 = vadd.f32 %v2422, %v3878
    %v3880 = vpop.f32.mrf.mxu0
    %v3881 = vadd.f32 %v2426, %v3880
    %3882 = vmatprep.mubr.f32.mxu0 %v2022
    %3883 = vmatmul.mubr.f32.gmra.mxu0 %v2021
    %v3884 = vpop.f32.mrf.mxu0
    %v3885 = vadd.f32 %v2422, %v3884
    %v3886 = vpop.f32.mrf.mxu0
    %v3887 = vadd.f32 %v2426, %v3886
    %3888 = vmatprep.mubr.f32.mxu0 %v2024
    %3889 = vmatmul.mubr.f32.gmra.mxu0 %v2023
    %v3890 = vpop.f32.mrf.mxu0
    %v3891 = vadd.f32 %v2422, %v3890
    %v3892 = vpop.f32.mrf.mxu0
    %v3893 = vadd.f32 %v2426, %v3892
    %3894 = vmatprep.mubr.f32.mxu0 %v2026
    %3895 = vmatmul.mubr.f32.gmra.mxu0 %v2025
    %v3896 = vpop.f32.mrf.mxu0
    %v3897 = vadd.f32 %v2422, %v3896
    %v3898 = vpop.f32.mrf.mxu0
    %v3899 = vadd.f32 %v2426, %v3898
    %3900 = vmatprep.mubr.f32.mxu0 %v2028
    %3901 = vmatmul.mubr.f32.gmra.mxu0 %v2027
    %v3902 = vpop.f32.mrf.mxu0
    %v3903 = vadd.f32 %v2422, %v3902
    %v3904 = vpop.f32.mrf.mxu0
    %v3905 = vadd.f32 %v2426, %v3904
    %3906 = vmatprep.mubr.f32.mxu0 %v2030
    %3907 = vmatmul.mubr.f32.gmra.mxu0 %v2029
    %v3908 = vpop.f32.mrf.mxu0
    %v3909 = vadd.f32 %v2422, %v3908
    %v3910 = vpop.f32.mrf.mxu0
    %v3911 = vadd.f32 %v2426, %v3910
    %3912 = vmatprep.mubr.f32.mxu0 %v2032
    %3913 = vmatmul.mubr.f32.gmra.mxu0 %v2031
    %v3914 = vpop.f32.mrf.mxu0
    %v3915 = vadd.f32 %v2422, %v3914
    %v3916 = vpop.f32.mrf.mxu0
    %v3917 = vadd.f32 %v2426, %v3916
    %3918 = vmatprep.mubr.f32.mxu0 %v2034
    %3919 = vmatmul.mubr.f32.gmra.mxu0 %v2033
    %v3920 = vpop.f32.mrf.mxu0
    %v3921 = vadd.f32 %v2422, %v3920
    %v3922 = vpop.f32.mrf.mxu0
    %v3923 = vadd.f32 %v2426, %v3922
    %3924 = vmatprep.mubr.f32.mxu0 %v2036
    %3925 = vmatmul.mubr.f32.gmra.mxu0 %v2035
    %v3926 = vpop.f32.mrf.mxu0
    %v3927 = vadd.f32 %v2422, %v3926
    %v3928 = vpop.f32.mrf.mxu0
    %v3929 = vadd.f32 %v2426, %v3928
    %3930 = vmatprep.mubr.f32.mxu0 %v2038
    %3931 = vmatmul.mubr.f32.gmra.mxu0 %v2037
    %v3932 = vpop.f32.mrf.mxu0
    %v3933 = vadd.f32 %v2422, %v3932
    %v3934 = vpop.f32.mrf.mxu0
    %v3935 = vadd.f32 %v2426, %v3934
    %3936 = vmatprep.mubr.f32.mxu0 %v2040
    %3937 = vmatmul.mubr.f32.gmra.mxu0 %v2039
    %v3938 = vpop.f32.mrf.mxu0
    %v3939 = vadd.f32 %v2422, %v3938
    %v3940 = vpop.f32.mrf.mxu0
    %v3941 = vadd.f32 %v2426, %v3940
    %3942 = vmatprep.mubr.f32.mxu0 %v2042
    %3943 = vmatmul.mubr.f32.gmra.mxu0 %v2041
    %v3944 = vpop.f32.mrf.mxu0
    %v3945 = vadd.f32 %v2422, %v3944
    %v3946 = vpop.f32.mrf.mxu0
    %v3947 = vadd.f32 %v2426, %v3946
    %3948 = vmatprep.mubr.f32.mxu0 %v2044
    %3949 = vmatmul.mubr.f32.gmra.mxu0 %v2043
    %v3950 = vpop.f32.mrf.mxu0
    %v3951 = vadd.f32 %v2422, %v3950
    %v3952 = vpop.f32.mrf.mxu0
    %v3953 = vadd.f32 %v2426, %v3952
    %3954 = vmatprep.mubr.f32.mxu0 %v2046
    %3955 = vmatmul.mubr.f32.gmra.mxu0 %v2045
    %v3956 = vpop.f32.mrf.mxu0
    %v3957 = vadd.f32 %v2422, %v3956
    %v3958 = vpop.f32.mrf.mxu0
    %v3959 = vadd.f32 %v2426, %v3958
    %3960 = vmatprep.mubr.f32.mxu0 %v2048
    %3961 = vmatmul.mubr.f32.gmra.mxu0 %v2047
    %v3962 = vpop.f32.mrf.mxu0
    %v3963 = vadd.f32 %v2422, %v3962
    %v3964 = vpop.f32.mrf.mxu0
    %v3965 = vadd.f32 %v2426, %v3964
    %3966 = vmatprep.mubr.f32.mxu0 %v2050
    %3967 = vmatmul.mubr.f32.gmra.mxu0 %v2049
    %v3968 = vpop.f32.mrf.mxu0
    %v3969 = vadd.f32 %v2422, %v3968
    %v3970 = vpop.f32.mrf.mxu0
    %v3971 = vadd.f32 %v2426, %v3970
    %3972 = vmatprep.mubr.f32.mxu0 %v2052
    %3973 = vmatmul.mubr.f32.gmra.mxu0 %v2051
    %v3974 = vpop.f32.mrf.mxu0
    %v3975 = vadd.f32 %v2422, %v3974
    %v3976 = vpop.f32.mrf.mxu0
    %v3977 = vadd.f32 %v2426, %v3976
    %3978 = vmatprep.mubr.f32.mxu0 %v2054
    %3979 = vmatmul.mubr.f32.gmra.mxu0 %v2053
    %v3980 = vpop.f32.mrf.mxu0
    %v3981 = vadd.f32 %v2422, %v3980
    %v3982 = vpop.f32.mrf.mxu0
    %v3983 = vadd.f32 %v2426, %v3982
    %3984 = vmatprep.mubr.f32.mxu0 %v2056
    %3985 = vmatmul.mubr.f32.gmra.mxu0 %v2055
    %v3986 = vpop.f32.mrf.mxu0
    %v3987 = vadd.f32 %v2422, %v3986
    %v3988 = vpop.f32.mrf.mxu0
    %v3989 = vadd.f32 %v2426, %v3988
    %3990 = vmatprep.mubr.f32.mxu0 %v2058
    %3991 = vmatmul.mubr.f32.gmra.mxu0 %v2057
    %v3992 = vpop.f32.mrf.mxu0
    %v3993 = vadd.f32 %v2422, %v3992
    %v3994 = vpop.f32.mrf.mxu0
    %v3995 = vadd.f32 %v2426, %v3994
    %3996 = vmatprep.mubr.f32.mxu0 %v2060
    %3997 = vmatmul.mubr.f32.gmra.mxu0 %v2059
    %v3998 = vpop.f32.mrf.mxu0
    %v3999 = vadd.f32 %v2422, %v3998
    %v4000 = vpop.f32.mrf.mxu0
    %v4001 = vadd.f32 %v2426, %v4000
    %4002 = vmatprep.mubr.f32.mxu0 %v2062
    %4003 = vmatmul.mubr.f32.gmra.mxu0 %v2061
    %v4004 = vpop.f32.mrf.mxu0
    %v4005 = vadd.f32 %v2422, %v4004
    %v4006 = vpop.f32.mrf.mxu0
    %v4007 = vadd.f32 %v2426, %v4006
    %4008 = vmatprep.mubr.f32.mxu0 %v2064
    %4009 = vmatmul.mubr.f32.gmra.mxu0 %v2063
    %v4010 = vpop.f32.mrf.mxu0
    %v4011 = vadd.f32 %v2422, %v4010
    %v4012 = vpop.f32.mrf.mxu0
    %v4013 = vadd.f32 %v2426, %v4012
    %4014 = vmatprep.mubr.f32.mxu0 %v2066
    %4015 = vmatmul.mubr.f32.gmra.mxu0 %v2065
    %v4016 = vpop.f32.mrf.mxu0
    %v4017 = vadd.f32 %v2422, %v4016
    %v4018 = vpop.f32.mrf.mxu0
    %v4019 = vadd.f32 %v2426, %v4018
    %4020 = vmatprep.mubr.f32.mxu0 %v2068
    %4021 = vmatmul.mubr.f32.gmra.mxu0 %v2067
    %v4022 = vpop.f32.mrf.mxu0
    %v4023 = vadd.f32 %v2422, %v4022
    %v4024 = vpop.f32.mrf.mxu0
    %v4025 = vadd.f32 %v2426, %v4024
    %4026 = vmatprep.mubr.f32.mxu0 %v2070
    %4027 = vmatmul.mubr.f32.gmra.mxu0 %v2069
    %v4028 = vpop.f32.mrf.mxu0
    %v4029 = vadd.f32 %v2422, %v4028
    %v4030 = vpop.f32.mrf.mxu0
    %v4031 = vadd.f32 %v2426, %v4030
    %4032 = vmatprep.mubr.f32.mxu0 %v2072
    %4033 = vmatmul.mubr.f32.gmra.mxu0 %v2071
    %v4034 = vpop.f32.mrf.mxu0
    %v4035 = vadd.f32 %v2422, %v4034
    %v4036 = vpop.f32.mrf.mxu0
    %v4037 = vadd.f32 %v2426, %v4036
    %4038 = vmatprep.mubr.f32.mxu0 %v2074
    %4039 = vmatmul.mubr.f32.gmra.mxu0 %v2073
    %v4040 = vpop.f32.mrf.mxu0
    %v4041 = vadd.f32 %v2422, %v4040
    %v4042 = vpop.f32.mrf.mxu0
    %v4043 = vadd.f32 %v2426, %v4042
    %4044 = vmatprep.mubr.f32.mxu0 %v2076
    %4045 = vmatmul.mubr.f32.gmra.mxu0 %v2075
    %v4046 = vpop.f32.mrf.mxu0
    %v4047 = vadd.f32 %v2422, %v4046
    %v4048 = vpop.f32.mrf.mxu0
    %v4049 = vadd.f32 %v2426, %v4048
    %4050 = vmatprep.mubr.f32.mxu0 %v2078
    %4051 = vmatmul.mubr.f32.gmra.mxu0 %v2077
    %v4052 = vpop.f32.mrf.mxu0
    %v4053 = vadd.f32 %v2422, %v4052
    %v4054 = vpop.f32.mrf.mxu0
    %v4055 = vadd.f32 %v2426, %v4054
    %4056 = vmatprep.mubr.f32.mxu0 %v2080
    %4057 = vmatmul.mubr.f32.gmra.mxu0 %v2079
    %v4058 = vpop.f32.mrf.mxu0
    %v4059 = vadd.f32 %v2422, %v4058
    %v4060 = vpop.f32.mrf.mxu0
    %v4061 = vadd.f32 %v2426, %v4060
    %4062 = vmatprep.mubr.f32.mxu0 %v2082
    %4063 = vmatmul.mubr.f32.gmra.mxu0 %v2081
    %v4064 = vpop.f32.mrf.mxu0
    %v4065 = vadd.f32 %v2422, %v4064
    %v4066 = vpop.f32.mrf.mxu0
    %v4067 = vadd.f32 %v2426, %v4066
    %4068 = vmatprep.mubr.f32.mxu0 %v2084
    %4069 = vmatmul.mubr.f32.gmra.mxu0 %v2083
    %v4070 = vpop.f32.mrf.mxu0
    %v4071 = vadd.f32 %v2422, %v4070
    %v4072 = vpop.f32.mrf.mxu0
    %v4073 = vadd.f32 %v2426, %v4072
    %4074 = vmatprep.mubr.f32.mxu0 %v2086
    %4075 = vmatmul.mubr.f32.gmra.mxu0 %v2085
    %v4076 = vpop.f32.mrf.mxu0
    %v4077 = vadd.f32 %v2422, %v4076
    %v4078 = vpop.f32.mrf.mxu0
    %v4079 = vadd.f32 %v2426, %v4078
    %4080 = vmatprep.mubr.f32.mxu0 %v2088
    %4081 = vmatmul.mubr.f32.gmra.mxu0 %v2087
    %v4082 = vpop.f32.mrf.mxu0
    %v4083 = vadd.f32 %v2422, %v4082
    %v4084 = vpop.f32.mrf.mxu0
    %v4085 = vadd.f32 %v2426, %v4084
    %4086 = vmatprep.mubr.f32.mxu0 %v2090
    %4087 = vmatmul.mubr.f32.gmra.mxu0 %v2089
    %v4088 = vpop.f32.mrf.mxu0
    %v4089 = vadd.f32 %v2422, %v4088
    %v4090 = vpop.f32.mrf.mxu0
    %v4091 = vadd.f32 %v2426, %v4090
    %4092 = vmatprep.mubr.f32.mxu0 %v2092
    %4093 = vmatmul.mubr.f32.gmra.mxu0 %v2091
    %v4094 = vpop.f32.mrf.mxu0
    %v4095 = vadd.f32 %v2422, %v4094
    %v4096 = vpop.f32.mrf.mxu0
    %v4097 = vadd.f32 %v2426, %v4096
    %4098 = vmatprep.mubr.f32.mxu0 %v2094
    %4099 = vmatmul.mubr.f32.gmra.mxu0 %v2093
    %v4100 = vpop.f32.mrf.mxu0
    %v4101 = vadd.f32 %v2422, %v4100
    %v4102 = vpop.f32.mrf.mxu0
    %v4103 = vadd.f32 %v2426, %v4102
    %4104 = vmatprep.mubr.f32.mxu0 %v2096
    %4105 = vmatmul.mubr.f32.gmra.mxu0 %v2095
    %v4106 = vpop.f32.mrf.mxu0
    %v4107 = vadd.f32 %v2422, %v4106
    %v4108 = vpop.f32.mrf.mxu0
    %v4109 = vadd.f32 %v2426, %v4108
    %4110 = vmatprep.mubr.f32.mxu0 %v2098
    %4111 = vmatmul.mubr.f32.gmra.mxu0 %v2097
    %v4112 = vpop.f32.mrf.mxu0
    %v4113 = vadd.f32 %v2422, %v4112
    %v4114 = vpop.f32.mrf.mxu0
    %v4115 = vadd.f32 %v2426, %v4114
    %4116 = vmatprep.mubr.f32.mxu0 %v2100
    %4117 = vmatmul.mubr.f32.gmra.mxu0 %v2099
    %v4118 = vpop.f32.mrf.mxu0
    %v4119 = vadd.f32 %v2422, %v4118
    %v4120 = vpop.f32.mrf.mxu0
    %v4121 = vadd.f32 %v2426, %v4120
    %4122 = vmatprep.mubr.f32.mxu0 %v2102
    %4123 = vmatmul.mubr.f32.gmra.mxu0 %v2101
    %v4124 = vpop.f32.mrf.mxu0
    %v4125 = vadd.f32 %v2422, %v4124
    %v4126 = vpop.f32.mrf.mxu0
    %v4127 = vadd.f32 %v2426, %v4126
    %4128 = vmatprep.mubr.f32.mxu0 %v2104
    %4129 = vmatmul.mubr.f32.gmra.mxu0 %v2103
    %v4130 = vpop.f32.mrf.mxu0
    %v4131 = vadd.f32 %v2422, %v4130
    %v4132 = vpop.f32.mrf.mxu0
    %v4133 = vadd.f32 %v2426, %v4132
    %4134 = vmatprep.mubr.f32.mxu0 %v2106
    %4135 = vmatmul.mubr.f32.gmra.mxu0 %v2105
    %v4136 = vpop.f32.mrf.mxu0
    %v4137 = vadd.f32 %v2422, %v4136
    %v4138 = vpop.f32.mrf.mxu0
    %v4139 = vadd.f32 %v2426, %v4138
    %4140 = vmatprep.mubr.f32.mxu0 %v2108
    %4141 = vmatmul.mubr.f32.gmra.mxu0 %v2107
    %v4142 = vpop.f32.mrf.mxu0
    %v4143 = vadd.f32 %v2422, %v4142
    %v4144 = vpop.f32.mrf.mxu0
    %v4145 = vadd.f32 %v2426, %v4144
    %4146 = vmatprep.mubr.f32.mxu0 %v2110
    %4147 = vmatmul.mubr.f32.gmra.mxu0 %v2109
    %v4148 = vpop.f32.mrf.mxu0
    %v4149 = vadd.f32 %v2422, %v4148
    %v4150 = vpop.f32.mrf.mxu0
    %v4151 = vadd.f32 %v2426, %v4150
    %4152 = vmatprep.mubr.f32.mxu0 %v2112
    %4153 = vmatmul.mubr.f32.gmra.mxu0 %v2111
    %v4154 = vpop.f32.mrf.mxu0
    %v4155 = vadd.f32 %v2422, %v4154
    %v4156 = vpop.f32.mrf.mxu0
    %v4157 = vadd.f32 %v2426, %v4156
    %4158 = vmatprep.mubr.f32.mxu0 %v2114
    %4159 = vmatmul.mubr.f32.gmra.mxu0 %v2113
    %v4160 = vpop.f32.mrf.mxu0
    %v4161 = vadd.f32 %v2422, %v4160
    %v4162 = vpop.f32.mrf.mxu0
    %v4163 = vadd.f32 %v2426, %v4162
    %4164 = vmatprep.mubr.f32.mxu0 %v2116
    %4165 = vmatmul.mubr.f32.gmra.mxu0 %v2115
    %v4166 = vpop.f32.mrf.mxu0
    %v4167 = vadd.f32 %v2422, %v4166
    %v4168 = vpop.f32.mrf.mxu0
    %v4169 = vadd.f32 %v2426, %v4168
    %4170 = vmatprep.mubr.f32.mxu0 %v2118
    %4171 = vmatmul.mubr.f32.gmra.mxu0 %v2117
    %v4172 = vpop.f32.mrf.mxu0
    %v4173 = vadd.f32 %v2422, %v4172
    %v4174 = vpop.f32.mrf.mxu0
    %v4175 = vadd.f32 %v2426, %v4174
    %4176 = vmatprep.mubr.f32.mxu0 %v2120
    %4177 = vmatmul.mubr.f32.gmra.mxu0 %v2119
    %v4178 = vpop.f32.mrf.mxu0
    %v4179 = vadd.f32 %v2422, %v4178
    %v4180 = vpop.f32.mrf.mxu0
    %v4181 = vadd.f32 %v2426, %v4180
    %4182 = vmatprep.mubr.f32.mxu0 %v2122
    %4183 = vmatmul.mubr.f32.gmra.mxu0 %v2121
    %v4184 = vpop.f32.mrf.mxu0
    %v4185 = vadd.f32 %v2422, %v4184
    %v4186 = vpop.f32.mrf.mxu0
    %v4187 = vadd.f32 %v2426, %v4186
    %4188 = vmatprep.mubr.f32.mxu0 %v2124
    %4189 = vmatmul.mubr.f32.gmra.mxu0 %v2123
    %v4190 = vpop.f32.mrf.mxu0
    %v4191 = vadd.f32 %v2422, %v4190
    %v4192 = vpop.f32.mrf.mxu0
    %v4193 = vadd.f32 %v2426, %v4192
    %4194 = vmatprep.mubr.f32.mxu0 %v2126
    %4195 = vmatmul.mubr.f32.gmra.mxu0 %v2125
    %v4196 = vpop.f32.mrf.mxu0
    %v4197 = vadd.f32 %v2422, %v4196
    %v4198 = vpop.f32.mrf.mxu0
    %v4199 = vadd.f32 %v2426, %v4198
    %4200 = vmatprep.mubr.f32.mxu0 %v2128
    %4201 = vmatmul.mubr.f32.gmra.mxu0 %v2127
    %v4202 = vpop.f32.mrf.mxu0
    %v4203 = vadd.f32 %v2422, %v4202
    %v4204 = vpop.f32.mrf.mxu0
    %v4205 = vadd.f32 %v2426, %v4204
    %4206 = vmatprep.mubr.f32.mxu0 %v2130
    %4207 = vmatmul.mubr.f32.gmra.mxu0 %v2129
    %v4208 = vpop.f32.mrf.mxu0
    %v4209 = vadd.f32 %v2422, %v4208
    %v4210 = vpop.f32.mrf.mxu0
    %v4211 = vadd.f32 %v2426, %v4210
    %4212 = vmatprep.mubr.f32.mxu0 %v2132
    %4213 = vmatmul.mubr.f32.gmra.mxu0 %v2131
    %v4214 = vpop.f32.mrf.mxu0
    %v4215 = vadd.f32 %v2422, %v4214
    %v4216 = vpop.f32.mrf.mxu0
    %v4217 = vadd.f32 %v2426, %v4216
    %4218 = vmatprep.mubr.f32.mxu0 %v2134
    %4219 = vmatmul.mubr.f32.gmra.mxu0 %v2133
    %v4220 = vpop.f32.mrf.mxu0
    %v4221 = vadd.f32 %v2422, %v4220
    %v4222 = vpop.f32.mrf.mxu0
    %v4223 = vadd.f32 %v2426, %v4222
    %4224 = vmatprep.mubr.f32.mxu0 %v2136
    %4225 = vmatmul.mubr.f32.gmra.mxu0 %v2135
    %v4226 = vpop.f32.mrf.mxu0
    %v4227 = vadd.f32 %v2422, %v4226
    %v4228 = vpop.f32.mrf.mxu0
    %v4229 = vadd.f32 %v2426, %v4228
    %4230 = vdwg.mxu0
    %v4231 = vmul.f32 %v2502, 0.5
    %v4232 = vmul.f32 %v2504, 0.5
    %v4233 = vmul.f32 %v2951, 0.5
    %v4234 = vmul.f32 %v2953, 0.5
    %v4235 = vmul.f32 %v3400, 0.5
    %v4236 = vmul.f32 %v3402, 0.5
    %v4237 = vmul.f32 %v3849, 0.5
    %v4238 = vmul.f32 %v3851, 0.5
    %v4239 = vmul.f32 %v2508, 0.5
    %v4240 = vmul.f32 %v2510, 0.5
    %v4241 = vmul.f32 %v2957, 0.5
    %v4242 = vmul.f32 %v2959, 0.5
    %v4243 = vmul.f32 %v3406, 0.5
    %v4244 = vmul.f32 %v3408, 0.5
    %v4245 = vmul.f32 %v3855, 0.5
    %v4246 = vmul.f32 %v3857, 0.5
    %v4247 = vmul.f32 %v2514, 0.5
    %v4248 = vmul.f32 %v2516, 0.5
    %v4249 = vmul.f32 %v2963, 0.5
    %v4250 = vmul.f32 %v2965, 0.5
    %v4251 = vmul.f32 %v3412, 0.5
    %v4252 = vmul.f32 %v3414, 0.5
    %v4253 = vmul.f32 %v3861, 0.5
    %v4254 = vmul.f32 %v3863, 0.5
    %v4255 = vmul.f32 %v2520, 0.5
    %v4256 = vmul.f32 %v2522, 0.5
    %v4257 = vmul.f32 %v2969, 0.5
    %v4258 = vmul.f32 %v2971, 0.5
    %v4259 = vmul.f32 %v3418, 0.5
    %v4260 = vmul.f32 %v3420, 0.5
    %v4261 = vmul.f32 %v3867, 0.5
    %v4262 = vmul.f32 %v3869, 0.5
    %v4263 = vmul.f32 %v2526, 0.5
    %v4264 = vmul.f32 %v2528, 0.5
    %v4265 = vmul.f32 %v2975, 0.5
    %v4266 = vmul.f32 %v2977, 0.5
    %v4267 = vmul.f32 %v3424, 0.5
    %v4268 = vmul.f32 %v3426, 0.5
    %v4269 = vmul.f32 %v3873, 0.5
    %v4270 = vmul.f32 %v3875, 0.5
    %v4271 = vmul.f32 %v2532, 0.5
    %v4272 = vmul.f32 %v2534, 0.5
    %v4273 = vmul.f32 %v2981, 0.5
    %v4274 = vmul.f32 %v2983, 0.5
    %v4275 = vmul.f32 %v3430, 0.5
    %v4276 = vmul.f32 %v3432, 0.5
    %v4277 = vmul.f32 %v3879, 0.5
    %v4278 = vmul.f32 %v3881, 0.5
    %v4279 = vmul.f32 %v2538, 0.5
    %v4280 = vmul.f32 %v2540, 0.5
    %v4281 = vmul.f32 %v2987, 0.5
    %v4282 = vmul.f32 %v2989, 0.5
    %v4283 = vmul.f32 %v3436, 0.5
    %v4284 = vmul.f32 %v3438, 0.5
    %v4285 = vmul.f32 %v3885, 0.5
    %v4286 = vmul.f32 %v3887, 0.5
    %v4287 = vmul.f32 %v2544, 0.5
    %v4288 = vmul.f32 %v2546, 0.5
    %v4289 = vmul.f32 %v2993, 0.5
    %v4290 = vmul.f32 %v2995, 0.5
    %v4291 = vmul.f32 %v3442, 0.5
    %v4292 = vmul.f32 %v3444, 0.5
    %v4293 = vmul.f32 %v3891, 0.5
    %v4294 = vmul.f32 %v3893, 0.5
    %v4295 = vmul.f32 %v2550, 0.5
    %v4296 = vmul.f32 %v2552, 0.5
    %v4297 = vmul.f32 %v2999, 0.5
    %v4298 = vmul.f32 %v3001, 0.5
    %v4299 = vmul.f32 %v3448, 0.5
    %v4300 = vmul.f32 %v3450, 0.5
    %v4301 = vmul.f32 %v3897, 0.5
    %v4302 = vmul.f32 %v3899, 0.5
    %v4303 = vmul.f32 %v2556, 0.5
    %v4304 = vmul.f32 %v2558, 0.5
    %v4305 = vmul.f32 %v3005, 0.5
    %v4306 = vmul.f32 %v3007, 0.5
    %v4307 = vmul.f32 %v3454, 0.5
    %v4308 = vmul.f32 %v3456, 0.5
    %v4309 = vmul.f32 %v3903, 0.5
    %v4310 = vmul.f32 %v3905, 0.5
    %v4311 = vmul.f32 %v2562, 0.5
    %v4312 = vmul.f32 %v2564, 0.5
    %v4313 = vmul.f32 %v3011, 0.5
    %v4314 = vmul.f32 %v3013, 0.5
    %v4315 = vmul.f32 %v3460, 0.5
    %v4316 = vmul.f32 %v3462, 0.5
    %v4317 = vmul.f32 %v3909, 0.5
    %v4318 = vmul.f32 %v3911, 0.5
    %v4319 = vmul.f32 %v2568, 0.5
    %v4320 = vmul.f32 %v2570, 0.5
    %v4321 = vmul.f32 %v3017, 0.5
    %v4322 = vmul.f32 %v3019, 0.5
    %v4323 = vmul.f32 %v3466, 0.5
    %v4324 = vmul.f32 %v3468, 0.5
    %v4325 = vmul.f32 %v3915, 0.5
    %v4326 = vmul.f32 %v3917, 0.5
    %v4327 = vmul.f32 %v2574, 0.5
    %v4328 = vmul.f32 %v2576, 0.5
    %v4329 = vmul.f32 %v3023, 0.5
    %v4330 = vmul.f32 %v3025, 0.5
    %v4331 = vmul.f32 %v3472, 0.5
    %v4332 = vmul.f32 %v3474, 0.5
    %v4333 = vmul.f32 %v3921, 0.5
    %v4334 = vmul.f32 %v3923, 0.5
    %v4335 = vmul.f32 %v2580, 0.5
    %v4336 = vmul.f32 %v2582, 0.5
    %v4337 = vmul.f32 %v3029, 0.5
    %v4338 = vmul.f32 %v3031, 0.5
    %v4339 = vmul.f32 %v3478, 0.5
    %v4340 = vmul.f32 %v3480, 0.5
    %v4341 = vmul.f32 %v3927, 0.5
    %v4342 = vmul.f32 %v3929, 0.5
    %v4343 = vmul.f32 %v2586, 0.5
    %v4344 = vmul.f32 %v2588, 0.5
    %v4345 = vmul.f32 %v3035, 0.5
    %v4346 = vmul.f32 %v3037, 0.5
    %v4347 = vmul.f32 %v3484, 0.5
    %v4348 = vmul.f32 %v3486, 0.5
    %v4349 = vmul.f32 %v3933, 0.5
    %v4350 = vmul.f32 %v3935, 0.5
    %v4351 = vmul.f32 %v2592, 0.5
    %v4352 = vmul.f32 %v2594, 0.5
    %v4353 = vmul.f32 %v3041, 0.5
    %v4354 = vmul.f32 %v3043, 0.5
    %v4355 = vmul.f32 %v3490, 0.5
    %v4356 = vmul.f32 %v3492, 0.5
    %v4357 = vmul.f32 %v3939, 0.5
    %v4358 = vmul.f32 %v3941, 0.5
    %v4359 = vmul.f32 %v2598, 0.5
    %v4360 = vmul.f32 %v2600, 0.5
    %v4361 = vmul.f32 %v3047, 0.5
    %v4362 = vmul.f32 %v3049, 0.5
    %v4363 = vmul.f32 %v3496, 0.5
    %v4364 = vmul.f32 %v3498, 0.5
    %v4365 = vmul.f32 %v3945, 0.5
    %v4366 = vmul.f32 %v3947, 0.5
    %v4367 = vmul.f32 %v2604, 0.5
    %v4368 = vmul.f32 %v2606, 0.5
    %v4369 = vmul.f32 %v3053, 0.5
    %v4370 = vmul.f32 %v3055, 0.5
    %v4371 = vmul.f32 %v3502, 0.5
    %v4372 = vmul.f32 %v3504, 0.5
    %v4373 = vmul.f32 %v3951, 0.5
    %v4374 = vmul.f32 %v3953, 0.5
    %v4375 = vmul.f32 %v2610, 0.5
    %v4376 = vmul.f32 %v2612, 0.5
    %v4377 = vmul.f32 %v3059, 0.5
    %v4378 = vmul.f32 %v3061, 0.5
    %v4379 = vmul.f32 %v3508, 0.5
    %v4380 = vmul.f32 %v3510, 0.5
    %v4381 = vmul.f32 %v3957, 0.5
    %v4382 = vmul.f32 %v3959, 0.5
    %v4383 = vmul.f32 %v2616, 0.5
    %v4384 = vmul.f32 %v2618, 0.5
    %v4385 = vmul.f32 %v3065, 0.5
    %v4386 = vmul.f32 %v3067, 0.5
    %v4387 = vmul.f32 %v3514, 0.5
    %v4388 = vmul.f32 %v3516, 0.5
    %v4389 = vmul.f32 %v3963, 0.5
    %v4390 = vmul.f32 %v3965, 0.5
    %v4391 = vmul.f32 %v2622, 0.5
    %v4392 = vmul.f32 %v2624, 0.5
    %v4393 = vmul.f32 %v3071, 0.5
    %v4394 = vmul.f32 %v3073, 0.5
    %v4395 = vmul.f32 %v3520, 0.5
    %v4396 = vmul.f32 %v3522, 0.5
    %v4397 = vmul.f32 %v3969, 0.5
    %v4398 = vmul.f32 %v3971, 0.5
    %v4399 = vmul.f32 %v2628, 0.5
    %v4400 = vmul.f32 %v2630, 0.5
    %v4401 = vmul.f32 %v3077, 0.5
    %v4402 = vmul.f32 %v3079, 0.5
    %v4403 = vmul.f32 %v3526, 0.5
    %v4404 = vmul.f32 %v3528, 0.5
    %v4405 = vmul.f32 %v3975, 0.5
    %v4406 = vmul.f32 %v3977, 0.5
    %v4407 = vmul.f32 %v2634, 0.5
    %v4408 = vmul.f32 %v2636, 0.5
    %v4409 = vmul.f32 %v3083, 0.5
    %v4410 = vmul.f32 %v3085, 0.5
    %v4411 = vmul.f32 %v3532, 0.5
    %v4412 = vmul.f32 %v3534, 0.5
    %v4413 = vmul.f32 %v3981, 0.5
    %v4414 = vmul.f32 %v3983, 0.5
    %v4415 = vmul.f32 %v2640, 0.5
    %v4416 = vmul.f32 %v2642, 0.5
    %v4417 = vmul.f32 %v3089, 0.5
    %v4418 = vmul.f32 %v3091, 0.5
    %v4419 = vmul.f32 %v3538, 0.5
    %v4420 = vmul.f32 %v3540, 0.5
    %v4421 = vmul.f32 %v3987, 0.5
    %v4422 = vmul.f32 %v3989, 0.5
    %v4423 = vmul.f32 %v2646, 0.5
    %v4424 = vmul.f32 %v2648, 0.5
    %v4425 = vmul.f32 %v3095, 0.5
    %v4426 = vmul.f32 %v3097, 0.5
    %v4427 = vmul.f32 %v3544, 0.5
    %v4428 = vmul.f32 %v3546, 0.5
    %v4429 = vmul.f32 %v3993, 0.5
    %v4430 = vmul.f32 %v3995, 0.5
    %v4431 = vmul.f32 %v2652, 0.5
    %v4432 = vmul.f32 %v2654, 0.5
    %v4433 = vmul.f32 %v3101, 0.5
    %v4434 = vmul.f32 %v3103, 0.5
    %v4435 = vmul.f32 %v3550, 0.5
    %v4436 = vmul.f32 %v3552, 0.5
    %v4437 = vmul.f32 %v3999, 0.5
    %v4438 = vmul.f32 %v4001, 0.5
    %v4439 = vmul.f32 %v2658, 0.5
    %v4440 = vmul.f32 %v2660, 0.5
    %v4441 = vmul.f32 %v3107, 0.5
    %v4442 = vmul.f32 %v3109, 0.5
    %v4443 = vmul.f32 %v3556, 0.5
    %v4444 = vmul.f32 %v3558, 0.5
    %v4445 = vmul.f32 %v4005, 0.5
    %v4446 = vmul.f32 %v4007, 0.5
    %v4447 = vmul.f32 %v2664, 0.5
    %v4448 = vmul.f32 %v2666, 0.5
    %v4449 = vmul.f32 %v3113, 0.5
    %v4450 = vmul.f32 %v3115, 0.5
    %v4451 = vmul.f32 %v3562, 0.5
    %v4452 = vmul.f32 %v3564, 0.5
    %v4453 = vmul.f32 %v4011, 0.5
    %v4454 = vmul.f32 %v4013, 0.5
    %v4455 = vmul.f32 %v2670, 0.5
    %v4456 = vmul.f32 %v2672, 0.5
    %v4457 = vmul.f32 %v3119, 0.5
    %v4458 = vmul.f32 %v3121, 0.5
    %v4459 = vmul.f32 %v3568, 0.5
    %v4460 = vmul.f32 %v3570, 0.5
    %v4461 = vmul.f32 %v4017, 0.5
    %v4462 = vmul.f32 %v4019, 0.5
    %v4463 = vmul.f32 %v2676, 0.5
    %v4464 = vmul.f32 %v2678, 0.5
    %v4465 = vmul.f32 %v3125, 0.5
    %v4466 = vmul.f32 %v3127, 0.5
    %v4467 = vmul.f32 %v3574, 0.5
    %v4468 = vmul.f32 %v3576, 0.5
    %v4469 = vmul.f32 %v4023, 0.5
    %v4470 = vmul.f32 %v4025, 0.5
    %v4471 = vmul.f32 %v2682, 0.5
    %v4472 = vmul.f32 %v2684, 0.5
    %v4473 = vmul.f32 %v3131, 0.5
    %v4474 = vmul.f32 %v3133, 0.5
    %v4475 = vmul.f32 %v3580, 0.5
    %v4476 = vmul.f32 %v3582, 0.5
    %v4477 = vmul.f32 %v4029, 0.5
    %v4478 = vmul.f32 %v4031, 0.5
    %v4479 = vmul.f32 %v2688, 0.5
    %v4480 = vmul.f32 %v2690, 0.5
    %v4481 = vmul.f32 %v3137, 0.5
    %v4482 = vmul.f32 %v3139, 0.5
    %v4483 = vmul.f32 %v3586, 0.5
    %v4484 = vmul.f32 %v3588, 0.5
    %v4485 = vmul.f32 %v4035, 0.5
    %v4486 = vmul.f32 %v4037, 0.5
    %v4487 = vmul.f32 %v2694, 0.5
    %v4488 = vmul.f32 %v2696, 0.5
    %v4489 = vmul.f32 %v3143, 0.5
    %v4490 = vmul.f32 %v3145, 0.5
    %v4491 = vmul.f32 %v3592, 0.5
    %v4492 = vmul.f32 %v3594, 0.5
    %v4493 = vmul.f32 %v4041, 0.5
    %v4494 = vmul.f32 %v4043, 0.5
    %v4495 = vmul.f32 %v2700, 0.5
    %v4496 = vmul.f32 %v2702, 0.5
    %v4497 = vmul.f32 %v3149, 0.5
    %v4498 = vmul.f32 %v3151, 0.5
    %v4499 = vmul.f32 %v3598, 0.5
    %v4500 = vmul.f32 %v3600, 0.5
    %v4501 = vmul.f32 %v4047, 0.5
    %v4502 = vmul.f32 %v4049, 0.5
    %v4503 = vmul.f32 %v2706, 0.5
    %v4504 = vmul.f32 %v2708, 0.5
    %v4505 = vmul.f32 %v3155, 0.5
    %v4506 = vmul.f32 %v3157, 0.5
    %v4507 = vmul.f32 %v3604, 0.5
    %v4508 = vmul.f32 %v3606, 0.5
    %v4509 = vmul.f32 %v4053, 0.5
    %v4510 = vmul.f32 %v4055, 0.5
    %v4511 = vmul.f32 %v2712, 0.5
    %v4512 = vmul.f32 %v2714, 0.5
    %v4513 = vmul.f32 %v3161, 0.5
    %v4514 = vmul.f32 %v3163, 0.5
    %v4515 = vmul.f32 %v3610, 0.5
    %v4516 = vmul.f32 %v3612, 0.5
    %v4517 = vmul.f32 %v4059, 0.5
    %v4518 = vmul.f32 %v4061, 0.5
    %v4519 = vmul.f32 %v2718, 0.5
    %v4520 = vmul.f32 %v2720, 0.5
    %v4521 = vmul.f32 %v3167, 0.5
    %v4522 = vmul.f32 %v3169, 0.5
    %v4523 = vmul.f32 %v3616, 0.5
    %v4524 = vmul.f32 %v3618, 0.5
    %v4525 = vmul.f32 %v4065, 0.5
    %v4526 = vmul.f32 %v4067, 0.5
    %v4527 = vmul.f32 %v2724, 0.5
    %v4528 = vmul.f32 %v2726, 0.5
    %v4529 = vmul.f32 %v3173, 0.5
    %v4530 = vmul.f32 %v3175, 0.5
    %v4531 = vmul.f32 %v3622, 0.5
    %v4532 = vmul.f32 %v3624, 0.5
    %v4533 = vmul.f32 %v4071, 0.5
    %v4534 = vmul.f32 %v4073, 0.5
    %v4535 = vmul.f32 %v2730, 0.5
    %v4536 = vmul.f32 %v2732, 0.5
    %v4537 = vmul.f32 %v3179, 0.5
    %v4538 = vmul.f32 %v3181, 0.5
    %v4539 = vmul.f32 %v3628, 0.5
    %v4540 = vmul.f32 %v3630, 0.5
    %v4541 = vmul.f32 %v4077, 0.5
    %v4542 = vmul.f32 %v4079, 0.5
    %v4543 = vmul.f32 %v2736, 0.5
    %v4544 = vmul.f32 %v2738, 0.5
    %v4545 = vmul.f32 %v3185, 0.5
    %v4546 = vmul.f32 %v3187, 0.5
    %v4547 = vmul.f32 %v3634, 0.5
    %v4548 = vmul.f32 %v3636, 0.5
    %v4549 = vmul.f32 %v4083, 0.5
    %v4550 = vmul.f32 %v4085, 0.5
    %v4551 = vmul.f32 %v2742, 0.5
    %v4552 = vmul.f32 %v2744, 0.5
    %v4553 = vmul.f32 %v3191, 0.5
    %v4554 = vmul.f32 %v3193, 0.5
    %v4555 = vmul.f32 %v3640, 0.5
    %v4556 = vmul.f32 %v3642, 0.5
    %v4557 = vmul.f32 %v4089, 0.5
    %v4558 = vmul.f32 %v4091, 0.5
    %v4559 = vmul.f32 %v2748, 0.5
    %v4560 = vmul.f32 %v2750, 0.5
    %v4561 = vmul.f32 %v3197, 0.5
    %v4562 = vmul.f32 %v3199, 0.5
    %v4563 = vmul.f32 %v3646, 0.5
    %v4564 = vmul.f32 %v3648, 0.5
    %v4565 = vmul.f32 %v4095, 0.5
    %v4566 = vmul.f32 %v4097, 0.5
    %v4567 = vmul.f32 %v2754, 0.5
    %v4568 = vmul.f32 %v2756, 0.5
    %v4569 = vmul.f32 %v3203, 0.5
    %v4570 = vmul.f32 %v3205, 0.5
    %v4571 = vmul.f32 %v3652, 0.5
    %v4572 = vmul.f32 %v3654, 0.5
    %v4573 = vmul.f32 %v4101, 0.5
    %v4574 = vmul.f32 %v4103, 0.5
    %v4575 = vmul.f32 %v2760, 0.5
    %v4576 = vmul.f32 %v2762, 0.5
    %v4577 = vmul.f32 %v3209, 0.5
    %v4578 = vmul.f32 %v3211, 0.5
    %v4579 = vmul.f32 %v3658, 0.5
    %v4580 = vmul.f32 %v3660, 0.5
    %v4581 = vmul.f32 %v4107, 0.5
    %v4582 = vmul.f32 %v4109, 0.5
    %v4583 = vmul.f32 %v2766, 0.5
    %v4584 = vmul.f32 %v2768, 0.5
    %v4585 = vmul.f32 %v3215, 0.5
    %v4586 = vmul.f32 %v3217, 0.5
    %v4587 = vmul.f32 %v3664, 0.5
    %v4588 = vmul.f32 %v3666, 0.5
    %v4589 = vmul.f32 %v4113, 0.5
    %v4590 = vmul.f32 %v4115, 0.5
    %v4591 = vmul.f32 %v2772, 0.5
    %v4592 = vmul.f32 %v2774, 0.5
    %v4593 = vmul.f32 %v3221, 0.5
    %v4594 = vmul.f32 %v3223, 0.5
    %v4595 = vmul.f32 %v3670, 0.5
    %v4596 = vmul.f32 %v3672, 0.5
    %v4597 = vmul.f32 %v4119, 0.5
    %v4598 = vmul.f32 %v4121, 0.5
    %v4599 = vmul.f32 %v2778, 0.5
    %v4600 = vmul.f32 %v2780, 0.5
    %v4601 = vmul.f32 %v3227, 0.5
    %v4602 = vmul.f32 %v3229, 0.5
    %v4603 = vmul.f32 %v3676, 0.5
    %v4604 = vmul.f32 %v3678, 0.5
    %v4605 = vmul.f32 %v4125, 0.5
    %v4606 = vmul.f32 %v4127, 0.5
    %v4607 = vmul.f32 %v2784, 0.5
    %v4608 = vmul.f32 %v2786, 0.5
    %v4609 = vmul.f32 %v3233, 0.5
    %v4610 = vmul.f32 %v3235, 0.5
    %v4611 = vmul.f32 %v3682, 0.5
    %v4612 = vmul.f32 %v3684, 0.5
    %v4613 = vmul.f32 %v4131, 0.5
    %v4614 = vmul.f32 %v4133, 0.5
    %v4615 = vmul.f32 %v2790, 0.5
    %v4616 = vmul.f32 %v2792, 0.5
    %v4617 = vmul.f32 %v3239, 0.5
    %v4618 = vmul.f32 %v3241, 0.5
    %v4619 = vmul.f32 %v3688, 0.5
    %v4620 = vmul.f32 %v3690, 0.5
    %v4621 = vmul.f32 %v4137, 0.5
    %v4622 = vmul.f32 %v4139, 0.5
    %v4623 = vmul.f32 %v2796, 0.5
    %v4624 = vmul.f32 %v2798, 0.5
    %v4625 = vmul.f32 %v3245, 0.5
    %v4626 = vmul.f32 %v3247, 0.5
    %v4627 = vmul.f32 %v3694, 0.5
    %v4628 = vmul.f32 %v3696, 0.5
    %v4629 = vmul.f32 %v4143, 0.5
    %v4630 = vmul.f32 %v4145, 0.5
    %v4631 = vmul.f32 %v2802, 0.5
    %v4632 = vmul.f32 %v2804, 0.5
    %v4633 = vmul.f32 %v3251, 0.5
    %v4634 = vmul.f32 %v3253, 0.5
    %v4635 = vmul.f32 %v3700, 0.5
    %v4636 = vmul.f32 %v3702, 0.5
    %v4637 = vmul.f32 %v4149, 0.5
    %v4638 = vmul.f32 %v4151, 0.5
    %v4639 = vmul.f32 %v2808, 0.5
    %v4640 = vmul.f32 %v2810, 0.5
    %v4641 = vmul.f32 %v3257, 0.5
    %v4642 = vmul.f32 %v3259, 0.5
    %v4643 = vmul.f32 %v3706, 0.5
    %v4644 = vmul.f32 %v3708, 0.5
    %v4645 = vmul.f32 %v4155, 0.5
    %v4646 = vmul.f32 %v4157, 0.5
    %v4647 = vmul.f32 %v2814, 0.5
    %v4648 = vmul.f32 %v2816, 0.5
    %v4649 = vmul.f32 %v3263, 0.5
    %v4650 = vmul.f32 %v3265, 0.5
    %v4651 = vmul.f32 %v3712, 0.5
    %v4652 = vmul.f32 %v3714, 0.5
    %v4653 = vmul.f32 %v4161, 0.5
    %v4654 = vmul.f32 %v4163, 0.5
    %v4655 = vmul.f32 %v2820, 0.5
    %v4656 = vmul.f32 %v2822, 0.5
    %v4657 = vmul.f32 %v3269, 0.5
    %v4658 = vmul.f32 %v3271, 0.5
    %v4659 = vmul.f32 %v3718, 0.5
    %v4660 = vmul.f32 %v3720, 0.5
    %v4661 = vmul.f32 %v4167, 0.5
    %v4662 = vmul.f32 %v4169, 0.5
    %v4663 = vmul.f32 %v2826, 0.5
    %v4664 = vmul.f32 %v2828, 0.5
    %v4665 = vmul.f32 %v3275, 0.5
    %v4666 = vmul.f32 %v3277, 0.5
    %v4667 = vmul.f32 %v3724, 0.5
    %v4668 = vmul.f32 %v3726, 0.5
    %v4669 = vmul.f32 %v4173, 0.5
    %v4670 = vmul.f32 %v4175, 0.5
    %v4671 = vmul.f32 %v2832, 0.5
    %v4672 = vmul.f32 %v2834, 0.5
    %v4673 = vmul.f32 %v3281, 0.5
    %v4674 = vmul.f32 %v3283, 0.5
    %v4675 = vmul.f32 %v3730, 0.5
    %v4676 = vmul.f32 %v3732, 0.5
    %v4677 = vmul.f32 %v4179, 0.5
    %v4678 = vmul.f32 %v4181, 0.5
    %v4679 = vmul.f32 %v2838, 0.5
    %v4680 = vmul.f32 %v2840, 0.5
    %v4681 = vmul.f32 %v3287, 0.5
    %v4682 = vmul.f32 %v3289, 0.5
    %v4683 = vmul.f32 %v3736, 0.5
    %v4684 = vmul.f32 %v3738, 0.5
    %v4685 = vmul.f32 %v4185, 0.5
    %v4686 = vmul.f32 %v4187, 0.5
    %v4687 = vmul.f32 %v2844, 0.5
    %v4688 = vmul.f32 %v2846, 0.5
    %v4689 = vmul.f32 %v3293, 0.5
    %v4690 = vmul.f32 %v3295, 0.5
    %v4691 = vmul.f32 %v3742, 0.5
    %v4692 = vmul.f32 %v3744, 0.5
    %v4693 = vmul.f32 %v4191, 0.5
    %v4694 = vmul.f32 %v4193, 0.5
    %v4695 = vmul.f32 %v2850, 0.5
    %v4696 = vmul.f32 %v2852, 0.5
    %v4697 = vmul.f32 %v3299, 0.5
    %v4698 = vmul.f32 %v3301, 0.5
    %v4699 = vmul.f32 %v3748, 0.5
    %v4700 = vmul.f32 %v3750, 0.5
    %v4701 = vmul.f32 %v4197, 0.5
    %v4702 = vmul.f32 %v4199, 0.5
    %v4703 = vmul.f32 %v2856, 0.5
    %v4704 = vmul.f32 %v2858, 0.5
    %v4705 = vmul.f32 %v3305, 0.5
    %v4706 = vmul.f32 %v3307, 0.5
    %v4707 = vmul.f32 %v3754, 0.5
    %v4708 = vmul.f32 %v3756, 0.5
    %v4709 = vmul.f32 %v4203, 0.5
    %v4710 = vmul.f32 %v4205, 0.5
    %v4711 = vmul.f32 %v2862, 0.5
    %v4712 = vmul.f32 %v2864, 0.5
    %v4713 = vmul.f32 %v3311, 0.5
    %v4714 = vmul.f32 %v3313, 0.5
    %v4715 = vmul.f32 %v3760, 0.5
    %v4716 = vmul.f32 %v3762, 0.5
    %v4717 = vmul.f32 %v4209, 0.5
    %v4718 = vmul.f32 %v4211, 0.5
    %v4719 = vmul.f32 %v2868, 0.5
    %v4720 = vmul.f32 %v2870, 0.5
    %v4721 = vmul.f32 %v3317, 0.5
    %v4722 = vmul.f32 %v3319, 0.5
    %v4723 = vmul.f32 %v3766, 0.5
    %v4724 = vmul.f32 %v3768, 0.5
    %v4725 = vmul.f32 %v4215, 0.5
    %v4726 = vmul.f32 %v4217, 0.5
    %v4727 = vmul.f32 %v2874, 0.5
    %v4728 = vmul.f32 %v2876, 0.5
    %v4729 = vmul.f32 %v3323, 0.5
    %v4730 = vmul.f32 %v3325, 0.5
    %v4731 = vmul.f32 %v3772, 0.5
    %v4732 = vmul.f32 %v3774, 0.5
    %v4733 = vmul.f32 %v4221, 0.5
    %v4734 = vmul.f32 %v4223, 0.5
    %v4735 = vmul.f32 %v2880, 0.5
    %v4736 = vmul.f32 %v2882, 0.5
    %v4737 = vmul.f32 %v3329, 0.5
    %v4738 = vmul.f32 %v3331, 0.5
    %v4739 = vmul.f32 %v3778, 0.5
    %v4740 = vmul.f32 %v3780, 0.5
    %v4741 = vmul.f32 %v4227, 0.5
    %v4742 = vmul.f32 %v4229, 0.5
    %v4743 = vmul.f32 %v2502, 0.70710677
    %v4744 = vmul.f32 %v2504, 0.70710677
    %v4745 = vmul.f32 %v2951, 0.70710677
    %v4746 = vmul.f32 %v2953, 0.70710677
    %v4747 = vmul.f32 %v3400, 0.70710677
    %v4748 = vmul.f32 %v3402, 0.70710677
    %v4749 = vmul.f32 %v3849, 0.70710677
    %v4750 = vmul.f32 %v3851, 0.70710677
    %v4751 = vmul.f32 %v2508, 0.70710677
    %v4752 = vmul.f32 %v2510, 0.70710677
    %v4753 = vmul.f32 %v2957, 0.70710677
    %v4754 = vmul.f32 %v2959, 0.70710677
    %v4755 = vmul.f32 %v3406, 0.70710677
    %v4756 = vmul.f32 %v3408, 0.70710677
    %v4757 = vmul.f32 %v3855, 0.70710677
    %v4758 = vmul.f32 %v3857, 0.70710677
    %v4759 = vmul.f32 %v2514, 0.70710677
    %v4760 = vmul.f32 %v2516, 0.70710677
    %v4761 = vmul.f32 %v2963, 0.70710677
    %v4762 = vmul.f32 %v2965, 0.70710677
    %v4763 = vmul.f32 %v3412, 0.70710677
    %v4764 = vmul.f32 %v3414, 0.70710677
    %v4765 = vmul.f32 %v3861, 0.70710677
    %v4766 = vmul.f32 %v3863, 0.70710677
    %v4767 = vmul.f32 %v2520, 0.70710677
    %v4768 = vmul.f32 %v2522, 0.70710677
    %v4769 = vmul.f32 %v2969, 0.70710677
    %v4770 = vmul.f32 %v2971, 0.70710677
    %v4771 = vmul.f32 %v3418, 0.70710677
    %v4772 = vmul.f32 %v3420, 0.70710677
    %v4773 = vmul.f32 %v3867, 0.70710677
    %v4774 = vmul.f32 %v3869, 0.70710677
    %v4775 = vmul.f32 %v2526, 0.70710677
    %v4776 = vmul.f32 %v2528, 0.70710677
    %v4777 = vmul.f32 %v2975, 0.70710677
    %v4778 = vmul.f32 %v2977, 0.70710677
    %v4779 = vmul.f32 %v3424, 0.70710677
    %v4780 = vmul.f32 %v3426, 0.70710677
    %v4781 = vmul.f32 %v3873, 0.70710677
    %v4782 = vmul.f32 %v3875, 0.70710677
    %v4783 = vmul.f32 %v2532, 0.70710677
    %v4784 = vmul.f32 %v2534, 0.70710677
    %v4785 = vmul.f32 %v2981, 0.70710677
    %v4786 = vmul.f32 %v2983, 0.70710677
    %v4787 = vmul.f32 %v3430, 0.70710677
    %v4788 = vmul.f32 %v3432, 0.70710677
    %v4789 = vmul.f32 %v3879, 0.70710677
    %v4790 = vmul.f32 %v3881, 0.70710677
    %v4791 = vmul.f32 %v2538, 0.70710677
    %v4792 = vmul.f32 %v2540, 0.70710677
    %v4793 = vmul.f32 %v2987, 0.70710677
    %v4794 = vmul.f32 %v2989, 0.70710677
    %v4795 = vmul.f32 %v3436, 0.70710677
    %v4796 = vmul.f32 %v3438, 0.70710677
    %v4797 = vmul.f32 %v3885, 0.70710677
    %v4798 = vmul.f32 %v3887, 0.70710677
    %v4799 = vmul.f32 %v2544, 0.70710677
    %v4800 = vmul.f32 %v2546, 0.70710677
    %v4801 = vmul.f32 %v2993, 0.70710677
    %v4802 = vmul.f32 %v2995, 0.70710677
    %v4803 = vmul.f32 %v3442, 0.70710677
    %v4804 = vmul.f32 %v3444, 0.70710677
    %v4805 = vmul.f32 %v3891, 0.70710677
    %v4806 = vmul.f32 %v3893, 0.70710677
    %v4807 = vmul.f32 %v2550, 0.70710677
    %v4808 = vmul.f32 %v2552, 0.70710677
    %v4809 = vmul.f32 %v2999, 0.70710677
    %v4810 = vmul.f32 %v3001, 0.70710677
    %v4811 = vmul.f32 %v3448, 0.70710677
    %v4812 = vmul.f32 %v3450, 0.70710677
    %v4813 = vmul.f32 %v3897, 0.70710677
    %v4814 = vmul.f32 %v3899, 0.70710677
    %v4815 = vmul.f32 %v2556, 0.70710677
    %v4816 = vmul.f32 %v2558, 0.70710677
    %v4817 = vmul.f32 %v3005, 0.70710677
    %v4818 = vmul.f32 %v3007, 0.70710677
    %v4819 = vmul.f32 %v3454, 0.70710677
    %v4820 = vmul.f32 %v3456, 0.70710677
    %v4821 = vmul.f32 %v3903, 0.70710677
    %v4822 = vmul.f32 %v3905, 0.70710677
    %v4823 = vmul.f32 %v2562, 0.70710677
    %v4824 = vmul.f32 %v2564, 0.70710677
    %v4825 = vmul.f32 %v3011, 0.70710677
    %v4826 = vmul.f32 %v3013, 0.70710677
    %v4827 = vmul.f32 %v3460, 0.70710677
    %v4828 = vmul.f32 %v3462, 0.70710677
    %v4829 = vmul.f32 %v3909, 0.70710677
    %v4830 = vmul.f32 %v3911, 0.70710677
    %v4831 = vmul.f32 %v2568, 0.70710677
    %v4832 = vmul.f32 %v2570, 0.70710677
    %v4833 = vmul.f32 %v3017, 0.70710677
    %v4834 = vmul.f32 %v3019, 0.70710677
    %v4835 = vmul.f32 %v3466, 0.70710677
    %v4836 = vmul.f32 %v3468, 0.70710677
    %v4837 = vmul.f32 %v3915, 0.70710677
    %v4838 = vmul.f32 %v3917, 0.70710677
    %v4839 = vmul.f32 %v2574, 0.70710677
    %v4840 = vmul.f32 %v2576, 0.70710677
    %v4841 = vmul.f32 %v3023, 0.70710677
    %v4842 = vmul.f32 %v3025, 0.70710677
    %v4843 = vmul.f32 %v3472, 0.70710677
    %v4844 = vmul.f32 %v3474, 0.70710677
    %v4845 = vmul.f32 %v3921, 0.70710677
    %v4846 = vmul.f32 %v3923, 0.70710677
    %v4847 = vmul.f32 %v2580, 0.70710677
    %v4848 = vmul.f32 %v2582, 0.70710677
    %v4849 = vmul.f32 %v3029, 0.70710677
    %v4850 = vmul.f32 %v3031, 0.70710677
    %v4851 = vmul.f32 %v3478, 0.70710677
    %v4852 = vmul.f32 %v3480, 0.70710677
    %v4853 = vmul.f32 %v3927, 0.70710677
    %v4854 = vmul.f32 %v3929, 0.70710677
    %v4855 = vmul.f32 %v2586, 0.70710677
    %v4856 = vmul.f32 %v2588, 0.70710677
    %v4857 = vmul.f32 %v3035, 0.70710677
    %v4858 = vmul.f32 %v3037, 0.70710677
    %v4859 = vmul.f32 %v3484, 0.70710677
    %v4860 = vmul.f32 %v3486, 0.70710677
    %v4861 = vmul.f32 %v3933, 0.70710677
    %v4862 = vmul.f32 %v3935, 0.70710677
    %v4863 = vmul.f32 %v2592, 0.70710677
    %v4864 = vmul.f32 %v2594, 0.70710677
    %v4865 = vmul.f32 %v3041, 0.70710677
    %v4866 = vmul.f32 %v3043, 0.70710677
    %v4867 = vmul.f32 %v3490, 0.70710677
    %v4868 = vmul.f32 %v3492, 0.70710677
    %v4869 = vmul.f32 %v3939, 0.70710677
    %v4870 = vmul.f32 %v3941, 0.70710677
    %v4871 = vmul.f32 %v2598, 0.70710677
    %v4872 = vmul.f32 %v2600, 0.70710677
    %v4873 = vmul.f32 %v3047, 0.70710677
    %v4874 = vmul.f32 %v3049, 0.70710677
    %v4875 = vmul.f32 %v3496, 0.70710677
    %v4876 = vmul.f32 %v3498, 0.70710677
    %v4877 = vmul.f32 %v3945, 0.70710677
    %v4878 = vmul.f32 %v3947, 0.70710677
    %v4879 = vmul.f32 %v2604, 0.70710677
    %v4880 = vmul.f32 %v2606, 0.70710677
    %v4881 = vmul.f32 %v3053, 0.70710677
    %v4882 = vmul.f32 %v3055, 0.70710677
    %v4883 = vmul.f32 %v3502, 0.70710677
    %v4884 = vmul.f32 %v3504, 0.70710677
    %v4885 = vmul.f32 %v3951, 0.70710677
    %v4886 = vmul.f32 %v3953, 0.70710677
    %v4887 = vmul.f32 %v2610, 0.70710677
    %v4888 = vmul.f32 %v2612, 0.70710677
    %v4889 = vmul.f32 %v3059, 0.70710677
    %v4890 = vmul.f32 %v3061, 0.70710677
    %v4891 = vmul.f32 %v3508, 0.70710677
    %v4892 = vmul.f32 %v3510, 0.70710677
    %v4893 = vmul.f32 %v3957, 0.70710677
    %v4894 = vmul.f32 %v3959, 0.70710677
    %v4895 = vmul.f32 %v2616, 0.70710677
    %v4896 = vmul.f32 %v2618, 0.70710677
    %v4897 = vmul.f32 %v3065, 0.70710677
    %v4898 = vmul.f32 %v3067, 0.70710677
    %v4899 = vmul.f32 %v3514, 0.70710677
    %v4900 = vmul.f32 %v3516, 0.70710677
    %v4901 = vmul.f32 %v3963, 0.70710677
    %v4902 = vmul.f32 %v3965, 0.70710677
    %v4903 = vmul.f32 %v2622, 0.70710677
    %v4904 = vmul.f32 %v2624, 0.70710677
    %v4905 = vmul.f32 %v3071, 0.70710677
    %v4906 = vmul.f32 %v3073, 0.70710677
    %v4907 = vmul.f32 %v3520, 0.70710677
    %v4908 = vmul.f32 %v3522, 0.70710677
    %v4909 = vmul.f32 %v3969, 0.70710677
    %v4910 = vmul.f32 %v3971, 0.70710677
    %v4911 = vmul.f32 %v2628, 0.70710677
    %v4912 = vmul.f32 %v2630, 0.70710677
    %v4913 = vmul.f32 %v3077, 0.70710677
    %v4914 = vmul.f32 %v3079, 0.70710677
    %v4915 = vmul.f32 %v3526, 0.70710677
    %v4916 = vmul.f32 %v3528, 0.70710677
    %v4917 = vmul.f32 %v3975, 0.70710677
    %v4918 = vmul.f32 %v3977, 0.70710677
    %v4919 = vmul.f32 %v2634, 0.70710677
    %v4920 = vmul.f32 %v2636, 0.70710677
    %v4921 = vmul.f32 %v3083, 0.70710677
    %v4922 = vmul.f32 %v3085, 0.70710677
    %v4923 = vmul.f32 %v3532, 0.70710677
    %v4924 = vmul.f32 %v3534, 0.70710677
    %v4925 = vmul.f32 %v3981, 0.70710677
    %v4926 = vmul.f32 %v3983, 0.70710677
    %v4927 = vmul.f32 %v2640, 0.70710677
    %v4928 = vmul.f32 %v2642, 0.70710677
    %v4929 = vmul.f32 %v3089, 0.70710677
    %v4930 = vmul.f32 %v3091, 0.70710677
    %v4931 = vmul.f32 %v3538, 0.70710677
    %v4932 = vmul.f32 %v3540, 0.70710677
    %v4933 = vmul.f32 %v3987, 0.70710677
    %v4934 = vmul.f32 %v3989, 0.70710677
    %v4935 = vmul.f32 %v2646, 0.70710677
    %v4936 = vmul.f32 %v2648, 0.70710677
    %v4937 = vmul.f32 %v3095, 0.70710677
    %v4938 = vmul.f32 %v3097, 0.70710677
    %v4939 = vmul.f32 %v3544, 0.70710677
    %v4940 = vmul.f32 %v3546, 0.70710677
    %v4941 = vmul.f32 %v3993, 0.70710677
    %v4942 = vmul.f32 %v3995, 0.70710677
    %v4943 = vmul.f32 %v2652, 0.70710677
    %v4944 = vmul.f32 %v2654, 0.70710677
    %v4945 = vmul.f32 %v3101, 0.70710677
    %v4946 = vmul.f32 %v3103, 0.70710677
    %v4947 = vmul.f32 %v3550, 0.70710677
    %v4948 = vmul.f32 %v3552, 0.70710677
    %v4949 = vmul.f32 %v3999, 0.70710677
    %v4950 = vmul.f32 %v4001, 0.70710677
    %v4951 = vmul.f32 %v2658, 0.70710677
    %v4952 = vmul.f32 %v2660, 0.70710677
    %v4953 = vmul.f32 %v3107, 0.70710677
    %v4954 = vmul.f32 %v3109, 0.70710677
    %v4955 = vmul.f32 %v3556, 0.70710677
    %v4956 = vmul.f32 %v3558, 0.70710677
    %v4957 = vmul.f32 %v4005, 0.70710677
    %v4958 = vmul.f32 %v4007, 0.70710677
    %v4959 = vmul.f32 %v2664, 0.70710677
    %v4960 = vmul.f32 %v2666, 0.70710677
    %v4961 = vmul.f32 %v3113, 0.70710677
    %v4962 = vmul.f32 %v3115, 0.70710677
    %v4963 = vmul.f32 %v3562, 0.70710677
    %v4964 = vmul.f32 %v3564, 0.70710677
    %v4965 = vmul.f32 %v4011, 0.70710677
    %v4966 = vmul.f32 %v4013, 0.70710677
    %v4967 = vmul.f32 %v2670, 0.70710677
    %v4968 = vmul.f32 %v2672, 0.70710677
    %v4969 = vmul.f32 %v3119, 0.70710677
    %v4970 = vmul.f32 %v3121, 0.70710677
    %v4971 = vmul.f32 %v3568, 0.70710677
    %v4972 = vmul.f32 %v3570, 0.70710677
    %v4973 = vmul.f32 %v4017, 0.70710677
    %v4974 = vmul.f32 %v4019, 0.70710677
    %v4975 = vmul.f32 %v2676, 0.70710677
    %v4976 = vmul.f32 %v2678, 0.70710677
    %v4977 = vmul.f32 %v3125, 0.70710677
    %v4978 = vmul.f32 %v3127, 0.70710677
    %v4979 = vmul.f32 %v3574, 0.70710677
    %v4980 = vmul.f32 %v3576, 0.70710677
    %v4981 = vmul.f32 %v4023, 0.70710677
    %v4982 = vmul.f32 %v4025, 0.70710677
    %v4983 = vmul.f32 %v2682, 0.70710677
    %v4984 = vmul.f32 %v2684, 0.70710677
    %v4985 = vmul.f32 %v3131, 0.70710677
    %v4986 = vmul.f32 %v3133, 0.70710677
    %v4987 = vmul.f32 %v3580, 0.70710677
    %v4988 = vmul.f32 %v3582, 0.70710677
    %v4989 = vmul.f32 %v4029, 0.70710677
    %v4990 = vmul.f32 %v4031, 0.70710677
    %v4991 = vmul.f32 %v2688, 0.70710677
    %v4992 = vmul.f32 %v2690, 0.70710677
    %v4993 = vmul.f32 %v3137, 0.70710677
    %v4994 = vmul.f32 %v3139, 0.70710677
    %v4995 = vmul.f32 %v3586, 0.70710677
    %v4996 = vmul.f32 %v3588, 0.70710677
    %v4997 = vmul.f32 %v4035, 0.70710677
    %v4998 = vmul.f32 %v4037, 0.70710677
    %v4999 = vmul.f32 %v2694, 0.70710677
    %v5000 = vmul.f32 %v2696, 0.70710677
    %v5001 = vmul.f32 %v3143, 0.70710677
    %v5002 = vmul.f32 %v3145, 0.70710677
    %v5003 = vmul.f32 %v3592, 0.70710677
    %v5004 = vmul.f32 %v3594, 0.70710677
    %v5005 = vmul.f32 %v4041, 0.70710677
    %v5006 = vmul.f32 %v4043, 0.70710677
    %v5007 = vmul.f32 %v2700, 0.70710677
    %v5008 = vmul.f32 %v2702, 0.70710677
    %v5009 = vmul.f32 %v3149, 0.70710677
    %v5010 = vmul.f32 %v3151, 0.70710677
    %v5011 = vmul.f32 %v3598, 0.70710677
    %v5012 = vmul.f32 %v3600, 0.70710677
    %v5013 = vmul.f32 %v4047, 0.70710677
    %v5014 = vmul.f32 %v4049, 0.70710677
    %v5015 = vmul.f32 %v2706, 0.70710677
    %v5016 = vmul.f32 %v2708, 0.70710677
    %v5017 = vmul.f32 %v3155, 0.70710677
    %v5018 = vmul.f32 %v3157, 0.70710677
    %v5019 = vmul.f32 %v3604, 0.70710677
    %v5020 = vmul.f32 %v3606, 0.70710677
    %v5021 = vmul.f32 %v4053, 0.70710677
    %v5022 = vmul.f32 %v4055, 0.70710677
    %v5023 = vmul.f32 %v2712, 0.70710677
    %v5024 = vmul.f32 %v2714, 0.70710677
    %v5025 = vmul.f32 %v3161, 0.70710677
    %v5026 = vmul.f32 %v3163, 0.70710677
    %v5027 = vmul.f32 %v3610, 0.70710677
    %v5028 = vmul.f32 %v3612, 0.70710677
    %v5029 = vmul.f32 %v4059, 0.70710677
    %v5030 = vmul.f32 %v4061, 0.70710677
    %v5031 = vmul.f32 %v2718, 0.70710677
    %v5032 = vmul.f32 %v2720, 0.70710677
    %v5033 = vmul.f32 %v3167, 0.70710677
    %v5034 = vmul.f32 %v3169, 0.70710677
    %v5035 = vmul.f32 %v3616, 0.70710677
    %v5036 = vmul.f32 %v3618, 0.70710677
    %v5037 = vmul.f32 %v4065, 0.70710677
    %v5038 = vmul.f32 %v4067, 0.70710677
    %v5039 = vmul.f32 %v2724, 0.70710677
    %v5040 = vmul.f32 %v2726, 0.70710677
    %v5041 = vmul.f32 %v3173, 0.70710677
    %v5042 = vmul.f32 %v3175, 0.70710677
    %v5043 = vmul.f32 %v3622, 0.70710677
    %v5044 = vmul.f32 %v3624, 0.70710677
    %v5045 = vmul.f32 %v4071, 0.70710677
    %v5046 = vmul.f32 %v4073, 0.70710677
    %v5047 = vmul.f32 %v2730, 0.70710677
    %v5048 = vmul.f32 %v2732, 0.70710677
    %v5049 = vmul.f32 %v3179, 0.70710677
    %v5050 = vmul.f32 %v3181, 0.70710677
    %v5051 = vmul.f32 %v3628, 0.70710677
    %v5052 = vmul.f32 %v3630, 0.70710677
    %v5053 = vmul.f32 %v4077, 0.70710677
    %v5054 = vmul.f32 %v4079, 0.70710677
    %v5055 = vmul.f32 %v2736, 0.70710677
    %v5056 = vmul.f32 %v2738, 0.70710677
    %v5057 = vmul.f32 %v3185, 0.70710677
    %v5058 = vmul.f32 %v3187, 0.70710677
    %v5059 = vmul.f32 %v3634, 0.70710677
    %v5060 = vmul.f32 %v3636, 0.70710677
    %v5061 = vmul.f32 %v4083, 0.70710677
    %v5062 = vmul.f32 %v4085, 0.70710677
    %v5063 = vmul.f32 %v2742, 0.70710677
    %v5064 = vmul.f32 %v2744, 0.70710677
    %v5065 = vmul.f32 %v3191, 0.70710677
    %v5066 = vmul.f32 %v3193, 0.70710677
    %v5067 = vmul.f32 %v3640, 0.70710677
    %v5068 = vmul.f32 %v3642, 0.70710677
    %v5069 = vmul.f32 %v4089, 0.70710677
    %v5070 = vmul.f32 %v4091, 0.70710677
    %v5071 = vmul.f32 %v2748, 0.70710677
    %v5072 = vmul.f32 %v2750, 0.70710677
    %v5073 = vmul.f32 %v3197, 0.70710677
    %v5074 = vmul.f32 %v3199, 0.70710677
    %v5075 = vmul.f32 %v3646, 0.70710677
    %v5076 = vmul.f32 %v3648, 0.70710677
    %v5077 = vmul.f32 %v4095, 0.70710677
    %v5078 = vmul.f32 %v4097, 0.70710677
    %v5079 = vmul.f32 %v2754, 0.70710677
    %v5080 = vmul.f32 %v2756, 0.70710677
    %v5081 = vmul.f32 %v3203, 0.70710677
    %v5082 = vmul.f32 %v3205, 0.70710677
    %v5083 = vmul.f32 %v3652, 0.70710677
    %v5084 = vmul.f32 %v3654, 0.70710677
    %v5085 = vmul.f32 %v4101, 0.70710677
    %v5086 = vmul.f32 %v4103, 0.70710677
    %v5087 = vmul.f32 %v2760, 0.70710677
    %v5088 = vmul.f32 %v2762, 0.70710677
    %v5089 = vmul.f32 %v3209, 0.70710677
    %v5090 = vmul.f32 %v3211, 0.70710677
    %v5091 = vmul.f32 %v3658, 0.70710677
    %v5092 = vmul.f32 %v3660, 0.70710677
    %v5093 = vmul.f32 %v4107, 0.70710677
    %v5094 = vmul.f32 %v4109, 0.70710677
    %v5095 = vmul.f32 %v2766, 0.70710677
    %v5096 = vmul.f32 %v2768, 0.70710677
    %v5097 = vmul.f32 %v3215, 0.70710677
    %v5098 = vmul.f32 %v3217, 0.70710677
    %v5099 = vmul.f32 %v3664, 0.70710677
    %v5100 = vmul.f32 %v3666, 0.70710677
    %v5101 = vmul.f32 %v4113, 0.70710677
    %v5102 = vmul.f32 %v4115, 0.70710677
    %v5103 = vmul.f32 %v2772, 0.70710677
    %v5104 = vmul.f32 %v2774, 0.70710677
    %v5105 = vmul.f32 %v3221, 0.70710677
    %v5106 = vmul.f32 %v3223, 0.70710677
    %v5107 = vmul.f32 %v3670, 0.70710677
    %v5108 = vmul.f32 %v3672, 0.70710677
    %v5109 = vmul.f32 %v4119, 0.70710677
    %v5110 = vmul.f32 %v4121, 0.70710677
    %v5111 = vmul.f32 %v2778, 0.70710677
    %v5112 = vmul.f32 %v2780, 0.70710677
    %v5113 = vmul.f32 %v3227, 0.70710677
    %v5114 = vmul.f32 %v3229, 0.70710677
    %v5115 = vmul.f32 %v3676, 0.70710677
    %v5116 = vmul.f32 %v3678, 0.70710677
    %v5117 = vmul.f32 %v4125, 0.70710677
    %v5118 = vmul.f32 %v4127, 0.70710677
    %v5119 = vmul.f32 %v2784, 0.70710677
    %v5120 = vmul.f32 %v2786, 0.70710677
    %v5121 = vmul.f32 %v3233, 0.70710677
    %v5122 = vmul.f32 %v3235, 0.70710677
    %v5123 = vmul.f32 %v3682, 0.70710677
    %v5124 = vmul.f32 %v3684, 0.70710677
    %v5125 = vmul.f32 %v4131, 0.70710677
    %v5126 = vmul.f32 %v4133, 0.70710677
    %v5127 = vmul.f32 %v2790, 0.70710677
    %v5128 = vmul.f32 %v2792, 0.70710677
    %v5129 = vmul.f32 %v3239, 0.70710677
    %v5130 = vmul.f32 %v3241, 0.70710677
    %v5131 = vmul.f32 %v3688, 0.70710677
    %v5132 = vmul.f32 %v3690, 0.70710677
    %v5133 = vmul.f32 %v4137, 0.70710677
    %v5134 = vmul.f32 %v4139, 0.70710677
    %v5135 = vmul.f32 %v2796, 0.70710677
    %v5136 = vmul.f32 %v2798, 0.70710677
    %v5137 = vmul.f32 %v3245, 0.70710677
    %v5138 = vmul.f32 %v3247, 0.70710677
    %v5139 = vmul.f32 %v3694, 0.70710677
    %v5140 = vmul.f32 %v3696, 0.70710677
    %v5141 = vmul.f32 %v4143, 0.70710677
    %v5142 = vmul.f32 %v4145, 0.70710677
    %v5143 = vmul.f32 %v2802, 0.70710677
    %v5144 = vmul.f32 %v2804, 0.70710677
    %v5145 = vmul.f32 %v3251, 0.70710677
    %v5146 = vmul.f32 %v3253, 0.70710677
    %v5147 = vmul.f32 %v3700, 0.70710677
    %v5148 = vmul.f32 %v3702, 0.70710677
    %v5149 = vmul.f32 %v4149, 0.70710677
    %v5150 = vmul.f32 %v4151, 0.70710677
    %v5151 = vmul.f32 %v2808, 0.70710677
    %v5152 = vmul.f32 %v2810, 0.70710677
    %v5153 = vmul.f32 %v3257, 0.70710677
    %v5154 = vmul.f32 %v3259, 0.70710677
    %v5155 = vmul.f32 %v3706, 0.70710677
    %v5156 = vmul.f32 %v3708, 0.70710677
    %v5157 = vmul.f32 %v4155, 0.70710677
    %v5158 = vmul.f32 %v4157, 0.70710677
    %v5159 = vmul.f32 %v2814, 0.70710677
    %v5160 = vmul.f32 %v2816, 0.70710677
    %v5161 = vmul.f32 %v3263, 0.70710677
    %v5162 = vmul.f32 %v3265, 0.70710677
    %v5163 = vmul.f32 %v3712, 0.70710677
    %v5164 = vmul.f32 %v3714, 0.70710677
    %v5165 = vmul.f32 %v4161, 0.70710677
    %v5166 = vmul.f32 %v4163, 0.70710677
    %v5167 = vmul.f32 %v2820, 0.70710677
    %v5168 = vmul.f32 %v2822, 0.70710677
    %v5169 = vmul.f32 %v3269, 0.70710677
    %v5170 = vmul.f32 %v3271, 0.70710677
    %v5171 = vmul.f32 %v3718, 0.70710677
    %v5172 = vmul.f32 %v3720, 0.70710677
    %v5173 = vmul.f32 %v4167, 0.70710677
    %v5174 = vmul.f32 %v4169, 0.70710677
    %v5175 = vmul.f32 %v2826, 0.70710677
    %v5176 = vmul.f32 %v2828, 0.70710677
    %v5177 = vmul.f32 %v3275, 0.70710677
    %v5178 = vmul.f32 %v3277, 0.70710677
    %v5179 = vmul.f32 %v3724, 0.70710677
    %v5180 = vmul.f32 %v3726, 0.70710677
    %v5181 = vmul.f32 %v4173, 0.70710677
    %v5182 = vmul.f32 %v4175, 0.70710677
    %v5183 = vmul.f32 %v2832, 0.70710677
    %v5184 = vmul.f32 %v2834, 0.70710677
    %v5185 = vmul.f32 %v3281, 0.70710677
    %v5186 = vmul.f32 %v3283, 0.70710677
    %v5187 = vmul.f32 %v3730, 0.70710677
    %v5188 = vmul.f32 %v3732, 0.70710677
    %v5189 = vmul.f32 %v4179, 0.70710677
    %v5190 = vmul.f32 %v4181, 0.70710677
    %v5191 = vmul.f32 %v2838, 0.70710677
    %v5192 = vmul.f32 %v2840, 0.70710677
    %v5193 = vmul.f32 %v3287, 0.70710677
    %v5194 = vmul.f32 %v3289, 0.70710677
    %v5195 = vmul.f32 %v3736, 0.70710677
    %v5196 = vmul.f32 %v3738, 0.70710677
    %v5197 = vmul.f32 %v4185, 0.70710677
    %v5198 = vmul.f32 %v4187, 0.70710677
    %v5199 = vmul.f32 %v2844, 0.70710677
    %v5200 = vmul.f32 %v2846, 0.70710677
    %v5201 = vmul.f32 %v3293, 0.70710677
    %v5202 = vmul.f32 %v3295, 0.70710677
    %v5203 = vmul.f32 %v3742, 0.70710677
    %v5204 = vmul.f32 %v3744, 0.70710677
    %v5205 = vmul.f32 %v4191, 0.70710677
    %v5206 = vmul.f32 %v4193, 0.70710677
    %v5207 = vmul.f32 %v2850, 0.70710677
    %v5208 = vmul.f32 %v2852, 0.70710677
    %v5209 = vmul.f32 %v3299, 0.70710677
    %v5210 = vmul.f32 %v3301, 0.70710677
    %v5211 = vmul.f32 %v3748, 0.70710677
    %v5212 = vmul.f32 %v3750, 0.70710677
    %v5213 = vmul.f32 %v4197, 0.70710677
    %v5214 = vmul.f32 %v4199, 0.70710677
    %v5215 = vmul.f32 %v2856, 0.70710677
    %v5216 = vmul.f32 %v2858, 0.70710677
    %v5217 = vmul.f32 %v3305, 0.70710677
    %v5218 = vmul.f32 %v3307, 0.70710677
    %v5219 = vmul.f32 %v3754, 0.70710677
    %v5220 = vmul.f32 %v3756, 0.70710677
    %v5221 = vmul.f32 %v4203, 0.70710677
    %v5222 = vmul.f32 %v4205, 0.70710677
    %v5223 = vmul.f32 %v2862, 0.70710677
    %v5224 = vmul.f32 %v2864, 0.70710677
    %v5225 = vmul.f32 %v3311, 0.70710677
    %v5226 = vmul.f32 %v3313, 0.70710677
    %v5227 = vmul.f32 %v3760, 0.70710677
    %v5228 = vmul.f32 %v3762, 0.70710677
    %v5229 = vmul.f32 %v4209, 0.70710677
    %v5230 = vmul.f32 %v4211, 0.70710677
    %v5231 = vmul.f32 %v2868, 0.70710677
    %v5232 = vmul.f32 %v2870, 0.70710677
    %v5233 = vmul.f32 %v3317, 0.70710677
    %v5234 = vmul.f32 %v3319, 0.70710677
    %v5235 = vmul.f32 %v3766, 0.70710677
    %v5236 = vmul.f32 %v3768, 0.70710677
    %v5237 = vmul.f32 %v4215, 0.70710677
    %v5238 = vmul.f32 %v4217, 0.70710677
    %v5239 = vmul.f32 %v2874, 0.70710677
    %v5240 = vmul.f32 %v2876, 0.70710677
    %v5241 = vmul.f32 %v3323, 0.70710677
    %v5242 = vmul.f32 %v3325, 0.70710677
    %v5243 = vmul.f32 %v3772, 0.70710677
    %v5244 = vmul.f32 %v3774, 0.70710677
    %v5245 = vmul.f32 %v4221, 0.70710677
    %v5246 = vmul.f32 %v4223, 0.70710677
    %v5247 = vmul.f32 %v2880, 0.70710677
    %v5248 = vmul.f32 %v2882, 0.70710677
    %v5249 = vmul.f32 %v3329, 0.70710677
    %v5250 = vmul.f32 %v3331, 0.70710677
    %v5251 = vmul.f32 %v3778, 0.70710677
    %v5252 = vmul.f32 %v3780, 0.70710677
    %v5253 = vmul.f32 %v4227, 0.70710677
    %v5254 = vmul.f32 %v4229, 0.70710677
    %v5255 = verf.f32.pop %v4743
    %v5256 = verf.f32.pop %v4744
    %v5257 = verf.f32.pop %v4745
    %v5258 = verf.f32.pop %v4746
    %v5259 = verf.f32.pop %v4747
    %v5260 = verf.f32.pop %v4748
    %v5261 = verf.f32.pop %v4749
    %v5262 = verf.f32.pop %v4750
    %v5263 = verf.f32.pop %v4751
    %v5264 = verf.f32.pop %v4752
    %v5265 = verf.f32.pop %v4753
    %v5266 = verf.f32.pop %v4754
    %v5267 = verf.f32.pop %v4755
    %v5268 = verf.f32.pop %v4756
    %v5269 = verf.f32.pop %v4757
    %v5270 = verf.f32.pop %v4758
    %v5271 = verf.f32.pop %v4759
    %v5272 = verf.f32.pop %v4760
    %v5273 = verf.f32.pop %v4761
    %v5274 = verf.f32.pop %v4762
    %v5275 = verf.f32.pop %v4763
    %v5276 = verf.f32.pop %v4764
    %v5277 = verf.f32.pop %v4765
    %v5278 = verf.f32.pop %v4766
    %v5279 = verf.f32.pop %v4767
    %v5280 = verf.f32.pop %v4768
    %v5281 = verf.f32.pop %v4769
    %v5282 = verf.f32.pop %v4770
    %v5283 = verf.f32.pop %v4771
    %v5284 = verf.f32.pop %v4772
    %v5285 = verf.f32.pop %v4773
    %v5286 = verf.f32.pop %v4774
    %v5287 = verf.f32.pop %v4775
    %v5288 = verf.f32.pop %v4776
    %v5289 = verf.f32.pop %v4777
    %v5290 = verf.f32.pop %v4778
    %v5291 = verf.f32.pop %v4779
    %v5292 = verf.f32.pop %v4780
    %v5293 = verf.f32.pop %v4781
    %v5294 = verf.f32.pop %v4782
    %v5295 = verf.f32.pop %v4783
    %v5296 = verf.f32.pop %v4784
    %v5297 = verf.f32.pop %v4785
    %v5298 = verf.f32.pop %v4786
    %v5299 = verf.f32.pop %v4787
    %v5300 = verf.f32.pop %v4788
    %v5301 = verf.f32.pop %v4789
    %v5302 = verf.f32.pop %v4790
    %v5303 = verf.f32.pop %v4791
    %v5304 = verf.f32.pop %v4792
    %v5305 = verf.f32.pop %v4793
    %v5306 = verf.f32.pop %v4794
    %v5307 = verf.f32.pop %v4795
    %v5308 = verf.f32.pop %v4796
    %v5309 = verf.f32.pop %v4797
    %v5310 = verf.f32.pop %v4798
    %v5311 = verf.f32.pop %v4799
    %v5312 = verf.f32.pop %v4800
    %v5313 = verf.f32.pop %v4801
    %v5314 = verf.f32.pop %v4802
    %v5315 = verf.f32.pop %v4803
    %v5316 = verf.f32.pop %v4804
    %v5317 = verf.f32.pop %v4805
    %v5318 = verf.f32.pop %v4806
    %v5319 = verf.f32.pop %v4807
    %v5320 = verf.f32.pop %v4808
    %v5321 = verf.f32.pop %v4809
    %v5322 = verf.f32.pop %v4810
    %v5323 = verf.f32.pop %v4811
    %v5324 = verf.f32.pop %v4812
    %v5325 = verf.f32.pop %v4813
    %v5326 = verf.f32.pop %v4814
    %v5327 = verf.f32.pop %v4815
    %v5328 = verf.f32.pop %v4816
    %v5329 = verf.f32.pop %v4817
    %v5330 = verf.f32.pop %v4818
    %v5331 = verf.f32.pop %v4819
    %v5332 = verf.f32.pop %v4820
    %v5333 = verf.f32.pop %v4821
    %v5334 = verf.f32.pop %v4822
    %v5335 = verf.f32.pop %v4823
    %v5336 = verf.f32.pop %v4824
    %v5337 = verf.f32.pop %v4825
    %v5338 = verf.f32.pop %v4826
    %v5339 = verf.f32.pop %v4827
    %v5340 = verf.f32.pop %v4828
    %v5341 = verf.f32.pop %v4829
    %v5342 = verf.f32.pop %v4830
    %v5343 = verf.f32.pop %v4831
    %v5344 = verf.f32.pop %v4832
    %v5345 = verf.f32.pop %v4833
    %v5346 = verf.f32.pop %v4834
    %v5347 = verf.f32.pop %v4835
    %v5348 = verf.f32.pop %v4836
    %v5349 = verf.f32.pop %v4837
    %v5350 = verf.f32.pop %v4838
    %v5351 = verf.f32.pop %v4839
    %v5352 = verf.f32.pop %v4840
    %v5353 = verf.f32.pop %v4841
    %v5354 = verf.f32.pop %v4842
    %v5355 = verf.f32.pop %v4843
    %v5356 = verf.f32.pop %v4844
    %v5357 = verf.f32.pop %v4845
    %v5358 = verf.f32.pop %v4846
    %v5359 = verf.f32.pop %v4847
    %v5360 = verf.f32.pop %v4848
    %v5361 = verf.f32.pop %v4849
    %v5362 = verf.f32.pop %v4850
    %v5363 = verf.f32.pop %v4851
    %v5364 = verf.f32.pop %v4852
    %v5365 = verf.f32.pop %v4853
    %v5366 = verf.f32.pop %v4854
    %v5367 = verf.f32.pop %v4855
    %v5368 = verf.f32.pop %v4856
    %v5369 = verf.f32.pop %v4857
    %v5370 = verf.f32.pop %v4858
    %v5371 = verf.f32.pop %v4859
    %v5372 = verf.f32.pop %v4860
    %v5373 = verf.f32.pop %v4861
    %v5374 = verf.f32.pop %v4862
    %v5375 = verf.f32.pop %v4863
    %v5376 = verf.f32.pop %v4864
    %v5377 = verf.f32.pop %v4865
    %v5378 = verf.f32.pop %v4866
    %v5379 = verf.f32.pop %v4867
    %v5380 = verf.f32.pop %v4868
    %v5381 = verf.f32.pop %v4869
    %v5382 = verf.f32.pop %v4870
    %v5383 = verf.f32.pop %v4871
    %v5384 = verf.f32.pop %v4872
    %v5385 = verf.f32.pop %v4873
    %v5386 = verf.f32.pop %v4874
    %v5387 = verf.f32.pop %v4875
    %v5388 = verf.f32.pop %v4876
    %v5389 = verf.f32.pop %v4877
    %v5390 = verf.f32.pop %v4878
    %v5391 = verf.f32.pop %v4879
    %v5392 = verf.f32.pop %v4880
    %v5393 = verf.f32.pop %v4881
    %v5394 = verf.f32.pop %v4882
    %v5395 = verf.f32.pop %v4883
    %v5396 = verf.f32.pop %v4884
    %v5397 = verf.f32.pop %v4885
    %v5398 = verf.f32.pop %v4886
    %v5399 = verf.f32.pop %v4887
    %v5400 = verf.f32.pop %v4888
    %v5401 = verf.f32.pop %v4889
    %v5402 = verf.f32.pop %v4890
    %v5403 = verf.f32.pop %v4891
    %v5404 = verf.f32.pop %v4892
    %v5405 = verf.f32.pop %v4893
    %v5406 = verf.f32.pop %v4894
    %v5407 = verf.f32.pop %v4895
    %v5408 = verf.f32.pop %v4896
    %v5409 = verf.f32.pop %v4897
    %v5410 = verf.f32.pop %v4898
    %v5411 = verf.f32.pop %v4899
    %v5412 = verf.f32.pop %v4900
    %v5413 = verf.f32.pop %v4901
    %v5414 = verf.f32.pop %v4902
    %v5415 = verf.f32.pop %v4903
    %v5416 = verf.f32.pop %v4904
    %v5417 = verf.f32.pop %v4905
    %v5418 = verf.f32.pop %v4906
    %v5419 = verf.f32.pop %v4907
    %v5420 = verf.f32.pop %v4908
    %v5421 = verf.f32.pop %v4909
    %v5422 = verf.f32.pop %v4910
    %v5423 = verf.f32.pop %v4911
    %v5424 = verf.f32.pop %v4912
    %v5425 = verf.f32.pop %v4913
    %v5426 = verf.f32.pop %v4914
    %v5427 = verf.f32.pop %v4915
    %v5428 = verf.f32.pop %v4916
    %v5429 = verf.f32.pop %v4917
    %v5430 = verf.f32.pop %v4918
    %v5431 = verf.f32.pop %v4919
    %v5432 = verf.f32.pop %v4920
    %v5433 = verf.f32.pop %v4921
    %v5434 = verf.f32.pop %v4922
    %v5435 = verf.f32.pop %v4923
    %v5436 = verf.f32.pop %v4924
    %v5437 = verf.f32.pop %v4925
    %v5438 = verf.f32.pop %v4926
    %v5439 = verf.f32.pop %v4927
    %v5440 = verf.f32.pop %v4928
    %v5441 = verf.f32.pop %v4929
    %v5442 = verf.f32.pop %v4930
    %v5443 = verf.f32.pop %v4931
    %v5444 = verf.f32.pop %v4932
    %v5445 = verf.f32.pop %v4933
    %v5446 = verf.f32.pop %v4934
    %v5447 = verf.f32.pop %v4935
    %v5448 = verf.f32.pop %v4936
    %v5449 = verf.f32.pop %v4937
    %v5450 = verf.f32.pop %v4938
    %v5451 = verf.f32.pop %v4939
    %v5452 = verf.f32.pop %v4940
    %v5453 = verf.f32.pop %v4941
    %v5454 = verf.f32.pop %v4942
    %v5455 = verf.f32.pop %v4943
    %v5456 = verf.f32.pop %v4944
    %v5457 = verf.f32.pop %v4945
    %v5458 = verf.f32.pop %v4946
    %v5459 = verf.f32.pop %v4947
    %v5460 = verf.f32.pop %v4948
    %v5461 = verf.f32.pop %v4949
    %v5462 = verf.f32.pop %v4950
    %v5463 = verf.f32.pop %v4951
    %v5464 = verf.f32.pop %v4952
    %v5465 = verf.f32.pop %v4953
    %v5466 = verf.f32.pop %v4954
    %v5467 = verf.f32.pop %v4955
    %v5468 = verf.f32.pop %v4956
    %v5469 = verf.f32.pop %v4957
    %v5470 = verf.f32.pop %v4958
    %v5471 = verf.f32.pop %v4959
    %v5472 = verf.f32.pop %v4960
    %v5473 = verf.f32.pop %v4961
    %v5474 = verf.f32.pop %v4962
    %v5475 = verf.f32.pop %v4963
    %v5476 = verf.f32.pop %v4964
    %v5477 = verf.f32.pop %v4965
    %v5478 = verf.f32.pop %v4966
    %v5479 = verf.f32.pop %v4967
    %v5480 = verf.f32.pop %v4968
    %v5481 = verf.f32.pop %v4969
    %v5482 = verf.f32.pop %v4970
    %v5483 = verf.f32.pop %v4971
    %v5484 = verf.f32.pop %v4972
    %v5485 = verf.f32.pop %v4973
    %v5486 = verf.f32.pop %v4974
    %v5487 = verf.f32.pop %v4975
    %v5488 = verf.f32.pop %v4976
    %v5489 = verf.f32.pop %v4977
    %v5490 = verf.f32.pop %v4978
    %v5491 = verf.f32.pop %v4979
    %v5492 = verf.f32.pop %v4980
    %v5493 = verf.f32.pop %v4981
    %v5494 = verf.f32.pop %v4982
    %v5495 = verf.f32.pop %v4983
    %v5496 = verf.f32.pop %v4984
    %v5497 = verf.f32.pop %v4985
    %v5498 = verf.f32.pop %v4986
    %v5499 = verf.f32.pop %v4987
    %v5500 = verf.f32.pop %v4988
    %v5501 = verf.f32.pop %v4989
    %v5502 = verf.f32.pop %v4990
    %v5503 = verf.f32.pop %v4991
    %v5504 = verf.f32.pop %v4992
    %v5505 = verf.f32.pop %v4993
    %v5506 = verf.f32.pop %v4994
    %v5507 = verf.f32.pop %v4995
    %v5508 = verf.f32.pop %v4996
    %v5509 = verf.f32.pop %v4997
    %v5510 = verf.f32.pop %v4998
    %v5511 = verf.f32.pop %v4999
    %v5512 = verf.f32.pop %v5000
    %v5513 = verf.f32.pop %v5001
    %v5514 = verf.f32.pop %v5002
    %v5515 = verf.f32.pop %v5003
    %v5516 = verf.f32.pop %v5004
    %v5517 = verf.f32.pop %v5005
    %v5518 = verf.f32.pop %v5006
    %v5519 = verf.f32.pop %v5007
    %v5520 = verf.f32.pop %v5008
    %v5521 = verf.f32.pop %v5009
    %v5522 = verf.f32.pop %v5010
    %v5523 = verf.f32.pop %v5011
    %v5524 = verf.f32.pop %v5012
    %v5525 = verf.f32.pop %v5013
    %v5526 = verf.f32.pop %v5014
    %v5527 = verf.f32.pop %v5015
    %v5528 = verf.f32.pop %v5016
    %v5529 = verf.f32.pop %v5017
    %v5530 = verf.f32.pop %v5018
    %v5531 = verf.f32.pop %v5019
    %v5532 = verf.f32.pop %v5020
    %v5533 = verf.f32.pop %v5021
    %v5534 = verf.f32.pop %v5022
    %v5535 = verf.f32.pop %v5023
    %v5536 = verf.f32.pop %v5024
    %v5537 = verf.f32.pop %v5025
    %v5538 = verf.f32.pop %v5026
    %v5539 = verf.f32.pop %v5027
    %v5540 = verf.f32.pop %v5028
    %v5541 = verf.f32.pop %v5029
    %v5542 = verf.f32.pop %v5030
    %v5543 = verf.f32.pop %v5031
    %v5544 = verf.f32.pop %v5032
    %v5545 = verf.f32.pop %v5033
    %v5546 = verf.f32.pop %v5034
    %v5547 = verf.f32.pop %v5035
    %v5548 = verf.f32.pop %v5036
    %v5549 = verf.f32.pop %v5037
    %v5550 = verf.f32.pop %v5038
    %v5551 = verf.f32.pop %v5039
    %v5552 = verf.f32.pop %v5040
    %v5553 = verf.f32.pop %v5041
    %v5554 = verf.f32.pop %v5042
    %v5555 = verf.f32.pop %v5043
    %v5556 = verf.f32.pop %v5044
    %v5557 = verf.f32.pop %v5045
    %v5558 = verf.f32.pop %v5046
    %v5559 = verf.f32.pop %v5047
    %v5560 = verf.f32.pop %v5048
    %v5561 = verf.f32.pop %v5049
    %v5562 = verf.f32.pop %v5050
    %v5563 = verf.f32.pop %v5051
    %v5564 = verf.f32.pop %v5052
    %v5565 = verf.f32.pop %v5053
    %v5566 = verf.f32.pop %v5054
    %v5567 = verf.f32.pop %v5055
    %v5568 = verf.f32.pop %v5056
    %v5569 = verf.f32.pop %v5057
    %v5570 = verf.f32.pop %v5058
    %v5571 = verf.f32.pop %v5059
    %v5572 = verf.f32.pop %v5060
    %v5573 = verf.f32.pop %v5061
    %v5574 = verf.f32.pop %v5062
    %v5575 = verf.f32.pop %v5063
    %v5576 = verf.f32.pop %v5064
    %v5577 = verf.f32.pop %v5065
    %v5578 = verf.f32.pop %v5066
    %v5579 = verf.f32.pop %v5067
    %v5580 = verf.f32.pop %v5068
    %v5581 = verf.f32.pop %v5069
    %v5582 = verf.f32.pop %v5070
    %v5583 = verf.f32.pop %v5071
    %v5584 = verf.f32.pop %v5072
    %v5585 = verf.f32.pop %v5073
    %v5586 = verf.f32.pop %v5074
    %v5587 = verf.f32.pop %v5075
    %v5588 = verf.f32.pop %v5076
    %v5589 = verf.f32.pop %v5077
    %v5590 = verf.f32.pop %v5078
    %v5591 = verf.f32.pop %v5079
    %v5592 = verf.f32.pop %v5080
    %v5593 = verf.f32.pop %v5081
    %v5594 = verf.f32.pop %v5082
    %v5595 = verf.f32.pop %v5083
    %v5596 = verf.f32.pop %v5084
    %v5597 = verf.f32.pop %v5085
    %v5598 = verf.f32.pop %v5086
    %v5599 = verf.f32.pop %v5087
    %v5600 = verf.f32.pop %v5088
    %v5601 = verf.f32.pop %v5089
    %v5602 = verf.f32.pop %v5090
    %v5603 = verf.f32.pop %v5091
    %v5604 = verf.f32.pop %v5092
    %v5605 = verf.f32.pop %v5093
    %v5606 = verf.f32.pop %v5094
    %v5607 = verf.f32.pop %v5095
    %v5608 = verf.f32.pop %v5096
    %v5609 = verf.f32.pop %v5097
    %v5610 = verf.f32.pop %v5098
    %v5611 = verf.f32.pop %v5099
    %v5612 = verf.f32.pop %v5100
    %v5613 = verf.f32.pop %v5101
    %v5614 = verf.f32.pop %v5102
    %v5615 = verf.f32.pop %v5103
    %v5616 = verf.f32.pop %v5104
    %v5617 = verf.f32.pop %v5105
    %v5618 = verf.f32.pop %v5106
    %v5619 = verf.f32.pop %v5107
    %v5620 = verf.f32.pop %v5108
    %v5621 = verf.f32.pop %v5109
    %v5622 = verf.f32.pop %v5110
    %v5623 = verf.f32.pop %v5111
    %v5624 = verf.f32.pop %v5112
    %v5625 = verf.f32.pop %v5113
    %v5626 = verf.f32.pop %v5114
    %v5627 = verf.f32.pop %v5115
    %v5628 = verf.f32.pop %v5116
    %v5629 = verf.f32.pop %v5117
    %v5630 = verf.f32.pop %v5118
    %v5631 = verf.f32.pop %v5119
    %v5632 = verf.f32.pop %v5120
    %v5633 = verf.f32.pop %v5121
    %v5634 = verf.f32.pop %v5122
    %v5635 = verf.f32.pop %v5123
    %v5636 = verf.f32.pop %v5124
    %v5637 = verf.f32.pop %v5125
    %v5638 = verf.f32.pop %v5126
    %v5639 = verf.f32.pop %v5127
    %v5640 = verf.f32.pop %v5128
    %v5641 = verf.f32.pop %v5129
    %v5642 = verf.f32.pop %v5130
    %v5643 = verf.f32.pop %v5131
    %v5644 = verf.f32.pop %v5132
    %v5645 = verf.f32.pop %v5133
    %v5646 = verf.f32.pop %v5134
    %v5647 = verf.f32.pop %v5135
    %v5648 = verf.f32.pop %v5136
    %v5649 = verf.f32.pop %v5137
    %v5650 = verf.f32.pop %v5138
    %v5651 = verf.f32.pop %v5139
    %v5652 = verf.f32.pop %v5140
    %v5653 = verf.f32.pop %v5141
    %v5654 = verf.f32.pop %v5142
    %v5655 = verf.f32.pop %v5143
    %v5656 = verf.f32.pop %v5144
    %v5657 = verf.f32.pop %v5145
    %v5658 = verf.f32.pop %v5146
    %v5659 = verf.f32.pop %v5147
    %v5660 = verf.f32.pop %v5148
    %v5661 = verf.f32.pop %v5149
    %v5662 = verf.f32.pop %v5150
    %v5663 = verf.f32.pop %v5151
    %v5664 = verf.f32.pop %v5152
    %v5665 = verf.f32.pop %v5153
    %v5666 = verf.f32.pop %v5154
    %v5667 = verf.f32.pop %v5155
    %v5668 = verf.f32.pop %v5156
    %v5669 = verf.f32.pop %v5157
    %v5670 = verf.f32.pop %v5158
    %v5671 = verf.f32.pop %v5159
    %v5672 = verf.f32.pop %v5160
    %v5673 = verf.f32.pop %v5161
    %v5674 = verf.f32.pop %v5162
    %v5675 = verf.f32.pop %v5163
    %v5676 = verf.f32.pop %v5164
    %v5677 = verf.f32.pop %v5165
    %v5678 = verf.f32.pop %v5166
    %v5679 = verf.f32.pop %v5167
    %v5680 = verf.f32.pop %v5168
    %v5681 = verf.f32.pop %v5169
    %v5682 = verf.f32.pop %v5170
    %v5683 = verf.f32.pop %v5171
    %v5684 = verf.f32.pop %v5172
    %v5685 = verf.f32.pop %v5173
    %v5686 = verf.f32.pop %v5174
    %v5687 = verf.f32.pop %v5175
    %v5688 = verf.f32.pop %v5176
    %v5689 = verf.f32.pop %v5177
    %v5690 = verf.f32.pop %v5178
    %v5691 = verf.f32.pop %v5179
    %v5692 = verf.f32.pop %v5180
    %v5693 = verf.f32.pop %v5181
    %v5694 = verf.f32.pop %v5182
    %v5695 = verf.f32.pop %v5183
    %v5696 = verf.f32.pop %v5184
    %v5697 = verf.f32.pop %v5185
    %v5698 = verf.f32.pop %v5186
    %v5699 = verf.f32.pop %v5187
    %v5700 = verf.f32.pop %v5188
    %v5701 = verf.f32.pop %v5189
    %v5702 = verf.f32.pop %v5190
    %v5703 = verf.f32.pop %v5191
    %v5704 = verf.f32.pop %v5192
    %v5705 = verf.f32.pop %v5193
    %v5706 = verf.f32.pop %v5194
    %v5707 = verf.f32.pop %v5195
    %v5708 = verf.f32.pop %v5196
    %v5709 = verf.f32.pop %v5197
    %v5710 = verf.f32.pop %v5198
    %v5711 = verf.f32.pop %v5199
    %v5712 = verf.f32.pop %v5200
    %v5713 = verf.f32.pop %v5201
    %v5714 = verf.f32.pop %v5202
    %v5715 = verf.f32.pop %v5203
    %v5716 = verf.f32.pop %v5204
    %v5717 = verf.f32.pop %v5205
    %v5718 = verf.f32.pop %v5206
    %v5719 = verf.f32.pop %v5207
    %v5720 = verf.f32.pop %v5208
    %v5721 = verf.f32.pop %v5209
    %v5722 = verf.f32.pop %v5210
    %v5723 = verf.f32.pop %v5211
    %v5724 = verf.f32.pop %v5212
    %v5725 = verf.f32.pop %v5213
    %v5726 = verf.f32.pop %v5214
    %v5727 = verf.f32.pop %v5215
    %v5728 = verf.f32.pop %v5216
    %v5729 = verf.f32.pop %v5217
    %v5730 = verf.f32.pop %v5218
    %v5731 = verf.f32.pop %v5219
    %v5732 = verf.f32.pop %v5220
    %v5733 = verf.f32.pop %v5221
    %v5734 = verf.f32.pop %v5222
    %v5735 = verf.f32.pop %v5223
    %v5736 = verf.f32.pop %v5224
    %v5737 = verf.f32.pop %v5225
    %v5738 = verf.f32.pop %v5226
    %v5739 = verf.f32.pop %v5227
    %v5740 = verf.f32.pop %v5228
    %v5741 = verf.f32.pop %v5229
    %v5742 = verf.f32.pop %v5230
    %v5743 = verf.f32.pop %v5231
    %v5744 = verf.f32.pop %v5232
    %v5745 = verf.f32.pop %v5233
    %v5746 = verf.f32.pop %v5234
    %v5747 = verf.f32.pop %v5235
    %v5748 = verf.f32.pop %v5236
    %v5749 = verf.f32.pop %v5237
    %v5750 = verf.f32.pop %v5238
    %v5751 = verf.f32.pop %v5239
    %v5752 = verf.f32.pop %v5240
    %v5753 = verf.f32.pop %v5241
    %v5754 = verf.f32.pop %v5242
    %v5755 = verf.f32.pop %v5243
    %v5756 = verf.f32.pop %v5244
    %v5757 = verf.f32.pop %v5245
    %v5758 = verf.f32.pop %v5246
    %v5759 = verf.f32.pop %v5247
    %v5760 = verf.f32.pop %v5248
    %v5761 = verf.f32.pop %v5249
    %v5762 = verf.f32.pop %v5250
    %v5763 = verf.f32.pop %v5251
    %v5764 = verf.f32.pop %v5252
    %v5765 = verf.f32.pop %v5253
    %v5766 = verf.f32.pop %v5254
    %v5767 = vadd.f32 %v5255, 1.0
    %v5768 = vadd.f32 %v5256, 1.0
    %v5769 = vadd.f32 %v5257, 1.0
    %v5770 = vadd.f32 %v5258, 1.0
    %v5771 = vadd.f32 %v5259, 1.0
    %v5772 = vadd.f32 %v5260, 1.0
    %v5773 = vadd.f32 %v5261, 1.0
    %v5774 = vadd.f32 %v5262, 1.0
    %v5775 = vadd.f32 %v5263, 1.0
    %v5776 = vadd.f32 %v5264, 1.0
    %v5777 = vadd.f32 %v5265, 1.0
    %v5778 = vadd.f32 %v5266, 1.0
    %v5779 = vadd.f32 %v5267, 1.0
    %v5780 = vadd.f32 %v5268, 1.0
    %v5781 = vadd.f32 %v5269, 1.0
    %v5782 = vadd.f32 %v5270, 1.0
    %v5783 = vadd.f32 %v5271, 1.0
    %v5784 = vadd.f32 %v5272, 1.0
    %v5785 = vadd.f32 %v5273, 1.0
    %v5786 = vadd.f32 %v5274, 1.0
    %v5787 = vadd.f32 %v5275, 1.0
    %v5788 = vadd.f32 %v5276, 1.0
    %v5789 = vadd.f32 %v5277, 1.0
    %v5790 = vadd.f32 %v5278, 1.0
    %v5791 = vadd.f32 %v5279, 1.0
    %v5792 = vadd.f32 %v5280, 1.0
    %v5793 = vadd.f32 %v5281, 1.0
    %v5794 = vadd.f32 %v5282, 1.0
    %v5795 = vadd.f32 %v5283, 1.0
    %v5796 = vadd.f32 %v5284, 1.0
    %v5797 = vadd.f32 %v5285, 1.0
    %v5798 = vadd.f32 %v5286, 1.0
    %v5799 = vadd.f32 %v5287, 1.0
    %v5800 = vadd.f32 %v5288, 1.0
    %v5801 = vadd.f32 %v5289, 1.0
    %v5802 = vadd.f32 %v5290, 1.0
    %v5803 = vadd.f32 %v5291, 1.0
    %v5804 = vadd.f32 %v5292, 1.0
    %v5805 = vadd.f32 %v5293, 1.0
    %v5806 = vadd.f32 %v5294, 1.0
    %v5807 = vadd.f32 %v5295, 1.0
    %v5808 = vadd.f32 %v5296, 1.0
    %v5809 = vadd.f32 %v5297, 1.0
    %v5810 = vadd.f32 %v5298, 1.0
    %v5811 = vadd.f32 %v5299, 1.0
    %v5812 = vadd.f32 %v5300, 1.0
    %v5813 = vadd.f32 %v5301, 1.0
    %v5814 = vadd.f32 %v5302, 1.0
    %v5815 = vadd.f32 %v5303, 1.0
    %v5816 = vadd.f32 %v5304, 1.0
    %v5817 = vadd.f32 %v5305, 1.0
    %v5818 = vadd.f32 %v5306, 1.0
    %v5819 = vadd.f32 %v5307, 1.0
    %v5820 = vadd.f32 %v5308, 1.0
    %v5821 = vadd.f32 %v5309, 1.0
    %v5822 = vadd.f32 %v5310, 1.0
    %v5823 = vadd.f32 %v5311, 1.0
    %v5824 = vadd.f32 %v5312, 1.0
    %v5825 = vadd.f32 %v5313, 1.0
    %v5826 = vadd.f32 %v5314, 1.0
    %v5827 = vadd.f32 %v5315, 1.0
    %v5828 = vadd.f32 %v5316, 1.0
    %v5829 = vadd.f32 %v5317, 1.0
    %v5830 = vadd.f32 %v5318, 1.0
    %v5831 = vadd.f32 %v5319, 1.0
    %v5832 = vadd.f32 %v5320, 1.0
    %v5833 = vadd.f32 %v5321, 1.0
    %v5834 = vadd.f32 %v5322, 1.0
    %v5835 = vadd.f32 %v5323, 1.0
    %v5836 = vadd.f32 %v5324, 1.0
    %v5837 = vadd.f32 %v5325, 1.0
    %v5838 = vadd.f32 %v5326, 1.0
    %v5839 = vadd.f32 %v5327, 1.0
    %v5840 = vadd.f32 %v5328, 1.0
    %v5841 = vadd.f32 %v5329, 1.0
    %v5842 = vadd.f32 %v5330, 1.0
    %v5843 = vadd.f32 %v5331, 1.0
    %v5844 = vadd.f32 %v5332, 1.0
    %v5845 = vadd.f32 %v5333, 1.0
    %v5846 = vadd.f32 %v5334, 1.0
    %v5847 = vadd.f32 %v5335, 1.0
    %v5848 = vadd.f32 %v5336, 1.0
    %v5849 = vadd.f32 %v5337, 1.0
    %v5850 = vadd.f32 %v5338, 1.0
    %v5851 = vadd.f32 %v5339, 1.0
    %v5852 = vadd.f32 %v5340, 1.0
    %v5853 = vadd.f32 %v5341, 1.0
    %v5854 = vadd.f32 %v5342, 1.0
    %v5855 = vadd.f32 %v5343, 1.0
    %v5856 = vadd.f32 %v5344, 1.0
    %v5857 = vadd.f32 %v5345, 1.0
    %v5858 = vadd.f32 %v5346, 1.0
    %v5859 = vadd.f32 %v5347, 1.0
    %v5860 = vadd.f32 %v5348, 1.0
    %v5861 = vadd.f32 %v5349, 1.0
    %v5862 = vadd.f32 %v5350, 1.0
    %v5863 = vadd.f32 %v5351, 1.0
    %v5864 = vadd.f32 %v5352, 1.0
    %v5865 = vadd.f32 %v5353, 1.0
    %v5866 = vadd.f32 %v5354, 1.0
    %v5867 = vadd.f32 %v5355, 1.0
    %v5868 = vadd.f32 %v5356, 1.0
    %v5869 = vadd.f32 %v5357, 1.0
    %v5870 = vadd.f32 %v5358, 1.0
    %v5871 = vadd.f32 %v5359, 1.0
    %v5872 = vadd.f32 %v5360, 1.0
    %v5873 = vadd.f32 %v5361, 1.0
    %v5874 = vadd.f32 %v5362, 1.0
    %v5875 = vadd.f32 %v5363, 1.0
    %v5876 = vadd.f32 %v5364, 1.0
    %v5877 = vadd.f32 %v5365, 1.0
    %v5878 = vadd.f32 %v5366, 1.0
    %v5879 = vadd.f32 %v5367, 1.0
    %v5880 = vadd.f32 %v5368, 1.0
    %v5881 = vadd.f32 %v5369, 1.0
    %v5882 = vadd.f32 %v5370, 1.0
    %v5883 = vadd.f32 %v5371, 1.0
    %v5884 = vadd.f32 %v5372, 1.0
    %v5885 = vadd.f32 %v5373, 1.0
    %v5886 = vadd.f32 %v5374, 1.0
    %v5887 = vadd.f32 %v5375, 1.0
    %v5888 = vadd.f32 %v5376, 1.0
    %v5889 = vadd.f32 %v5377, 1.0
    %v5890 = vadd.f32 %v5378, 1.0
    %v5891 = vadd.f32 %v5379, 1.0
    %v5892 = vadd.f32 %v5380, 1.0
    %v5893 = vadd.f32 %v5381, 1.0
    %v5894 = vadd.f32 %v5382, 1.0
    %v5895 = vadd.f32 %v5383, 1.0
    %v5896 = vadd.f32 %v5384, 1.0
    %v5897 = vadd.f32 %v5385, 1.0
    %v5898 = vadd.f32 %v5386, 1.0
    %v5899 = vadd.f32 %v5387, 1.0
    %v5900 = vadd.f32 %v5388, 1.0
    %v5901 = vadd.f32 %v5389, 1.0
    %v5902 = vadd.f32 %v5390, 1.0
    %v5903 = vadd.f32 %v5391, 1.0
    %v5904 = vadd.f32 %v5392, 1.0
    %v5905 = vadd.f32 %v5393, 1.0
    %v5906 = vadd.f32 %v5394, 1.0
    %v5907 = vadd.f32 %v5395, 1.0
    %v5908 = vadd.f32 %v5396, 1.0
    %v5909 = vadd.f32 %v5397, 1.0
    %v5910 = vadd.f32 %v5398, 1.0
    %v5911 = vadd.f32 %v5399, 1.0
    %v5912 = vadd.f32 %v5400, 1.0
    %v5913 = vadd.f32 %v5401, 1.0
    %v5914 = vadd.f32 %v5402, 1.0
    %v5915 = vadd.f32 %v5403, 1.0
    %v5916 = vadd.f32 %v5404, 1.0
    %v5917 = vadd.f32 %v5405, 1.0
    %v5918 = vadd.f32 %v5406, 1.0
    %v5919 = vadd.f32 %v5407, 1.0
    %v5920 = vadd.f32 %v5408, 1.0
    %v5921 = vadd.f32 %v5409, 1.0
    %v5922 = vadd.f32 %v5410, 1.0
    %v5923 = vadd.f32 %v5411, 1.0
    %v5924 = vadd.f32 %v5412, 1.0
    %v5925 = vadd.f32 %v5413, 1.0
    %v5926 = vadd.f32 %v5414, 1.0
    %v5927 = vadd.f32 %v5415, 1.0
    %v5928 = vadd.f32 %v5416, 1.0
    %v5929 = vadd.f32 %v5417, 1.0
    %v5930 = vadd.f32 %v5418, 1.0
    %v5931 = vadd.f32 %v5419, 1.0
    %v5932 = vadd.f32 %v5420, 1.0
    %v5933 = vadd.f32 %v5421, 1.0
    %v5934 = vadd.f32 %v5422, 1.0
    %v5935 = vadd.f32 %v5423, 1.0
    %v5936 = vadd.f32 %v5424, 1.0
    %v5937 = vadd.f32 %v5425, 1.0
    %v5938 = vadd.f32 %v5426, 1.0
    %v5939 = vadd.f32 %v5427, 1.0
    %v5940 = vadd.f32 %v5428, 1.0
    %v5941 = vadd.f32 %v5429, 1.0
    %v5942 = vadd.f32 %v5430, 1.0
    %v5943 = vadd.f32 %v5431, 1.0
    %v5944 = vadd.f32 %v5432, 1.0
    %v5945 = vadd.f32 %v5433, 1.0
    %v5946 = vadd.f32 %v5434, 1.0
    %v5947 = vadd.f32 %v5435, 1.0
    %v5948 = vadd.f32 %v5436, 1.0
    %v5949 = vadd.f32 %v5437, 1.0
    %v5950 = vadd.f32 %v5438, 1.0
    %v5951 = vadd.f32 %v5439, 1.0
    %v5952 = vadd.f32 %v5440, 1.0
    %v5953 = vadd.f32 %v5441, 1.0
    %v5954 = vadd.f32 %v5442, 1.0
    %v5955 = vadd.f32 %v5443, 1.0
    %v5956 = vadd.f32 %v5444, 1.0
    %v5957 = vadd.f32 %v5445, 1.0
    %v5958 = vadd.f32 %v5446, 1.0
    %v5959 = vadd.f32 %v5447, 1.0
    %v5960 = vadd.f32 %v5448, 1.0
    %v5961 = vadd.f32 %v5449, 1.0
    %v5962 = vadd.f32 %v5450, 1.0
    %v5963 = vadd.f32 %v5451, 1.0
    %v5964 = vadd.f32 %v5452, 1.0
    %v5965 = vadd.f32 %v5453, 1.0
    %v5966 = vadd.f32 %v5454, 1.0
    %v5967 = vadd.f32 %v5455, 1.0
    %v5968 = vadd.f32 %v5456, 1.0
    %v5969 = vadd.f32 %v5457, 1.0
    %v5970 = vadd.f32 %v5458, 1.0
    %v5971 = vadd.f32 %v5459, 1.0
    %v5972 = vadd.f32 %v5460, 1.0
    %v5973 = vadd.f32 %v5461, 1.0
    %v5974 = vadd.f32 %v5462, 1.0
    %v5975 = vadd.f32 %v5463, 1.0
    %v5976 = vadd.f32 %v5464, 1.0
    %v5977 = vadd.f32 %v5465, 1.0
    %v5978 = vadd.f32 %v5466, 1.0
    %v5979 = vadd.f32 %v5467, 1.0
    %v5980 = vadd.f32 %v5468, 1.0
    %v5981 = vadd.f32 %v5469, 1.0
    %v5982 = vadd.f32 %v5470, 1.0
    %v5983 = vadd.f32 %v5471, 1.0
    %v5984 = vadd.f32 %v5472, 1.0
    %v5985 = vadd.f32 %v5473, 1.0
    %v5986 = vadd.f32 %v5474, 1.0
    %v5987 = vadd.f32 %v5475, 1.0
    %v5988 = vadd.f32 %v5476, 1.0
    %v5989 = vadd.f32 %v5477, 1.0
    %v5990 = vadd.f32 %v5478, 1.0
    %v5991 = vadd.f32 %v5479, 1.0
    %v5992 = vadd.f32 %v5480, 1.0
    %v5993 = vadd.f32 %v5481, 1.0
    %v5994 = vadd.f32 %v5482, 1.0
    %v5995 = vadd.f32 %v5483, 1.0
    %v5996 = vadd.f32 %v5484, 1.0
    %v5997 = vadd.f32 %v5485, 1.0
    %v5998 = vadd.f32 %v5486, 1.0
    %v5999 = vadd.f32 %v5487, 1.0
    %v6000 = vadd.f32 %v5488, 1.0
    %v6001 = vadd.f32 %v5489, 1.0
    %v6002 = vadd.f32 %v5490, 1.0
    %v6003 = vadd.f32 %v5491, 1.0
    %v6004 = vadd.f32 %v5492, 1.0
    %v6005 = vadd.f32 %v5493, 1.0
    %v6006 = vadd.f32 %v5494, 1.0
    %v6007 = vadd.f32 %v5495, 1.0
    %v6008 = vadd.f32 %v5496, 1.0
    %v6009 = vadd.f32 %v5497, 1.0
    %v6010 = vadd.f32 %v5498, 1.0
    %v6011 = vadd.f32 %v5499, 1.0
    %v6012 = vadd.f32 %v5500, 1.0
    %v6013 = vadd.f32 %v5501, 1.0
    %v6014 = vadd.f32 %v5502, 1.0
    %v6015 = vadd.f32 %v5503, 1.0
    %v6016 = vadd.f32 %v5504, 1.0
    %v6017 = vadd.f32 %v5505, 1.0
    %v6018 = vadd.f32 %v5506, 1.0
    %v6019 = vadd.f32 %v5507, 1.0
    %v6020 = vadd.f32 %v5508, 1.0
    %v6021 = vadd.f32 %v5509, 1.0
    %v6022 = vadd.f32 %v5510, 1.0
    %v6023 = vadd.f32 %v5511, 1.0
    %v6024 = vadd.f32 %v5512, 1.0
    %v6025 = vadd.f32 %v5513, 1.0
    %v6026 = vadd.f32 %v5514, 1.0
    %v6027 = vadd.f32 %v5515, 1.0
    %v6028 = vadd.f32 %v5516, 1.0
    %v6029 = vadd.f32 %v5517, 1.0
    %v6030 = vadd.f32 %v5518, 1.0
    %v6031 = vadd.f32 %v5519, 1.0
    %v6032 = vadd.f32 %v5520, 1.0
    %v6033 = vadd.f32 %v5521, 1.0
    %v6034 = vadd.f32 %v5522, 1.0
    %v6035 = vadd.f32 %v5523, 1.0
    %v6036 = vadd.f32 %v5524, 1.0
    %v6037 = vadd.f32 %v5525, 1.0
    %v6038 = vadd.f32 %v5526, 1.0
    %v6039 = vadd.f32 %v5527, 1.0
    %v6040 = vadd.f32 %v5528, 1.0
    %v6041 = vadd.f32 %v5529, 1.0
    %v6042 = vadd.f32 %v5530, 1.0
    %v6043 = vadd.f32 %v5531, 1.0
    %v6044 = vadd.f32 %v5532, 1.0
    %v6045 = vadd.f32 %v5533, 1.0
    %v6046 = vadd.f32 %v5534, 1.0
    %v6047 = vadd.f32 %v5535, 1.0
    %v6048 = vadd.f32 %v5536, 1.0
    %v6049 = vadd.f32 %v5537, 1.0
    %v6050 = vadd.f32 %v5538, 1.0
    %v6051 = vadd.f32 %v5539, 1.0
    %v6052 = vadd.f32 %v5540, 1.0
    %v6053 = vadd.f32 %v5541, 1.0
    %v6054 = vadd.f32 %v5542, 1.0
    %v6055 = vadd.f32 %v5543, 1.0
    %v6056 = vadd.f32 %v5544, 1.0
    %v6057 = vadd.f32 %v5545, 1.0
    %v6058 = vadd.f32 %v5546, 1.0
    %v6059 = vadd.f32 %v5547, 1.0
    %v6060 = vadd.f32 %v5548, 1.0
    %v6061 = vadd.f32 %v5549, 1.0
    %v6062 = vadd.f32 %v5550, 1.0
    %v6063 = vadd.f32 %v5551, 1.0
    %v6064 = vadd.f32 %v5552, 1.0
    %v6065 = vadd.f32 %v5553, 1.0
    %v6066 = vadd.f32 %v5554, 1.0
    %v6067 = vadd.f32 %v5555, 1.0
    %v6068 = vadd.f32 %v5556, 1.0
    %v6069 = vadd.f32 %v5557, 1.0
    %v6070 = vadd.f32 %v5558, 1.0
    %v6071 = vadd.f32 %v5559, 1.0
    %v6072 = vadd.f32 %v5560, 1.0
    %v6073 = vadd.f32 %v5561, 1.0
    %v6074 = vadd.f32 %v5562, 1.0
    %v6075 = vadd.f32 %v5563, 1.0
    %v6076 = vadd.f32 %v5564, 1.0
    %v6077 = vadd.f32 %v5565, 1.0
    %v6078 = vadd.f32 %v5566, 1.0
    %v6079 = vadd.f32 %v5567, 1.0
    %v6080 = vadd.f32 %v5568, 1.0
    %v6081 = vadd.f32 %v5569, 1.0
    %v6082 = vadd.f32 %v5570, 1.0
    %v6083 = vadd.f32 %v5571, 1.0
    %v6084 = vadd.f32 %v5572, 1.0
    %v6085 = vadd.f32 %v5573, 1.0
    %v6086 = vadd.f32 %v5574, 1.0
    %v6087 = vadd.f32 %v5575, 1.0
    %v6088 = vadd.f32 %v5576, 1.0
    %v6089 = vadd.f32 %v5577, 1.0
    %v6090 = vadd.f32 %v5578, 1.0
    %v6091 = vadd.f32 %v5579, 1.0
    %v6092 = vadd.f32 %v5580, 1.0
    %v6093 = vadd.f32 %v5581, 1.0
    %v6094 = vadd.f32 %v5582, 1.0
    %v6095 = vadd.f32 %v5583, 1.0
    %v6096 = vadd.f32 %v5584, 1.0
    %v6097 = vadd.f32 %v5585, 1.0
    %v6098 = vadd.f32 %v5586, 1.0
    %v6099 = vadd.f32 %v5587, 1.0
    %v6100 = vadd.f32 %v5588, 1.0
    %v6101 = vadd.f32 %v5589, 1.0
    %v6102 = vadd.f32 %v5590, 1.0
    %v6103 = vadd.f32 %v5591, 1.0
    %v6104 = vadd.f32 %v5592, 1.0
    %v6105 = vadd.f32 %v5593, 1.0
    %v6106 = vadd.f32 %v5594, 1.0
    %v6107 = vadd.f32 %v5595, 1.0
    %v6108 = vadd.f32 %v5596, 1.0
    %v6109 = vadd.f32 %v5597, 1.0
    %v6110 = vadd.f32 %v5598, 1.0
    %v6111 = vadd.f32 %v5599, 1.0
    %v6112 = vadd.f32 %v5600, 1.0
    %v6113 = vadd.f32 %v5601, 1.0
    %v6114 = vadd.f32 %v5602, 1.0
    %v6115 = vadd.f32 %v5603, 1.0
    %v6116 = vadd.f32 %v5604, 1.0
    %v6117 = vadd.f32 %v5605, 1.0
    %v6118 = vadd.f32 %v5606, 1.0
    %v6119 = vadd.f32 %v5607, 1.0
    %v6120 = vadd.f32 %v5608, 1.0
    %v6121 = vadd.f32 %v5609, 1.0
    %v6122 = vadd.f32 %v5610, 1.0
    %v6123 = vadd.f32 %v5611, 1.0
    %v6124 = vadd.f32 %v5612, 1.0
    %v6125 = vadd.f32 %v5613, 1.0
    %v6126 = vadd.f32 %v5614, 1.0
    %v6127 = vadd.f32 %v5615, 1.0
    %v6128 = vadd.f32 %v5616, 1.0
    %v6129 = vadd.f32 %v5617, 1.0
    %v6130 = vadd.f32 %v5618, 1.0
    %v6131 = vadd.f32 %v5619, 1.0
    %v6132 = vadd.f32 %v5620, 1.0
    %v6133 = vadd.f32 %v5621, 1.0
    %v6134 = vadd.f32 %v5622, 1.0
    %v6135 = vadd.f32 %v5623, 1.0
    %v6136 = vadd.f32 %v5624, 1.0
    %v6137 = vadd.f32 %v5625, 1.0
    %v6138 = vadd.f32 %v5626, 1.0
    %v6139 = vadd.f32 %v5627, 1.0
    %v6140 = vadd.f32 %v5628, 1.0
    %v6141 = vadd.f32 %v5629, 1.0
    %v6142 = vadd.f32 %v5630, 1.0
    %v6143 = vadd.f32 %v5631, 1.0
    %v6144 = vadd.f32 %v5632, 1.0
    %v6145 = vadd.f32 %v5633, 1.0
    %v6146 = vadd.f32 %v5634, 1.0
    %v6147 = vadd.f32 %v5635, 1.0
    %v6148 = vadd.f32 %v5636, 1.0
    %v6149 = vadd.f32 %v5637, 1.0
    %v6150 = vadd.f32 %v5638, 1.0
    %v6151 = vadd.f32 %v5639, 1.0
    %v6152 = vadd.f32 %v5640, 1.0
    %v6153 = vadd.f32 %v5641, 1.0
    %v6154 = vadd.f32 %v5642, 1.0
    %v6155 = vadd.f32 %v5643, 1.0
    %v6156 = vadd.f32 %v5644, 1.0
    %v6157 = vadd.f32 %v5645, 1.0
    %v6158 = vadd.f32 %v5646, 1.0
    %v6159 = vadd.f32 %v5647, 1.0
    %v6160 = vadd.f32 %v5648, 1.0
    %v6161 = vadd.f32 %v5649, 1.0
    %v6162 = vadd.f32 %v5650, 1.0
    %v6163 = vadd.f32 %v5651, 1.0
    %v6164 = vadd.f32 %v5652, 1.0
    %v6165 = vadd.f32 %v5653, 1.0
    %v6166 = vadd.f32 %v5654, 1.0
    %v6167 = vadd.f32 %v5655, 1.0
    %v6168 = vadd.f32 %v5656, 1.0
    %v6169 = vadd.f32 %v5657, 1.0
    %v6170 = vadd.f32 %v5658, 1.0
    %v6171 = vadd.f32 %v5659, 1.0
    %v6172 = vadd.f32 %v5660, 1.0
    %v6173 = vadd.f32 %v5661, 1.0
    %v6174 = vadd.f32 %v5662, 1.0
    %v6175 = vadd.f32 %v5663, 1.0
    %v6176 = vadd.f32 %v5664, 1.0
    %v6177 = vadd.f32 %v5665, 1.0
    %v6178 = vadd.f32 %v5666, 1.0
    %v6179 = vadd.f32 %v5667, 1.0
    %v6180 = vadd.f32 %v5668, 1.0
    %v6181 = vadd.f32 %v5669, 1.0
    %v6182 = vadd.f32 %v5670, 1.0
    %v6183 = vadd.f32 %v5671, 1.0
    %v6184 = vadd.f32 %v5672, 1.0
    %v6185 = vadd.f32 %v5673, 1.0
    %v6186 = vadd.f32 %v5674, 1.0
    %v6187 = vadd.f32 %v5675, 1.0
    %v6188 = vadd.f32 %v5676, 1.0
    %v6189 = vadd.f32 %v5677, 1.0
    %v6190 = vadd.f32 %v5678, 1.0
    %v6191 = vadd.f32 %v5679, 1.0
    %v6192 = vadd.f32 %v5680, 1.0
    %v6193 = vadd.f32 %v5681, 1.0
    %v6194 = vadd.f32 %v5682, 1.0
    %v6195 = vadd.f32 %v5683, 1.0
    %v6196 = vadd.f32 %v5684, 1.0
    %v6197 = vadd.f32 %v5685, 1.0
    %v6198 = vadd.f32 %v5686, 1.0
    %v6199 = vadd.f32 %v5687, 1.0
    %v6200 = vadd.f32 %v5688, 1.0
    %v6201 = vadd.f32 %v5689, 1.0
    %v6202 = vadd.f32 %v5690, 1.0
    %v6203 = vadd.f32 %v5691, 1.0
    %v6204 = vadd.f32 %v5692, 1.0
    %v6205 = vadd.f32 %v5693, 1.0
    %v6206 = vadd.f32 %v5694, 1.0
    %v6207 = vadd.f32 %v5695, 1.0
    %v6208 = vadd.f32 %v5696, 1.0
    %v6209 = vadd.f32 %v5697, 1.0
    %v6210 = vadd.f32 %v5698, 1.0
    %v6211 = vadd.f32 %v5699, 1.0
    %v6212 = vadd.f32 %v5700, 1.0
    %v6213 = vadd.f32 %v5701, 1.0
    %v6214 = vadd.f32 %v5702, 1.0
    %v6215 = vadd.f32 %v5703, 1.0
    %v6216 = vadd.f32 %v5704, 1.0
    %v6217 = vadd.f32 %v5705, 1.0
    %v6218 = vadd.f32 %v5706, 1.0
    %v6219 = vadd.f32 %v5707, 1.0
    %v6220 = vadd.f32 %v5708, 1.0
    %v6221 = vadd.f32 %v5709, 1.0
    %v6222 = vadd.f32 %v5710, 1.0
    %v6223 = vadd.f32 %v5711, 1.0
    %v6224 = vadd.f32 %v5712, 1.0
    %v6225 = vadd.f32 %v5713, 1.0
    %v6226 = vadd.f32 %v5714, 1.0
    %v6227 = vadd.f32 %v5715, 1.0
    %v6228 = vadd.f32 %v5716, 1.0
    %v6229 = vadd.f32 %v5717, 1.0
    %v6230 = vadd.f32 %v5718, 1.0
    %v6231 = vadd.f32 %v5719, 1.0
    %v6232 = vadd.f32 %v5720, 1.0
    %v6233 = vadd.f32 %v5721, 1.0
    %v6234 = vadd.f32 %v5722, 1.0
    %v6235 = vadd.f32 %v5723, 1.0
    %v6236 = vadd.f32 %v5724, 1.0
    %v6237 = vadd.f32 %v5725, 1.0
    %v6238 = vadd.f32 %v5726, 1.0
    %v6239 = vadd.f32 %v5727, 1.0
    %v6240 = vadd.f32 %v5728, 1.0
    %v6241 = vadd.f32 %v5729, 1.0
    %v6242 = vadd.f32 %v5730, 1.0
    %v6243 = vadd.f32 %v5731, 1.0
    %v6244 = vadd.f32 %v5732, 1.0
    %v6245 = vadd.f32 %v5733, 1.0
    %v6246 = vadd.f32 %v5734, 1.0
    %v6247 = vadd.f32 %v5735, 1.0
    %v6248 = vadd.f32 %v5736, 1.0
    %v6249 = vadd.f32 %v5737, 1.0
    %v6250 = vadd.f32 %v5738, 1.0
    %v6251 = vadd.f32 %v5739, 1.0
    %v6252 = vadd.f32 %v5740, 1.0
    %v6253 = vadd.f32 %v5741, 1.0
    %v6254 = vadd.f32 %v5742, 1.0
    %v6255 = vadd.f32 %v5743, 1.0
    %v6256 = vadd.f32 %v5744, 1.0
    %v6257 = vadd.f32 %v5745, 1.0
    %v6258 = vadd.f32 %v5746, 1.0
    %v6259 = vadd.f32 %v5747, 1.0
    %v6260 = vadd.f32 %v5748, 1.0
    %v6261 = vadd.f32 %v5749, 1.0
    %v6262 = vadd.f32 %v5750, 1.0
    %v6263 = vadd.f32 %v5751, 1.0
    %v6264 = vadd.f32 %v5752, 1.0
    %v6265 = vadd.f32 %v5753, 1.0
    %v6266 = vadd.f32 %v5754, 1.0
    %v6267 = vadd.f32 %v5755, 1.0
    %v6268 = vadd.f32 %v5756, 1.0
    %v6269 = vadd.f32 %v5757, 1.0
    %v6270 = vadd.f32 %v5758, 1.0
    %v6271 = vadd.f32 %v5759, 1.0
    %v6272 = vadd.f32 %v5760, 1.0
    %v6273 = vadd.f32 %v5761, 1.0
    %v6274 = vadd.f32 %v5762, 1.0
    %v6275 = vadd.f32 %v5763, 1.0
    %v6276 = vadd.f32 %v5764, 1.0
    %v6277 = vadd.f32 %v5765, 1.0
    %v6278 = vadd.f32 %v5766, 1.0
    %v6279 = vmul.f32 %v4231, %v5767
    %v6280 = vmul.f32 %v4232, %v5768
    %v6281 = vmul.f32 %v4233, %v5769
    %v6282 = vmul.f32 %v4234, %v5770
    %v6283 = vmul.f32 %v4235, %v5771
    %v6284 = vmul.f32 %v4236, %v5772
    %v6285 = vmul.f32 %v4237, %v5773
    %v6286 = vmul.f32 %v4238, %v5774
    %v6287 = vmul.f32 %v4239, %v5775
    %v6288 = vmul.f32 %v4240, %v5776
    %v6289 = vmul.f32 %v4241, %v5777
    %v6290 = vmul.f32 %v4242, %v5778
    %v6291 = vmul.f32 %v4243, %v5779
    %v6292 = vmul.f32 %v4244, %v5780
    %v6293 = vmul.f32 %v4245, %v5781
    %v6294 = vmul.f32 %v4246, %v5782
    %v6295 = vmul.f32 %v4247, %v5783
    %v6296 = vmul.f32 %v4248, %v5784
    %v6297 = vmul.f32 %v4249, %v5785
    %v6298 = vmul.f32 %v4250, %v5786
    %v6299 = vmul.f32 %v4251, %v5787
    %v6300 = vmul.f32 %v4252, %v5788
    %v6301 = vmul.f32 %v4253, %v5789
    %v6302 = vmul.f32 %v4254, %v5790
    %v6303 = vmul.f32 %v4255, %v5791
    %v6304 = vmul.f32 %v4256, %v5792
    %v6305 = vmul.f32 %v4257, %v5793
    %v6306 = vmul.f32 %v4258, %v5794
    %v6307 = vmul.f32 %v4259, %v5795
    %v6308 = vmul.f32 %v4260, %v5796
    %v6309 = vmul.f32 %v4261, %v5797
    %v6310 = vmul.f32 %v4262, %v5798
    %v6311 = vmul.f32 %v4263, %v5799
    %v6312 = vmul.f32 %v4264, %v5800
    %v6313 = vmul.f32 %v4265, %v5801
    %v6314 = vmul.f32 %v4266, %v5802
    %v6315 = vmul.f32 %v4267, %v5803
    %v6316 = vmul.f32 %v4268, %v5804
    %v6317 = vmul.f32 %v4269, %v5805
    %v6318 = vmul.f32 %v4270, %v5806
    %v6319 = vmul.f32 %v4271, %v5807
    %v6320 = vmul.f32 %v4272, %v5808
    %v6321 = vmul.f32 %v4273, %v5809
    %v6322 = vmul.f32 %v4274, %v5810
    %v6323 = vmul.f32 %v4275, %v5811
    %v6324 = vmul.f32 %v4276, %v5812
    %v6325 = vmul.f32 %v4277, %v5813
    %v6326 = vmul.f32 %v4278, %v5814
    %v6327 = vmul.f32 %v4279, %v5815
    %v6328 = vmul.f32 %v4280, %v5816
    %v6329 = vmul.f32 %v4281, %v5817
    %v6330 = vmul.f32 %v4282, %v5818
    %v6331 = vmul.f32 %v4283, %v5819
    %v6332 = vmul.f32 %v4284, %v5820
    %v6333 = vmul.f32 %v4285, %v5821
    %v6334 = vmul.f32 %v4286, %v5822
    %v6335 = vmul.f32 %v4287, %v5823
    %v6336 = vmul.f32 %v4288, %v5824
    %v6337 = vmul.f32 %v4289, %v5825
    %v6338 = vmul.f32 %v4290, %v5826
    %v6339 = vmul.f32 %v4291, %v5827
    %v6340 = vmul.f32 %v4292, %v5828
    %v6341 = vmul.f32 %v4293, %v5829
    %v6342 = vmul.f32 %v4294, %v5830
    %v6343 = vmul.f32 %v4295, %v5831
    %v6344 = vmul.f32 %v4296, %v5832
    %v6345 = vmul.f32 %v4297, %v5833
    %v6346 = vmul.f32 %v4298, %v5834
    %v6347 = vmul.f32 %v4299, %v5835
    %v6348 = vmul.f32 %v4300, %v5836
    %v6349 = vmul.f32 %v4301, %v5837
    %v6350 = vmul.f32 %v4302, %v5838
    %v6351 = vmul.f32 %v4303, %v5839
    %v6352 = vmul.f32 %v4304, %v5840
    %v6353 = vmul.f32 %v4305, %v5841
    %v6354 = vmul.f32 %v4306, %v5842
    %v6355 = vmul.f32 %v4307, %v5843
    %v6356 = vmul.f32 %v4308, %v5844
    %v6357 = vmul.f32 %v4309, %v5845
    %v6358 = vmul.f32 %v4310, %v5846
    %v6359 = vmul.f32 %v4311, %v5847
    %v6360 = vmul.f32 %v4312, %v5848
    %v6361 = vmul.f32 %v4313, %v5849
    %v6362 = vmul.f32 %v4314, %v5850
    %v6363 = vmul.f32 %v4315, %v5851
    %v6364 = vmul.f32 %v4316, %v5852
    %v6365 = vmul.f32 %v4317, %v5853
    %v6366 = vmul.f32 %v4318, %v5854
    %v6367 = vmul.f32 %v4319, %v5855
    %v6368 = vmul.f32 %v4320, %v5856
    %v6369 = vmul.f32 %v4321, %v5857
    %v6370 = vmul.f32 %v4322, %v5858
    %v6371 = vmul.f32 %v4323, %v5859
    %v6372 = vmul.f32 %v4324, %v5860
    %v6373 = vmul.f32 %v4325, %v5861
    %v6374 = vmul.f32 %v4326, %v5862
    %v6375 = vmul.f32 %v4327, %v5863
    %v6376 = vmul.f32 %v4328, %v5864
    %v6377 = vmul.f32 %v4329, %v5865
    %v6378 = vmul.f32 %v4330, %v5866
    %v6379 = vmul.f32 %v4331, %v5867
    %v6380 = vmul.f32 %v4332, %v5868
    %v6381 = vmul.f32 %v4333, %v5869
    %v6382 = vmul.f32 %v4334, %v5870
    %v6383 = vmul.f32 %v4335, %v5871
    %v6384 = vmul.f32 %v4336, %v5872
    %v6385 = vmul.f32 %v4337, %v5873
    %v6386 = vmul.f32 %v4338, %v5874
    %v6387 = vmul.f32 %v4339, %v5875
    %v6388 = vmul.f32 %v4340, %v5876
    %v6389 = vmul.f32 %v4341, %v5877
    %v6390 = vmul.f32 %v4342, %v5878
    %v6391 = vmul.f32 %v4343, %v5879
    %v6392 = vmul.f32 %v4344, %v5880
    %v6393 = vmul.f32 %v4345, %v5881
    %v6394 = vmul.f32 %v4346, %v5882
    %v6395 = vmul.f32 %v4347, %v5883
    %v6396 = vmul.f32 %v4348, %v5884
    %v6397 = vmul.f32 %v4349, %v5885
    %v6398 = vmul.f32 %v4350, %v5886
    %v6399 = vmul.f32 %v4351, %v5887
    %v6400 = vmul.f32 %v4352, %v5888
    %v6401 = vmul.f32 %v4353, %v5889
    %v6402 = vmul.f32 %v4354, %v5890
    %v6403 = vmul.f32 %v4355, %v5891
    %v6404 = vmul.f32 %v4356, %v5892
    %v6405 = vmul.f32 %v4357, %v5893
    %v6406 = vmul.f32 %v4358, %v5894
    %v6407 = vmul.f32 %v4359, %v5895
    %v6408 = vmul.f32 %v4360, %v5896
    %v6409 = vmul.f32 %v4361, %v5897
    %v6410 = vmul.f32 %v4362, %v5898
    %v6411 = vmul.f32 %v4363, %v5899
    %v6412 = vmul.f32 %v4364, %v5900
    %v6413 = vmul.f32 %v4365, %v5901
    %v6414 = vmul.f32 %v4366, %v5902
    %v6415 = vmul.f32 %v4367, %v5903
    %v6416 = vmul.f32 %v4368, %v5904
    %v6417 = vmul.f32 %v4369, %v5905
    %v6418 = vmul.f32 %v4370, %v5906
    %v6419 = vmul.f32 %v4371, %v5907
    %v6420 = vmul.f32 %v4372, %v5908
    %v6421 = vmul.f32 %v4373, %v5909
    %v6422 = vmul.f32 %v4374, %v5910
    %v6423 = vmul.f32 %v4375, %v5911
    %v6424 = vmul.f32 %v4376, %v5912
    %v6425 = vmul.f32 %v4377, %v5913
    %v6426 = vmul.f32 %v4378, %v5914
    %v6427 = vmul.f32 %v4379, %v5915
    %v6428 = vmul.f32 %v4380, %v5916
    %v6429 = vmul.f32 %v4381, %v5917
    %v6430 = vmul.f32 %v4382, %v5918
    %v6431 = vmul.f32 %v4383, %v5919
    %v6432 = vmul.f32 %v4384, %v5920
    %v6433 = vmul.f32 %v4385, %v5921
    %v6434 = vmul.f32 %v4386, %v5922
    %v6435 = vmul.f32 %v4387, %v5923
    %v6436 = vmul.f32 %v4388, %v5924
    %v6437 = vmul.f32 %v4389, %v5925
    %v6438 = vmul.f32 %v4390, %v5926
    %v6439 = vmul.f32 %v4391, %v5927
    %v6440 = vmul.f32 %v4392, %v5928
    %v6441 = vmul.f32 %v4393, %v5929
    %v6442 = vmul.f32 %v4394, %v5930
    %v6443 = vmul.f32 %v4395, %v5931
    %v6444 = vmul.f32 %v4396, %v5932
    %v6445 = vmul.f32 %v4397, %v5933
    %v6446 = vmul.f32 %v4398, %v5934
    %v6447 = vmul.f32 %v4399, %v5935
    %v6448 = vmul.f32 %v4400, %v5936
    %v6449 = vmul.f32 %v4401, %v5937
    %v6450 = vmul.f32 %v4402, %v5938
    %v6451 = vmul.f32 %v4403, %v5939
    %v6452 = vmul.f32 %v4404, %v5940
    %v6453 = vmul.f32 %v4405, %v5941
    %v6454 = vmul.f32 %v4406, %v5942
    %v6455 = vmul.f32 %v4407, %v5943
    %v6456 = vmul.f32 %v4408, %v5944
    %v6457 = vmul.f32 %v4409, %v5945
    %v6458 = vmul.f32 %v4410, %v5946
    %v6459 = vmul.f32 %v4411, %v5947
    %v6460 = vmul.f32 %v4412, %v5948
    %v6461 = vmul.f32 %v4413, %v5949
    %v6462 = vmul.f32 %v4414, %v5950
    %v6463 = vmul.f32 %v4415, %v5951
    %v6464 = vmul.f32 %v4416, %v5952
    %v6465 = vmul.f32 %v4417, %v5953
    %v6466 = vmul.f32 %v4418, %v5954
    %v6467 = vmul.f32 %v4419, %v5955
    %v6468 = vmul.f32 %v4420, %v5956
    %v6469 = vmul.f32 %v4421, %v5957
    %v6470 = vmul.f32 %v4422, %v5958
    %v6471 = vmul.f32 %v4423, %v5959
    %v6472 = vmul.f32 %v4424, %v5960
    %v6473 = vmul.f32 %v4425, %v5961
    %v6474 = vmul.f32 %v4426, %v5962
    %v6475 = vmul.f32 %v4427, %v5963
    %v6476 = vmul.f32 %v4428, %v5964
    %v6477 = vmul.f32 %v4429, %v5965
    %v6478 = vmul.f32 %v4430, %v5966
    %v6479 = vmul.f32 %v4431, %v5967
    %v6480 = vmul.f32 %v4432, %v5968
    %v6481 = vmul.f32 %v4433, %v5969
    %v6482 = vmul.f32 %v4434, %v5970
    %v6483 = vmul.f32 %v4435, %v5971
    %v6484 = vmul.f32 %v4436, %v5972
    %v6485 = vmul.f32 %v4437, %v5973
    %v6486 = vmul.f32 %v4438, %v5974
    %v6487 = vmul.f32 %v4439, %v5975
    %v6488 = vmul.f32 %v4440, %v5976
    %v6489 = vmul.f32 %v4441, %v5977
    %v6490 = vmul.f32 %v4442, %v5978
    %v6491 = vmul.f32 %v4443, %v5979
    %v6492 = vmul.f32 %v4444, %v5980
    %v6493 = vmul.f32 %v4445, %v5981
    %v6494 = vmul.f32 %v4446, %v5982
    %v6495 = vmul.f32 %v4447, %v5983
    %v6496 = vmul.f32 %v4448, %v5984
    %v6497 = vmul.f32 %v4449, %v5985
    %v6498 = vmul.f32 %v4450, %v5986
    %v6499 = vmul.f32 %v4451, %v5987
    %v6500 = vmul.f32 %v4452, %v5988
    %v6501 = vmul.f32 %v4453, %v5989
    %v6502 = vmul.f32 %v4454, %v5990
    %v6503 = vmul.f32 %v4455, %v5991
    %v6504 = vmul.f32 %v4456, %v5992
    %v6505 = vmul.f32 %v4457, %v5993
    %v6506 = vmul.f32 %v4458, %v5994
    %v6507 = vmul.f32 %v4459, %v5995
    %v6508 = vmul.f32 %v4460, %v5996
    %v6509 = vmul.f32 %v4461, %v5997
    %v6510 = vmul.f32 %v4462, %v5998
    %v6511 = vmul.f32 %v4463, %v5999
    %v6512 = vmul.f32 %v4464, %v6000
    %v6513 = vmul.f32 %v4465, %v6001
    %v6514 = vmul.f32 %v4466, %v6002
    %v6515 = vmul.f32 %v4467, %v6003
    %v6516 = vmul.f32 %v4468, %v6004
    %v6517 = vmul.f32 %v4469, %v6005
    %v6518 = vmul.f32 %v4470, %v6006
    %v6519 = vmul.f32 %v4471, %v6007
    %v6520 = vmul.f32 %v4472, %v6008
    %v6521 = vmul.f32 %v4473, %v6009
    %v6522 = vmul.f32 %v4474, %v6010
    %v6523 = vmul.f32 %v4475, %v6011
    %v6524 = vmul.f32 %v4476, %v6012
    %v6525 = vmul.f32 %v4477, %v6013
    %v6526 = vmul.f32 %v4478, %v6014
    %v6527 = vmul.f32 %v4479, %v6015
    %v6528 = vmul.f32 %v4480, %v6016
    %v6529 = vmul.f32 %v4481, %v6017
    %v6530 = vmul.f32 %v4482, %v6018
    %v6531 = vmul.f32 %v4483, %v6019
    %v6532 = vmul.f32 %v4484, %v6020
    %v6533 = vmul.f32 %v4485, %v6021
    %v6534 = vmul.f32 %v4486, %v6022
    %v6535 = vmul.f32 %v4487, %v6023
    %v6536 = vmul.f32 %v4488, %v6024
    %v6537 = vmul.f32 %v4489, %v6025
    %v6538 = vmul.f32 %v4490, %v6026
    %v6539 = vmul.f32 %v4491, %v6027
    %v6540 = vmul.f32 %v4492, %v6028
    %v6541 = vmul.f32 %v4493, %v6029
    %v6542 = vmul.f32 %v4494, %v6030
    %v6543 = vmul.f32 %v4495, %v6031
    %v6544 = vmul.f32 %v4496, %v6032
    %v6545 = vmul.f32 %v4497, %v6033
    %v6546 = vmul.f32 %v4498, %v6034
    %v6547 = vmul.f32 %v4499, %v6035
    %v6548 = vmul.f32 %v4500, %v6036
    %v6549 = vmul.f32 %v4501, %v6037
    %v6550 = vmul.f32 %v4502, %v6038
    %v6551 = vmul.f32 %v4503, %v6039
    %v6552 = vmul.f32 %v4504, %v6040
    %v6553 = vmul.f32 %v4505, %v6041
    %v6554 = vmul.f32 %v4506, %v6042
    %v6555 = vmul.f32 %v4507, %v6043
    %v6556 = vmul.f32 %v4508, %v6044
    %v6557 = vmul.f32 %v4509, %v6045
    %v6558 = vmul.f32 %v4510, %v6046
    %v6559 = vmul.f32 %v4511, %v6047
    %v6560 = vmul.f32 %v4512, %v6048
    %v6561 = vmul.f32 %v4513, %v6049
    %v6562 = vmul.f32 %v4514, %v6050
    %v6563 = vmul.f32 %v4515, %v6051
    %v6564 = vmul.f32 %v4516, %v6052
    %v6565 = vmul.f32 %v4517, %v6053
    %v6566 = vmul.f32 %v4518, %v6054
    %v6567 = vmul.f32 %v4519, %v6055
    %v6568 = vmul.f32 %v4520, %v6056
    %v6569 = vmul.f32 %v4521, %v6057
    %v6570 = vmul.f32 %v4522, %v6058
    %v6571 = vmul.f32 %v4523, %v6059
    %v6572 = vmul.f32 %v4524, %v6060
    %v6573 = vmul.f32 %v4525, %v6061
    %v6574 = vmul.f32 %v4526, %v6062
    %v6575 = vmul.f32 %v4527, %v6063
    %v6576 = vmul.f32 %v4528, %v6064
    %v6577 = vmul.f32 %v4529, %v6065
    %v6578 = vmul.f32 %v4530, %v6066
    %v6579 = vmul.f32 %v4531, %v6067
    %v6580 = vmul.f32 %v4532, %v6068
    %v6581 = vmul.f32 %v4533, %v6069
    %v6582 = vmul.f32 %v4534, %v6070
    %v6583 = vmul.f32 %v4535, %v6071
    %v6584 = vmul.f32 %v4536, %v6072
    %v6585 = vmul.f32 %v4537, %v6073
    %v6586 = vmul.f32 %v4538, %v6074
    %v6587 = vmul.f32 %v4539, %v6075
    %v6588 = vmul.f32 %v4540, %v6076
    %v6589 = vmul.f32 %v4541, %v6077
    %v6590 = vmul.f32 %v4542, %v6078
    %v6591 = vmul.f32 %v4543, %v6079
    %v6592 = vmul.f32 %v4544, %v6080
    %v6593 = vmul.f32 %v4545, %v6081
    %v6594 = vmul.f32 %v4546, %v6082
    %v6595 = vmul.f32 %v4547, %v6083
    %v6596 = vmul.f32 %v4548, %v6084
    %v6597 = vmul.f32 %v4549, %v6085
    %v6598 = vmul.f32 %v4550, %v6086
    %v6599 = vmul.f32 %v4551, %v6087
    %v6600 = vmul.f32 %v4552, %v6088
    %v6601 = vmul.f32 %v4553, %v6089
    %v6602 = vmul.f32 %v4554, %v6090
    %v6603 = vmul.f32 %v4555, %v6091
    %v6604 = vmul.f32 %v4556, %v6092
    %v6605 = vmul.f32 %v4557, %v6093
    %v6606 = vmul.f32 %v4558, %v6094
    %v6607 = vmul.f32 %v4559, %v6095
    %v6608 = vmul.f32 %v4560, %v6096
    %v6609 = vmul.f32 %v4561, %v6097
    %v6610 = vmul.f32 %v4562, %v6098
    %v6611 = vmul.f32 %v4563, %v6099
    %v6612 = vmul.f32 %v4564, %v6100
    %v6613 = vmul.f32 %v4565, %v6101
    %v6614 = vmul.f32 %v4566, %v6102
    %v6615 = vmul.f32 %v4567, %v6103
    %v6616 = vmul.f32 %v4568, %v6104
    %v6617 = vmul.f32 %v4569, %v6105
    %v6618 = vmul.f32 %v4570, %v6106
    %v6619 = vmul.f32 %v4571, %v6107
    %v6620 = vmul.f32 %v4572, %v6108
    %v6621 = vmul.f32 %v4573, %v6109
    %v6622 = vmul.f32 %v4574, %v6110
    %v6623 = vmul.f32 %v4575, %v6111
    %v6624 = vmul.f32 %v4576, %v6112
    %v6625 = vmul.f32 %v4577, %v6113
    %v6626 = vmul.f32 %v4578, %v6114
    %v6627 = vmul.f32 %v4579, %v6115
    %v6628 = vmul.f32 %v4580, %v6116
    %v6629 = vmul.f32 %v4581, %v6117
    %v6630 = vmul.f32 %v4582, %v6118
    %v6631 = vmul.f32 %v4583, %v6119
    %v6632 = vmul.f32 %v4584, %v6120
    %v6633 = vmul.f32 %v4585, %v6121
    %v6634 = vmul.f32 %v4586, %v6122
    %v6635 = vmul.f32 %v4587, %v6123
    %v6636 = vmul.f32 %v4588, %v6124
    %v6637 = vmul.f32 %v4589, %v6125
    %v6638 = vmul.f32 %v4590, %v6126
    %v6639 = vmul.f32 %v4591, %v6127
    %v6640 = vmul.f32 %v4592, %v6128
    %v6641 = vmul.f32 %v4593, %v6129
    %v6642 = vmul.f32 %v4594, %v6130
    %v6643 = vmul.f32 %v4595, %v6131
    %v6644 = vmul.f32 %v4596, %v6132
    %v6645 = vmul.f32 %v4597, %v6133
    %v6646 = vmul.f32 %v4598, %v6134
    %v6647 = vmul.f32 %v4599, %v6135
    %v6648 = vmul.f32 %v4600, %v6136
    %v6649 = vmul.f32 %v4601, %v6137
    %v6650 = vmul.f32 %v4602, %v6138
    %v6651 = vmul.f32 %v4603, %v6139
    %v6652 = vmul.f32 %v4604, %v6140
    %v6653 = vmul.f32 %v4605, %v6141
    %v6654 = vmul.f32 %v4606, %v6142
    %v6655 = vmul.f32 %v4607, %v6143
    %v6656 = vmul.f32 %v4608, %v6144
    %v6657 = vmul.f32 %v4609, %v6145
    %v6658 = vmul.f32 %v4610, %v6146
    %v6659 = vmul.f32 %v4611, %v6147
    %v6660 = vmul.f32 %v4612, %v6148
    %v6661 = vmul.f32 %v4613, %v6149
    %v6662 = vmul.f32 %v4614, %v6150
    %v6663 = vmul.f32 %v4615, %v6151
    %v6664 = vmul.f32 %v4616, %v6152
    %v6665 = vmul.f32 %v4617, %v6153
    %v6666 = vmul.f32 %v4618, %v6154
    %v6667 = vmul.f32 %v4619, %v6155
    %v6668 = vmul.f32 %v4620, %v6156
    %v6669 = vmul.f32 %v4621, %v6157
    %v6670 = vmul.f32 %v4622, %v6158
    %v6671 = vmul.f32 %v4623, %v6159
    %v6672 = vmul.f32 %v4624, %v6160
    %v6673 = vmul.f32 %v4625, %v6161
    %v6674 = vmul.f32 %v4626, %v6162
    %v6675 = vmul.f32 %v4627, %v6163
    %v6676 = vmul.f32 %v4628, %v6164
    %v6677 = vmul.f32 %v4629, %v6165
    %v6678 = vmul.f32 %v4630, %v6166
    %v6679 = vmul.f32 %v4631, %v6167
    %v6680 = vmul.f32 %v4632, %v6168
    %v6681 = vmul.f32 %v4633, %v6169
    %v6682 = vmul.f32 %v4634, %v6170
    %v6683 = vmul.f32 %v4635, %v6171
    %v6684 = vmul.f32 %v4636, %v6172
    %v6685 = vmul.f32 %v4637, %v6173
    %v6686 = vmul.f32 %v4638, %v6174
    %v6687 = vmul.f32 %v4639, %v6175
    %v6688 = vmul.f32 %v4640, %v6176
    %v6689 = vmul.f32 %v4641, %v6177
    %v6690 = vmul.f32 %v4642, %v6178
    %v6691 = vmul.f32 %v4643, %v6179
    %v6692 = vmul.f32 %v4644, %v6180
    %v6693 = vmul.f32 %v4645, %v6181
    %v6694 = vmul.f32 %v4646, %v6182
    %v6695 = vmul.f32 %v4647, %v6183
    %v6696 = vmul.f32 %v4648, %v6184
    %v6697 = vmul.f32 %v4649, %v6185
    %v6698 = vmul.f32 %v4650, %v6186
    %v6699 = vmul.f32 %v4651, %v6187
    %v6700 = vmul.f32 %v4652, %v6188
    %v6701 = vmul.f32 %v4653, %v6189
    %v6702 = vmul.f32 %v4654, %v6190
    %v6703 = vmul.f32 %v4655, %v6191
    %v6704 = vmul.f32 %v4656, %v6192
    %v6705 = vmul.f32 %v4657, %v6193
    %v6706 = vmul.f32 %v4658, %v6194
    %v6707 = vmul.f32 %v4659, %v6195
    %v6708 = vmul.f32 %v4660, %v6196
    %v6709 = vmul.f32 %v4661, %v6197
    %v6710 = vmul.f32 %v4662, %v6198
    %v6711 = vmul.f32 %v4663, %v6199
    %v6712 = vmul.f32 %v4664, %v6200
    %v6713 = vmul.f32 %v4665, %v6201
    %v6714 = vmul.f32 %v4666, %v6202
    %v6715 = vmul.f32 %v4667, %v6203
    %v6716 = vmul.f32 %v4668, %v6204
    %v6717 = vmul.f32 %v4669, %v6205
    %v6718 = vmul.f32 %v4670, %v6206
    %v6719 = vmul.f32 %v4671, %v6207
    %v6720 = vmul.f32 %v4672, %v6208
    %v6721 = vmul.f32 %v4673, %v6209
    %v6722 = vmul.f32 %v4674, %v6210
    %v6723 = vmul.f32 %v4675, %v6211
    %v6724 = vmul.f32 %v4676, %v6212
    %v6725 = vmul.f32 %v4677, %v6213
    %v6726 = vmul.f32 %v4678, %v6214
    %v6727 = vmul.f32 %v4679, %v6215
    %v6728 = vmul.f32 %v4680, %v6216
    %v6729 = vmul.f32 %v4681, %v6217
    %v6730 = vmul.f32 %v4682, %v6218
    %v6731 = vmul.f32 %v4683, %v6219
    %v6732 = vmul.f32 %v4684, %v6220
    %v6733 = vmul.f32 %v4685, %v6221
    %v6734 = vmul.f32 %v4686, %v6222
    %v6735 = vmul.f32 %v4687, %v6223
    %v6736 = vmul.f32 %v4688, %v6224
    %v6737 = vmul.f32 %v4689, %v6225
    %v6738 = vmul.f32 %v4690, %v6226
    %v6739 = vmul.f32 %v4691, %v6227
    %v6740 = vmul.f32 %v4692, %v6228
    %v6741 = vmul.f32 %v4693, %v6229
    %v6742 = vmul.f32 %v4694, %v6230
    %v6743 = vmul.f32 %v4695, %v6231
    %v6744 = vmul.f32 %v4696, %v6232
    %v6745 = vmul.f32 %v4697, %v6233
    %v6746 = vmul.f32 %v4698, %v6234
    %v6747 = vmul.f32 %v4699, %v6235
    %v6748 = vmul.f32 %v4700, %v6236
    %v6749 = vmul.f32 %v4701, %v6237
    %v6750 = vmul.f32 %v4702, %v6238
    %v6751 = vmul.f32 %v4703, %v6239
    %v6752 = vmul.f32 %v4704, %v6240
    %v6753 = vmul.f32 %v4705, %v6241
    %v6754 = vmul.f32 %v4706, %v6242
    %v6755 = vmul.f32 %v4707, %v6243
    %v6756 = vmul.f32 %v4708, %v6244
    %v6757 = vmul.f32 %v4709, %v6245
    %v6758 = vmul.f32 %v4710, %v6246
    %v6759 = vmul.f32 %v4711, %v6247
    %v6760 = vmul.f32 %v4712, %v6248
    %v6761 = vmul.f32 %v4713, %v6249
    %v6762 = vmul.f32 %v4714, %v6250
    %v6763 = vmul.f32 %v4715, %v6251
    %v6764 = vmul.f32 %v4716, %v6252
    %v6765 = vmul.f32 %v4717, %v6253
    %v6766 = vmul.f32 %v4718, %v6254
    %v6767 = vmul.f32 %v4719, %v6255
    %v6768 = vmul.f32 %v4720, %v6256
    %v6769 = vmul.f32 %v4721, %v6257
    %v6770 = vmul.f32 %v4722, %v6258
    %v6771 = vmul.f32 %v4723, %v6259
    %v6772 = vmul.f32 %v4724, %v6260
    %v6773 = vmul.f32 %v4725, %v6261
    %v6774 = vmul.f32 %v4726, %v6262
    %v6775 = vmul.f32 %v4727, %v6263
    %v6776 = vmul.f32 %v4728, %v6264
    %v6777 = vmul.f32 %v4729, %v6265
    %v6778 = vmul.f32 %v4730, %v6266
    %v6779 = vmul.f32 %v4731, %v6267
    %v6780 = vmul.f32 %v4732, %v6268
    %v6781 = vmul.f32 %v4733, %v6269
    %v6782 = vmul.f32 %v4734, %v6270
    %v6783 = vmul.f32 %v4735, %v6271
    %v6784 = vmul.f32 %v4736, %v6272
    %v6785 = vmul.f32 %v4737, %v6273
    %v6786 = vmul.f32 %v4738, %v6274
    %v6787 = vmul.f32 %v4739, %v6275
    %v6788 = vmul.f32 %v4740, %v6276
    %v6789 = vmul.f32 %v4741, %v6277
    %v6790 = vmul.f32 %v4742, %v6278
    %v6791 = vld [vmem:[#allocation7] sm:$0xff]
    %v6792 = vld [vmem:[#allocation7 + $0x8] sm:$0xff]
    %v6793 = vld [vmem:[#allocation7 + $0x10] sm:$0xff]
    %v6794 = vld [vmem:[#allocation7 + $0x18] sm:$0xff]
    %v6795 = vld [vmem:[#allocation7 + $0x20] sm:$0xff]
    %v6796 = vld [vmem:[#allocation7 + $0x28] sm:$0xff]
    %v6797 = vld [vmem:[#allocation7 + $0x30] sm:$0xff]
    %v6798 = vld [vmem:[#allocation7 + $0x38] sm:$0xff]
    %v6799 = vld [vmem:[#allocation7 + $0x40] sm:$0xff]
    %v6800 = vld [vmem:[#allocation7 + $0x48] sm:$0xff]
    %v6801 = vld [vmem:[#allocation7 + $0x50] sm:$0xff]
    %v6802 = vld [vmem:[#allocation7 + $0x58] sm:$0xff]
    %v6803 = vld [vmem:[#allocation7 + $0x60] sm:$0xff]
    %v6804 = vld [vmem:[#allocation7 + $0x68] sm:$0xff]
    %v6805 = vld [vmem:[#allocation7 + $0x70] sm:$0xff]
    %v6806 = vld [vmem:[#allocation7 + $0x78] sm:$0xff]
    %v6807 = vld [vmem:[#allocation7 + $0x80] sm:$0xff]
    %v6808 = vld [vmem:[#allocation7 + $0x88] sm:$0xff]
    %v6809 = vld [vmem:[#allocation7 + $0x90] sm:$0xff]
    %v6810 = vld [vmem:[#allocation7 + $0x98] sm:$0xff]
    %v6811 = vld [vmem:[#allocation7 + $0xa0] sm:$0xff]
    %v6812 = vld [vmem:[#allocation7 + $0xa8] sm:$0xff]
    %v6813 = vld [vmem:[#allocation7 + $0xb0] sm:$0xff]
    %v6814 = vld [vmem:[#allocation7 + $0xb8] sm:$0xff]
    %v6815 = vld [vmem:[#allocation7 + $0xc0] sm:$0xff]
    %v6816 = vld [vmem:[#allocation7 + $0xc8] sm:$0xff]
    %v6817 = vld [vmem:[#allocation7 + $0xd0] sm:$0xff]
    %v6818 = vld [vmem:[#allocation7 + $0xd8] sm:$0xff]
    %v6819 = vld [vmem:[#allocation7 + $0xe0] sm:$0xff]
    %v6820 = vld [vmem:[#allocation7 + $0xe8] sm:$0xff]
    %v6821 = vld [vmem:[#allocation7 + $0xf0] sm:$0xff]
    %v6822 = vld [vmem:[#allocation7 + $0xf8] sm:$0xff]
    %v6823 = vld [vmem:[#allocation7 + $0x100] sm:$0xff]
    %v6824 = vld [vmem:[#allocation7 + $0x108] sm:$0xff]
    %v6825 = vld [vmem:[#allocation7 + $0x110] sm:$0xff]
    %v6826 = vld [vmem:[#allocation7 + $0x118] sm:$0xff]
    %v6827 = vld [vmem:[#allocation7 + $0x120] sm:$0xff]
    %v6828 = vld [vmem:[#allocation7 + $0x128] sm:$0xff]
    %v6829 = vld [vmem:[#allocation7 + $0x130] sm:$0xff]
    %v6830 = vld [vmem:[#allocation7 + $0x138] sm:$0xff]
    %v6831 = vld [vmem:[#allocation7 + $0x140] sm:$0xff]
    %v6832 = vld [vmem:[#allocation7 + $0x148] sm:$0xff]
    %v6833 = vld [vmem:[#allocation7 + $0x150] sm:$0xff]
    %v6834 = vld [vmem:[#allocation7 + $0x158] sm:$0xff]
    %v6835 = vld [vmem:[#allocation7 + $0x160] sm:$0xff]
    %v6836 = vld [vmem:[#allocation7 + $0x168] sm:$0xff]
    %v6837 = vld [vmem:[#allocation7 + $0x170] sm:$0xff]
    %v6838 = vld [vmem:[#allocation7 + $0x178] sm:$0xff]
    %v6839 = vld [vmem:[#allocation7 + $0x180] sm:$0xff]
    %v6840 = vld [vmem:[#allocation7 + $0x188] sm:$0xff]
    %v6841 = vld [vmem:[#allocation7 + $0x190] sm:$0xff]
    %v6842 = vld [vmem:[#allocation7 + $0x198] sm:$0xff]
    %v6843 = vld [vmem:[#allocation7 + $0x1a0] sm:$0xff]
    %v6844 = vld [vmem:[#allocation7 + $0x1a8] sm:$0xff]
    %v6845 = vld [vmem:[#allocation7 + $0x1b0] sm:$0xff]
    %v6846 = vld [vmem:[#allocation7 + $0x1b8] sm:$0xff]
    %v6847 = vld [vmem:[#allocation7 + $0x1c0] sm:$0xff]
    %v6848 = vld [vmem:[#allocation7 + $0x1c8] sm:$0xff]
    %v6849 = vld [vmem:[#allocation7 + $0x1d0] sm:$0xff]
    %v6850 = vld [vmem:[#allocation7 + $0x1d8] sm:$0xff]
    %v6851 = vld [vmem:[#allocation7 + $0x1e0] sm:$0xff]
    %v6852 = vld [vmem:[#allocation7 + $0x1e8] sm:$0xff]
    %v6853 = vld [vmem:[#allocation7 + $0x1f0] sm:$0xff]
    %v6854 = vld [vmem:[#allocation7 + $0x1f8] sm:$0xff]
    %v6855 = vld [vmem:[#allocation7 + $0x200] sm:$0xff]
    %v6856 = vld [vmem:[#allocation7 + $0x208] sm:$0xff]
    %v6857 = vld [vmem:[#allocation7 + $0x210] sm:$0xff]
    %v6858 = vld [vmem:[#allocation7 + $0x218] sm:$0xff]
    %v6859 = vld [vmem:[#allocation7 + $0x220] sm:$0xff]
    %v6860 = vld [vmem:[#allocation7 + $0x228] sm:$0xff]
    %v6861 = vld [vmem:[#allocation7 + $0x230] sm:$0xff]
    %v6862 = vld [vmem:[#allocation7 + $0x238] sm:$0xff]
    %v6863 = vld [vmem:[#allocation7 + $0x240] sm:$0xff]
    %v6864 = vld [vmem:[#allocation7 + $0x248] sm:$0xff]
    %v6865 = vld [vmem:[#allocation7 + $0x250] sm:$0xff]
    %v6866 = vld [vmem:[#allocation7 + $0x258] sm:$0xff]
    %v6867 = vld [vmem:[#allocation7 + $0x260] sm:$0xff]
    %v6868 = vld [vmem:[#allocation7 + $0x268] sm:$0xff]
    %v6869 = vld [vmem:[#allocation7 + $0x270] sm:$0xff]
    %v6870 = vld [vmem:[#allocation7 + $0x278] sm:$0xff]
    %v6871 = vld [vmem:[#allocation7 + $0x280] sm:$0xff]
    %v6872 = vld [vmem:[#allocation7 + $0x288] sm:$0xff]
    %v6873 = vld [vmem:[#allocation7 + $0x290] sm:$0xff]
    %v6874 = vld [vmem:[#allocation7 + $0x298] sm:$0xff]
    %v6875 = vld [vmem:[#allocation7 + $0x2a0] sm:$0xff]
    %v6876 = vld [vmem:[#allocation7 + $0x2a8] sm:$0xff]
    %v6877 = vld [vmem:[#allocation7 + $0x2b0] sm:$0xff]
    %v6878 = vld [vmem:[#allocation7 + $0x2b8] sm:$0xff]
    %v6879 = vld [vmem:[#allocation7 + $0x2c0] sm:$0xff]
    %v6880 = vld [vmem:[#allocation7 + $0x2c8] sm:$0xff]
    %v6881 = vld [vmem:[#allocation7 + $0x2d0] sm:$0xff]
    %v6882 = vld [vmem:[#allocation7 + $0x2d8] sm:$0xff]
    %v6883 = vld [vmem:[#allocation7 + $0x2e0] sm:$0xff]
    %v6884 = vld [vmem:[#allocation7 + $0x2e8] sm:$0xff]
    %v6885 = vld [vmem:[#allocation7 + $0x2f0] sm:$0xff]
    %v6886 = vld [vmem:[#allocation7 + $0x2f8] sm:$0xff]
    %v6887 = vld [vmem:[#allocation7 + $0x300] sm:$0xff]
    %v6888 = vld [vmem:[#allocation7 + $0x308] sm:$0xff]
    %v6889 = vld [vmem:[#allocation7 + $0x310] sm:$0xff]
    %v6890 = vld [vmem:[#allocation7 + $0x318] sm:$0xff]
    %v6891 = vld [vmem:[#allocation7 + $0x320] sm:$0xff]
    %v6892 = vld [vmem:[#allocation7 + $0x328] sm:$0xff]
    %v6893 = vld [vmem:[#allocation7 + $0x330] sm:$0xff]
    %v6894 = vld [vmem:[#allocation7 + $0x338] sm:$0xff]
    %v6895 = vld [vmem:[#allocation7 + $0x340] sm:$0xff]
    %v6896 = vld [vmem:[#allocation7 + $0x348] sm:$0xff]
    %v6897 = vld [vmem:[#allocation7 + $0x350] sm:$0xff]
    %v6898 = vld [vmem:[#allocation7 + $0x358] sm:$0xff]
    %v6899 = vld [vmem:[#allocation7 + $0x360] sm:$0xff]
    %v6900 = vld [vmem:[#allocation7 + $0x368] sm:$0xff]
    %v6901 = vld [vmem:[#allocation7 + $0x370] sm:$0xff]
    %v6902 = vld [vmem:[#allocation7 + $0x378] sm:$0xff]
    %v6903 = vld [vmem:[#allocation7 + $0x380] sm:$0xff]
    %v6904 = vld [vmem:[#allocation7 + $0x388] sm:$0xff]
    %v6905 = vld [vmem:[#allocation7 + $0x390] sm:$0xff]
    %v6906 = vld [vmem:[#allocation7 + $0x398] sm:$0xff]
    %v6907 = vld [vmem:[#allocation7 + $0x3a0] sm:$0xff]
    %v6908 = vld [vmem:[#allocation7 + $0x3a8] sm:$0xff]
    %v6909 = vld [vmem:[#allocation7 + $0x3b0] sm:$0xff]
    %v6910 = vld [vmem:[#allocation7 + $0x3b8] sm:$0xff]
    %v6911 = vld [vmem:[#allocation7 + $0x3c0] sm:$0xff]
    %v6912 = vld [vmem:[#allocation7 + $0x3c8] sm:$0xff]
    %v6913 = vld [vmem:[#allocation7 + $0x3d0] sm:$0xff]
    %v6914 = vld [vmem:[#allocation7 + $0x3d8] sm:$0xff]
    %v6915 = vld [vmem:[#allocation7 + $0x3e0] sm:$0xff]
    %v6916 = vld [vmem:[#allocation7 + $0x3e8] sm:$0xff]
    %v6917 = vld [vmem:[#allocation7 + $0x3f0] sm:$0xff]
    %v6918 = vld [vmem:[#allocation7 + $0x3f8] sm:$0xff]
    %v6919 = vld [vmem:[#allocation7 + $0x400] sm:$0xff]
    %v6920 = vld [vmem:[#allocation7 + $0x408] sm:$0xff]
    %v6921 = vld [vmem:[#allocation7 + $0x410] sm:$0xff]
    %v6922 = vld [vmem:[#allocation7 + $0x418] sm:$0xff]
    %v6923 = vld [vmem:[#allocation7 + $0x420] sm:$0xff]
    %v6924 = vld [vmem:[#allocation7 + $0x428] sm:$0xff]
    %v6925 = vld [vmem:[#allocation7 + $0x430] sm:$0xff]
    %v6926 = vld [vmem:[#allocation7 + $0x438] sm:$0xff]
    %v6927 = vld [vmem:[#allocation7 + $0x440] sm:$0xff]
    %v6928 = vld [vmem:[#allocation7 + $0x448] sm:$0xff]
    %v6929 = vld [vmem:[#allocation7 + $0x450] sm:$0xff]
    %v6930 = vld [vmem:[#allocation7 + $0x458] sm:$0xff]
    %v6931 = vld [vmem:[#allocation7 + $0x460] sm:$0xff]
    %v6932 = vld [vmem:[#allocation7 + $0x468] sm:$0xff]
    %v6933 = vld [vmem:[#allocation7 + $0x470] sm:$0xff]
    %v6934 = vld [vmem:[#allocation7 + $0x478] sm:$0xff]
    %v6935 = vld [vmem:[#allocation7 + $0x480] sm:$0xff]
    %v6936 = vld [vmem:[#allocation7 + $0x488] sm:$0xff]
    %v6937 = vld [vmem:[#allocation7 + $0x490] sm:$0xff]
    %v6938 = vld [vmem:[#allocation7 + $0x498] sm:$0xff]
    %v6939 = vld [vmem:[#allocation7 + $0x4a0] sm:$0xff]
    %v6940 = vld [vmem:[#allocation7 + $0x4a8] sm:$0xff]
    %v6941 = vld [vmem:[#allocation7 + $0x4b0] sm:$0xff]
    %v6942 = vld [vmem:[#allocation7 + $0x4b8] sm:$0xff]
    %v6943 = vld [vmem:[#allocation7 + $0x4c0] sm:$0xff]
    %v6944 = vld [vmem:[#allocation7 + $0x4c8] sm:$0xff]
    %v6945 = vld [vmem:[#allocation7 + $0x4d0] sm:$0xff]
    %v6946 = vld [vmem:[#allocation7 + $0x4d8] sm:$0xff]
    %v6947 = vld [vmem:[#allocation7 + $0x4e0] sm:$0xff]
    %v6948 = vld [vmem:[#allocation7 + $0x4e8] sm:$0xff]
    %v6949 = vld [vmem:[#allocation7 + $0x4f0] sm:$0xff]
    %v6950 = vld [vmem:[#allocation7 + $0x4f8] sm:$0xff]
    %v6951 = vld [vmem:[#allocation7 + $0x500] sm:$0xff]
    %v6952 = vld [vmem:[#allocation7 + $0x508] sm:$0xff]
    %v6953 = vld [vmem:[#allocation7 + $0x510] sm:$0xff]
    %v6954 = vld [vmem:[#allocation7 + $0x518] sm:$0xff]
    %v6955 = vld [vmem:[#allocation7 + $0x520] sm:$0xff]
    %v6956 = vld [vmem:[#allocation7 + $0x528] sm:$0xff]
    %v6957 = vld [vmem:[#allocation7 + $0x530] sm:$0xff]
    %v6958 = vld [vmem:[#allocation7 + $0x538] sm:$0xff]
    %v6959 = vld [vmem:[#allocation7 + $0x540] sm:$0xff]
    %v6960 = vld [vmem:[#allocation7 + $0x548] sm:$0xff]
    %v6961 = vld [vmem:[#allocation7 + $0x550] sm:$0xff]
    %v6962 = vld [vmem:[#allocation7 + $0x558] sm:$0xff]
    %v6963 = vld [vmem:[#allocation7 + $0x560] sm:$0xff]
    %v6964 = vld [vmem:[#allocation7 + $0x568] sm:$0xff]
    %v6965 = vld [vmem:[#allocation7 + $0x570] sm:$0xff]
    %v6966 = vld [vmem:[#allocation7 + $0x578] sm:$0xff]
    %v6967 = vld [vmem:[#allocation7 + $0x580] sm:$0xff]
    %v6968 = vld [vmem:[#allocation7 + $0x588] sm:$0xff]
    %v6969 = vld [vmem:[#allocation7 + $0x590] sm:$0xff]
    %v6970 = vld [vmem:[#allocation7 + $0x598] sm:$0xff]
    %v6971 = vld [vmem:[#allocation7 + $0x5a0] sm:$0xff]
    %v6972 = vld [vmem:[#allocation7 + $0x5a8] sm:$0xff]
    %v6973 = vld [vmem:[#allocation7 + $0x5b0] sm:$0xff]
    %v6974 = vld [vmem:[#allocation7 + $0x5b8] sm:$0xff]
    %v6975 = vld [vmem:[#allocation7 + $0x5c0] sm:$0xff]
    %v6976 = vld [vmem:[#allocation7 + $0x5c8] sm:$0xff]
    %v6977 = vld [vmem:[#allocation7 + $0x5d0] sm:$0xff]
    %v6978 = vld [vmem:[#allocation7 + $0x5d8] sm:$0xff]
    %v6979 = vld [vmem:[#allocation7 + $0x5e0] sm:$0xff]
    %v6980 = vld [vmem:[#allocation7 + $0x5e8] sm:$0xff]
    %v6981 = vld [vmem:[#allocation7 + $0x5f0] sm:$0xff]
    %v6982 = vld [vmem:[#allocation7 + $0x5f8] sm:$0xff]
    %v6983 = vld [vmem:[#allocation7 + $0x600] sm:$0xff]
    %v6984 = vld [vmem:[#allocation7 + $0x608] sm:$0xff]
    %v6985 = vld [vmem:[#allocation7 + $0x610] sm:$0xff]
    %v6986 = vld [vmem:[#allocation7 + $0x618] sm:$0xff]
    %v6987 = vld [vmem:[#allocation7 + $0x620] sm:$0xff]
    %v6988 = vld [vmem:[#allocation7 + $0x628] sm:$0xff]
    %v6989 = vld [vmem:[#allocation7 + $0x630] sm:$0xff]
    %v6990 = vld [vmem:[#allocation7 + $0x638] sm:$0xff]
    %v6991 = vld [vmem:[#allocation7 + $0x640] sm:$0xff]
    %v6992 = vld [vmem:[#allocation7 + $0x648] sm:$0xff]
    %v6993 = vld [vmem:[#allocation7 + $0x650] sm:$0xff]
    %v6994 = vld [vmem:[#allocation7 + $0x658] sm:$0xff]
    %v6995 = vld [vmem:[#allocation7 + $0x660] sm:$0xff]
    %v6996 = vld [vmem:[#allocation7 + $0x668] sm:$0xff]
    %v6997 = vld [vmem:[#allocation7 + $0x670] sm:$0xff]
    %v6998 = vld [vmem:[#allocation7 + $0x678] sm:$0xff]
    %v6999 = vld [vmem:[#allocation7 + $0x680] sm:$0xff]
    %v7000 = vld [vmem:[#allocation7 + $0x688] sm:$0xff]
    %v7001 = vld [vmem:[#allocation7 + $0x690] sm:$0xff]
    %v7002 = vld [vmem:[#allocation7 + $0x698] sm:$0xff]
    %v7003 = vld [vmem:[#allocation7 + $0x6a0] sm:$0xff]
    %v7004 = vld [vmem:[#allocation7 + $0x6a8] sm:$0xff]
    %v7005 = vld [vmem:[#allocation7 + $0x6b0] sm:$0xff]
    %v7006 = vld [vmem:[#allocation7 + $0x6b8] sm:$0xff]
    %v7007 = vld [vmem:[#allocation7 + $0x6c0] sm:$0xff]
    %v7008 = vld [vmem:[#allocation7 + $0x6c8] sm:$0xff]
    %v7009 = vld [vmem:[#allocation7 + $0x6d0] sm:$0xff]
    %v7010 = vld [vmem:[#allocation7 + $0x6d8] sm:$0xff]
    %v7011 = vld [vmem:[#allocation7 + $0x6e0] sm:$0xff]
    %v7012 = vld [vmem:[#allocation7 + $0x6e8] sm:$0xff]
    %v7013 = vld [vmem:[#allocation7 + $0x6f0] sm:$0xff]
    %v7014 = vld [vmem:[#allocation7 + $0x6f8] sm:$0xff]
    %v7015 = vld [vmem:[#allocation7 + $0x700] sm:$0xff]
    %v7016 = vld [vmem:[#allocation7 + $0x708] sm:$0xff]
    %v7017 = vld [vmem:[#allocation7 + $0x710] sm:$0xff]
    %v7018 = vld [vmem:[#allocation7 + $0x718] sm:$0xff]
    %v7019 = vld [vmem:[#allocation7 + $0x720] sm:$0xff]
    %v7020 = vld [vmem:[#allocation7 + $0x728] sm:$0xff]
    %v7021 = vld [vmem:[#allocation7 + $0x730] sm:$0xff]
    %v7022 = vld [vmem:[#allocation7 + $0x738] sm:$0xff]
    %v7023 = vld [vmem:[#allocation7 + $0x740] sm:$0xff]
    %v7024 = vld [vmem:[#allocation7 + $0x748] sm:$0xff]
    %v7025 = vld [vmem:[#allocation7 + $0x750] sm:$0xff]
    %v7026 = vld [vmem:[#allocation7 + $0x758] sm:$0xff]
    %v7027 = vld [vmem:[#allocation7 + $0x760] sm:$0xff]
    %v7028 = vld [vmem:[#allocation7 + $0x768] sm:$0xff]
    %v7029 = vld [vmem:[#allocation7 + $0x770] sm:$0xff]
    %v7030 = vld [vmem:[#allocation7 + $0x778] sm:$0xff]
    %v7031 = vld [vmem:[#allocation7 + $0x780] sm:$0xff]
    %v7032 = vld [vmem:[#allocation7 + $0x788] sm:$0xff]
    %v7033 = vld [vmem:[#allocation7 + $0x790] sm:$0xff]
    %v7034 = vld [vmem:[#allocation7 + $0x798] sm:$0xff]
    %v7035 = vld [vmem:[#allocation7 + $0x7a0] sm:$0xff]
    %v7036 = vld [vmem:[#allocation7 + $0x7a8] sm:$0xff]
    %v7037 = vld [vmem:[#allocation7 + $0x7b0] sm:$0xff]
    %v7038 = vld [vmem:[#allocation7 + $0x7b8] sm:$0xff]
    %v7039 = vld [vmem:[#allocation7 + $0x7c0] sm:$0xff]
    %v7040 = vld [vmem:[#allocation7 + $0x7c8] sm:$0xff]
    %v7041 = vld [vmem:[#allocation7 + $0x7d0] sm:$0xff]
    %v7042 = vld [vmem:[#allocation7 + $0x7d8] sm:$0xff]
    %v7043 = vld [vmem:[#allocation7 + $0x7e0] sm:$0xff]
    %v7044 = vld [vmem:[#allocation7 + $0x7e8] sm:$0xff]
    %v7045 = vld [vmem:[#allocation7 + $0x7f0] sm:$0xff]
    %v7046 = vld [vmem:[#allocation7 + $0x7f8] sm:$0xff]
    %v7047 = vld [vmem:[%s8] sm:$0x3]
    %v7049 = vlaneseq
    %v7050 = vshrl.u32 %v7049, 7
    %v7051 = vsub.s32 0, %v7050
    %v7052 = vrot.slane %v7047, %v7051
    %v7053 = vlaneseq
    %v7054 = vshrl.u32 %v7053, 7
    %v7055 = vsub.s32 1, %v7054
    %v7056 = vrot.slane %v7047, %v7055
    %7059 = vmatprep.subr.mxu0 %v6822
    %7060 = vmatpush1.msra.mxu0 %v6821
    %7061 = vmatprep.subr.mxu0 %v6820
    %7062 = vmatpush1.msra.mxu0 %v6819
    %7063 = vmatprep.subr.mxu0 %v6818
    %7064 = vmatpush1.msra.mxu0 %v6817
    %7065 = vmatprep.subr.mxu0 %v6816
    %7066 = vmatpush1.msra.mxu0 %v6815
    %7067 = vmatprep.subr.mxu0 %v6814
    %7068 = vmatpush1.msra.mxu0 %v6813
    %7069 = vmatprep.subr.mxu0 %v6812
    %7070 = vmatpush1.msra.mxu0 %v6811
    %7071 = vmatprep.subr.mxu0 %v6810
    %7072 = vmatpush1.msra.mxu0 %v6809
    %7073 = vmatprep.subr.mxu0 %v6808
    %7074 = vmatpush1.msra.mxu0 %v6807
    %7075 = vmatprep.subr.mxu0 %v6806
    %7076 = vmatpush1.msra.mxu0 %v6805
    %7077 = vmatprep.subr.mxu0 %v6804
    %7078 = vmatpush1.msra.mxu0 %v6803
    %7079 = vmatprep.subr.mxu0 %v6802
    %7080 = vmatpush1.msra.mxu0 %v6801
    %7081 = vmatprep.subr.mxu0 %v6800
    %7082 = vmatpush1.msra.mxu0 %v6799
    %7083 = vmatprep.subr.mxu0 %v6798
    %7084 = vmatpush1.msra.mxu0 %v6797
    %7085 = vmatprep.subr.mxu0 %v6796
    %7086 = vmatpush1.msra.mxu0 %v6795
    %7087 = vmatprep.subr.mxu0 %v6794
    %7088 = vmatpush1.msra.mxu0 %v6793
    %7089 = vmatprep.subr.mxu0 %v6792
    %7090 = vmatpush1.msra.mxu0 %v6791
    %7091 = vmatprep.subr.mxu0 %v6854
    %7092 = vmatpush2.msra.mxu0 %v6853
    %7093 = vmatprep.subr.mxu0 %v6852
    %7094 = vmatpush2.msra.mxu0 %v6851
    %7095 = vmatprep.subr.mxu0 %v6850
    %7096 = vmatpush2.msra.mxu0 %v6849
    %7097 = vmatprep.subr.mxu0 %v6848
    %7098 = vmatpush2.msra.mxu0 %v6847
    %7099 = vmatprep.subr.mxu0 %v6846
    %7100 = vmatpush2.msra.mxu0 %v6845
    %7101 = vmatprep.subr.mxu0 %v6844
    %7102 = vmatpush2.msra.mxu0 %v6843
    %7103 = vmatprep.subr.mxu0 %v6842
    %7104 = vmatpush2.msra.mxu0 %v6841
    %7105 = vmatprep.subr.mxu0 %v6840
    %7106 = vmatpush2.msra.mxu0 %v6839
    %7107 = vmatprep.subr.mxu0 %v6838
    %7108 = vmatpush2.msra.mxu0 %v6837
    %7109 = vmatprep.subr.mxu0 %v6836
    %7110 = vmatpush2.msra.mxu0 %v6835
    %7111 = vmatprep.subr.mxu0 %v6834
    %7112 = vmatpush2.msra.mxu0 %v6833
    %7113 = vmatprep.subr.mxu0 %v6832
    %7114 = vmatpush2.msra.mxu0 %v6831
    %7115 = vmatprep.subr.mxu0 %v6830
    %7116 = vmatpush2.msra.mxu0 %v6829
    %7117 = vmatprep.subr.mxu0 %v6828
    %7118 = vmatpush2.msra.mxu0 %v6827
    %7119 = vmatprep.subr.mxu0 %v6826
    %7120 = vmatpush2.msra.mxu0 %v6825
    %7121 = vmatprep.subr.mxu0 %v6824
    %7122 = vmatpush2.msra.mxu0 %v6823
    %7123 = vmatprep.mubr.f32.mxu0 %v6280
    %7124 = vmatmul.mubr.f32.gmra.mxu0 %v6279
    %v7125 = vpop.f32.mrf.mxu0
    %v7126 = vadd.f32 %v7052, %v7125
    %v7127 = vpop.f32.mrf.mxu0
    %v7128 = vadd.f32 %v7056, %v7127
    %7129 = vmatprep.mubr.f32.mxu0 %v6288
    %7130 = vmatmul.mubr.f32.gmra.mxu0 %v6287
    %v7131 = vpop.f32.mrf.mxu0
    %v7132 = vadd.f32 %v7052, %v7131
    %v7133 = vpop.f32.mrf.mxu0
    %v7134 = vadd.f32 %v7056, %v7133
    %7135 = vmatprep.mubr.f32.mxu0 %v6296
    %7136 = vmatmul.mubr.f32.gmra.mxu0 %v6295
    %v7137 = vpop.f32.mrf.mxu0
    %v7138 = vadd.f32 %v7052, %v7137
    %v7139 = vpop.f32.mrf.mxu0
    %v7140 = vadd.f32 %v7056, %v7139
    %7141 = vmatprep.mubr.f32.mxu0 %v6304
    %7142 = vmatmul.mubr.f32.gmra.mxu0 %v6303
    %v7143 = vpop.f32.mrf.mxu0
    %v7144 = vadd.f32 %v7052, %v7143
    %v7145 = vpop.f32.mrf.mxu0
    %v7146 = vadd.f32 %v7056, %v7145
    %7147 = vmatprep.mubr.f32.mxu0 %v6312
    %7148 = vmatmul.mubr.f32.gmra.mxu0 %v6311
    %v7149 = vpop.f32.mrf.mxu0
    %v7150 = vadd.f32 %v7052, %v7149
    %v7151 = vpop.f32.mrf.mxu0
    %v7152 = vadd.f32 %v7056, %v7151
    %7153 = vmatprep.mubr.f32.mxu0 %v6320
    %7154 = vmatmul.mubr.f32.gmra.mxu0 %v6319
    %v7155 = vpop.f32.mrf.mxu0
    %v7156 = vadd.f32 %v7052, %v7155
    %v7157 = vpop.f32.mrf.mxu0
    %v7158 = vadd.f32 %v7056, %v7157
    %7159 = vmatprep.mubr.f32.mxu0 %v6328
    %7160 = vmatmul.mubr.f32.gmra.mxu0 %v6327
    %v7161 = vpop.f32.mrf.mxu0
    %v7162 = vadd.f32 %v7052, %v7161
    %v7163 = vpop.f32.mrf.mxu0
    %v7164 = vadd.f32 %v7056, %v7163
    %7165 = vmatprep.mubr.f32.mxu0 %v6336
    %7166 = vmatmul.mubr.f32.gmra.mxu0 %v6335
    %v7167 = vpop.f32.mrf.mxu0
    %v7168 = vadd.f32 %v7052, %v7167
    %v7169 = vpop.f32.mrf.mxu0
    %v7170 = vadd.f32 %v7056, %v7169
    %7171 = vmatprep.mubr.f32.mxu0 %v6344
    %7172 = vmatmul.mubr.f32.gmra.mxu0 %v6343
    %v7173 = vpop.f32.mrf.mxu0
    %v7174 = vadd.f32 %v7052, %v7173
    %v7175 = vpop.f32.mrf.mxu0
    %v7176 = vadd.f32 %v7056, %v7175
    %7177 = vmatprep.mubr.f32.mxu0 %v6352
    %7178 = vmatmul.mubr.f32.gmra.mxu0 %v6351
    %v7179 = vpop.f32.mrf.mxu0
    %v7180 = vadd.f32 %v7052, %v7179
    %v7181 = vpop.f32.mrf.mxu0
    %v7182 = vadd.f32 %v7056, %v7181
    %7183 = vmatprep.mubr.f32.mxu0 %v6360
    %7184 = vmatmul.mubr.f32.gmra.mxu0 %v6359
    %v7185 = vpop.f32.mrf.mxu0
    %v7186 = vadd.f32 %v7052, %v7185
    %v7187 = vpop.f32.mrf.mxu0
    %v7188 = vadd.f32 %v7056, %v7187
    %7189 = vmatprep.mubr.f32.mxu0 %v6368
    %7190 = vmatmul.mubr.f32.gmra.mxu0 %v6367
    %v7191 = vpop.f32.mrf.mxu0
    %v7192 = vadd.f32 %v7052, %v7191
    %v7193 = vpop.f32.mrf.mxu0
    %v7194 = vadd.f32 %v7056, %v7193
    %7195 = vmatprep.mubr.f32.mxu0 %v6376
    %7196 = vmatmul.mubr.f32.gmra.mxu0 %v6375
    %v7197 = vpop.f32.mrf.mxu0
    %v7198 = vadd.f32 %v7052, %v7197
    %v7199 = vpop.f32.mrf.mxu0
    %v7200 = vadd.f32 %v7056, %v7199
    %7201 = vmatprep.mubr.f32.mxu0 %v6384
    %7202 = vmatmul.mubr.f32.gmra.mxu0 %v6383
    %v7203 = vpop.f32.mrf.mxu0
    %v7204 = vadd.f32 %v7052, %v7203
    %v7205 = vpop.f32.mrf.mxu0
    %v7206 = vadd.f32 %v7056, %v7205
    %7207 = vmatprep.mubr.f32.mxu0 %v6392
    %7208 = vmatmul.mubr.f32.gmra.mxu0 %v6391
    %v7209 = vpop.f32.mrf.mxu0
    %v7210 = vadd.f32 %v7052, %v7209
    %v7211 = vpop.f32.mrf.mxu0
    %v7212 = vadd.f32 %v7056, %v7211
    %7213 = vmatprep.mubr.f32.mxu0 %v6400
    %7214 = vmatmul.mubr.f32.gmra.mxu0 %v6399
    %v7215 = vpop.f32.mrf.mxu0
    %v7216 = vadd.f32 %v7052, %v7215
    %v7217 = vpop.f32.mrf.mxu0
    %v7218 = vadd.f32 %v7056, %v7217
    %7219 = vmatprep.mubr.f32.mxu0 %v6408
    %7220 = vmatmul.mubr.f32.gmra.mxu0 %v6407
    %v7221 = vpop.f32.mrf.mxu0
    %v7222 = vadd.f32 %v7052, %v7221
    %v7223 = vpop.f32.mrf.mxu0
    %v7224 = vadd.f32 %v7056, %v7223
    %7225 = vmatprep.mubr.f32.mxu0 %v6416
    %7226 = vmatmul.mubr.f32.gmra.mxu0 %v6415
    %v7227 = vpop.f32.mrf.mxu0
    %v7228 = vadd.f32 %v7052, %v7227
    %v7229 = vpop.f32.mrf.mxu0
    %v7230 = vadd.f32 %v7056, %v7229
    %7231 = vmatprep.mubr.f32.mxu0 %v6424
    %7232 = vmatmul.mubr.f32.gmra.mxu0 %v6423
    %v7233 = vpop.f32.mrf.mxu0
    %v7234 = vadd.f32 %v7052, %v7233
    %v7235 = vpop.f32.mrf.mxu0
    %v7236 = vadd.f32 %v7056, %v7235
    %7237 = vmatprep.mubr.f32.mxu0 %v6432
    %7238 = vmatmul.mubr.f32.gmra.mxu0 %v6431
    %v7239 = vpop.f32.mrf.mxu0
    %v7240 = vadd.f32 %v7052, %v7239
    %v7241 = vpop.f32.mrf.mxu0
    %v7242 = vadd.f32 %v7056, %v7241
    %7243 = vmatprep.mubr.f32.mxu0 %v6440
    %7244 = vmatmul.mubr.f32.gmra.mxu0 %v6439
    %v7245 = vpop.f32.mrf.mxu0
    %v7246 = vadd.f32 %v7052, %v7245
    %v7247 = vpop.f32.mrf.mxu0
    %v7248 = vadd.f32 %v7056, %v7247
    %7249 = vmatprep.mubr.f32.mxu0 %v6448
    %7250 = vmatmul.mubr.f32.gmra.mxu0 %v6447
    %v7251 = vpop.f32.mrf.mxu0
    %v7252 = vadd.f32 %v7052, %v7251
    %v7253 = vpop.f32.mrf.mxu0
    %v7254 = vadd.f32 %v7056, %v7253
    %7255 = vmatprep.mubr.f32.mxu0 %v6456
    %7256 = vmatmul.mubr.f32.gmra.mxu0 %v6455
    %v7257 = vpop.f32.mrf.mxu0
    %v7258 = vadd.f32 %v7052, %v7257
    %v7259 = vpop.f32.mrf.mxu0
    %v7260 = vadd.f32 %v7056, %v7259
    %7261 = vmatprep.mubr.f32.mxu0 %v6464
    %7262 = vmatmul.mubr.f32.gmra.mxu0 %v6463
    %v7263 = vpop.f32.mrf.mxu0
    %v7264 = vadd.f32 %v7052, %v7263
    %v7265 = vpop.f32.mrf.mxu0
    %v7266 = vadd.f32 %v7056, %v7265
    %7267 = vmatprep.mubr.f32.mxu0 %v6472
    %7268 = vmatmul.mubr.f32.gmra.mxu0 %v6471
    %v7269 = vpop.f32.mrf.mxu0
    %v7270 = vadd.f32 %v7052, %v7269
    %v7271 = vpop.f32.mrf.mxu0
    %v7272 = vadd.f32 %v7056, %v7271
    %7273 = vmatprep.mubr.f32.mxu0 %v6480
    %7274 = vmatmul.mubr.f32.gmra.mxu0 %v6479
    %v7275 = vpop.f32.mrf.mxu0
    %v7276 = vadd.f32 %v7052, %v7275
    %v7277 = vpop.f32.mrf.mxu0
    %v7278 = vadd.f32 %v7056, %v7277
    %7279 = vmatprep.mubr.f32.mxu0 %v6488
    %7280 = vmatmul.mubr.f32.gmra.mxu0 %v6487
    %v7281 = vpop.f32.mrf.mxu0
    %v7282 = vadd.f32 %v7052, %v7281
    %v7283 = vpop.f32.mrf.mxu0
    %v7284 = vadd.f32 %v7056, %v7283
    %7285 = vmatprep.mubr.f32.mxu0 %v6496
    %7286 = vmatmul.mubr.f32.gmra.mxu0 %v6495
    %v7287 = vpop.f32.mrf.mxu0
    %v7288 = vadd.f32 %v7052, %v7287
    %v7289 = vpop.f32.mrf.mxu0
    %v7290 = vadd.f32 %v7056, %v7289
    %7291 = vmatprep.mubr.f32.mxu0 %v6504
    %7292 = vmatmul.mubr.f32.gmra.mxu0 %v6503
    %v7293 = vpop.f32.mrf.mxu0
    %v7294 = vadd.f32 %v7052, %v7293
    %v7295 = vpop.f32.mrf.mxu0
    %v7296 = vadd.f32 %v7056, %v7295
    %7297 = vmatprep.mubr.f32.mxu0 %v6512
    %7298 = vmatmul.mubr.f32.gmra.mxu0 %v6511
    %v7299 = vpop.f32.mrf.mxu0
    %v7300 = vadd.f32 %v7052, %v7299
    %v7301 = vpop.f32.mrf.mxu0
    %v7302 = vadd.f32 %v7056, %v7301
    %7303 = vmatprep.mubr.f32.mxu0 %v6520
    %7304 = vmatmul.mubr.f32.gmra.mxu0 %v6519
    %v7305 = vpop.f32.mrf.mxu0
    %v7306 = vadd.f32 %v7052, %v7305
    %v7307 = vpop.f32.mrf.mxu0
    %v7308 = vadd.f32 %v7056, %v7307
    %7309 = vmatprep.mubr.f32.mxu0 %v6528
    %7310 = vmatmul.mubr.f32.gmra.mxu0 %v6527
    %v7311 = vpop.f32.mrf.mxu0
    %v7312 = vadd.f32 %v7052, %v7311
    %v7313 = vpop.f32.mrf.mxu0
    %v7314 = vadd.f32 %v7056, %v7313
    %7315 = vmatprep.mubr.f32.mxu0 %v6536
    %7316 = vmatmul.mubr.f32.gmra.mxu0 %v6535
    %v7317 = vpop.f32.mrf.mxu0
    %v7318 = vadd.f32 %v7052, %v7317
    %v7319 = vpop.f32.mrf.mxu0
    %v7320 = vadd.f32 %v7056, %v7319
    %7321 = vmatprep.mubr.f32.mxu0 %v6544
    %7322 = vmatmul.mubr.f32.gmra.mxu0 %v6543
    %v7323 = vpop.f32.mrf.mxu0
    %v7324 = vadd.f32 %v7052, %v7323
    %v7325 = vpop.f32.mrf.mxu0
    %v7326 = vadd.f32 %v7056, %v7325
    %7327 = vmatprep.mubr.f32.mxu0 %v6552
    %7328 = vmatmul.mubr.f32.gmra.mxu0 %v6551
    %v7329 = vpop.f32.mrf.mxu0
    %v7330 = vadd.f32 %v7052, %v7329
    %v7331 = vpop.f32.mrf.mxu0
    %v7332 = vadd.f32 %v7056, %v7331
    %7333 = vmatprep.mubr.f32.mxu0 %v6560
    %7334 = vmatmul.mubr.f32.gmra.mxu0 %v6559
    %v7335 = vpop.f32.mrf.mxu0
    %v7336 = vadd.f32 %v7052, %v7335
    %v7337 = vpop.f32.mrf.mxu0
    %v7338 = vadd.f32 %v7056, %v7337
    %7339 = vmatprep.mubr.f32.mxu0 %v6568
    %7340 = vmatmul.mubr.f32.gmra.mxu0 %v6567
    %v7341 = vpop.f32.mrf.mxu0
    %v7342 = vadd.f32 %v7052, %v7341
    %v7343 = vpop.f32.mrf.mxu0
    %v7344 = vadd.f32 %v7056, %v7343
    %7345 = vmatprep.mubr.f32.mxu0 %v6576
    %7346 = vmatmul.mubr.f32.gmra.mxu0 %v6575
    %v7347 = vpop.f32.mrf.mxu0
    %v7348 = vadd.f32 %v7052, %v7347
    %v7349 = vpop.f32.mrf.mxu0
    %v7350 = vadd.f32 %v7056, %v7349
    %7351 = vmatprep.mubr.f32.mxu0 %v6584
    %7352 = vmatmul.mubr.f32.gmra.mxu0 %v6583
    %v7353 = vpop.f32.mrf.mxu0
    %v7354 = vadd.f32 %v7052, %v7353
    %v7355 = vpop.f32.mrf.mxu0
    %v7356 = vadd.f32 %v7056, %v7355
    %7357 = vmatprep.mubr.f32.mxu0 %v6592
    %7358 = vmatmul.mubr.f32.gmra.mxu0 %v6591
    %v7359 = vpop.f32.mrf.mxu0
    %v7360 = vadd.f32 %v7052, %v7359
    %v7361 = vpop.f32.mrf.mxu0
    %v7362 = vadd.f32 %v7056, %v7361
    %7363 = vmatprep.mubr.f32.mxu0 %v6600
    %7364 = vmatmul.mubr.f32.gmra.mxu0 %v6599
    %v7365 = vpop.f32.mrf.mxu0
    %v7366 = vadd.f32 %v7052, %v7365
    %v7367 = vpop.f32.mrf.mxu0
    %v7368 = vadd.f32 %v7056, %v7367
    %7369 = vmatprep.mubr.f32.mxu0 %v6608
    %7370 = vmatmul.mubr.f32.gmra.mxu0 %v6607
    %v7371 = vpop.f32.mrf.mxu0
    %v7372 = vadd.f32 %v7052, %v7371
    %v7373 = vpop.f32.mrf.mxu0
    %v7374 = vadd.f32 %v7056, %v7373
    %7375 = vmatprep.mubr.f32.mxu0 %v6616
    %7376 = vmatmul.mubr.f32.gmra.mxu0 %v6615
    %v7377 = vpop.f32.mrf.mxu0
    %v7378 = vadd.f32 %v7052, %v7377
    %v7379 = vpop.f32.mrf.mxu0
    %v7380 = vadd.f32 %v7056, %v7379
    %7381 = vmatprep.mubr.f32.mxu0 %v6624
    %7382 = vmatmul.mubr.f32.gmra.mxu0 %v6623
    %v7383 = vpop.f32.mrf.mxu0
    %v7384 = vadd.f32 %v7052, %v7383
    %v7385 = vpop.f32.mrf.mxu0
    %v7386 = vadd.f32 %v7056, %v7385
    %7387 = vmatprep.mubr.f32.mxu0 %v6632
    %7388 = vmatmul.mubr.f32.gmra.mxu0 %v6631
    %v7389 = vpop.f32.mrf.mxu0
    %v7390 = vadd.f32 %v7052, %v7389
    %v7391 = vpop.f32.mrf.mxu0
    %v7392 = vadd.f32 %v7056, %v7391
    %7393 = vmatprep.mubr.f32.mxu0 %v6640
    %7394 = vmatmul.mubr.f32.gmra.mxu0 %v6639
    %v7395 = vpop.f32.mrf.mxu0
    %v7396 = vadd.f32 %v7052, %v7395
    %v7397 = vpop.f32.mrf.mxu0
    %v7398 = vadd.f32 %v7056, %v7397
    %7399 = vmatprep.mubr.f32.mxu0 %v6648
    %7400 = vmatmul.mubr.f32.gmra.mxu0 %v6647
    %v7401 = vpop.f32.mrf.mxu0
    %v7402 = vadd.f32 %v7052, %v7401
    %v7403 = vpop.f32.mrf.mxu0
    %v7404 = vadd.f32 %v7056, %v7403
    %7405 = vmatprep.mubr.f32.mxu0 %v6656
    %7406 = vmatmul.mubr.f32.gmra.mxu0 %v6655
    %v7407 = vpop.f32.mrf.mxu0
    %v7408 = vadd.f32 %v7052, %v7407
    %v7409 = vpop.f32.mrf.mxu0
    %v7410 = vadd.f32 %v7056, %v7409
    %7411 = vmatprep.mubr.f32.mxu0 %v6664
    %7412 = vmatmul.mubr.f32.gmra.mxu0 %v6663
    %v7413 = vpop.f32.mrf.mxu0
    %v7414 = vadd.f32 %v7052, %v7413
    %v7415 = vpop.f32.mrf.mxu0
    %v7416 = vadd.f32 %v7056, %v7415
    %7417 = vmatprep.mubr.f32.mxu0 %v6672
    %7418 = vmatmul.mubr.f32.gmra.mxu0 %v6671
    %v7419 = vpop.f32.mrf.mxu0
    %v7420 = vadd.f32 %v7052, %v7419
    %v7421 = vpop.f32.mrf.mxu0
    %v7422 = vadd.f32 %v7056, %v7421
    %7423 = vmatprep.mubr.f32.mxu0 %v6680
    %7424 = vmatmul.mubr.f32.gmra.mxu0 %v6679
    %v7425 = vpop.f32.mrf.mxu0
    %v7426 = vadd.f32 %v7052, %v7425
    %v7427 = vpop.f32.mrf.mxu0
    %v7428 = vadd.f32 %v7056, %v7427
    %7429 = vmatprep.mubr.f32.mxu0 %v6688
    %7430 = vmatmul.mubr.f32.gmra.mxu0 %v6687
    %v7431 = vpop.f32.mrf.mxu0
    %v7432 = vadd.f32 %v7052, %v7431
    %v7433 = vpop.f32.mrf.mxu0
    %v7434 = vadd.f32 %v7056, %v7433
    %7435 = vmatprep.mubr.f32.mxu0 %v6696
    %7436 = vmatmul.mubr.f32.gmra.mxu0 %v6695
    %v7437 = vpop.f32.mrf.mxu0
    %v7438 = vadd.f32 %v7052, %v7437
    %v7439 = vpop.f32.mrf.mxu0
    %v7440 = vadd.f32 %v7056, %v7439
    %7441 = vmatprep.mubr.f32.mxu0 %v6704
    %7442 = vmatmul.mubr.f32.gmra.mxu0 %v6703
    %v7443 = vpop.f32.mrf.mxu0
    %v7444 = vadd.f32 %v7052, %v7443
    %v7445 = vpop.f32.mrf.mxu0
    %v7446 = vadd.f32 %v7056, %v7445
    %7447 = vmatprep.mubr.f32.mxu0 %v6712
    %7448 = vmatmul.mubr.f32.gmra.mxu0 %v6711
    %v7449 = vpop.f32.mrf.mxu0
    %v7450 = vadd.f32 %v7052, %v7449
    %v7451 = vpop.f32.mrf.mxu0
    %v7452 = vadd.f32 %v7056, %v7451
    %7453 = vmatprep.mubr.f32.mxu0 %v6720
    %7454 = vmatmul.mubr.f32.gmra.mxu0 %v6719
    %v7455 = vpop.f32.mrf.mxu0
    %v7456 = vadd.f32 %v7052, %v7455
    %v7457 = vpop.f32.mrf.mxu0
    %v7458 = vadd.f32 %v7056, %v7457
    %7459 = vmatprep.mubr.f32.mxu0 %v6728
    %7460 = vmatmul.mubr.f32.gmra.mxu0 %v6727
    %v7461 = vpop.f32.mrf.mxu0
    %v7462 = vadd.f32 %v7052, %v7461
    %v7463 = vpop.f32.mrf.mxu0
    %v7464 = vadd.f32 %v7056, %v7463
    %7465 = vmatprep.mubr.f32.mxu0 %v6736
    %7466 = vmatmul.mubr.f32.gmra.mxu0 %v6735
    %v7467 = vpop.f32.mrf.mxu0
    %v7468 = vadd.f32 %v7052, %v7467
    %v7469 = vpop.f32.mrf.mxu0
    %v7470 = vadd.f32 %v7056, %v7469
    %7471 = vmatprep.mubr.f32.mxu0 %v6744
    %7472 = vmatmul.mubr.f32.gmra.mxu0 %v6743
    %v7473 = vpop.f32.mrf.mxu0
    %v7474 = vadd.f32 %v7052, %v7473
    %v7475 = vpop.f32.mrf.mxu0
    %v7476 = vadd.f32 %v7056, %v7475
    %7477 = vmatprep.mubr.f32.mxu0 %v6752
    %7478 = vmatmul.mubr.f32.gmra.mxu0 %v6751
    %v7479 = vpop.f32.mrf.mxu0
    %v7480 = vadd.f32 %v7052, %v7479
    %v7481 = vpop.f32.mrf.mxu0
    %v7482 = vadd.f32 %v7056, %v7481
    %7483 = vmatprep.mubr.f32.mxu0 %v6760
    %7484 = vmatmul.mubr.f32.gmra.mxu0 %v6759
    %v7485 = vpop.f32.mrf.mxu0
    %v7486 = vadd.f32 %v7052, %v7485
    %v7487 = vpop.f32.mrf.mxu0
    %v7488 = vadd.f32 %v7056, %v7487
    %7489 = vmatprep.mubr.f32.mxu0 %v6768
    %7490 = vmatmul.mubr.f32.gmra.mxu0 %v6767
    %v7491 = vpop.f32.mrf.mxu0
    %v7492 = vadd.f32 %v7052, %v7491
    %v7493 = vpop.f32.mrf.mxu0
    %v7494 = vadd.f32 %v7056, %v7493
    %7495 = vmatprep.mubr.f32.mxu0 %v6776
    %7496 = vmatmul.mubr.f32.gmra.mxu0 %v6775
    %v7497 = vpop.f32.mrf.mxu0
    %v7498 = vadd.f32 %v7052, %v7497
    %v7499 = vpop.f32.mrf.mxu0
    %v7500 = vadd.f32 %v7056, %v7499
    %7501 = vmatprep.mubr.f32.mxu0 %v6784
    %7502 = vmatmul.mubr.f32.gmra.mxu0 %v6783
    %v7503 = vpop.f32.mrf.mxu0
    %v7504 = vadd.f32 %v7052, %v7503
    %v7505 = vpop.f32.mrf.mxu0
    %v7506 = vadd.f32 %v7056, %v7505
    %7507 = vdwg.mxu0
    %7508 = vmatprep.subr.mxu0 %v6886
    %7509 = vmatpush1.msra.mxu0 %v6885
    %7510 = vmatprep.subr.mxu0 %v6884
    %7511 = vmatpush1.msra.mxu0 %v6883
    %7512 = vmatprep.subr.mxu0 %v6882
    %7513 = vmatpush1.msra.mxu0 %v6881
    %7514 = vmatprep.subr.mxu0 %v6880
    %7515 = vmatpush1.msra.mxu0 %v6879
    %7516 = vmatprep.subr.mxu0 %v6878
    %7517 = vmatpush1.msra.mxu0 %v6877
    %7518 = vmatprep.subr.mxu0 %v6876
    %7519 = vmatpush1.msra.mxu0 %v6875
    %7520 = vmatprep.subr.mxu0 %v6874
    %7521 = vmatpush1.msra.mxu0 %v6873
    %7522 = vmatprep.subr.mxu0 %v6872
    %7523 = vmatpush1.msra.mxu0 %v6871
    %7524 = vmatprep.subr.mxu0 %v6870
    %7525 = vmatpush1.msra.mxu0 %v6869
    %7526 = vmatprep.subr.mxu0 %v6868
    %7527 = vmatpush1.msra.mxu0 %v6867
    %7528 = vmatprep.subr.mxu0 %v6866
    %7529 = vmatpush1.msra.mxu0 %v6865
    %7530 = vmatprep.subr.mxu0 %v6864
    %7531 = vmatpush1.msra.mxu0 %v6863
    %7532 = vmatprep.subr.mxu0 %v6862
    %7533 = vmatpush1.msra.mxu0 %v6861
    %7534 = vmatprep.subr.mxu0 %v6860
    %7535 = vmatpush1.msra.mxu0 %v6859
    %7536 = vmatprep.subr.mxu0 %v6858
    %7537 = vmatpush1.msra.mxu0 %v6857
    %7538 = vmatprep.subr.mxu0 %v6856
    %7539 = vmatpush1.msra.mxu0 %v6855
    %7540 = vmatprep.subr.mxu0 %v6918
    %7541 = vmatpush2.msra.mxu0 %v6917
    %7542 = vmatprep.subr.mxu0 %v6916
    %7543 = vmatpush2.msra.mxu0 %v6915
    %7544 = vmatprep.subr.mxu0 %v6914
    %7545 = vmatpush2.msra.mxu0 %v6913
    %7546 = vmatprep.subr.mxu0 %v6912
    %7547 = vmatpush2.msra.mxu0 %v6911
    %7548 = vmatprep.subr.mxu0 %v6910
    %7549 = vmatpush2.msra.mxu0 %v6909
    %7550 = vmatprep.subr.mxu0 %v6908
    %7551 = vmatpush2.msra.mxu0 %v6907
    %7552 = vmatprep.subr.mxu0 %v6906
    %7553 = vmatpush2.msra.mxu0 %v6905
    %7554 = vmatprep.subr.mxu0 %v6904
    %7555 = vmatpush2.msra.mxu0 %v6903
    %7556 = vmatprep.subr.mxu0 %v6902
    %7557 = vmatpush2.msra.mxu0 %v6901
    %7558 = vmatprep.subr.mxu0 %v6900
    %7559 = vmatpush2.msra.mxu0 %v6899
    %7560 = vmatprep.subr.mxu0 %v6898
    %7561 = vmatpush2.msra.mxu0 %v6897
    %7562 = vmatprep.subr.mxu0 %v6896
    %7563 = vmatpush2.msra.mxu0 %v6895
    %7564 = vmatprep.subr.mxu0 %v6894
    %7565 = vmatpush2.msra.mxu0 %v6893
    %7566 = vmatprep.subr.mxu0 %v6892
    %7567 = vmatpush2.msra.mxu0 %v6891
    %7568 = vmatprep.subr.mxu0 %v6890
    %7569 = vmatpush2.msra.mxu0 %v6889
    %7570 = vmatprep.subr.mxu0 %v6888
    %7571 = vmatpush2.msra.mxu0 %v6887
    %7572 = vmatprep.mubr.f32.mxu0 %v6282
    %7573 = vmatmul.mubr.f32.gmra.mxu0 %v6281
    %v7574 = vpop.f32.mrf.mxu0
    %v7575 = vadd.f32 %v7126, %v7574
    %v7576 = vpop.f32.mrf.mxu0
    %v7577 = vadd.f32 %v7128, %v7576
    %7578 = vmatprep.mubr.f32.mxu0 %v6290
    %7579 = vmatmul.mubr.f32.gmra.mxu0 %v6289
    %v7580 = vpop.f32.mrf.mxu0
    %v7581 = vadd.f32 %v7132, %v7580
    %v7582 = vpop.f32.mrf.mxu0
    %v7583 = vadd.f32 %v7134, %v7582
    %7584 = vmatprep.mubr.f32.mxu0 %v6298
    %7585 = vmatmul.mubr.f32.gmra.mxu0 %v6297
    %v7586 = vpop.f32.mrf.mxu0
    %v7587 = vadd.f32 %v7138, %v7586
    %v7588 = vpop.f32.mrf.mxu0
    %v7589 = vadd.f32 %v7140, %v7588
    %7590 = vmatprep.mubr.f32.mxu0 %v6306
    %7591 = vmatmul.mubr.f32.gmra.mxu0 %v6305
    %v7592 = vpop.f32.mrf.mxu0
    %v7593 = vadd.f32 %v7144, %v7592
    %v7594 = vpop.f32.mrf.mxu0
    %v7595 = vadd.f32 %v7146, %v7594
    %7596 = vmatprep.mubr.f32.mxu0 %v6314
    %7597 = vmatmul.mubr.f32.gmra.mxu0 %v6313
    %v7598 = vpop.f32.mrf.mxu0
    %v7599 = vadd.f32 %v7150, %v7598
    %v7600 = vpop.f32.mrf.mxu0
    %v7601 = vadd.f32 %v7152, %v7600
    %7602 = vmatprep.mubr.f32.mxu0 %v6322
    %7603 = vmatmul.mubr.f32.gmra.mxu0 %v6321
    %v7604 = vpop.f32.mrf.mxu0
    %v7605 = vadd.f32 %v7156, %v7604
    %v7606 = vpop.f32.mrf.mxu0
    %v7607 = vadd.f32 %v7158, %v7606
    %7608 = vmatprep.mubr.f32.mxu0 %v6330
    %7609 = vmatmul.mubr.f32.gmra.mxu0 %v6329
    %v7610 = vpop.f32.mrf.mxu0
    %v7611 = vadd.f32 %v7162, %v7610
    %v7612 = vpop.f32.mrf.mxu0
    %v7613 = vadd.f32 %v7164, %v7612
    %7614 = vmatprep.mubr.f32.mxu0 %v6338
    %7615 = vmatmul.mubr.f32.gmra.mxu0 %v6337
    %v7616 = vpop.f32.mrf.mxu0
    %v7617 = vadd.f32 %v7168, %v7616
    %v7618 = vpop.f32.mrf.mxu0
    %v7619 = vadd.f32 %v7170, %v7618
    %7620 = vmatprep.mubr.f32.mxu0 %v6346
    %7621 = vmatmul.mubr.f32.gmra.mxu0 %v6345
    %v7622 = vpop.f32.mrf.mxu0
    %v7623 = vadd.f32 %v7174, %v7622
    %v7624 = vpop.f32.mrf.mxu0
    %v7625 = vadd.f32 %v7176, %v7624
    %7626 = vmatprep.mubr.f32.mxu0 %v6354
    %7627 = vmatmul.mubr.f32.gmra.mxu0 %v6353
    %v7628 = vpop.f32.mrf.mxu0
    %v7629 = vadd.f32 %v7180, %v7628
    %v7630 = vpop.f32.mrf.mxu0
    %v7631 = vadd.f32 %v7182, %v7630
    %7632 = vmatprep.mubr.f32.mxu0 %v6362
    %7633 = vmatmul.mubr.f32.gmra.mxu0 %v6361
    %v7634 = vpop.f32.mrf.mxu0
    %v7635 = vadd.f32 %v7186, %v7634
    %v7636 = vpop.f32.mrf.mxu0
    %v7637 = vadd.f32 %v7188, %v7636
    %7638 = vmatprep.mubr.f32.mxu0 %v6370
    %7639 = vmatmul.mubr.f32.gmra.mxu0 %v6369
    %v7640 = vpop.f32.mrf.mxu0
    %v7641 = vadd.f32 %v7192, %v7640
    %v7642 = vpop.f32.mrf.mxu0
    %v7643 = vadd.f32 %v7194, %v7642
    %7644 = vmatprep.mubr.f32.mxu0 %v6378
    %7645 = vmatmul.mubr.f32.gmra.mxu0 %v6377
    %v7646 = vpop.f32.mrf.mxu0
    %v7647 = vadd.f32 %v7198, %v7646
    %v7648 = vpop.f32.mrf.mxu0
    %v7649 = vadd.f32 %v7200, %v7648
    %7650 = vmatprep.mubr.f32.mxu0 %v6386
    %7651 = vmatmul.mubr.f32.gmra.mxu0 %v6385
    %v7652 = vpop.f32.mrf.mxu0
    %v7653 = vadd.f32 %v7204, %v7652
    %v7654 = vpop.f32.mrf.mxu0
    %v7655 = vadd.f32 %v7206, %v7654
    %7656 = vmatprep.mubr.f32.mxu0 %v6394
    %7657 = vmatmul.mubr.f32.gmra.mxu0 %v6393
    %v7658 = vpop.f32.mrf.mxu0
    %v7659 = vadd.f32 %v7210, %v7658
    %v7660 = vpop.f32.mrf.mxu0
    %v7661 = vadd.f32 %v7212, %v7660
    %7662 = vmatprep.mubr.f32.mxu0 %v6402
    %7663 = vmatmul.mubr.f32.gmra.mxu0 %v6401
    %v7664 = vpop.f32.mrf.mxu0
    %v7665 = vadd.f32 %v7216, %v7664
    %v7666 = vpop.f32.mrf.mxu0
    %v7667 = vadd.f32 %v7218, %v7666
    %7668 = vmatprep.mubr.f32.mxu0 %v6410
    %7669 = vmatmul.mubr.f32.gmra.mxu0 %v6409
    %v7670 = vpop.f32.mrf.mxu0
    %v7671 = vadd.f32 %v7222, %v7670
    %v7672 = vpop.f32.mrf.mxu0
    %v7673 = vadd.f32 %v7224, %v7672
    %7674 = vmatprep.mubr.f32.mxu0 %v6418
    %7675 = vmatmul.mubr.f32.gmra.mxu0 %v6417
    %v7676 = vpop.f32.mrf.mxu0
    %v7677 = vadd.f32 %v7228, %v7676
    %v7678 = vpop.f32.mrf.mxu0
    %v7679 = vadd.f32 %v7230, %v7678
    %7680 = vmatprep.mubr.f32.mxu0 %v6426
    %7681 = vmatmul.mubr.f32.gmra.mxu0 %v6425
    %v7682 = vpop.f32.mrf.mxu0
    %v7683 = vadd.f32 %v7234, %v7682
    %v7684 = vpop.f32.mrf.mxu0
    %v7685 = vadd.f32 %v7236, %v7684
    %7686 = vmatprep.mubr.f32.mxu0 %v6434
    %7687 = vmatmul.mubr.f32.gmra.mxu0 %v6433
    %v7688 = vpop.f32.mrf.mxu0
    %v7689 = vadd.f32 %v7240, %v7688
    %v7690 = vpop.f32.mrf.mxu0
    %v7691 = vadd.f32 %v7242, %v7690
    %7692 = vmatprep.mubr.f32.mxu0 %v6442
    %7693 = vmatmul.mubr.f32.gmra.mxu0 %v6441
    %v7694 = vpop.f32.mrf.mxu0
    %v7695 = vadd.f32 %v7246, %v7694
    %v7696 = vpop.f32.mrf.mxu0
    %v7697 = vadd.f32 %v7248, %v7696
    %7698 = vmatprep.mubr.f32.mxu0 %v6450
    %7699 = vmatmul.mubr.f32.gmra.mxu0 %v6449
    %v7700 = vpop.f32.mrf.mxu0
    %v7701 = vadd.f32 %v7252, %v7700
    %v7702 = vpop.f32.mrf.mxu0
    %v7703 = vadd.f32 %v7254, %v7702
    %7704 = vmatprep.mubr.f32.mxu0 %v6458
    %7705 = vmatmul.mubr.f32.gmra.mxu0 %v6457
    %v7706 = vpop.f32.mrf.mxu0
    %v7707 = vadd.f32 %v7258, %v7706
    %v7708 = vpop.f32.mrf.mxu0
    %v7709 = vadd.f32 %v7260, %v7708
    %7710 = vmatprep.mubr.f32.mxu0 %v6466
    %7711 = vmatmul.mubr.f32.gmra.mxu0 %v6465
    %v7712 = vpop.f32.mrf.mxu0
    %v7713 = vadd.f32 %v7264, %v7712
    %v7714 = vpop.f32.mrf.mxu0
    %v7715 = vadd.f32 %v7266, %v7714
    %7716 = vmatprep.mubr.f32.mxu0 %v6474
    %7717 = vmatmul.mubr.f32.gmra.mxu0 %v6473
    %v7718 = vpop.f32.mrf.mxu0
    %v7719 = vadd.f32 %v7270, %v7718
    %v7720 = vpop.f32.mrf.mxu0
    %v7721 = vadd.f32 %v7272, %v7720
    %7722 = vmatprep.mubr.f32.mxu0 %v6482
    %7723 = vmatmul.mubr.f32.gmra.mxu0 %v6481
    %v7724 = vpop.f32.mrf.mxu0
    %v7725 = vadd.f32 %v7276, %v7724
    %v7726 = vpop.f32.mrf.mxu0
    %v7727 = vadd.f32 %v7278, %v7726
    %7728 = vmatprep.mubr.f32.mxu0 %v6490
    %7729 = vmatmul.mubr.f32.gmra.mxu0 %v6489
    %v7730 = vpop.f32.mrf.mxu0
    %v7731 = vadd.f32 %v7282, %v7730
    %v7732 = vpop.f32.mrf.mxu0
    %v7733 = vadd.f32 %v7284, %v7732
    %7734 = vmatprep.mubr.f32.mxu0 %v6498
    %7735 = vmatmul.mubr.f32.gmra.mxu0 %v6497
    %v7736 = vpop.f32.mrf.mxu0
    %v7737 = vadd.f32 %v7288, %v7736
    %v7738 = vpop.f32.mrf.mxu0
    %v7739 = vadd.f32 %v7290, %v7738
    %7740 = vmatprep.mubr.f32.mxu0 %v6506
    %7741 = vmatmul.mubr.f32.gmra.mxu0 %v6505
    %v7742 = vpop.f32.mrf.mxu0
    %v7743 = vadd.f32 %v7294, %v7742
    %v7744 = vpop.f32.mrf.mxu0
    %v7745 = vadd.f32 %v7296, %v7744
    %7746 = vmatprep.mubr.f32.mxu0 %v6514
    %7747 = vmatmul.mubr.f32.gmra.mxu0 %v6513
    %v7748 = vpop.f32.mrf.mxu0
    %v7749 = vadd.f32 %v7300, %v7748
    %v7750 = vpop.f32.mrf.mxu0
    %v7751 = vadd.f32 %v7302, %v7750
    %7752 = vmatprep.mubr.f32.mxu0 %v6522
    %7753 = vmatmul.mubr.f32.gmra.mxu0 %v6521
    %v7754 = vpop.f32.mrf.mxu0
    %v7755 = vadd.f32 %v7306, %v7754
    %v7756 = vpop.f32.mrf.mxu0
    %v7757 = vadd.f32 %v7308, %v7756
    %7758 = vmatprep.mubr.f32.mxu0 %v6530
    %7759 = vmatmul.mubr.f32.gmra.mxu0 %v6529
    %v7760 = vpop.f32.mrf.mxu0
    %v7761 = vadd.f32 %v7312, %v7760
    %v7762 = vpop.f32.mrf.mxu0
    %v7763 = vadd.f32 %v7314, %v7762
    %7764 = vmatprep.mubr.f32.mxu0 %v6538
    %7765 = vmatmul.mubr.f32.gmra.mxu0 %v6537
    %v7766 = vpop.f32.mrf.mxu0
    %v7767 = vadd.f32 %v7318, %v7766
    %v7768 = vpop.f32.mrf.mxu0
    %v7769 = vadd.f32 %v7320, %v7768
    %7770 = vmatprep.mubr.f32.mxu0 %v6546
    %7771 = vmatmul.mubr.f32.gmra.mxu0 %v6545
    %v7772 = vpop.f32.mrf.mxu0
    %v7773 = vadd.f32 %v7324, %v7772
    %v7774 = vpop.f32.mrf.mxu0
    %v7775 = vadd.f32 %v7326, %v7774
    %7776 = vmatprep.mubr.f32.mxu0 %v6554
    %7777 = vmatmul.mubr.f32.gmra.mxu0 %v6553
    %v7778 = vpop.f32.mrf.mxu0
    %v7779 = vadd.f32 %v7330, %v7778
    %v7780 = vpop.f32.mrf.mxu0
    %v7781 = vadd.f32 %v7332, %v7780
    %7782 = vmatprep.mubr.f32.mxu0 %v6562
    %7783 = vmatmul.mubr.f32.gmra.mxu0 %v6561
    %v7784 = vpop.f32.mrf.mxu0
    %v7785 = vadd.f32 %v7336, %v7784
    %v7786 = vpop.f32.mrf.mxu0
    %v7787 = vadd.f32 %v7338, %v7786
    %7788 = vmatprep.mubr.f32.mxu0 %v6570
    %7789 = vmatmul.mubr.f32.gmra.mxu0 %v6569
    %v7790 = vpop.f32.mrf.mxu0
    %v7791 = vadd.f32 %v7342, %v7790
    %v7792 = vpop.f32.mrf.mxu0
    %v7793 = vadd.f32 %v7344, %v7792
    %7794 = vmatprep.mubr.f32.mxu0 %v6578
    %7795 = vmatmul.mubr.f32.gmra.mxu0 %v6577
    %v7796 = vpop.f32.mrf.mxu0
    %v7797 = vadd.f32 %v7348, %v7796
    %v7798 = vpop.f32.mrf.mxu0
    %v7799 = vadd.f32 %v7350, %v7798
    %7800 = vmatprep.mubr.f32.mxu0 %v6586
    %7801 = vmatmul.mubr.f32.gmra.mxu0 %v6585
    %v7802 = vpop.f32.mrf.mxu0
    %v7803 = vadd.f32 %v7354, %v7802
    %v7804 = vpop.f32.mrf.mxu0
    %v7805 = vadd.f32 %v7356, %v7804
    %7806 = vmatprep.mubr.f32.mxu0 %v6594
    %7807 = vmatmul.mubr.f32.gmra.mxu0 %v6593
    %v7808 = vpop.f32.mrf.mxu0
    %v7809 = vadd.f32 %v7360, %v7808
    %v7810 = vpop.f32.mrf.mxu0
    %v7811 = vadd.f32 %v7362, %v7810
    %7812 = vmatprep.mubr.f32.mxu0 %v6602
    %7813 = vmatmul.mubr.f32.gmra.mxu0 %v6601
    %v7814 = vpop.f32.mrf.mxu0
    %v7815 = vadd.f32 %v7366, %v7814
    %v7816 = vpop.f32.mrf.mxu0
    %v7817 = vadd.f32 %v7368, %v7816
    %7818 = vmatprep.mubr.f32.mxu0 %v6610
    %7819 = vmatmul.mubr.f32.gmra.mxu0 %v6609
    %v7820 = vpop.f32.mrf.mxu0
    %v7821 = vadd.f32 %v7372, %v7820
    %v7822 = vpop.f32.mrf.mxu0
    %v7823 = vadd.f32 %v7374, %v7822
    %7824 = vmatprep.mubr.f32.mxu0 %v6618
    %7825 = vmatmul.mubr.f32.gmra.mxu0 %v6617
    %v7826 = vpop.f32.mrf.mxu0
    %v7827 = vadd.f32 %v7378, %v7826
    %v7828 = vpop.f32.mrf.mxu0
    %v7829 = vadd.f32 %v7380, %v7828
    %7830 = vmatprep.mubr.f32.mxu0 %v6626
    %7831 = vmatmul.mubr.f32.gmra.mxu0 %v6625
    %v7832 = vpop.f32.mrf.mxu0
    %v7833 = vadd.f32 %v7384, %v7832
    %v7834 = vpop.f32.mrf.mxu0
    %v7835 = vadd.f32 %v7386, %v7834
    %7836 = vmatprep.mubr.f32.mxu0 %v6634
    %7837 = vmatmul.mubr.f32.gmra.mxu0 %v6633
    %v7838 = vpop.f32.mrf.mxu0
    %v7839 = vadd.f32 %v7390, %v7838
    %v7840 = vpop.f32.mrf.mxu0
    %v7841 = vadd.f32 %v7392, %v7840
    %7842 = vmatprep.mubr.f32.mxu0 %v6642
    %7843 = vmatmul.mubr.f32.gmra.mxu0 %v6641
    %v7844 = vpop.f32.mrf.mxu0
    %v7845 = vadd.f32 %v7396, %v7844
    %v7846 = vpop.f32.mrf.mxu0
    %v7847 = vadd.f32 %v7398, %v7846
    %7848 = vmatprep.mubr.f32.mxu0 %v6650
    %7849 = vmatmul.mubr.f32.gmra.mxu0 %v6649
    %v7850 = vpop.f32.mrf.mxu0
    %v7851 = vadd.f32 %v7402, %v7850
    %v7852 = vpop.f32.mrf.mxu0
    %v7853 = vadd.f32 %v7404, %v7852
    %7854 = vmatprep.mubr.f32.mxu0 %v6658
    %7855 = vmatmul.mubr.f32.gmra.mxu0 %v6657
    %v7856 = vpop.f32.mrf.mxu0
    %v7857 = vadd.f32 %v7408, %v7856
    %v7858 = vpop.f32.mrf.mxu0
    %v7859 = vadd.f32 %v7410, %v7858
    %7860 = vmatprep.mubr.f32.mxu0 %v6666
    %7861 = vmatmul.mubr.f32.gmra.mxu0 %v6665
    %v7862 = vpop.f32.mrf.mxu0
    %v7863 = vadd.f32 %v7414, %v7862
    %v7864 = vpop.f32.mrf.mxu0
    %v7865 = vadd.f32 %v7416, %v7864
    %7866 = vmatprep.mubr.f32.mxu0 %v6674
    %7867 = vmatmul.mubr.f32.gmra.mxu0 %v6673
    %v7868 = vpop.f32.mrf.mxu0
    %v7869 = vadd.f32 %v7420, %v7868
    %v7870 = vpop.f32.mrf.mxu0
    %v7871 = vadd.f32 %v7422, %v7870
    %7872 = vmatprep.mubr.f32.mxu0 %v6682
    %7873 = vmatmul.mubr.f32.gmra.mxu0 %v6681
    %v7874 = vpop.f32.mrf.mxu0
    %v7875 = vadd.f32 %v7426, %v7874
    %v7876 = vpop.f32.mrf.mxu0
    %v7877 = vadd.f32 %v7428, %v7876
    %7878 = vmatprep.mubr.f32.mxu0 %v6690
    %7879 = vmatmul.mubr.f32.gmra.mxu0 %v6689
    %v7880 = vpop.f32.mrf.mxu0
    %v7881 = vadd.f32 %v7432, %v7880
    %v7882 = vpop.f32.mrf.mxu0
    %v7883 = vadd.f32 %v7434, %v7882
    %7884 = vmatprep.mubr.f32.mxu0 %v6698
    %7885 = vmatmul.mubr.f32.gmra.mxu0 %v6697
    %v7886 = vpop.f32.mrf.mxu0
    %v7887 = vadd.f32 %v7438, %v7886
    %v7888 = vpop.f32.mrf.mxu0
    %v7889 = vadd.f32 %v7440, %v7888
    %7890 = vmatprep.mubr.f32.mxu0 %v6706
    %7891 = vmatmul.mubr.f32.gmra.mxu0 %v6705
    %v7892 = vpop.f32.mrf.mxu0
    %v7893 = vadd.f32 %v7444, %v7892
    %v7894 = vpop.f32.mrf.mxu0
    %v7895 = vadd.f32 %v7446, %v7894
    %7896 = vmatprep.mubr.f32.mxu0 %v6714
    %7897 = vmatmul.mubr.f32.gmra.mxu0 %v6713
    %v7898 = vpop.f32.mrf.mxu0
    %v7899 = vadd.f32 %v7450, %v7898
    %v7900 = vpop.f32.mrf.mxu0
    %v7901 = vadd.f32 %v7452, %v7900
    %7902 = vmatprep.mubr.f32.mxu0 %v6722
    %7903 = vmatmul.mubr.f32.gmra.mxu0 %v6721
    %v7904 = vpop.f32.mrf.mxu0
    %v7905 = vadd.f32 %v7456, %v7904
    %v7906 = vpop.f32.mrf.mxu0
    %v7907 = vadd.f32 %v7458, %v7906
    %7908 = vmatprep.mubr.f32.mxu0 %v6730
    %7909 = vmatmul.mubr.f32.gmra.mxu0 %v6729
    %v7910 = vpop.f32.mrf.mxu0
    %v7911 = vadd.f32 %v7462, %v7910
    %v7912 = vpop.f32.mrf.mxu0
    %v7913 = vadd.f32 %v7464, %v7912
    %7914 = vmatprep.mubr.f32.mxu0 %v6738
    %7915 = vmatmul.mubr.f32.gmra.mxu0 %v6737
    %v7916 = vpop.f32.mrf.mxu0
    %v7917 = vadd.f32 %v7468, %v7916
    %v7918 = vpop.f32.mrf.mxu0
    %v7919 = vadd.f32 %v7470, %v7918
    %7920 = vmatprep.mubr.f32.mxu0 %v6746
    %7921 = vmatmul.mubr.f32.gmra.mxu0 %v6745
    %v7922 = vpop.f32.mrf.mxu0
    %v7923 = vadd.f32 %v7474, %v7922
    %v7924 = vpop.f32.mrf.mxu0
    %v7925 = vadd.f32 %v7476, %v7924
    %7926 = vmatprep.mubr.f32.mxu0 %v6754
    %7927 = vmatmul.mubr.f32.gmra.mxu0 %v6753
    %v7928 = vpop.f32.mrf.mxu0
    %v7929 = vadd.f32 %v7480, %v7928
    %v7930 = vpop.f32.mrf.mxu0
    %v7931 = vadd.f32 %v7482, %v7930
    %7932 = vmatprep.mubr.f32.mxu0 %v6762
    %7933 = vmatmul.mubr.f32.gmra.mxu0 %v6761
    %v7934 = vpop.f32.mrf.mxu0
    %v7935 = vadd.f32 %v7486, %v7934
    %v7936 = vpop.f32.mrf.mxu0
    %v7937 = vadd.f32 %v7488, %v7936
    %7938 = vmatprep.mubr.f32.mxu0 %v6770
    %7939 = vmatmul.mubr.f32.gmra.mxu0 %v6769
    %v7940 = vpop.f32.mrf.mxu0
    %v7941 = vadd.f32 %v7492, %v7940
    %v7942 = vpop.f32.mrf.mxu0
    %v7943 = vadd.f32 %v7494, %v7942
    %7944 = vmatprep.mubr.f32.mxu0 %v6778
    %7945 = vmatmul.mubr.f32.gmra.mxu0 %v6777
    %v7946 = vpop.f32.mrf.mxu0
    %v7947 = vadd.f32 %v7498, %v7946
    %v7948 = vpop.f32.mrf.mxu0
    %v7949 = vadd.f32 %v7500, %v7948
    %7950 = vmatprep.mubr.f32.mxu0 %v6786
    %7951 = vmatmul.mubr.f32.gmra.mxu0 %v6785
    %v7952 = vpop.f32.mrf.mxu0
    %v7953 = vadd.f32 %v7504, %v7952
    %v7954 = vpop.f32.mrf.mxu0
    %v7955 = vadd.f32 %v7506, %v7954
    %7956 = vdwg.mxu0
    %7957 = vmatprep.subr.mxu0 %v6950
    %7958 = vmatpush1.msra.mxu0 %v6949
    %7959 = vmatprep.subr.mxu0 %v6948
    %7960 = vmatpush1.msra.mxu0 %v6947
    %7961 = vmatprep.subr.mxu0 %v6946
    %7962 = vmatpush1.msra.mxu0 %v6945
    %7963 = vmatprep.subr.mxu0 %v6944
    %7964 = vmatpush1.msra.mxu0 %v6943
    %7965 = vmatprep.subr.mxu0 %v6942
    %7966 = vmatpush1.msra.mxu0 %v6941
    %7967 = vmatprep.subr.mxu0 %v6940
    %7968 = vmatpush1.msra.mxu0 %v6939
    %7969 = vmatprep.subr.mxu0 %v6938
    %7970 = vmatpush1.msra.mxu0 %v6937
    %7971 = vmatprep.subr.mxu0 %v6936
    %7972 = vmatpush1.msra.mxu0 %v6935
    %7973 = vmatprep.subr.mxu0 %v6934
    %7974 = vmatpush1.msra.mxu0 %v6933
    %7975 = vmatprep.subr.mxu0 %v6932
    %7976 = vmatpush1.msra.mxu0 %v6931
    %7977 = vmatprep.subr.mxu0 %v6930
    %7978 = vmatpush1.msra.mxu0 %v6929
    %7979 = vmatprep.subr.mxu0 %v6928
    %7980 = vmatpush1.msra.mxu0 %v6927
    %7981 = vmatprep.subr.mxu0 %v6926
    %7982 = vmatpush1.msra.mxu0 %v6925
    %7983 = vmatprep.subr.mxu0 %v6924
    %7984 = vmatpush1.msra.mxu0 %v6923
    %7985 = vmatprep.subr.mxu0 %v6922
    %7986 = vmatpush1.msra.mxu0 %v6921
    %7987 = vmatprep.subr.mxu0 %v6920
    %7988 = vmatpush1.msra.mxu0 %v6919
    %7989 = vmatprep.subr.mxu0 %v6982
    %7990 = vmatpush2.msra.mxu0 %v6981
    %7991 = vmatprep.subr.mxu0 %v6980
    %7992 = vmatpush2.msra.mxu0 %v6979
    %7993 = vmatprep.subr.mxu0 %v6978
    %7994 = vmatpush2.msra.mxu0 %v6977
    %7995 = vmatprep.subr.mxu0 %v6976
    %7996 = vmatpush2.msra.mxu0 %v6975
    %7997 = vmatprep.subr.mxu0 %v6974
    %7998 = vmatpush2.msra.mxu0 %v6973
    %7999 = vmatprep.subr.mxu0 %v6972
    %8000 = vmatpush2.msra.mxu0 %v6971
    %8001 = vmatprep.subr.mxu0 %v6970
    %8002 = vmatpush2.msra.mxu0 %v6969
    %8003 = vmatprep.subr.mxu0 %v6968
    %8004 = vmatpush2.msra.mxu0 %v6967
    %8005 = vmatprep.subr.mxu0 %v6966
    %8006 = vmatpush2.msra.mxu0 %v6965
    %8007 = vmatprep.subr.mxu0 %v6964
    %8008 = vmatpush2.msra.mxu0 %v6963
    %8009 = vmatprep.subr.mxu0 %v6962
    %8010 = vmatpush2.msra.mxu0 %v6961
    %8011 = vmatprep.subr.mxu0 %v6960
    %8012 = vmatpush2.msra.mxu0 %v6959
    %8013 = vmatprep.subr.mxu0 %v6958
    %8014 = vmatpush2.msra.mxu0 %v6957
    %8015 = vmatprep.subr.mxu0 %v6956
    %8016 = vmatpush2.msra.mxu0 %v6955
    %8017 = vmatprep.subr.mxu0 %v6954
    %8018 = vmatpush2.msra.mxu0 %v6953
    %8019 = vmatprep.subr.mxu0 %v6952
    %8020 = vmatpush2.msra.mxu0 %v6951
    %8021 = vmatprep.mubr.f32.mxu0 %v6284
    %8022 = vmatmul.mubr.f32.gmra.mxu0 %v6283
    %v8023 = vpop.f32.mrf.mxu0
    %v8024 = vadd.f32 %v7575, %v8023
    %v8025 = vpop.f32.mrf.mxu0
    %v8026 = vadd.f32 %v7577, %v8025
    %8027 = vmatprep.mubr.f32.mxu0 %v6292
    %8028 = vmatmul.mubr.f32.gmra.mxu0 %v6291
    %v8029 = vpop.f32.mrf.mxu0
    %v8030 = vadd.f32 %v7581, %v8029
    %v8031 = vpop.f32.mrf.mxu0
    %v8032 = vadd.f32 %v7583, %v8031
    %8033 = vmatprep.mubr.f32.mxu0 %v6300
    %8034 = vmatmul.mubr.f32.gmra.mxu0 %v6299
    %v8035 = vpop.f32.mrf.mxu0
    %v8036 = vadd.f32 %v7587, %v8035
    %v8037 = vpop.f32.mrf.mxu0
    %v8038 = vadd.f32 %v7589, %v8037
    %8039 = vmatprep.mubr.f32.mxu0 %v6308
    %8040 = vmatmul.mubr.f32.gmra.mxu0 %v6307
    %v8041 = vpop.f32.mrf.mxu0
    %v8042 = vadd.f32 %v7593, %v8041
    %v8043 = vpop.f32.mrf.mxu0
    %v8044 = vadd.f32 %v7595, %v8043
    %8045 = vmatprep.mubr.f32.mxu0 %v6316
    %8046 = vmatmul.mubr.f32.gmra.mxu0 %v6315
    %v8047 = vpop.f32.mrf.mxu0
    %v8048 = vadd.f32 %v7599, %v8047
    %v8049 = vpop.f32.mrf.mxu0
    %v8050 = vadd.f32 %v7601, %v8049
    %8051 = vmatprep.mubr.f32.mxu0 %v6324
    %8052 = vmatmul.mubr.f32.gmra.mxu0 %v6323
    %v8053 = vpop.f32.mrf.mxu0
    %v8054 = vadd.f32 %v7605, %v8053
    %v8055 = vpop.f32.mrf.mxu0
    %v8056 = vadd.f32 %v7607, %v8055
    %8057 = vmatprep.mubr.f32.mxu0 %v6332
    %8058 = vmatmul.mubr.f32.gmra.mxu0 %v6331
    %v8059 = vpop.f32.mrf.mxu0
    %v8060 = vadd.f32 %v7611, %v8059
    %v8061 = vpop.f32.mrf.mxu0
    %v8062 = vadd.f32 %v7613, %v8061
    %8063 = vmatprep.mubr.f32.mxu0 %v6340
    %8064 = vmatmul.mubr.f32.gmra.mxu0 %v6339
    %v8065 = vpop.f32.mrf.mxu0
    %v8066 = vadd.f32 %v7617, %v8065
    %v8067 = vpop.f32.mrf.mxu0
    %v8068 = vadd.f32 %v7619, %v8067
    %8069 = vmatprep.mubr.f32.mxu0 %v6348
    %8070 = vmatmul.mubr.f32.gmra.mxu0 %v6347
    %v8071 = vpop.f32.mrf.mxu0
    %v8072 = vadd.f32 %v7623, %v8071
    %v8073 = vpop.f32.mrf.mxu0
    %v8074 = vadd.f32 %v7625, %v8073
    %8075 = vmatprep.mubr.f32.mxu0 %v6356
    %8076 = vmatmul.mubr.f32.gmra.mxu0 %v6355
    %v8077 = vpop.f32.mrf.mxu0
    %v8078 = vadd.f32 %v7629, %v8077
    %v8079 = vpop.f32.mrf.mxu0
    %v8080 = vadd.f32 %v7631, %v8079
    %8081 = vmatprep.mubr.f32.mxu0 %v6364
    %8082 = vmatmul.mubr.f32.gmra.mxu0 %v6363
    %v8083 = vpop.f32.mrf.mxu0
    %v8084 = vadd.f32 %v7635, %v8083
    %v8085 = vpop.f32.mrf.mxu0
    %v8086 = vadd.f32 %v7637, %v8085
    %8087 = vmatprep.mubr.f32.mxu0 %v6372
    %8088 = vmatmul.mubr.f32.gmra.mxu0 %v6371
    %v8089 = vpop.f32.mrf.mxu0
    %v8090 = vadd.f32 %v7641, %v8089
    %v8091 = vpop.f32.mrf.mxu0
    %v8092 = vadd.f32 %v7643, %v8091
    %8093 = vmatprep.mubr.f32.mxu0 %v6380
    %8094 = vmatmul.mubr.f32.gmra.mxu0 %v6379
    %v8095 = vpop.f32.mrf.mxu0
    %v8096 = vadd.f32 %v7647, %v8095
    %v8097 = vpop.f32.mrf.mxu0
    %v8098 = vadd.f32 %v7649, %v8097
    %8099 = vmatprep.mubr.f32.mxu0 %v6388
    %8100 = vmatmul.mubr.f32.gmra.mxu0 %v6387
    %v8101 = vpop.f32.mrf.mxu0
    %v8102 = vadd.f32 %v7653, %v8101
    %v8103 = vpop.f32.mrf.mxu0
    %v8104 = vadd.f32 %v7655, %v8103
    %8105 = vmatprep.mubr.f32.mxu0 %v6396
    %8106 = vmatmul.mubr.f32.gmra.mxu0 %v6395
    %v8107 = vpop.f32.mrf.mxu0
    %v8108 = vadd.f32 %v7659, %v8107
    %v8109 = vpop.f32.mrf.mxu0
    %v8110 = vadd.f32 %v7661, %v8109
    %8111 = vmatprep.mubr.f32.mxu0 %v6404
    %8112 = vmatmul.mubr.f32.gmra.mxu0 %v6403
    %v8113 = vpop.f32.mrf.mxu0
    %v8114 = vadd.f32 %v7665, %v8113
    %v8115 = vpop.f32.mrf.mxu0
    %v8116 = vadd.f32 %v7667, %v8115
    %8117 = vmatprep.mubr.f32.mxu0 %v6412
    %8118 = vmatmul.mubr.f32.gmra.mxu0 %v6411
    %v8119 = vpop.f32.mrf.mxu0
    %v8120 = vadd.f32 %v7671, %v8119
    %v8121 = vpop.f32.mrf.mxu0
    %v8122 = vadd.f32 %v7673, %v8121
    %8123 = vmatprep.mubr.f32.mxu0 %v6420
    %8124 = vmatmul.mubr.f32.gmra.mxu0 %v6419
    %v8125 = vpop.f32.mrf.mxu0
    %v8126 = vadd.f32 %v7677, %v8125
    %v8127 = vpop.f32.mrf.mxu0
    %v8128 = vadd.f32 %v7679, %v8127
    %8129 = vmatprep.mubr.f32.mxu0 %v6428
    %8130 = vmatmul.mubr.f32.gmra.mxu0 %v6427
    %v8131 = vpop.f32.mrf.mxu0
    %v8132 = vadd.f32 %v7683, %v8131
    %v8133 = vpop.f32.mrf.mxu0
    %v8134 = vadd.f32 %v7685, %v8133
    %8135 = vmatprep.mubr.f32.mxu0 %v6436
    %8136 = vmatmul.mubr.f32.gmra.mxu0 %v6435
    %v8137 = vpop.f32.mrf.mxu0
    %v8138 = vadd.f32 %v7689, %v8137
    %v8139 = vpop.f32.mrf.mxu0
    %v8140 = vadd.f32 %v7691, %v8139
    %8141 = vmatprep.mubr.f32.mxu0 %v6444
    %8142 = vmatmul.mubr.f32.gmra.mxu0 %v6443
    %v8143 = vpop.f32.mrf.mxu0
    %v8144 = vadd.f32 %v7695, %v8143
    %v8145 = vpop.f32.mrf.mxu0
    %v8146 = vadd.f32 %v7697, %v8145
    %8147 = vmatprep.mubr.f32.mxu0 %v6452
    %8148 = vmatmul.mubr.f32.gmra.mxu0 %v6451
    %v8149 = vpop.f32.mrf.mxu0
    %v8150 = vadd.f32 %v7701, %v8149
    %v8151 = vpop.f32.mrf.mxu0
    %v8152 = vadd.f32 %v7703, %v8151
    %8153 = vmatprep.mubr.f32.mxu0 %v6460
    %8154 = vmatmul.mubr.f32.gmra.mxu0 %v6459
    %v8155 = vpop.f32.mrf.mxu0
    %v8156 = vadd.f32 %v7707, %v8155
    %v8157 = vpop.f32.mrf.mxu0
    %v8158 = vadd.f32 %v7709, %v8157
    %8159 = vmatprep.mubr.f32.mxu0 %v6468
    %8160 = vmatmul.mubr.f32.gmra.mxu0 %v6467
    %v8161 = vpop.f32.mrf.mxu0
    %v8162 = vadd.f32 %v7713, %v8161
    %v8163 = vpop.f32.mrf.mxu0
    %v8164 = vadd.f32 %v7715, %v8163
    %8165 = vmatprep.mubr.f32.mxu0 %v6476
    %8166 = vmatmul.mubr.f32.gmra.mxu0 %v6475
    %v8167 = vpop.f32.mrf.mxu0
    %v8168 = vadd.f32 %v7719, %v8167
    %v8169 = vpop.f32.mrf.mxu0
    %v8170 = vadd.f32 %v7721, %v8169
    %8171 = vmatprep.mubr.f32.mxu0 %v6484
    %8172 = vmatmul.mubr.f32.gmra.mxu0 %v6483
    %v8173 = vpop.f32.mrf.mxu0
    %v8174 = vadd.f32 %v7725, %v8173
    %v8175 = vpop.f32.mrf.mxu0
    %v8176 = vadd.f32 %v7727, %v8175
    %8177 = vmatprep.mubr.f32.mxu0 %v6492
    %8178 = vmatmul.mubr.f32.gmra.mxu0 %v6491
    %v8179 = vpop.f32.mrf.mxu0
    %v8180 = vadd.f32 %v7731, %v8179
    %v8181 = vpop.f32.mrf.mxu0
    %v8182 = vadd.f32 %v7733, %v8181
    %8183 = vmatprep.mubr.f32.mxu0 %v6500
    %8184 = vmatmul.mubr.f32.gmra.mxu0 %v6499
    %v8185 = vpop.f32.mrf.mxu0
    %v8186 = vadd.f32 %v7737, %v8185
    %v8187 = vpop.f32.mrf.mxu0
    %v8188 = vadd.f32 %v7739, %v8187
    %8189 = vmatprep.mubr.f32.mxu0 %v6508
    %8190 = vmatmul.mubr.f32.gmra.mxu0 %v6507
    %v8191 = vpop.f32.mrf.mxu0
    %v8192 = vadd.f32 %v7743, %v8191
    %v8193 = vpop.f32.mrf.mxu0
    %v8194 = vadd.f32 %v7745, %v8193
    %8195 = vmatprep.mubr.f32.mxu0 %v6516
    %8196 = vmatmul.mubr.f32.gmra.mxu0 %v6515
    %v8197 = vpop.f32.mrf.mxu0
    %v8198 = vadd.f32 %v7749, %v8197
    %v8199 = vpop.f32.mrf.mxu0
    %v8200 = vadd.f32 %v7751, %v8199
    %8201 = vmatprep.mubr.f32.mxu0 %v6524
    %8202 = vmatmul.mubr.f32.gmra.mxu0 %v6523
    %v8203 = vpop.f32.mrf.mxu0
    %v8204 = vadd.f32 %v7755, %v8203
    %v8205 = vpop.f32.mrf.mxu0
    %v8206 = vadd.f32 %v7757, %v8205
    %8207 = vmatprep.mubr.f32.mxu0 %v6532
    %8208 = vmatmul.mubr.f32.gmra.mxu0 %v6531
    %v8209 = vpop.f32.mrf.mxu0
    %v8210 = vadd.f32 %v7761, %v8209
    %v8211 = vpop.f32.mrf.mxu0
    %v8212 = vadd.f32 %v7763, %v8211
    %8213 = vmatprep.mubr.f32.mxu0 %v6540
    %8214 = vmatmul.mubr.f32.gmra.mxu0 %v6539
    %v8215 = vpop.f32.mrf.mxu0
    %v8216 = vadd.f32 %v7767, %v8215
    %v8217 = vpop.f32.mrf.mxu0
    %v8218 = vadd.f32 %v7769, %v8217
    %8219 = vmatprep.mubr.f32.mxu0 %v6548
    %8220 = vmatmul.mubr.f32.gmra.mxu0 %v6547
    %v8221 = vpop.f32.mrf.mxu0
    %v8222 = vadd.f32 %v7773, %v8221
    %v8223 = vpop.f32.mrf.mxu0
    %v8224 = vadd.f32 %v7775, %v8223
    %8225 = vmatprep.mubr.f32.mxu0 %v6556
    %8226 = vmatmul.mubr.f32.gmra.mxu0 %v6555
    %v8227 = vpop.f32.mrf.mxu0
    %v8228 = vadd.f32 %v7779, %v8227
    %v8229 = vpop.f32.mrf.mxu0
    %v8230 = vadd.f32 %v7781, %v8229
    %8231 = vmatprep.mubr.f32.mxu0 %v6564
    %8232 = vmatmul.mubr.f32.gmra.mxu0 %v6563
    %v8233 = vpop.f32.mrf.mxu0
    %v8234 = vadd.f32 %v7785, %v8233
    %v8235 = vpop.f32.mrf.mxu0
    %v8236 = vadd.f32 %v7787, %v8235
    %8237 = vmatprep.mubr.f32.mxu0 %v6572
    %8238 = vmatmul.mubr.f32.gmra.mxu0 %v6571
    %v8239 = vpop.f32.mrf.mxu0
    %v8240 = vadd.f32 %v7791, %v8239
    %v8241 = vpop.f32.mrf.mxu0
    %v8242 = vadd.f32 %v7793, %v8241
    %8243 = vmatprep.mubr.f32.mxu0 %v6580
    %8244 = vmatmul.mubr.f32.gmra.mxu0 %v6579
    %v8245 = vpop.f32.mrf.mxu0
    %v8246 = vadd.f32 %v7797, %v8245
    %v8247 = vpop.f32.mrf.mxu0
    %v8248 = vadd.f32 %v7799, %v8247
    %8249 = vmatprep.mubr.f32.mxu0 %v6588
    %8250 = vmatmul.mubr.f32.gmra.mxu0 %v6587
    %v8251 = vpop.f32.mrf.mxu0
    %v8252 = vadd.f32 %v7803, %v8251
    %v8253 = vpop.f32.mrf.mxu0
    %v8254 = vadd.f32 %v7805, %v8253
    %8255 = vmatprep.mubr.f32.mxu0 %v6596
    %8256 = vmatmul.mubr.f32.gmra.mxu0 %v6595
    %v8257 = vpop.f32.mrf.mxu0
    %v8258 = vadd.f32 %v7809, %v8257
    %v8259 = vpop.f32.mrf.mxu0
    %v8260 = vadd.f32 %v7811, %v8259
    %8261 = vmatprep.mubr.f32.mxu0 %v6604
    %8262 = vmatmul.mubr.f32.gmra.mxu0 %v6603
    %v8263 = vpop.f32.mrf.mxu0
    %v8264 = vadd.f32 %v7815, %v8263
    %v8265 = vpop.f32.mrf.mxu0
    %v8266 = vadd.f32 %v7817, %v8265
    %8267 = vmatprep.mubr.f32.mxu0 %v6612
    %8268 = vmatmul.mubr.f32.gmra.mxu0 %v6611
    %v8269 = vpop.f32.mrf.mxu0
    %v8270 = vadd.f32 %v7821, %v8269
    %v8271 = vpop.f32.mrf.mxu0
    %v8272 = vadd.f32 %v7823, %v8271
    %8273 = vmatprep.mubr.f32.mxu0 %v6620
    %8274 = vmatmul.mubr.f32.gmra.mxu0 %v6619
    %v8275 = vpop.f32.mrf.mxu0
    %v8276 = vadd.f32 %v7827, %v8275
    %v8277 = vpop.f32.mrf.mxu0
    %v8278 = vadd.f32 %v7829, %v8277
    %8279 = vmatprep.mubr.f32.mxu0 %v6628
    %8280 = vmatmul.mubr.f32.gmra.mxu0 %v6627
    %v8281 = vpop.f32.mrf.mxu0
    %v8282 = vadd.f32 %v7833, %v8281
    %v8283 = vpop.f32.mrf.mxu0
    %v8284 = vadd.f32 %v7835, %v8283
    %8285 = vmatprep.mubr.f32.mxu0 %v6636
    %8286 = vmatmul.mubr.f32.gmra.mxu0 %v6635
    %v8287 = vpop.f32.mrf.mxu0
    %v8288 = vadd.f32 %v7839, %v8287
    %v8289 = vpop.f32.mrf.mxu0
    %v8290 = vadd.f32 %v7841, %v8289
    %8291 = vmatprep.mubr.f32.mxu0 %v6644
    %8292 = vmatmul.mubr.f32.gmra.mxu0 %v6643
    %v8293 = vpop.f32.mrf.mxu0
    %v8294 = vadd.f32 %v7845, %v8293
    %v8295 = vpop.f32.mrf.mxu0
    %v8296 = vadd.f32 %v7847, %v8295
    %8297 = vmatprep.mubr.f32.mxu0 %v6652
    %8298 = vmatmul.mubr.f32.gmra.mxu0 %v6651
    %v8299 = vpop.f32.mrf.mxu0
    %v8300 = vadd.f32 %v7851, %v8299
    %v8301 = vpop.f32.mrf.mxu0
    %v8302 = vadd.f32 %v7853, %v8301
    %8303 = vmatprep.mubr.f32.mxu0 %v6660
    %8304 = vmatmul.mubr.f32.gmra.mxu0 %v6659
    %v8305 = vpop.f32.mrf.mxu0
    %v8306 = vadd.f32 %v7857, %v8305
    %v8307 = vpop.f32.mrf.mxu0
    %v8308 = vadd.f32 %v7859, %v8307
    %8309 = vmatprep.mubr.f32.mxu0 %v6668
    %8310 = vmatmul.mubr.f32.gmra.mxu0 %v6667
    %v8311 = vpop.f32.mrf.mxu0
    %v8312 = vadd.f32 %v7863, %v8311
    %v8313 = vpop.f32.mrf.mxu0
    %v8314 = vadd.f32 %v7865, %v8313
    %8315 = vmatprep.mubr.f32.mxu0 %v6676
    %8316 = vmatmul.mubr.f32.gmra.mxu0 %v6675
    %v8317 = vpop.f32.mrf.mxu0
    %v8318 = vadd.f32 %v7869, %v8317
    %v8319 = vpop.f32.mrf.mxu0
    %v8320 = vadd.f32 %v7871, %v8319
    %8321 = vmatprep.mubr.f32.mxu0 %v6684
    %8322 = vmatmul.mubr.f32.gmra.mxu0 %v6683
    %v8323 = vpop.f32.mrf.mxu0
    %v8324 = vadd.f32 %v7875, %v8323
    %v8325 = vpop.f32.mrf.mxu0
    %v8326 = vadd.f32 %v7877, %v8325
    %8327 = vmatprep.mubr.f32.mxu0 %v6692
    %8328 = vmatmul.mubr.f32.gmra.mxu0 %v6691
    %v8329 = vpop.f32.mrf.mxu0
    %v8330 = vadd.f32 %v7881, %v8329
    %v8331 = vpop.f32.mrf.mxu0
    %v8332 = vadd.f32 %v7883, %v8331
    %8333 = vmatprep.mubr.f32.mxu0 %v6700
    %8334 = vmatmul.mubr.f32.gmra.mxu0 %v6699
    %v8335 = vpop.f32.mrf.mxu0
    %v8336 = vadd.f32 %v7887, %v8335
    %v8337 = vpop.f32.mrf.mxu0
    %v8338 = vadd.f32 %v7889, %v8337
    %8339 = vmatprep.mubr.f32.mxu0 %v6708
    %8340 = vmatmul.mubr.f32.gmra.mxu0 %v6707
    %v8341 = vpop.f32.mrf.mxu0
    %v8342 = vadd.f32 %v7893, %v8341
    %v8343 = vpop.f32.mrf.mxu0
    %v8344 = vadd.f32 %v7895, %v8343
    %8345 = vmatprep.mubr.f32.mxu0 %v6716
    %8346 = vmatmul.mubr.f32.gmra.mxu0 %v6715
    %v8347 = vpop.f32.mrf.mxu0
    %v8348 = vadd.f32 %v7899, %v8347
    %v8349 = vpop.f32.mrf.mxu0
    %v8350 = vadd.f32 %v7901, %v8349
    %8351 = vmatprep.mubr.f32.mxu0 %v6724
    %8352 = vmatmul.mubr.f32.gmra.mxu0 %v6723
    %v8353 = vpop.f32.mrf.mxu0
    %v8354 = vadd.f32 %v7905, %v8353
    %v8355 = vpop.f32.mrf.mxu0
    %v8356 = vadd.f32 %v7907, %v8355
    %8357 = vmatprep.mubr.f32.mxu0 %v6732
    %8358 = vmatmul.mubr.f32.gmra.mxu0 %v6731
    %v8359 = vpop.f32.mrf.mxu0
    %v8360 = vadd.f32 %v7911, %v8359
    %v8361 = vpop.f32.mrf.mxu0
    %v8362 = vadd.f32 %v7913, %v8361
    %8363 = vmatprep.mubr.f32.mxu0 %v6740
    %8364 = vmatmul.mubr.f32.gmra.mxu0 %v6739
    %v8365 = vpop.f32.mrf.mxu0
    %v8366 = vadd.f32 %v7917, %v8365
    %v8367 = vpop.f32.mrf.mxu0
    %v8368 = vadd.f32 %v7919, %v8367
    %8369 = vmatprep.mubr.f32.mxu0 %v6748
    %8370 = vmatmul.mubr.f32.gmra.mxu0 %v6747
    %v8371 = vpop.f32.mrf.mxu0
    %v8372 = vadd.f32 %v7923, %v8371
    %v8373 = vpop.f32.mrf.mxu0
    %v8374 = vadd.f32 %v7925, %v8373
    %8375 = vmatprep.mubr.f32.mxu0 %v6756
    %8376 = vmatmul.mubr.f32.gmra.mxu0 %v6755
    %v8377 = vpop.f32.mrf.mxu0
    %v8378 = vadd.f32 %v7929, %v8377
    %v8379 = vpop.f32.mrf.mxu0
    %v8380 = vadd.f32 %v7931, %v8379
    %8381 = vmatprep.mubr.f32.mxu0 %v6764
    %8382 = vmatmul.mubr.f32.gmra.mxu0 %v6763
    %v8383 = vpop.f32.mrf.mxu0
    %v8384 = vadd.f32 %v7935, %v8383
    %v8385 = vpop.f32.mrf.mxu0
    %v8386 = vadd.f32 %v7937, %v8385
    %8387 = vmatprep.mubr.f32.mxu0 %v6772
    %8388 = vmatmul.mubr.f32.gmra.mxu0 %v6771
    %v8389 = vpop.f32.mrf.mxu0
    %v8390 = vadd.f32 %v7941, %v8389
    %v8391 = vpop.f32.mrf.mxu0
    %v8392 = vadd.f32 %v7943, %v8391
    %8393 = vmatprep.mubr.f32.mxu0 %v6780
    %8394 = vmatmul.mubr.f32.gmra.mxu0 %v6779
    %v8395 = vpop.f32.mrf.mxu0
    %v8396 = vadd.f32 %v7947, %v8395
    %v8397 = vpop.f32.mrf.mxu0
    %v8398 = vadd.f32 %v7949, %v8397
    %8399 = vmatprep.mubr.f32.mxu0 %v6788
    %8400 = vmatmul.mubr.f32.gmra.mxu0 %v6787
    %v8401 = vpop.f32.mrf.mxu0
    %v8402 = vadd.f32 %v7953, %v8401
    %v8403 = vpop.f32.mrf.mxu0
    %v8404 = vadd.f32 %v7955, %v8403
    %8405 = vdwg.mxu0
    %8406 = vmatprep.subr.mxu0 %v7014
    %8407 = vmatpush1.msra.mxu0 %v7013
    %8408 = vmatprep.subr.mxu0 %v7012
    %8409 = vmatpush1.msra.mxu0 %v7011
    %8410 = vmatprep.subr.mxu0 %v7010
    %8411 = vmatpush1.msra.mxu0 %v7009
    %8412 = vmatprep.subr.mxu0 %v7008
    %8413 = vmatpush1.msra.mxu0 %v7007
    %8414 = vmatprep.subr.mxu0 %v7006
    %8415 = vmatpush1.msra.mxu0 %v7005
    %8416 = vmatprep.subr.mxu0 %v7004
    %8417 = vmatpush1.msra.mxu0 %v7003
    %8418 = vmatprep.subr.mxu0 %v7002
    %8419 = vmatpush1.msra.mxu0 %v7001
    %8420 = vmatprep.subr.mxu0 %v7000
    %8421 = vmatpush1.msra.mxu0 %v6999
    %8422 = vmatprep.subr.mxu0 %v6998
    %8423 = vmatpush1.msra.mxu0 %v6997
    %8424 = vmatprep.subr.mxu0 %v6996
    %8425 = vmatpush1.msra.mxu0 %v6995
    %8426 = vmatprep.subr.mxu0 %v6994
    %8427 = vmatpush1.msra.mxu0 %v6993
    %8428 = vmatprep.subr.mxu0 %v6992
    %8429 = vmatpush1.msra.mxu0 %v6991
    %8430 = vmatprep.subr.mxu0 %v6990
    %8431 = vmatpush1.msra.mxu0 %v6989
    %8432 = vmatprep.subr.mxu0 %v6988
    %8433 = vmatpush1.msra.mxu0 %v6987
    %8434 = vmatprep.subr.mxu0 %v6986
    %8435 = vmatpush1.msra.mxu0 %v6985
    %8436 = vmatprep.subr.mxu0 %v6984
    %8437 = vmatpush1.msra.mxu0 %v6983
    %8438 = vmatprep.subr.mxu0 %v7046
    %8439 = vmatpush2.msra.mxu0 %v7045
    %8440 = vmatprep.subr.mxu0 %v7044
    %8441 = vmatpush2.msra.mxu0 %v7043
    %8442 = vmatprep.subr.mxu0 %v7042
    %8443 = vmatpush2.msra.mxu0 %v7041
    %8444 = vmatprep.subr.mxu0 %v7040
    %8445 = vmatpush2.msra.mxu0 %v7039
    %8446 = vmatprep.subr.mxu0 %v7038
    %8447 = vmatpush2.msra.mxu0 %v7037
    %8448 = vmatprep.subr.mxu0 %v7036
    %8449 = vmatpush2.msra.mxu0 %v7035
    %8450 = vmatprep.subr.mxu0 %v7034
    %8451 = vmatpush2.msra.mxu0 %v7033
    %8452 = vmatprep.subr.mxu0 %v7032
    %8453 = vmatpush2.msra.mxu0 %v7031
    %8454 = vmatprep.subr.mxu0 %v7030
    %8455 = vmatpush2.msra.mxu0 %v7029
    %8456 = vmatprep.subr.mxu0 %v7028
    %8457 = vmatpush2.msra.mxu0 %v7027
    %8458 = vmatprep.subr.mxu0 %v7026
    %8459 = vmatpush2.msra.mxu0 %v7025
    %8460 = vmatprep.subr.mxu0 %v7024
    %8461 = vmatpush2.msra.mxu0 %v7023
    %8462 = vmatprep.subr.mxu0 %v7022
    %8463 = vmatpush2.msra.mxu0 %v7021
    %8464 = vmatprep.subr.mxu0 %v7020
    %8465 = vmatpush2.msra.mxu0 %v7019
    %8466 = vmatprep.subr.mxu0 %v7018
    %8467 = vmatpush2.msra.mxu0 %v7017
    %8468 = vmatprep.subr.mxu0 %v7016
    %8469 = vmatpush2.msra.mxu0 %v7015
    %8470 = vmatprep.mubr.f32.mxu0 %v6286
    %8471 = vmatmul.mubr.f32.gmra.mxu0 %v6285
    %v8472 = vpop.f32.mrf.mxu0
    %v8473 = vadd.f32 %v8024, %v8472
    %v8474 = vpop.f32.mrf.mxu0
    %v8475 = vadd.f32 %v8026, %v8474
    %8476 = vmatprep.mubr.f32.mxu0 %v6294
    %8477 = vmatmul.mubr.f32.gmra.mxu0 %v6293
    %v8478 = vpop.f32.mrf.mxu0
    %v8479 = vadd.f32 %v8030, %v8478
    %v8480 = vpop.f32.mrf.mxu0
    %v8481 = vadd.f32 %v8032, %v8480
    %8482 = vmatprep.mubr.f32.mxu0 %v6302
    %8483 = vmatmul.mubr.f32.gmra.mxu0 %v6301
    %v8484 = vpop.f32.mrf.mxu0
    %v8485 = vadd.f32 %v8036, %v8484
    %v8486 = vpop.f32.mrf.mxu0
    %v8487 = vadd.f32 %v8038, %v8486
    %8488 = vmatprep.mubr.f32.mxu0 %v6310
    %8489 = vmatmul.mubr.f32.gmra.mxu0 %v6309
    %v8490 = vpop.f32.mrf.mxu0
    %v8491 = vadd.f32 %v8042, %v8490
    %v8492 = vpop.f32.mrf.mxu0
    %v8493 = vadd.f32 %v8044, %v8492
    %8494 = vmatprep.mubr.f32.mxu0 %v6318
    %8495 = vmatmul.mubr.f32.gmra.mxu0 %v6317
    %v8496 = vpop.f32.mrf.mxu0
    %v8497 = vadd.f32 %v8048, %v8496
    %v8498 = vpop.f32.mrf.mxu0
    %v8499 = vadd.f32 %v8050, %v8498
    %8500 = vmatprep.mubr.f32.mxu0 %v6326
    %8501 = vmatmul.mubr.f32.gmra.mxu0 %v6325
    %v8502 = vpop.f32.mrf.mxu0
    %v8503 = vadd.f32 %v8054, %v8502
    %v8504 = vpop.f32.mrf.mxu0
    %v8505 = vadd.f32 %v8056, %v8504
    %8506 = vmatprep.mubr.f32.mxu0 %v6334
    %8507 = vmatmul.mubr.f32.gmra.mxu0 %v6333
    %v8508 = vpop.f32.mrf.mxu0
    %v8509 = vadd.f32 %v8060, %v8508
    %v8510 = vpop.f32.mrf.mxu0
    %v8511 = vadd.f32 %v8062, %v8510
    %8512 = vmatprep.mubr.f32.mxu0 %v6342
    %8513 = vmatmul.mubr.f32.gmra.mxu0 %v6341
    %v8514 = vpop.f32.mrf.mxu0
    %v8515 = vadd.f32 %v8066, %v8514
    %v8516 = vpop.f32.mrf.mxu0
    %v8517 = vadd.f32 %v8068, %v8516
    %8518 = vmatprep.mubr.f32.mxu0 %v6350
    %8519 = vmatmul.mubr.f32.gmra.mxu0 %v6349
    %v8520 = vpop.f32.mrf.mxu0
    %v8521 = vadd.f32 %v8072, %v8520
    %v8522 = vpop.f32.mrf.mxu0
    %v8523 = vadd.f32 %v8074, %v8522
    %8524 = vmatprep.mubr.f32.mxu0 %v6358
    %8525 = vmatmul.mubr.f32.gmra.mxu0 %v6357
    %v8526 = vpop.f32.mrf.mxu0
    %v8527 = vadd.f32 %v8078, %v8526
    %v8528 = vpop.f32.mrf.mxu0
    %v8529 = vadd.f32 %v8080, %v8528
    %8530 = vmatprep.mubr.f32.mxu0 %v6366
    %8531 = vmatmul.mubr.f32.gmra.mxu0 %v6365
    %v8532 = vpop.f32.mrf.mxu0
    %v8533 = vadd.f32 %v8084, %v8532
    %v8534 = vpop.f32.mrf.mxu0
    %v8535 = vadd.f32 %v8086, %v8534
    %8536 = vmatprep.mubr.f32.mxu0 %v6374
    %8537 = vmatmul.mubr.f32.gmra.mxu0 %v6373
    %v8538 = vpop.f32.mrf.mxu0
    %v8539 = vadd.f32 %v8090, %v8538
    %v8540 = vpop.f32.mrf.mxu0
    %v8541 = vadd.f32 %v8092, %v8540
    %8542 = vmatprep.mubr.f32.mxu0 %v6382
    %8543 = vmatmul.mubr.f32.gmra.mxu0 %v6381
    %v8544 = vpop.f32.mrf.mxu0
    %v8545 = vadd.f32 %v8096, %v8544
    %v8546 = vpop.f32.mrf.mxu0
    %v8547 = vadd.f32 %v8098, %v8546
    %8548 = vmatprep.mubr.f32.mxu0 %v6390
    %8549 = vmatmul.mubr.f32.gmra.mxu0 %v6389
    %v8550 = vpop.f32.mrf.mxu0
    %v8551 = vadd.f32 %v8102, %v8550
    %v8552 = vpop.f32.mrf.mxu0
    %v8553 = vadd.f32 %v8104, %v8552
    %8554 = vmatprep.mubr.f32.mxu0 %v6398
    %8555 = vmatmul.mubr.f32.gmra.mxu0 %v6397
    %v8556 = vpop.f32.mrf.mxu0
    %v8557 = vadd.f32 %v8108, %v8556
    %v8558 = vpop.f32.mrf.mxu0
    %v8559 = vadd.f32 %v8110, %v8558
    %8560 = vmatprep.mubr.f32.mxu0 %v6406
    %8561 = vmatmul.mubr.f32.gmra.mxu0 %v6405
    %v8562 = vpop.f32.mrf.mxu0
    %v8563 = vadd.f32 %v8114, %v8562
    %v8564 = vpop.f32.mrf.mxu0
    %v8565 = vadd.f32 %v8116, %v8564
    %8566 = vmatprep.mubr.f32.mxu0 %v6414
    %8567 = vmatmul.mubr.f32.gmra.mxu0 %v6413
    %v8568 = vpop.f32.mrf.mxu0
    %v8569 = vadd.f32 %v8120, %v8568
    %v8570 = vpop.f32.mrf.mxu0
    %v8571 = vadd.f32 %v8122, %v8570
    %8572 = vmatprep.mubr.f32.mxu0 %v6422
    %8573 = vmatmul.mubr.f32.gmra.mxu0 %v6421
    %v8574 = vpop.f32.mrf.mxu0
    %v8575 = vadd.f32 %v8126, %v8574
    %v8576 = vpop.f32.mrf.mxu0
    %v8577 = vadd.f32 %v8128, %v8576
    %8578 = vmatprep.mubr.f32.mxu0 %v6430
    %8579 = vmatmul.mubr.f32.gmra.mxu0 %v6429
    %v8580 = vpop.f32.mrf.mxu0
    %v8581 = vadd.f32 %v8132, %v8580
    %v8582 = vpop.f32.mrf.mxu0
    %v8583 = vadd.f32 %v8134, %v8582
    %8584 = vmatprep.mubr.f32.mxu0 %v6438
    %8585 = vmatmul.mubr.f32.gmra.mxu0 %v6437
    %v8586 = vpop.f32.mrf.mxu0
    %v8587 = vadd.f32 %v8138, %v8586
    %v8588 = vpop.f32.mrf.mxu0
    %v8589 = vadd.f32 %v8140, %v8588
    %8590 = vmatprep.mubr.f32.mxu0 %v6446
    %8591 = vmatmul.mubr.f32.gmra.mxu0 %v6445
    %v8592 = vpop.f32.mrf.mxu0
    %v8593 = vadd.f32 %v8144, %v8592
    %v8594 = vpop.f32.mrf.mxu0
    %v8595 = vadd.f32 %v8146, %v8594
    %8596 = vmatprep.mubr.f32.mxu0 %v6454
    %8597 = vmatmul.mubr.f32.gmra.mxu0 %v6453
    %v8598 = vpop.f32.mrf.mxu0
    %v8599 = vadd.f32 %v8150, %v8598
    %v8600 = vpop.f32.mrf.mxu0
    %v8601 = vadd.f32 %v8152, %v8600
    %8602 = vmatprep.mubr.f32.mxu0 %v6462
    %8603 = vmatmul.mubr.f32.gmra.mxu0 %v6461
    %v8604 = vpop.f32.mrf.mxu0
    %v8605 = vadd.f32 %v8156, %v8604
    %v8606 = vpop.f32.mrf.mxu0
    %v8607 = vadd.f32 %v8158, %v8606
    %8608 = vmatprep.mubr.f32.mxu0 %v6470
    %8609 = vmatmul.mubr.f32.gmra.mxu0 %v6469
    %v8610 = vpop.f32.mrf.mxu0
    %v8611 = vadd.f32 %v8162, %v8610
    %v8612 = vpop.f32.mrf.mxu0
    %v8613 = vadd.f32 %v8164, %v8612
    %8614 = vmatprep.mubr.f32.mxu0 %v6478
    %8615 = vmatmul.mubr.f32.gmra.mxu0 %v6477
    %v8616 = vpop.f32.mrf.mxu0
    %v8617 = vadd.f32 %v8168, %v8616
    %v8618 = vpop.f32.mrf.mxu0
    %v8619 = vadd.f32 %v8170, %v8618
    %8620 = vmatprep.mubr.f32.mxu0 %v6486
    %8621 = vmatmul.mubr.f32.gmra.mxu0 %v6485
    %v8622 = vpop.f32.mrf.mxu0
    %v8623 = vadd.f32 %v8174, %v8622
    %v8624 = vpop.f32.mrf.mxu0
    %v8625 = vadd.f32 %v8176, %v8624
    %8626 = vmatprep.mubr.f32.mxu0 %v6494
    %8627 = vmatmul.mubr.f32.gmra.mxu0 %v6493
    %v8628 = vpop.f32.mrf.mxu0
    %v8629 = vadd.f32 %v8180, %v8628
    %v8630 = vpop.f32.mrf.mxu0
    %v8631 = vadd.f32 %v8182, %v8630
    %8632 = vmatprep.mubr.f32.mxu0 %v6502
    %8633 = vmatmul.mubr.f32.gmra.mxu0 %v6501
    %v8634 = vpop.f32.mrf.mxu0
    %v8635 = vadd.f32 %v8186, %v8634
    %v8636 = vpop.f32.mrf.mxu0
    %v8637 = vadd.f32 %v8188, %v8636
    %8638 = vmatprep.mubr.f32.mxu0 %v6510
    %8639 = vmatmul.mubr.f32.gmra.mxu0 %v6509
    %v8640 = vpop.f32.mrf.mxu0
    %v8641 = vadd.f32 %v8192, %v8640
    %v8642 = vpop.f32.mrf.mxu0
    %v8643 = vadd.f32 %v8194, %v8642
    %8644 = vmatprep.mubr.f32.mxu0 %v6518
    %8645 = vmatmul.mubr.f32.gmra.mxu0 %v6517
    %v8646 = vpop.f32.mrf.mxu0
    %v8647 = vadd.f32 %v8198, %v8646
    %v8648 = vpop.f32.mrf.mxu0
    %v8649 = vadd.f32 %v8200, %v8648
    %8650 = vmatprep.mubr.f32.mxu0 %v6526
    %8651 = vmatmul.mubr.f32.gmra.mxu0 %v6525
    %v8652 = vpop.f32.mrf.mxu0
    %v8653 = vadd.f32 %v8204, %v8652
    %v8654 = vpop.f32.mrf.mxu0
    %v8655 = vadd.f32 %v8206, %v8654
    %8656 = vmatprep.mubr.f32.mxu0 %v6534
    %8657 = vmatmul.mubr.f32.gmra.mxu0 %v6533
    %v8658 = vpop.f32.mrf.mxu0
    %v8659 = vadd.f32 %v8210, %v8658
    %v8660 = vpop.f32.mrf.mxu0
    %v8661 = vadd.f32 %v8212, %v8660
    %8662 = vmatprep.mubr.f32.mxu0 %v6542
    %8663 = vmatmul.mubr.f32.gmra.mxu0 %v6541
    %v8664 = vpop.f32.mrf.mxu0
    %v8665 = vadd.f32 %v8216, %v8664
    %v8666 = vpop.f32.mrf.mxu0
    %v8667 = vadd.f32 %v8218, %v8666
    %8668 = vmatprep.mubr.f32.mxu0 %v6550
    %8669 = vmatmul.mubr.f32.gmra.mxu0 %v6549
    %v8670 = vpop.f32.mrf.mxu0
    %v8671 = vadd.f32 %v8222, %v8670
    %v8672 = vpop.f32.mrf.mxu0
    %v8673 = vadd.f32 %v8224, %v8672
    %8674 = vmatprep.mubr.f32.mxu0 %v6558
    %8675 = vmatmul.mubr.f32.gmra.mxu0 %v6557
    %v8676 = vpop.f32.mrf.mxu0
    %v8677 = vadd.f32 %v8228, %v8676
    %v8678 = vpop.f32.mrf.mxu0
    %v8679 = vadd.f32 %v8230, %v8678
    %8680 = vmatprep.mubr.f32.mxu0 %v6566
    %8681 = vmatmul.mubr.f32.gmra.mxu0 %v6565
    %v8682 = vpop.f32.mrf.mxu0
    %v8683 = vadd.f32 %v8234, %v8682
    %v8684 = vpop.f32.mrf.mxu0
    %v8685 = vadd.f32 %v8236, %v8684
    %8686 = vmatprep.mubr.f32.mxu0 %v6574
    %8687 = vmatmul.mubr.f32.gmra.mxu0 %v6573
    %v8688 = vpop.f32.mrf.mxu0
    %v8689 = vadd.f32 %v8240, %v8688
    %v8690 = vpop.f32.mrf.mxu0
    %v8691 = vadd.f32 %v8242, %v8690
    %8692 = vmatprep.mubr.f32.mxu0 %v6582
    %8693 = vmatmul.mubr.f32.gmra.mxu0 %v6581
    %v8694 = vpop.f32.mrf.mxu0
    %v8695 = vadd.f32 %v8246, %v8694
    %v8696 = vpop.f32.mrf.mxu0
    %v8697 = vadd.f32 %v8248, %v8696
    %8698 = vmatprep.mubr.f32.mxu0 %v6590
    %8699 = vmatmul.mubr.f32.gmra.mxu0 %v6589
    %v8700 = vpop.f32.mrf.mxu0
    %v8701 = vadd.f32 %v8252, %v8700
    %v8702 = vpop.f32.mrf.mxu0
    %v8703 = vadd.f32 %v8254, %v8702
    %8704 = vmatprep.mubr.f32.mxu0 %v6598
    %8705 = vmatmul.mubr.f32.gmra.mxu0 %v6597
    %v8706 = vpop.f32.mrf.mxu0
    %v8707 = vadd.f32 %v8258, %v8706
    %v8708 = vpop.f32.mrf.mxu0
    %v8709 = vadd.f32 %v8260, %v8708
    %8710 = vmatprep.mubr.f32.mxu0 %v6606
    %8711 = vmatmul.mubr.f32.gmra.mxu0 %v6605
    %v8712 = vpop.f32.mrf.mxu0
    %v8713 = vadd.f32 %v8264, %v8712
    %v8714 = vpop.f32.mrf.mxu0
    %v8715 = vadd.f32 %v8266, %v8714
    %8716 = vmatprep.mubr.f32.mxu0 %v6614
    %8717 = vmatmul.mubr.f32.gmra.mxu0 %v6613
    %v8718 = vpop.f32.mrf.mxu0
    %v8719 = vadd.f32 %v8270, %v8718
    %v8720 = vpop.f32.mrf.mxu0
    %v8721 = vadd.f32 %v8272, %v8720
    %8722 = vmatprep.mubr.f32.mxu0 %v6622
    %8723 = vmatmul.mubr.f32.gmra.mxu0 %v6621
    %v8724 = vpop.f32.mrf.mxu0
    %v8725 = vadd.f32 %v8276, %v8724
    %v8726 = vpop.f32.mrf.mxu0
    %v8727 = vadd.f32 %v8278, %v8726
    %8728 = vmatprep.mubr.f32.mxu0 %v6630
    %8729 = vmatmul.mubr.f32.gmra.mxu0 %v6629
    %v8730 = vpop.f32.mrf.mxu0
    %v8731 = vadd.f32 %v8282, %v8730
    %v8732 = vpop.f32.mrf.mxu0
    %v8733 = vadd.f32 %v8284, %v8732
    %8734 = vmatprep.mubr.f32.mxu0 %v6638
    %8735 = vmatmul.mubr.f32.gmra.mxu0 %v6637
    %v8736 = vpop.f32.mrf.mxu0
    %v8737 = vadd.f32 %v8288, %v8736
    %v8738 = vpop.f32.mrf.mxu0
    %v8739 = vadd.f32 %v8290, %v8738
    %8740 = vmatprep.mubr.f32.mxu0 %v6646
    %8741 = vmatmul.mubr.f32.gmra.mxu0 %v6645
    %v8742 = vpop.f32.mrf.mxu0
    %v8743 = vadd.f32 %v8294, %v8742
    %v8744 = vpop.f32.mrf.mxu0
    %v8745 = vadd.f32 %v8296, %v8744
    %8746 = vmatprep.mubr.f32.mxu0 %v6654
    %8747 = vmatmul.mubr.f32.gmra.mxu0 %v6653
    %v8748 = vpop.f32.mrf.mxu0
    %v8749 = vadd.f32 %v8300, %v8748
    %v8750 = vpop.f32.mrf.mxu0
    %v8751 = vadd.f32 %v8302, %v8750
    %8752 = vmatprep.mubr.f32.mxu0 %v6662
    %8753 = vmatmul.mubr.f32.gmra.mxu0 %v6661
    %v8754 = vpop.f32.mrf.mxu0
    %v8755 = vadd.f32 %v8306, %v8754
    %v8756 = vpop.f32.mrf.mxu0
    %v8757 = vadd.f32 %v8308, %v8756
    %8758 = vmatprep.mubr.f32.mxu0 %v6670
    %8759 = vmatmul.mubr.f32.gmra.mxu0 %v6669
    %v8760 = vpop.f32.mrf.mxu0
    %v8761 = vadd.f32 %v8312, %v8760
    %v8762 = vpop.f32.mrf.mxu0
    %v8763 = vadd.f32 %v8314, %v8762
    %8764 = vmatprep.mubr.f32.mxu0 %v6678
    %8765 = vmatmul.mubr.f32.gmra.mxu0 %v6677
    %v8766 = vpop.f32.mrf.mxu0
    %v8767 = vadd.f32 %v8318, %v8766
    %v8768 = vpop.f32.mrf.mxu0
    %v8769 = vadd.f32 %v8320, %v8768
    %8770 = vmatprep.mubr.f32.mxu0 %v6686
    %8771 = vmatmul.mubr.f32.gmra.mxu0 %v6685
    %v8772 = vpop.f32.mrf.mxu0
    %v8773 = vadd.f32 %v8324, %v8772
    %v8774 = vpop.f32.mrf.mxu0
    %v8775 = vadd.f32 %v8326, %v8774
    %8776 = vmatprep.mubr.f32.mxu0 %v6694
    %8777 = vmatmul.mubr.f32.gmra.mxu0 %v6693
    %v8778 = vpop.f32.mrf.mxu0
    %v8779 = vadd.f32 %v8330, %v8778
    %v8780 = vpop.f32.mrf.mxu0
    %v8781 = vadd.f32 %v8332, %v8780
    %8782 = vmatprep.mubr.f32.mxu0 %v6702
    %8783 = vmatmul.mubr.f32.gmra.mxu0 %v6701
    %v8784 = vpop.f32.mrf.mxu0
    %v8785 = vadd.f32 %v8336, %v8784
    %v8786 = vpop.f32.mrf.mxu0
    %v8787 = vadd.f32 %v8338, %v8786
    %8788 = vmatprep.mubr.f32.mxu0 %v6710
    %8789 = vmatmul.mubr.f32.gmra.mxu0 %v6709
    %v8790 = vpop.f32.mrf.mxu0
    %v8791 = vadd.f32 %v8342, %v8790
    %v8792 = vpop.f32.mrf.mxu0
    %v8793 = vadd.f32 %v8344, %v8792
    %8794 = vmatprep.mubr.f32.mxu0 %v6718
    %8795 = vmatmul.mubr.f32.gmra.mxu0 %v6717
    %v8796 = vpop.f32.mrf.mxu0
    %v8797 = vadd.f32 %v8348, %v8796
    %v8798 = vpop.f32.mrf.mxu0
    %v8799 = vadd.f32 %v8350, %v8798
    %8800 = vmatprep.mubr.f32.mxu0 %v6726
    %8801 = vmatmul.mubr.f32.gmra.mxu0 %v6725
    %v8802 = vpop.f32.mrf.mxu0
    %v8803 = vadd.f32 %v8354, %v8802
    %v8804 = vpop.f32.mrf.mxu0
    %v8805 = vadd.f32 %v8356, %v8804
    %8806 = vmatprep.mubr.f32.mxu0 %v6734
    %8807 = vmatmul.mubr.f32.gmra.mxu0 %v6733
    %v8808 = vpop.f32.mrf.mxu0
    %v8809 = vadd.f32 %v8360, %v8808
    %v8810 = vpop.f32.mrf.mxu0
    %v8811 = vadd.f32 %v8362, %v8810
    %8812 = vmatprep.mubr.f32.mxu0 %v6742
    %8813 = vmatmul.mubr.f32.gmra.mxu0 %v6741
    %v8814 = vpop.f32.mrf.mxu0
    %v8815 = vadd.f32 %v8366, %v8814
    %v8816 = vpop.f32.mrf.mxu0
    %v8817 = vadd.f32 %v8368, %v8816
    %8818 = vmatprep.mubr.f32.mxu0 %v6750
    %8819 = vmatmul.mubr.f32.gmra.mxu0 %v6749
    %v8820 = vpop.f32.mrf.mxu0
    %v8821 = vadd.f32 %v8372, %v8820
    %v8822 = vpop.f32.mrf.mxu0
    %v8823 = vadd.f32 %v8374, %v8822
    %8824 = vmatprep.mubr.f32.mxu0 %v6758
    %8825 = vmatmul.mubr.f32.gmra.mxu0 %v6757
    %v8826 = vpop.f32.mrf.mxu0
    %v8827 = vadd.f32 %v8378, %v8826
    %v8828 = vpop.f32.mrf.mxu0
    %v8829 = vadd.f32 %v8380, %v8828
    %8830 = vmatprep.mubr.f32.mxu0 %v6766
    %8831 = vmatmul.mubr.f32.gmra.mxu0 %v6765
    %v8832 = vpop.f32.mrf.mxu0
    %v8833 = vadd.f32 %v8384, %v8832
    %v8834 = vpop.f32.mrf.mxu0
    %v8835 = vadd.f32 %v8386, %v8834
    %8836 = vmatprep.mubr.f32.mxu0 %v6774
    %8837 = vmatmul.mubr.f32.gmra.mxu0 %v6773
    %v8838 = vpop.f32.mrf.mxu0
    %v8839 = vadd.f32 %v8390, %v8838
    %v8840 = vpop.f32.mrf.mxu0
    %v8841 = vadd.f32 %v8392, %v8840
    %8842 = vmatprep.mubr.f32.mxu0 %v6782
    %8843 = vmatmul.mubr.f32.gmra.mxu0 %v6781
    %v8844 = vpop.f32.mrf.mxu0
    %v8845 = vadd.f32 %v8396, %v8844
    %v8846 = vpop.f32.mrf.mxu0
    %v8847 = vadd.f32 %v8398, %v8846
    %8848 = vmatprep.mubr.f32.mxu0 %v6790
    %8849 = vmatmul.mubr.f32.gmra.mxu0 %v6789
    %v8850 = vpop.f32.mrf.mxu0
    %v8851 = vadd.f32 %v8402, %v8850
    %v8852 = vpop.f32.mrf.mxu0
    %v8853 = vadd.f32 %v8404, %v8852
    %8854 = vdwg.mxu0
    %v8855 = vadd.f32 %v8473, %v2009
    %v8856 = vadd.f32 %v8475, %v2010
    %v8857 = vadd.f32 %v8479, %v2011
    %v8858 = vadd.f32 %v8481, %v2012
    %v8859 = vadd.f32 %v8485, %v2013
    %v8860 = vadd.f32 %v8487, %v2014
    %v8861 = vadd.f32 %v8491, %v2015
    %v8862 = vadd.f32 %v8493, %v2016
    %v8863 = vadd.f32 %v8497, %v2017
    %v8864 = vadd.f32 %v8499, %v2018
    %v8865 = vadd.f32 %v8503, %v2019
    %v8866 = vadd.f32 %v8505, %v2020
    %v8867 = vadd.f32 %v8509, %v2021
    %v8868 = vadd.f32 %v8511, %v2022
    %v8869 = vadd.f32 %v8515, %v2023
    %v8870 = vadd.f32 %v8517, %v2024
    %v8871 = vadd.f32 %v8521, %v2025
    %v8872 = vadd.f32 %v8523, %v2026
    %v8873 = vadd.f32 %v8527, %v2027
    %v8874 = vadd.f32 %v8529, %v2028
    %v8875 = vadd.f32 %v8533, %v2029
    %v8876 = vadd.f32 %v8535, %v2030
    %v8877 = vadd.f32 %v8539, %v2031
    %v8878 = vadd.f32 %v8541, %v2032
    %v8879 = vadd.f32 %v8545, %v2033
    %v8880 = vadd.f32 %v8547, %v2034
    %v8881 = vadd.f32 %v8551, %v2035
    %v8882 = vadd.f32 %v8553, %v2036
    %v8883 = vadd.f32 %v8557, %v2037
    %v8884 = vadd.f32 %v8559, %v2038
    %v8885 = vadd.f32 %v8563, %v2039
    %v8886 = vadd.f32 %v8565, %v2040
    %v8887 = vadd.f32 %v8569, %v2041
    %v8888 = vadd.f32 %v8571, %v2042
    %v8889 = vadd.f32 %v8575, %v2043
    %v8890 = vadd.f32 %v8577, %v2044
    %v8891 = vadd.f32 %v8581, %v2045
    %v8892 = vadd.f32 %v8583, %v2046
    %v8893 = vadd.f32 %v8587, %v2047
    %v8894 = vadd.f32 %v8589, %v2048
    %v8895 = vadd.f32 %v8593, %v2049
    %v8896 = vadd.f32 %v8595, %v2050
    %v8897 = vadd.f32 %v8599, %v2051
    %v8898 = vadd.f32 %v8601, %v2052
    %v8899 = vadd.f32 %v8605, %v2053
    %v8900 = vadd.f32 %v8607, %v2054
    %v8901 = vadd.f32 %v8611, %v2055
    %v8902 = vadd.f32 %v8613, %v2056
    %v8903 = vadd.f32 %v8617, %v2057
    %v8904 = vadd.f32 %v8619, %v2058
    %v8905 = vadd.f32 %v8623, %v2059
    %v8906 = vadd.f32 %v8625, %v2060
    %v8907 = vadd.f32 %v8629, %v2061
    %v8908 = vadd.f32 %v8631, %v2062
    %v8909 = vadd.f32 %v8635, %v2063
    %v8910 = vadd.f32 %v8637, %v2064
    %v8911 = vadd.f32 %v8641, %v2065
    %v8912 = vadd.f32 %v8643, %v2066
    %v8913 = vadd.f32 %v8647, %v2067
    %v8914 = vadd.f32 %v8649, %v2068
    %v8915 = vadd.f32 %v8653, %v2069
    %v8916 = vadd.f32 %v8655, %v2070
    %v8917 = vadd.f32 %v8659, %v2071
    %v8918 = vadd.f32 %v8661, %v2072
    %v8919 = vadd.f32 %v8665, %v2073
    %v8920 = vadd.f32 %v8667, %v2074
    %v8921 = vadd.f32 %v8671, %v2075
    %v8922 = vadd.f32 %v8673, %v2076
    %v8923 = vadd.f32 %v8677, %v2077
    %v8924 = vadd.f32 %v8679, %v2078
    %v8925 = vadd.f32 %v8683, %v2079
    %v8926 = vadd.f32 %v8685, %v2080
    %v8927 = vadd.f32 %v8689, %v2081
    %v8928 = vadd.f32 %v8691, %v2082
    %v8929 = vadd.f32 %v8695, %v2083
    %v8930 = vadd.f32 %v8697, %v2084
    %v8931 = vadd.f32 %v8701, %v2085
    %v8932 = vadd.f32 %v8703, %v2086
    %v8933 = vadd.f32 %v8707, %v2087
    %v8934 = vadd.f32 %v8709, %v2088
    %v8935 = vadd.f32 %v8713, %v2089
    %v8936 = vadd.f32 %v8715, %v2090
    %v8937 = vadd.f32 %v8719, %v2091
    %v8938 = vadd.f32 %v8721, %v2092
    %v8939 = vadd.f32 %v8725, %v2093
    %v8940 = vadd.f32 %v8727, %v2094
    %v8941 = vadd.f32 %v8731, %v2095
    %v8942 = vadd.f32 %v8733, %v2096
    %v8943 = vadd.f32 %v8737, %v2097
    %v8944 = vadd.f32 %v8739, %v2098
    %v8945 = vadd.f32 %v8743, %v2099
    %v8946 = vadd.f32 %v8745, %v2100
    %v8947 = vadd.f32 %v8749, %v2101
    %v8948 = vadd.f32 %v8751, %v2102
    %v8949 = vadd.f32 %v8755, %v2103
    %v8950 = vadd.f32 %v8757, %v2104
    %v8951 = vadd.f32 %v8761, %v2105
    %v8952 = vadd.f32 %v8763, %v2106
    %v8953 = vadd.f32 %v8767, %v2107
    %v8954 = vadd.f32 %v8769, %v2108
    %v8955 = vadd.f32 %v8773, %v2109
    %v8956 = vadd.f32 %v8775, %v2110
    %v8957 = vadd.f32 %v8779, %v2111
    %v8958 = vadd.f32 %v8781, %v2112
    %v8959 = vadd.f32 %v8785, %v2113
    %v8960 = vadd.f32 %v8787, %v2114
    %v8961 = vadd.f32 %v8791, %v2115
    %v8962 = vadd.f32 %v8793, %v2116
    %v8963 = vadd.f32 %v8797, %v2117
    %v8964 = vadd.f32 %v8799, %v2118
    %v8965 = vadd.f32 %v8803, %v2119
    %v8966 = vadd.f32 %v8805, %v2120
    %v8967 = vadd.f32 %v8809, %v2121
    %v8968 = vadd.f32 %v8811, %v2122
    %v8969 = vadd.f32 %v8815, %v2123
    %v8970 = vadd.f32 %v8817, %v2124
    %v8971 = vadd.f32 %v8821, %v2125
    %v8972 = vadd.f32 %v8823, %v2126
    %v8973 = vadd.f32 %v8827, %v2127
    %v8974 = vadd.f32 %v8829, %v2128
    %v8975 = vadd.f32 %v8833, %v2129
    %v8976 = vadd.f32 %v8835, %v2130
    %v8977 = vadd.f32 %v8839, %v2131
    %v8978 = vadd.f32 %v8841, %v2132
    %v8979 = vadd.f32 %v8845, %v2133
    %v8980 = vadd.f32 %v8847, %v2134
    %v8981 = vadd.f32 %v8851, %v2135
    %v8982 = vadd.f32 %v8853, %v2136
    %v8983 = vadd.f32 %v8855, %v8856
    %8984 = vadd.xlane.f32.xlu0 %v8983
    %v8985 = vpop.xlane.xlu0 %8984
    %v8986 = vadd.f32 %v8857, %v8858
    %8987 = vadd.xlane.f32.xlu0 %v8986
    %v8988 = vpop.xlane.xlu0 %8987
    %v8989 = vadd.f32 %v8859, %v8860
    %8990 = vadd.xlane.f32.xlu0 %v8989
    %v8991 = vpop.xlane.xlu0 %8990
    %v8992 = vadd.f32 %v8861, %v8862
    %8993 = vadd.xlane.f32.xlu0 %v8992
    %v8994 = vpop.xlane.xlu0 %8993
    %v8995 = vadd.f32 %v8863, %v8864
    %8996 = vadd.xlane.f32.xlu0 %v8995
    %v8997 = vpop.xlane.xlu0 %8996
    %v8998 = vadd.f32 %v8865, %v8866
    %8999 = vadd.xlane.f32.xlu0 %v8998
    %v9000 = vpop.xlane.xlu0 %8999
    %v9001 = vadd.f32 %v8867, %v8868
    %9002 = vadd.xlane.f32.xlu0 %v9001
    %v9003 = vpop.xlane.xlu0 %9002
    %v9004 = vadd.f32 %v8869, %v8870
    %9005 = vadd.xlane.f32.xlu0 %v9004
    %v9006 = vpop.xlane.xlu0 %9005
    %v9007 = vadd.f32 %v8871, %v8872
    %9008 = vadd.xlane.f32.xlu0 %v9007
    %v9009 = vpop.xlane.xlu0 %9008
    %v9010 = vadd.f32 %v8873, %v8874
    %9011 = vadd.xlane.f32.xlu0 %v9010
    %v9012 = vpop.xlane.xlu0 %9011
    %v9013 = vadd.f32 %v8875, %v8876
    %9014 = vadd.xlane.f32.xlu0 %v9013
    %v9015 = vpop.xlane.xlu0 %9014
    %v9016 = vadd.f32 %v8877, %v8878
    %9017 = vadd.xlane.f32.xlu0 %v9016
    %v9018 = vpop.xlane.xlu0 %9017
    %v9019 = vadd.f32 %v8879, %v8880
    %9020 = vadd.xlane.f32.xlu0 %v9019
    %v9021 = vpop.xlane.xlu0 %9020
    %v9022 = vadd.f32 %v8881, %v8882
    %9023 = vadd.xlane.f32.xlu0 %v9022
    %v9024 = vpop.xlane.xlu0 %9023
    %v9025 = vadd.f32 %v8883, %v8884
    %9026 = vadd.xlane.f32.xlu0 %v9025
    %v9027 = vpop.xlane.xlu0 %9026
    %v9028 = vadd.f32 %v8885, %v8886
    %9029 = vadd.xlane.f32.xlu0 %v9028
    %v9030 = vpop.xlane.xlu0 %9029
    %v9031 = vadd.f32 %v8887, %v8888
    %9032 = vadd.xlane.f32.xlu0 %v9031
    %v9033 = vpop.xlane.xlu0 %9032
    %v9034 = vadd.f32 %v8889, %v8890
    %9035 = vadd.xlane.f32.xlu0 %v9034
    %v9036 = vpop.xlane.xlu0 %9035
    %v9037 = vadd.f32 %v8891, %v8892
    %9038 = vadd.xlane.f32.xlu0 %v9037
    %v9039 = vpop.xlane.xlu0 %9038
    %v9040 = vadd.f32 %v8893, %v8894
    %9041 = vadd.xlane.f32.xlu0 %v9040
    %v9042 = vpop.xlane.xlu0 %9041
    %v9043 = vadd.f32 %v8895, %v8896
    %9044 = vadd.xlane.f32.xlu0 %v9043
    %v9045 = vpop.xlane.xlu0 %9044
    %v9046 = vadd.f32 %v8897, %v8898
    %9047 = vadd.xlane.f32.xlu0 %v9046
    %v9048 = vpop.xlane.xlu0 %9047
    %v9049 = vadd.f32 %v8899, %v8900
    %9050 = vadd.xlane.f32.xlu0 %v9049
    %v9051 = vpop.xlane.xlu0 %9050
    %v9052 = vadd.f32 %v8901, %v8902
    %9053 = vadd.xlane.f32.xlu0 %v9052
    %v9054 = vpop.xlane.xlu0 %9053
    %v9055 = vadd.f32 %v8903, %v8904
    %9056 = vadd.xlane.f32.xlu0 %v9055
    %v9057 = vpop.xlane.xlu0 %9056
    %v9058 = vadd.f32 %v8905, %v8906
    %9059 = vadd.xlane.f32.xlu0 %v9058
    %v9060 = vpop.xlane.xlu0 %9059
    %v9061 = vadd.f32 %v8907, %v8908
    %9062 = vadd.xlane.f32.xlu0 %v9061
    %v9063 = vpop.xlane.xlu0 %9062
    %v9064 = vadd.f32 %v8909, %v8910
    %9065 = vadd.xlane.f32.xlu0 %v9064
    %v9066 = vpop.xlane.xlu0 %9065
    %v9067 = vadd.f32 %v8911, %v8912
    %9068 = vadd.xlane.f32.xlu0 %v9067
    %v9069 = vpop.xlane.xlu0 %9068
    %v9070 = vadd.f32 %v8913, %v8914
    %9071 = vadd.xlane.f32.xlu0 %v9070
    %v9072 = vpop.xlane.xlu0 %9071
    %v9073 = vadd.f32 %v8915, %v8916
    %9074 = vadd.xlane.f32.xlu0 %v9073
    %v9075 = vpop.xlane.xlu0 %9074
    %v9076 = vadd.f32 %v8917, %v8918
    %9077 = vadd.xlane.f32.xlu0 %v9076
    %v9078 = vpop.xlane.xlu0 %9077
    %v9079 = vadd.f32 %v8919, %v8920
    %9080 = vadd.xlane.f32.xlu0 %v9079
    %v9081 = vpop.xlane.xlu0 %9080
    %v9082 = vadd.f32 %v8921, %v8922
    %9083 = vadd.xlane.f32.xlu0 %v9082
    %v9084 = vpop.xlane.xlu0 %9083
    %v9085 = vadd.f32 %v8923, %v8924
    %9086 = vadd.xlane.f32.xlu0 %v9085
    %v9087 = vpop.xlane.xlu0 %9086
    %v9088 = vadd.f32 %v8925, %v8926
    %9089 = vadd.xlane.f32.xlu0 %v9088
    %v9090 = vpop.xlane.xlu0 %9089
    %v9091 = vadd.f32 %v8927, %v8928
    %9092 = vadd.xlane.f32.xlu0 %v9091
    %v9093 = vpop.xlane.xlu0 %9092
    %v9094 = vadd.f32 %v8929, %v8930
    %9095 = vadd.xlane.f32.xlu0 %v9094
    %v9096 = vpop.xlane.xlu0 %9095
    %v9097 = vadd.f32 %v8931, %v8932
    %9098 = vadd.xlane.f32.xlu0 %v9097
    %v9099 = vpop.xlane.xlu0 %9098
    %v9100 = vadd.f32 %v8933, %v8934
    %9101 = vadd.xlane.f32.xlu0 %v9100
    %v9102 = vpop.xlane.xlu0 %9101
    %v9103 = vadd.f32 %v8935, %v8936
    %9104 = vadd.xlane.f32.xlu0 %v9103
    %v9105 = vpop.xlane.xlu0 %9104
    %v9106 = vadd.f32 %v8937, %v8938
    %9107 = vadd.xlane.f32.xlu0 %v9106
    %v9108 = vpop.xlane.xlu0 %9107
    %v9109 = vadd.f32 %v8939, %v8940
    %9110 = vadd.xlane.f32.xlu0 %v9109
    %v9111 = vpop.xlane.xlu0 %9110
    %v9112 = vadd.f32 %v8941, %v8942
    %9113 = vadd.xlane.f32.xlu0 %v9112
    %v9114 = vpop.xlane.xlu0 %9113
    %v9115 = vadd.f32 %v8943, %v8944
    %9116 = vadd.xlane.f32.xlu0 %v9115
    %v9117 = vpop.xlane.xlu0 %9116
    %v9118 = vadd.f32 %v8945, %v8946
    %9119 = vadd.xlane.f32.xlu0 %v9118
    %v9120 = vpop.xlane.xlu0 %9119
    %v9121 = vadd.f32 %v8947, %v8948
    %9122 = vadd.xlane.f32.xlu0 %v9121
    %v9123 = vpop.xlane.xlu0 %9122
    %v9124 = vadd.f32 %v8949, %v8950
    %9125 = vadd.xlane.f32.xlu0 %v9124
    %v9126 = vpop.xlane.xlu0 %9125
    %v9127 = vadd.f32 %v8951, %v8952
    %9128 = vadd.xlane.f32.xlu0 %v9127
    %v9129 = vpop.xlane.xlu0 %9128
    %v9130 = vadd.f32 %v8953, %v8954
    %9131 = vadd.xlane.f32.xlu0 %v9130
    %v9132 = vpop.xlane.xlu0 %9131
    %v9133 = vadd.f32 %v8955, %v8956
    %9134 = vadd.xlane.f32.xlu0 %v9133
    %v9135 = vpop.xlane.xlu0 %9134
    %v9136 = vadd.f32 %v8957, %v8958
    %9137 = vadd.xlane.f32.xlu0 %v9136
    %v9138 = vpop.xlane.xlu0 %9137
    %v9139 = vadd.f32 %v8959, %v8960
    %9140 = vadd.xlane.f32.xlu0 %v9139
    %v9141 = vpop.xlane.xlu0 %9140
    %v9142 = vadd.f32 %v8961, %v8962
    %9143 = vadd.xlane.f32.xlu0 %v9142
    %v9144 = vpop.xlane.xlu0 %9143
    %v9145 = vadd.f32 %v8963, %v8964
    %9146 = vadd.xlane.f32.xlu0 %v9145
    %v9147 = vpop.xlane.xlu0 %9146
    %v9148 = vadd.f32 %v8965, %v8966
    %9149 = vadd.xlane.f32.xlu0 %v9148
    %v9150 = vpop.xlane.xlu0 %9149
    %v9151 = vadd.f32 %v8967, %v8968
    %9152 = vadd.xlane.f32.xlu0 %v9151
    %v9153 = vpop.xlane.xlu0 %9152
    %v9154 = vadd.f32 %v8969, %v8970
    %9155 = vadd.xlane.f32.xlu0 %v9154
    %v9156 = vpop.xlane.xlu0 %9155
    %v9157 = vadd.f32 %v8971, %v8972
    %9158 = vadd.xlane.f32.xlu0 %v9157
    %v9159 = vpop.xlane.xlu0 %9158
    %v9160 = vadd.f32 %v8973, %v8974
    %9161 = vadd.xlane.f32.xlu0 %v9160
    %v9162 = vpop.xlane.xlu0 %9161
    %v9163 = vadd.f32 %v8975, %v8976
    %9164 = vadd.xlane.f32.xlu0 %v9163
    %v9165 = vpop.xlane.xlu0 %9164
    %v9166 = vadd.f32 %v8977, %v8978
    %9167 = vadd.xlane.f32.xlu0 %v9166
    %v9168 = vpop.xlane.xlu0 %9167
    %v9169 = vadd.f32 %v8979, %v8980
    %9170 = vadd.xlane.f32.xlu0 %v9169
    %v9171 = vpop.xlane.xlu0 %9170
    %v9172 = vadd.f32 %v8981, %v8982
    %9173 = vadd.xlane.f32.xlu0 %v9172
    %v9174 = vpop.xlane.xlu0 %9173
    %v9175 = vrcp.pop 256.0
    %v9176 = vmul.f32 %v8985, %v9175
    %v9177 = vmul.f32 %v8988, %v9175
    %v9178 = vmul.f32 %v8991, %v9175
    %v9179 = vmul.f32 %v8994, %v9175
    %v9180 = vmul.f32 %v8997, %v9175
    %v9181 = vmul.f32 %v9000, %v9175
    %v9182 = vmul.f32 %v9003, %v9175
    %v9183 = vmul.f32 %v9006, %v9175
    %v9184 = vmul.f32 %v9009, %v9175
    %v9185 = vmul.f32 %v9012, %v9175
    %v9186 = vmul.f32 %v9015, %v9175
    %v9187 = vmul.f32 %v9018, %v9175
    %v9188 = vmul.f32 %v9021, %v9175
    %v9189 = vmul.f32 %v9024, %v9175
    %v9190 = vmul.f32 %v9027, %v9175
    %v9191 = vmul.f32 %v9030, %v9175
    %v9192 = vmul.f32 %v9033, %v9175
    %v9193 = vmul.f32 %v9036, %v9175
    %v9194 = vmul.f32 %v9039, %v9175
    %v9195 = vmul.f32 %v9042, %v9175
    %v9196 = vmul.f32 %v9045, %v9175
    %v9197 = vmul.f32 %v9048, %v9175
    %v9198 = vmul.f32 %v9051, %v9175
    %v9199 = vmul.f32 %v9054, %v9175
    %v9200 = vmul.f32 %v9057, %v9175
    %v9201 = vmul.f32 %v9060, %v9175
    %v9202 = vmul.f32 %v9063, %v9175
    %v9203 = vmul.f32 %v9066, %v9175
    %v9204 = vmul.f32 %v9069, %v9175
    %v9205 = vmul.f32 %v9072, %v9175
    %v9206 = vmul.f32 %v9075, %v9175
    %v9207 = vmul.f32 %v9078, %v9175
    %v9208 = vmul.f32 %v9081, %v9175
    %v9209 = vmul.f32 %v9084, %v9175
    %v9210 = vmul.f32 %v9087, %v9175
    %v9211 = vmul.f32 %v9090, %v9175
    %v9212 = vmul.f32 %v9093, %v9175
    %v9213 = vmul.f32 %v9096, %v9175
    %v9214 = vmul.f32 %v9099, %v9175
    %v9215 = vmul.f32 %v9102, %v9175
    %v9216 = vmul.f32 %v9105, %v9175
    %v9217 = vmul.f32 %v9108, %v9175
    %v9218 = vmul.f32 %v9111, %v9175
    %v9219 = vmul.f32 %v9114, %v9175
    %v9220 = vmul.f32 %v9117, %v9175
    %v9221 = vmul.f32 %v9120, %v9175
    %v9222 = vmul.f32 %v9123, %v9175
    %v9223 = vmul.f32 %v9126, %v9175
    %v9224 = vmul.f32 %v9129, %v9175
    %v9225 = vmul.f32 %v9132, %v9175
    %v9226 = vmul.f32 %v9135, %v9175
    %v9227 = vmul.f32 %v9138, %v9175
    %v9228 = vmul.f32 %v9141, %v9175
    %v9229 = vmul.f32 %v9144, %v9175
    %v9230 = vmul.f32 %v9147, %v9175
    %v9231 = vmul.f32 %v9150, %v9175
    %v9232 = vmul.f32 %v9153, %v9175
    %v9233 = vmul.f32 %v9156, %v9175
    %v9234 = vmul.f32 %v9159, %v9175
    %v9235 = vmul.f32 %v9162, %v9175
    %v9236 = vmul.f32 %v9165, %v9175
    %v9237 = vmul.f32 %v9168, %v9175
    %v9238 = vmul.f32 %v9171, %v9175
    %v9239 = vmul.f32 %v9174, %v9175
    %v9240 = vsub.f32 %v8855, %v9176
    %v9241 = vsub.f32 %v8856, %v9176
    %v9242 = vsub.f32 %v8857, %v9177
    %v9243 = vsub.f32 %v8858, %v9177
    %v9244 = vsub.f32 %v8859, %v9178
    %v9245 = vsub.f32 %v8860, %v9178
    %v9246 = vsub.f32 %v8861, %v9179
    %v9247 = vsub.f32 %v8862, %v9179
    %v9248 = vsub.f32 %v8863, %v9180
    %v9249 = vsub.f32 %v8864, %v9180
    %v9250 = vsub.f32 %v8865, %v9181
    %v9251 = vsub.f32 %v8866, %v9181
    %v9252 = vsub.f32 %v8867, %v9182
    %v9253 = vsub.f32 %v8868, %v9182
    %v9254 = vsub.f32 %v8869, %v9183
    %v9255 = vsub.f32 %v8870, %v9183
    %v9256 = vsub.f32 %v8871, %v9184
    %v9257 = vsub.f32 %v8872, %v9184
    %v9258 = vsub.f32 %v8873, %v9185
    %v9259 = vsub.f32 %v8874, %v9185
    %v9260 = vsub.f32 %v8875, %v9186
    %v9261 = vsub.f32 %v8876, %v9186
    %v9262 = vsub.f32 %v8877, %v9187
    %v9263 = vsub.f32 %v8878, %v9187
    %v9264 = vsub.f32 %v8879, %v9188
    %v9265 = vsub.f32 %v8880, %v9188
    %v9266 = vsub.f32 %v8881, %v9189
    %v9267 = vsub.f32 %v8882, %v9189
    %v9268 = vsub.f32 %v8883, %v9190
    %v9269 = vsub.f32 %v8884, %v9190
    %v9270 = vsub.f32 %v8885, %v9191
    %v9271 = vsub.f32 %v8886, %v9191
    %v9272 = vsub.f32 %v8887, %v9192
    %v9273 = vsub.f32 %v8888, %v9192
    %v9274 = vsub.f32 %v8889, %v9193
    %v9275 = vsub.f32 %v8890, %v9193
    %v9276 = vsub.f32 %v8891, %v9194
    %v9277 = vsub.f32 %v8892, %v9194
    %v9278 = vsub.f32 %v8893, %v9195
    %v9279 = vsub.f32 %v8894, %v9195
    %v9280 = vsub.f32 %v8895, %v9196
    %v9281 = vsub.f32 %v8896, %v9196
    %v9282 = vsub.f32 %v8897, %v9197
    %v9283 = vsub.f32 %v8898, %v9197
    %v9284 = vsub.f32 %v8899, %v9198
    %v9285 = vsub.f32 %v8900, %v9198
    %v9286 = vsub.f32 %v8901, %v9199
    %v9287 = vsub.f32 %v8902, %v9199
    %v9288 = vsub.f32 %v8903, %v9200
    %v9289 = vsub.f32 %v8904, %v9200
    %v9290 = vsub.f32 %v8905, %v9201
    %v9291 = vsub.f32 %v8906, %v9201
    %v9292 = vsub.f32 %v8907, %v9202
    %v9293 = vsub.f32 %v8908, %v9202
    %v9294 = vsub.f32 %v8909, %v9203
    %v9295 = vsub.f32 %v8910, %v9203
    %v9296 = vsub.f32 %v8911, %v9204
    %v9297 = vsub.f32 %v8912, %v9204
    %v9298 = vsub.f32 %v8913, %v9205
    %v9299 = vsub.f32 %v8914, %v9205
    %v9300 = vsub.f32 %v8915, %v9206
    %v9301 = vsub.f32 %v8916, %v9206
    %v9302 = vsub.f32 %v8917, %v9207
    %v9303 = vsub.f32 %v8918, %v9207
    %v9304 = vsub.f32 %v8919, %v9208
    %v9305 = vsub.f32 %v8920, %v9208
    %v9306 = vsub.f32 %v8921, %v9209
    %v9307 = vsub.f32 %v8922, %v9209
    %v9308 = vsub.f32 %v8923, %v9210
    %v9309 = vsub.f32 %v8924, %v9210
    %v9310 = vsub.f32 %v8925, %v9211
    %v9311 = vsub.f32 %v8926, %v9211
    %v9312 = vsub.f32 %v8927, %v9212
    %v9313 = vsub.f32 %v8928, %v9212
    %v9314 = vsub.f32 %v8929, %v9213
    %v9315 = vsub.f32 %v8930, %v9213
    %v9316 = vsub.f32 %v8931, %v9214
    %v9317 = vsub.f32 %v8932, %v9214
    %v9318 = vsub.f32 %v8933, %v9215
    %v9319 = vsub.f32 %v8934, %v9215
    %v9320 = vsub.f32 %v8935, %v9216
    %v9321 = vsub.f32 %v8936, %v9216
    %v9322 = vsub.f32 %v8937, %v9217
    %v9323 = vsub.f32 %v8938, %v9217
    %v9324 = vsub.f32 %v8939, %v9218
    %v9325 = vsub.f32 %v8940, %v9218
    %v9326 = vsub.f32 %v8941, %v9219
    %v9327 = vsub.f32 %v8942, %v9219
    %v9328 = vsub.f32 %v8943, %v9220
    %v9329 = vsub.f32 %v8944, %v9220
    %v9330 = vsub.f32 %v8945, %v9221
    %v9331 = vsub.f32 %v8946, %v9221
    %v9332 = vsub.f32 %v8947, %v9222
    %v9333 = vsub.f32 %v8948, %v9222
    %v9334 = vsub.f32 %v8949, %v9223
    %v9335 = vsub.f32 %v8950, %v9223
    %v9336 = vsub.f32 %v8951, %v9224
    %v9337 = vsub.f32 %v8952, %v9224
    %v9338 = vsub.f32 %v8953, %v9225
    %v9339 = vsub.f32 %v8954, %v9225
    %v9340 = vsub.f32 %v8955, %v9226
    %v9341 = vsub.f32 %v8956, %v9226
    %v9342 = vsub.f32 %v8957, %v9227
    %v9343 = vsub.f32 %v8958, %v9227
    %v9344 = vsub.f32 %v8959, %v9228
    %v9345 = vsub.f32 %v8960, %v9228
    %v9346 = vsub.f32 %v8961, %v9229
    %v9347 = vsub.f32 %v8962, %v9229
    %v9348 = vsub.f32 %v8963, %v9230
    %v9349 = vsub.f32 %v8964, %v9230
    %v9350 = vsub.f32 %v8965, %v9231
    %v9351 = vsub.f32 %v8966, %v9231
    %v9352 = vsub.f32 %v8967, %v9232
    %v9353 = vsub.f32 %v8968, %v9232
    %v9354 = vsub.f32 %v8969, %v9233
    %v9355 = vsub.f32 %v8970, %v9233
    %v9356 = vsub.f32 %v8971, %v9234
    %v9357 = vsub.f32 %v8972, %v9234
    %v9358 = vsub.f32 %v8973, %v9235
    %v9359 = vsub.f32 %v8974, %v9235
    %v9360 = vsub.f32 %v8975, %v9236
    %v9361 = vsub.f32 %v8976, %v9236
    %v9362 = vsub.f32 %v8977, %v9237
    %v9363 = vsub.f32 %v8978, %v9237
    %v9364 = vsub.f32 %v8979, %v9238
    %v9365 = vsub.f32 %v8980, %v9238
    %v9366 = vsub.f32 %v8981, %v9239
    %v9367 = vsub.f32 %v8982, %v9239
    %v9368 = vmul.f32 %v9240, %v9240
    %v9369 = vmul.f32 %v9241, %v9241
    %v9370 = vmul.f32 %v9242, %v9242
    %v9371 = vmul.f32 %v9243, %v9243
    %v9372 = vmul.f32 %v9244, %v9244
    %v9373 = vmul.f32 %v9245, %v9245
    %v9374 = vmul.f32 %v9246, %v9246
    %v9375 = vmul.f32 %v9247, %v9247
    %v9376 = vmul.f32 %v9248, %v9248
    %v9377 = vmul.f32 %v9249, %v9249
    %v9378 = vmul.f32 %v9250, %v9250
    %v9379 = vmul.f32 %v9251, %v9251
    %v9380 = vmul.f32 %v9252, %v9252
    %v9381 = vmul.f32 %v9253, %v9253
    %v9382 = vmul.f32 %v9254, %v9254
    %v9383 = vmul.f32 %v9255, %v9255
    %v9384 = vmul.f32 %v9256, %v9256
    %v9385 = vmul.f32 %v9257, %v9257
    %v9386 = vmul.f32 %v9258, %v9258
    %v9387 = vmul.f32 %v9259, %v9259
    %v9388 = vmul.f32 %v9260, %v9260
    %v9389 = vmul.f32 %v9261, %v9261
    %v9390 = vmul.f32 %v9262, %v9262
    %v9391 = vmul.f32 %v9263, %v9263
    %v9392 = vmul.f32 %v9264, %v9264
    %v9393 = vmul.f32 %v9265, %v9265
    %v9394 = vmul.f32 %v9266, %v9266
    %v9395 = vmul.f32 %v9267, %v9267
    %v9396 = vmul.f32 %v9268, %v9268
    %v9397 = vmul.f32 %v9269, %v9269
    %v9398 = vmul.f32 %v9270, %v9270
    %v9399 = vmul.f32 %v9271, %v9271
    %v9400 = vmul.f32 %v9272, %v9272
    %v9401 = vmul.f32 %v9273, %v9273
    %v9402 = vmul.f32 %v9274, %v9274
    %v9403 = vmul.f32 %v9275, %v9275
    %v9404 = vmul.f32 %v9276, %v9276
    %v9405 = vmul.f32 %v9277, %v9277
    %v9406 = vmul.f32 %v9278, %v9278
    %v9407 = vmul.f32 %v9279, %v9279
    %v9408 = vmul.f32 %v9280, %v9280
    %v9409 = vmul.f32 %v9281, %v9281
    %v9410 = vmul.f32 %v9282, %v9282
    %v9411 = vmul.f32 %v9283, %v9283
    %v9412 = vmul.f32 %v9284, %v9284
    %v9413 = vmul.f32 %v9285, %v9285
    %v9414 = vmul.f32 %v9286, %v9286
    %v9415 = vmul.f32 %v9287, %v9287
    %v9416 = vmul.f32 %v9288, %v9288
    %v9417 = vmul.f32 %v9289, %v9289
    %v9418 = vmul.f32 %v9290, %v9290
    %v9419 = vmul.f32 %v9291, %v9291
    %v9420 = vmul.f32 %v9292, %v9292
    %v9421 = vmul.f32 %v9293, %v9293
    %v9422 = vmul.f32 %v9294, %v9294
    %v9423 = vmul.f32 %v9295, %v9295
    %v9424 = vmul.f32 %v9296, %v9296
    %v9425 = vmul.f32 %v9297, %v9297
    %v9426 = vmul.f32 %v9298, %v9298
    %v9427 = vmul.f32 %v9299, %v9299
    %v9428 = vmul.f32 %v9300, %v9300
    %v9429 = vmul.f32 %v9301, %v9301
    %v9430 = vmul.f32 %v9302, %v9302
    %v9431 = vmul.f32 %v9303, %v9303
    %v9432 = vmul.f32 %v9304, %v9304
    %v9433 = vmul.f32 %v9305, %v9305
    %v9434 = vmul.f32 %v9306, %v9306
    %v9435 = vmul.f32 %v9307, %v9307
    %v9436 = vmul.f32 %v9308, %v9308
    %v9437 = vmul.f32 %v9309, %v9309
    %v9438 = vmul.f32 %v9310, %v9310
    %v9439 = vmul.f32 %v9311, %v9311
    %v9440 = vmul.f32 %v9312, %v9312
    %v9441 = vmul.f32 %v9313, %v9313
    %v9442 = vmul.f32 %v9314, %v9314
    %v9443 = vmul.f32 %v9315, %v9315
    %v9444 = vmul.f32 %v9316, %v9316
    %v9445 = vmul.f32 %v9317, %v9317
    %v9446 = vmul.f32 %v9318, %v9318
    %v9447 = vmul.f32 %v9319, %v9319
    %v9448 = vmul.f32 %v9320, %v9320
    %v9449 = vmul.f32 %v9321, %v9321
    %v9450 = vmul.f32 %v9322, %v9322
    %v9451 = vmul.f32 %v9323, %v9323
    %v9452 = vmul.f32 %v9324, %v9324
    %v9453 = vmul.f32 %v9325, %v9325
    %v9454 = vmul.f32 %v9326, %v9326
    %v9455 = vmul.f32 %v9327, %v9327
    %v9456 = vmul.f32 %v9328, %v9328
    %v9457 = vmul.f32 %v9329, %v9329
    %v9458 = vmul.f32 %v9330, %v9330
    %v9459 = vmul.f32 %v9331, %v9331
    %v9460 = vmul.f32 %v9332, %v9332
    %v9461 = vmul.f32 %v9333, %v9333
    %v9462 = vmul.f32 %v9334, %v9334
    %v9463 = vmul.f32 %v9335, %v9335
    %v9464 = vmul.f32 %v9336, %v9336
    %v9465 = vmul.f32 %v9337, %v9337
    %v9466 = vmul.f32 %v9338, %v9338
    %v9467 = vmul.f32 %v9339, %v9339
    %v9468 = vmul.f32 %v9340, %v9340
    %v9469 = vmul.f32 %v9341, %v9341
    %v9470 = vmul.f32 %v9342, %v9342
    %v9471 = vmul.f32 %v9343, %v9343
    %v9472 = vmul.f32 %v9344, %v9344
    %v9473 = vmul.f32 %v9345, %v9345
    %v9474 = vmul.f32 %v9346, %v9346
    %v9475 = vmul.f32 %v9347, %v9347
    %v9476 = vmul.f32 %v9348, %v9348
    %v9477 = vmul.f32 %v9349, %v9349
    %v9478 = vmul.f32 %v9350, %v9350
    %v9479 = vmul.f32 %v9351, %v9351
    %v9480 = vmul.f32 %v9352, %v9352
    %v9481 = vmul.f32 %v9353, %v9353
    %v9482 = vmul.f32 %v9354, %v9354
    %v9483 = vmul.f32 %v9355, %v9355
    %v9484 = vmul.f32 %v9356, %v9356
    %v9485 = vmul.f32 %v9357, %v9357
    %v9486 = vmul.f32 %v9358, %v9358
    %v9487 = vmul.f32 %v9359, %v9359
    %v9488 = vmul.f32 %v9360, %v9360
    %v9489 = vmul.f32 %v9361, %v9361
    %v9490 = vmul.f32 %v9362, %v9362
    %v9491 = vmul.f32 %v9363, %v9363
    %v9492 = vmul.f32 %v9364, %v9364
    %v9493 = vmul.f32 %v9365, %v9365
    %v9494 = vmul.f32 %v9366, %v9366
    %v9495 = vmul.f32 %v9367, %v9367
    %v9496 = vadd.f32 %v9368, %v9369
    %9497 = vadd.xlane.f32.xlu0 %v9496
    %v9498 = vpop.xlane.xlu0 %9497
    %v9499 = vadd.f32 %v9370, %v9371
    %9500 = vadd.xlane.f32.xlu0 %v9499
    %v9501 = vpop.xlane.xlu0 %9500
    %v9502 = vadd.f32 %v9372, %v9373
    %9503 = vadd.xlane.f32.xlu0 %v9502
    %v9504 = vpop.xlane.xlu0 %9503
    %v9505 = vadd.f32 %v9374, %v9375
    %9506 = vadd.xlane.f32.xlu0 %v9505
    %v9507 = vpop.xlane.xlu0 %9506
    %v9508 = vadd.f32 %v9376, %v9377
    %9509 = vadd.xlane.f32.xlu0 %v9508
    %v9510 = vpop.xlane.xlu0 %9509
    %v9511 = vadd.f32 %v9378, %v9379
    %9512 = vadd.xlane.f32.xlu0 %v9511
    %v9513 = vpop.xlane.xlu0 %9512
    %v9514 = vadd.f32 %v9380, %v9381
    %9515 = vadd.xlane.f32.xlu0 %v9514
    %v9516 = vpop.xlane.xlu0 %9515
    %v9517 = vadd.f32 %v9382, %v9383
    %9518 = vadd.xlane.f32.xlu0 %v9517
    %v9519 = vpop.xlane.xlu0 %9518
    %v9520 = vadd.f32 %v9384, %v9385
    %9521 = vadd.xlane.f32.xlu0 %v9520
    %v9522 = vpop.xlane.xlu0 %9521
    %v9523 = vadd.f32 %v9386, %v9387
    %9524 = vadd.xlane.f32.xlu0 %v9523
    %v9525 = vpop.xlane.xlu0 %9524
    %v9526 = vadd.f32 %v9388, %v9389
    %9527 = vadd.xlane.f32.xlu0 %v9526
    %v9528 = vpop.xlane.xlu0 %9527
    %v9529 = vadd.f32 %v9390, %v9391
    %9530 = vadd.xlane.f32.xlu0 %v9529
    %v9531 = vpop.xlane.xlu0 %9530
    %v9532 = vadd.f32 %v9392, %v9393
    %9533 = vadd.xlane.f32.xlu0 %v9532
    %v9534 = vpop.xlane.xlu0 %9533
    %v9535 = vadd.f32 %v9394, %v9395
    %9536 = vadd.xlane.f32.xlu0 %v9535
    %v9537 = vpop.xlane.xlu0 %9536
    %v9538 = vadd.f32 %v9396, %v9397
    %9539 = vadd.xlane.f32.xlu0 %v9538
    %v9540 = vpop.xlane.xlu0 %9539
    %v9541 = vadd.f32 %v9398, %v9399
    %9542 = vadd.xlane.f32.xlu0 %v9541
    %v9543 = vpop.xlane.xlu0 %9542
    %v9544 = vadd.f32 %v9400, %v9401
    %9545 = vadd.xlane.f32.xlu0 %v9544
    %v9546 = vpop.xlane.xlu0 %9545
    %v9547 = vadd.f32 %v9402, %v9403
    %9548 = vadd.xlane.f32.xlu0 %v9547
    %v9549 = vpop.xlane.xlu0 %9548
    %v9550 = vadd.f32 %v9404, %v9405
    %9551 = vadd.xlane.f32.xlu0 %v9550
    %v9552 = vpop.xlane.xlu0 %9551
    %v9553 = vadd.f32 %v9406, %v9407
    %9554 = vadd.xlane.f32.xlu0 %v9553
    %v9555 = vpop.xlane.xlu0 %9554
    %v9556 = vadd.f32 %v9408, %v9409
    %9557 = vadd.xlane.f32.xlu0 %v9556
    %v9558 = vpop.xlane.xlu0 %9557
    %v9559 = vadd.f32 %v9410, %v9411
    %9560 = vadd.xlane.f32.xlu0 %v9559
    %v9561 = vpop.xlane.xlu0 %9560
    %v9562 = vadd.f32 %v9412, %v9413
    %9563 = vadd.xlane.f32.xlu0 %v9562
    %v9564 = vpop.xlane.xlu0 %9563
    %v9565 = vadd.f32 %v9414, %v9415
    %9566 = vadd.xlane.f32.xlu0 %v9565
    %v9567 = vpop.xlane.xlu0 %9566
    %v9568 = vadd.f32 %v9416, %v9417
    %9569 = vadd.xlane.f32.xlu0 %v9568
    %v9570 = vpop.xlane.xlu0 %9569
    %v9571 = vadd.f32 %v9418, %v9419
    %9572 = vadd.xlane.f32.xlu0 %v9571
    %v9573 = vpop.xlane.xlu0 %9572
    %v9574 = vadd.f32 %v9420, %v9421
    %9575 = vadd.xlane.f32.xlu0 %v9574
    %v9576 = vpop.xlane.xlu0 %9575
    %v9577 = vadd.f32 %v9422, %v9423
    %9578 = vadd.xlane.f32.xlu0 %v9577
    %v9579 = vpop.xlane.xlu0 %9578
    %v9580 = vadd.f32 %v9424, %v9425
    %9581 = vadd.xlane.f32.xlu0 %v9580
    %v9582 = vpop.xlane.xlu0 %9581
    %v9583 = vadd.f32 %v9426, %v9427
    %9584 = vadd.xlane.f32.xlu0 %v9583
    %v9585 = vpop.xlane.xlu0 %9584
    %v9586 = vadd.f32 %v9428, %v9429
    %9587 = vadd.xlane.f32.xlu0 %v9586
    %v9588 = vpop.xlane.xlu0 %9587
    %v9589 = vadd.f32 %v9430, %v9431
    %9590 = vadd.xlane.f32.xlu0 %v9589
    %v9591 = vpop.xlane.xlu0 %9590
    %v9592 = vadd.f32 %v9432, %v9433
    %9593 = vadd.xlane.f32.xlu0 %v9592
    %v9594 = vpop.xlane.xlu0 %9593
    %v9595 = vadd.f32 %v9434, %v9435
    %9596 = vadd.xlane.f32.xlu0 %v9595
    %v9597 = vpop.xlane.xlu0 %9596
    %v9598 = vadd.f32 %v9436, %v9437
    %9599 = vadd.xlane.f32.xlu0 %v9598
    %v9600 = vpop.xlane.xlu0 %9599
    %v9601 = vadd.f32 %v9438, %v9439
    %9602 = vadd.xlane.f32.xlu0 %v9601
    %v9603 = vpop.xlane.xlu0 %9602
    %v9604 = vadd.f32 %v9440, %v9441
    %9605 = vadd.xlane.f32.xlu0 %v9604
    %v9606 = vpop.xlane.xlu0 %9605
    %v9607 = vadd.f32 %v9442, %v9443
    %9608 = vadd.xlane.f32.xlu0 %v9607
    %v9609 = vpop.xlane.xlu0 %9608
    %v9610 = vadd.f32 %v9444, %v9445
    %9611 = vadd.xlane.f32.xlu0 %v9610
    %v9612 = vpop.xlane.xlu0 %9611
    %v9613 = vadd.f32 %v9446, %v9447
    %9614 = vadd.xlane.f32.xlu0 %v9613
    %v9615 = vpop.xlane.xlu0 %9614
    %v9616 = vadd.f32 %v9448, %v9449
    %9617 = vadd.xlane.f32.xlu0 %v9616
    %v9618 = vpop.xlane.xlu0 %9617
    %v9619 = vadd.f32 %v9450, %v9451
    %9620 = vadd.xlane.f32.xlu0 %v9619
    %v9621 = vpop.xlane.xlu0 %9620
    %v9622 = vadd.f32 %v9452, %v9453
    %9623 = vadd.xlane.f32.xlu0 %v9622
    %v9624 = vpop.xlane.xlu0 %9623
    %v9625 = vadd.f32 %v9454, %v9455
    %9626 = vadd.xlane.f32.xlu0 %v9625
    %v9627 = vpop.xlane.xlu0 %9626
    %v9628 = vadd.f32 %v9456, %v9457
    %9629 = vadd.xlane.f32.xlu0 %v9628
    %v9630 = vpop.xlane.xlu0 %9629
    %v9631 = vadd.f32 %v9458, %v9459
    %9632 = vadd.xlane.f32.xlu0 %v9631
    %v9633 = vpop.xlane.xlu0 %9632
    %v9634 = vadd.f32 %v9460, %v9461
    %9635 = vadd.xlane.f32.xlu0 %v9634
    %v9636 = vpop.xlane.xlu0 %9635
    %v9637 = vadd.f32 %v9462, %v9463
    %9638 = vadd.xlane.f32.xlu0 %v9637
    %v9639 = vpop.xlane.xlu0 %9638
    %v9640 = vadd.f32 %v9464, %v9465
    %9641 = vadd.xlane.f32.xlu0 %v9640
    %v9642 = vpop.xlane.xlu0 %9641
    %v9643 = vadd.f32 %v9466, %v9467
    %9644 = vadd.xlane.f32.xlu0 %v9643
    %v9645 = vpop.xlane.xlu0 %9644
    %v9646 = vadd.f32 %v9468, %v9469
    %9647 = vadd.xlane.f32.xlu0 %v9646
    %v9648 = vpop.xlane.xlu0 %9647
    %v9649 = vadd.f32 %v9470, %v9471
    %9650 = vadd.xlane.f32.xlu0 %v9649
    %v9651 = vpop.xlane.xlu0 %9650
    %v9652 = vadd.f32 %v9472, %v9473
    %9653 = vadd.xlane.f32.xlu0 %v9652
    %v9654 = vpop.xlane.xlu0 %9653
    %v9655 = vadd.f32 %v9474, %v9475
    %9656 = vadd.xlane.f32.xlu0 %v9655
    %v9657 = vpop.xlane.xlu0 %9656
    %v9658 = vadd.f32 %v9476, %v9477
    %9659 = vadd.xlane.f32.xlu0 %v9658
    %v9660 = vpop.xlane.xlu0 %9659
    %v9661 = vadd.f32 %v9478, %v9479
    %9662 = vadd.xlane.f32.xlu0 %v9661
    %v9663 = vpop.xlane.xlu0 %9662
    %v9664 = vadd.f32 %v9480, %v9481
    %9665 = vadd.xlane.f32.xlu0 %v9664
    %v9666 = vpop.xlane.xlu0 %9665
    %v9667 = vadd.f32 %v9482, %v9483
    %9668 = vadd.xlane.f32.xlu0 %v9667
    %v9669 = vpop.xlane.xlu0 %9668
    %v9670 = vadd.f32 %v9484, %v9485
    %9671 = vadd.xlane.f32.xlu0 %v9670
    %v9672 = vpop.xlane.xlu0 %9671
    %v9673 = vadd.f32 %v9486, %v9487
    %9674 = vadd.xlane.f32.xlu0 %v9673
    %v9675 = vpop.xlane.xlu0 %9674
    %v9676 = vadd.f32 %v9488, %v9489
    %9677 = vadd.xlane.f32.xlu0 %v9676
    %v9678 = vpop.xlane.xlu0 %9677
    %v9679 = vadd.f32 %v9490, %v9491
    %9680 = vadd.xlane.f32.xlu0 %v9679
    %v9681 = vpop.xlane.xlu0 %9680
    %v9682 = vadd.f32 %v9492, %v9493
    %9683 = vadd.xlane.f32.xlu0 %v9682
    %v9684 = vpop.xlane.xlu0 %9683
    %v9685 = vadd.f32 %v9494, %v9495
    %9686 = vadd.xlane.f32.xlu0 %v9685
    %v9687 = vpop.xlane.xlu0 %9686
    %v9688 = vmul.f32 %v9498, %v9175
    %v9689 = vmul.f32 %v9501, %v9175
    %v9690 = vmul.f32 %v9504, %v9175
    %v9691 = vmul.f32 %v9507, %v9175
    %v9692 = vmul.f32 %v9510, %v9175
    %v9693 = vmul.f32 %v9513, %v9175
    %v9694 = vmul.f32 %v9516, %v9175
    %v9695 = vmul.f32 %v9519, %v9175
    %v9696 = vmul.f32 %v9522, %v9175
    %v9697 = vmul.f32 %v9525, %v9175
    %v9698 = vmul.f32 %v9528, %v9175
    %v9699 = vmul.f32 %v9531, %v9175
    %v9700 = vmul.f32 %v9534, %v9175
    %v9701 = vmul.f32 %v9537, %v9175
    %v9702 = vmul.f32 %v9540, %v9175
    %v9703 = vmul.f32 %v9543, %v9175
    %v9704 = vmul.f32 %v9546, %v9175
    %v9705 = vmul.f32 %v9549, %v9175
    %v9706 = vmul.f32 %v9552, %v9175
    %v9707 = vmul.f32 %v9555, %v9175
    %v9708 = vmul.f32 %v9558, %v9175
    %v9709 = vmul.f32 %v9561, %v9175
    %v9710 = vmul.f32 %v9564, %v9175
    %v9711 = vmul.f32 %v9567, %v9175
    %v9712 = vmul.f32 %v9570, %v9175
    %v9713 = vmul.f32 %v9573, %v9175
    %v9714 = vmul.f32 %v9576, %v9175
    %v9715 = vmul.f32 %v9579, %v9175
    %v9716 = vmul.f32 %v9582, %v9175
    %v9717 = vmul.f32 %v9585, %v9175
    %v9718 = vmul.f32 %v9588, %v9175
    %v9719 = vmul.f32 %v9591, %v9175
    %v9720 = vmul.f32 %v9594, %v9175
    %v9721 = vmul.f32 %v9597, %v9175
    %v9722 = vmul.f32 %v9600, %v9175
    %v9723 = vmul.f32 %v9603, %v9175
    %v9724 = vmul.f32 %v9606, %v9175
    %v9725 = vmul.f32 %v9609, %v9175
    %v9726 = vmul.f32 %v9612, %v9175
    %v9727 = vmul.f32 %v9615, %v9175
    %v9728 = vmul.f32 %v9618, %v9175
    %v9729 = vmul.f32 %v9621, %v9175
    %v9730 = vmul.f32 %v9624, %v9175
    %v9731 = vmul.f32 %v9627, %v9175
    %v9732 = vmul.f32 %v9630, %v9175
    %v9733 = vmul.f32 %v9633, %v9175
    %v9734 = vmul.f32 %v9636, %v9175
    %v9735 = vmul.f32 %v9639, %v9175
    %v9736 = vmul.f32 %v9642, %v9175
    %v9737 = vmul.f32 %v9645, %v9175
    %v9738 = vmul.f32 %v9648, %v9175
    %v9739 = vmul.f32 %v9651, %v9175
    %v9740 = vmul.f32 %v9654, %v9175
    %v9741 = vmul.f32 %v9657, %v9175
    %v9742 = vmul.f32 %v9660, %v9175
    %v9743 = vmul.f32 %v9663, %v9175
    %v9744 = vmul.f32 %v9666, %v9175
    %v9745 = vmul.f32 %v9669, %v9175
    %v9746 = vmul.f32 %v9672, %v9175
    %v9747 = vmul.f32 %v9675, %v9175
    %v9748 = vmul.f32 %v9678, %v9175
    %v9749 = vmul.f32 %v9681, %v9175
    %v9750 = vmul.f32 %v9684, %v9175
    %v9751 = vmul.f32 %v9687, %v9175
    %v9752 = vadd.f32 %v9688, 1e-05
    %v9753 = vadd.f32 %v9689, 1e-05
    %v9754 = vadd.f32 %v9690, 1e-05
    %v9755 = vadd.f32 %v9691, 1e-05
    %v9756 = vadd.f32 %v9692, 1e-05
    %v9757 = vadd.f32 %v9693, 1e-05
    %v9758 = vadd.f32 %v9694, 1e-05
    %v9759 = vadd.f32 %v9695, 1e-05
    %v9760 = vadd.f32 %v9696, 1e-05
    %v9761 = vadd.f32 %v9697, 1e-05
    %v9762 = vadd.f32 %v9698, 1e-05
    %v9763 = vadd.f32 %v9699, 1e-05
    %v9764 = vadd.f32 %v9700, 1e-05
    %v9765 = vadd.f32 %v9701, 1e-05
    %v9766 = vadd.f32 %v9702, 1e-05
    %v9767 = vadd.f32 %v9703, 1e-05
    %v9768 = vadd.f32 %v9704, 1e-05
    %v9769 = vadd.f32 %v9705, 1e-05
    %v9770 = vadd.f32 %v9706, 1e-05
    %v9771 = vadd.f32 %v9707, 1e-05
    %v9772 = vadd.f32 %v9708, 1e-05
    %v9773 = vadd.f32 %v9709, 1e-05
    %v9774 = vadd.f32 %v9710, 1e-05
    %v9775 = vadd.f32 %v9711, 1e-05
    %v9776 = vadd.f32 %v9712, 1e-05
    %v9777 = vadd.f32 %v9713, 1e-05
    %v9778 = vadd.f32 %v9714, 1e-05
    %v9779 = vadd.f32 %v9715, 1e-05
    %v9780 = vadd.f32 %v9716, 1e-05
    %v9781 = vadd.f32 %v9717, 1e-05
    %v9782 = vadd.f32 %v9718, 1e-05
    %v9783 = vadd.f32 %v9719, 1e-05
    %v9784 = vadd.f32 %v9720, 1e-05
    %v9785 = vadd.f32 %v9721, 1e-05
    %v9786 = vadd.f32 %v9722, 1e-05
    %v9787 = vadd.f32 %v9723, 1e-05
    %v9788 = vadd.f32 %v9724, 1e-05
    %v9789 = vadd.f32 %v9725, 1e-05
    %v9790 = vadd.f32 %v9726, 1e-05
    %v9791 = vadd.f32 %v9727, 1e-05
    %v9792 = vadd.f32 %v9728, 1e-05
    %v9793 = vadd.f32 %v9729, 1e-05
    %v9794 = vadd.f32 %v9730, 1e-05
    %v9795 = vadd.f32 %v9731, 1e-05
    %v9796 = vadd.f32 %v9732, 1e-05
    %v9797 = vadd.f32 %v9733, 1e-05
    %v9798 = vadd.f32 %v9734, 1e-05
    %v9799 = vadd.f32 %v9735, 1e-05
    %v9800 = vadd.f32 %v9736, 1e-05
    %v9801 = vadd.f32 %v9737, 1e-05
    %v9802 = vadd.f32 %v9738, 1e-05
    %v9803 = vadd.f32 %v9739, 1e-05
    %v9804 = vadd.f32 %v9740, 1e-05
    %v9805 = vadd.f32 %v9741, 1e-05
    %v9806 = vadd.f32 %v9742, 1e-05
    %v9807 = vadd.f32 %v9743, 1e-05
    %v9808 = vadd.f32 %v9744, 1e-05
    %v9809 = vadd.f32 %v9745, 1e-05
    %v9810 = vadd.f32 %v9746, 1e-05
    %v9811 = vadd.f32 %v9747, 1e-05
    %v9812 = vadd.f32 %v9748, 1e-05
    %v9813 = vadd.f32 %v9749, 1e-05
    %v9814 = vadd.f32 %v9750, 1e-05
    %v9815 = vadd.f32 %v9751, 1e-05
    %v9816 = vrsqrt.pop %v9752
    %v9817 = vrsqrt.pop %v9753
    %v9818 = vrsqrt.pop %v9754
    %v9819 = vrsqrt.pop %v9755
    %v9820 = vrsqrt.pop %v9756
    %v9821 = vrsqrt.pop %v9757
    %v9822 = vrsqrt.pop %v9758
    %v9823 = vrsqrt.pop %v9759
    %v9824 = vrsqrt.pop %v9760
    %v9825 = vrsqrt.pop %v9761
    %v9826 = vrsqrt.pop %v9762
    %v9827 = vrsqrt.pop %v9763
    %v9828 = vrsqrt.pop %v9764
    %v9829 = vrsqrt.pop %v9765
    %v9830 = vrsqrt.pop %v9766
    %v9831 = vrsqrt.pop %v9767
    %v9832 = vrsqrt.pop %v9768
    %v9833 = vrsqrt.pop %v9769
    %v9834 = vrsqrt.pop %v9770
    %v9835 = vrsqrt.pop %v9771
    %v9836 = vrsqrt.pop %v9772
    %v9837 = vrsqrt.pop %v9773
    %v9838 = vrsqrt.pop %v9774
    %v9839 = vrsqrt.pop %v9775
    %v9840 = vrsqrt.pop %v9776
    %v9841 = vrsqrt.pop %v9777
    %v9842 = vrsqrt.pop %v9778
    %v9843 = vrsqrt.pop %v9779
    %v9844 = vrsqrt.pop %v9780
    %v9845 = vrsqrt.pop %v9781
    %v9846 = vrsqrt.pop %v9782
    %v9847 = vrsqrt.pop %v9783
    %v9848 = vrsqrt.pop %v9784
    %v9849 = vrsqrt.pop %v9785
    %v9850 = vrsqrt.pop %v9786
    %v9851 = vrsqrt.pop %v9787
    %v9852 = vrsqrt.pop %v9788
    %v9853 = vrsqrt.pop %v9789
    %v9854 = vrsqrt.pop %v9790
    %v9855 = vrsqrt.pop %v9791
    %v9856 = vrsqrt.pop %v9792
    %v9857 = vrsqrt.pop %v9793
    %v9858 = vrsqrt.pop %v9794
    %v9859 = vrsqrt.pop %v9795
    %v9860 = vrsqrt.pop %v9796
    %v9861 = vrsqrt.pop %v9797
    %v9862 = vrsqrt.pop %v9798
    %v9863 = vrsqrt.pop %v9799
    %v9864 = vrsqrt.pop %v9800
    %v9865 = vrsqrt.pop %v9801
    %v9866 = vrsqrt.pop %v9802
    %v9867 = vrsqrt.pop %v9803
    %v9868 = vrsqrt.pop %v9804
    %v9869 = vrsqrt.pop %v9805
    %v9870 = vrsqrt.pop %v9806
    %v9871 = vrsqrt.pop %v9807
    %v9872 = vrsqrt.pop %v9808
    %v9873 = vrsqrt.pop %v9809
    %v9874 = vrsqrt.pop %v9810
    %v9875 = vrsqrt.pop %v9811
    %v9876 = vrsqrt.pop %v9812
    %v9877 = vrsqrt.pop %v9813
    %v9878 = vrsqrt.pop %v9814
    %v9879 = vrsqrt.pop %v9815
    %v9880 = vmul.f32 %v9240, %v9816
    %v9881 = vmul.f32 %v9241, %v9816
    %v9882 = vmul.f32 %v9242, %v9817
    %v9883 = vmul.f32 %v9243, %v9817
    %v9884 = vmul.f32 %v9244, %v9818
    %v9885 = vmul.f32 %v9245, %v9818
    %v9886 = vmul.f32 %v9246, %v9819
    %v9887 = vmul.f32 %v9247, %v9819
    %v9888 = vmul.f32 %v9248, %v9820
    %v9889 = vmul.f32 %v9249, %v9820
    %v9890 = vmul.f32 %v9250, %v9821
    %v9891 = vmul.f32 %v9251, %v9821
    %v9892 = vmul.f32 %v9252, %v9822
    %v9893 = vmul.f32 %v9253, %v9822
    %v9894 = vmul.f32 %v9254, %v9823
    %v9895 = vmul.f32 %v9255, %v9823
    %v9896 = vmul.f32 %v9256, %v9824
    %v9897 = vmul.f32 %v9257, %v9824
    %v9898 = vmul.f32 %v9258, %v9825
    %v9899 = vmul.f32 %v9259, %v9825
    %v9900 = vmul.f32 %v9260, %v9826
    %v9901 = vmul.f32 %v9261, %v9826
    %v9902 = vmul.f32 %v9262, %v9827
    %v9903 = vmul.f32 %v9263, %v9827
    %v9904 = vmul.f32 %v9264, %v9828
    %v9905 = vmul.f32 %v9265, %v9828
    %v9906 = vmul.f32 %v9266, %v9829
    %v9907 = vmul.f32 %v9267, %v9829
    %v9908 = vmul.f32 %v9268, %v9830
    %v9909 = vmul.f32 %v9269, %v9830
    %v9910 = vmul.f32 %v9270, %v9831
    %v9911 = vmul.f32 %v9271, %v9831
    %v9912 = vmul.f32 %v9272, %v9832
    %v9913 = vmul.f32 %v9273, %v9832
    %v9914 = vmul.f32 %v9274, %v9833
    %v9915 = vmul.f32 %v9275, %v9833
    %v9916 = vmul.f32 %v9276, %v9834
    %v9917 = vmul.f32 %v9277, %v9834
    %v9918 = vmul.f32 %v9278, %v9835
    %v9919 = vmul.f32 %v9279, %v9835
    %v9920 = vmul.f32 %v9280, %v9836
    %v9921 = vmul.f32 %v9281, %v9836
    %v9922 = vmul.f32 %v9282, %v9837
    %v9923 = vmul.f32 %v9283, %v9837
    %v9924 = vmul.f32 %v9284, %v9838
    %v9925 = vmul.f32 %v9285, %v9838
    %v9926 = vmul.f32 %v9286, %v9839
    %v9927 = vmul.f32 %v9287, %v9839
    %v9928 = vmul.f32 %v9288, %v9840
    %v9929 = vmul.f32 %v9289, %v9840
    %v9930 = vmul.f32 %v9290, %v9841
    %v9931 = vmul.f32 %v9291, %v9841
    %v9932 = vmul.f32 %v9292, %v9842
    %v9933 = vmul.f32 %v9293, %v9842
    %v9934 = vmul.f32 %v9294, %v9843
    %v9935 = vmul.f32 %v9295, %v9843
    %v9936 = vmul.f32 %v9296, %v9844
    %v9937 = vmul.f32 %v9297, %v9844
    %v9938 = vmul.f32 %v9298, %v9845
    %v9939 = vmul.f32 %v9299, %v9845
    %v9940 = vmul.f32 %v9300, %v9846
    %v9941 = vmul.f32 %v9301, %v9846
    %v9942 = vmul.f32 %v9302, %v9847
    %v9943 = vmul.f32 %v9303, %v9847
    %v9944 = vmul.f32 %v9304, %v9848
    %v9945 = vmul.f32 %v9305, %v9848
    %v9946 = vmul.f32 %v9306, %v9849
    %v9947 = vmul.f32 %v9307, %v9849
    %v9948 = vmul.f32 %v9308, %v9850
    %v9949 = vmul.f32 %v9309, %v9850
    %v9950 = vmul.f32 %v9310, %v9851
    %v9951 = vmul.f32 %v9311, %v9851
    %v9952 = vmul.f32 %v9312, %v9852
    %v9953 = vmul.f32 %v9313, %v9852
    %v9954 = vmul.f32 %v9314, %v9853
    %v9955 = vmul.f32 %v9315, %v9853
    %v9956 = vmul.f32 %v9316, %v9854
    %v9957 = vmul.f32 %v9317, %v9854
    %v9958 = vmul.f32 %v9318, %v9855
    %v9959 = vmul.f32 %v9319, %v9855
    %v9960 = vmul.f32 %v9320, %v9856
    %v9961 = vmul.f32 %v9321, %v9856
    %v9962 = vmul.f32 %v9322, %v9857
    %v9963 = vmul.f32 %v9323, %v9857
    %v9964 = vmul.f32 %v9324, %v9858
    %v9965 = vmul.f32 %v9325, %v9858
    %v9966 = vmul.f32 %v9326, %v9859
    %v9967 = vmul.f32 %v9327, %v9859
    %v9968 = vmul.f32 %v9328, %v9860
    %v9969 = vmul.f32 %v9329, %v9860
    %v9970 = vmul.f32 %v9330, %v9861
    %v9971 = vmul.f32 %v9331, %v9861
    %v9972 = vmul.f32 %v9332, %v9862
    %v9973 = vmul.f32 %v9333, %v9862
    %v9974 = vmul.f32 %v9334, %v9863
    %v9975 = vmul.f32 %v9335, %v9863
    %v9976 = vmul.f32 %v9336, %v9864
    %v9977 = vmul.f32 %v9337, %v9864
    %v9978 = vmul.f32 %v9338, %v9865
    %v9979 = vmul.f32 %v9339, %v9865
    %v9980 = vmul.f32 %v9340, %v9866
    %v9981 = vmul.f32 %v9341, %v9866
    %v9982 = vmul.f32 %v9342, %v9867
    %v9983 = vmul.f32 %v9343, %v9867
    %v9984 = vmul.f32 %v9344, %v9868
    %v9985 = vmul.f32 %v9345, %v9868
    %v9986 = vmul.f32 %v9346, %v9869
    %v9987 = vmul.f32 %v9347, %v9869
    %v9988 = vmul.f32 %v9348, %v9870
    %v9989 = vmul.f32 %v9349, %v9870
    %v9990 = vmul.f32 %v9350, %v9871
    %v9991 = vmul.f32 %v9351, %v9871
    %v9992 = vmul.f32 %v9352, %v9872
    %v9993 = vmul.f32 %v9353, %v9872
    %v9994 = vmul.f32 %v9354, %v9873
    %v9995 = vmul.f32 %v9355, %v9873
    %v9996 = vmul.f32 %v9356, %v9874
    %v9997 = vmul.f32 %v9357, %v9874
    %v9998 = vmul.f32 %v9358, %v9875
    %v9999 = vmul.f32 %v9359, %v9875
    %v10000 = vmul.f32 %v9360, %v9876
    %v10001 = vmul.f32 %v9361, %v9876
    %v10002 = vmul.f32 %v9362, %v9877
    %v10003 = vmul.f32 %v9363, %v9877
    %v10004 = vmul.f32 %v9364, %v9878
    %v10005 = vmul.f32 %v9365, %v9878
    %v10006 = vmul.f32 %v9366, %v9879
    %v10007 = vmul.f32 %v9367, %v9879
    %v10008 = vld [vmem:[%s9] sm:$0x3]
    %v10010 = vlaneseq
    %v10011 = vshrl.u32 %v10010, 7
    %v10012 = vsub.s32 0, %v10011
    %v10013 = vrot.slane %v10008, %v10012
    %v10014 = vlaneseq
    %v10015 = vshrl.u32 %v10014, 7
    %v10016 = vsub.s32 1, %v10015
    %v10017 = vrot.slane %v10008, %v10016
    %v10020 = vmul.f32 %v9880, %v10013
    %v10021 = vmul.f32 %v9881, %v10017
    %v10022 = vmul.f32 %v9882, %v10013
    %v10023 = vmul.f32 %v9883, %v10017
    %v10024 = vmul.f32 %v9884, %v10013
    %v10025 = vmul.f32 %v9885, %v10017
    %v10026 = vmul.f32 %v9886, %v10013
    %v10027 = vmul.f32 %v9887, %v10017
    %v10028 = vmul.f32 %v9888, %v10013
    %v10029 = vmul.f32 %v9889, %v10017
    %v10030 = vmul.f32 %v9890, %v10013
    %v10031 = vmul.f32 %v9891, %v10017
    %v10032 = vmul.f32 %v9892, %v10013
    %v10033 = vmul.f32 %v9893, %v10017
    %v10034 = vmul.f32 %v9894, %v10013
    %v10035 = vmul.f32 %v9895, %v10017
    %v10036 = vmul.f32 %v9896, %v10013
    %v10037 = vmul.f32 %v9897, %v10017
    %v10038 = vmul.f32 %v9898, %v10013
    %v10039 = vmul.f32 %v9899, %v10017
    %v10040 = vmul.f32 %v9900, %v10013
    %v10041 = vmul.f32 %v9901, %v10017
    %v10042 = vmul.f32 %v9902, %v10013
    %v10043 = vmul.f32 %v9903, %v10017
    %v10044 = vmul.f32 %v9904, %v10013
    %v10045 = vmul.f32 %v9905, %v10017
    %v10046 = vmul.f32 %v9906, %v10013
    %v10047 = vmul.f32 %v9907, %v10017
    %v10048 = vmul.f32 %v9908, %v10013
    %v10049 = vmul.f32 %v9909, %v10017
    %v10050 = vmul.f32 %v9910, %v10013
    %v10051 = vmul.f32 %v9911, %v10017
    %v10052 = vmul.f32 %v9912, %v10013
    %v10053 = vmul.f32 %v9913, %v10017
    %v10054 = vmul.f32 %v9914, %v10013
    %v10055 = vmul.f32 %v9915, %v10017
    %v10056 = vmul.f32 %v9916, %v10013
    %v10057 = vmul.f32 %v9917, %v10017
    %v10058 = vmul.f32 %v9918, %v10013
    %v10059 = vmul.f32 %v9919, %v10017
    %v10060 = vmul.f32 %v9920, %v10013
    %v10061 = vmul.f32 %v9921, %v10017
    %v10062 = vmul.f32 %v9922, %v10013
    %v10063 = vmul.f32 %v9923, %v10017
    %v10064 = vmul.f32 %v9924, %v10013
    %v10065 = vmul.f32 %v9925, %v10017
    %v10066 = vmul.f32 %v9926, %v10013
    %v10067 = vmul.f32 %v9927, %v10017
    %v10068 = vmul.f32 %v9928, %v10013
    %v10069 = vmul.f32 %v9929, %v10017
    %v10070 = vmul.f32 %v9930, %v10013
    %v10071 = vmul.f32 %v9931, %v10017
    %v10072 = vmul.f32 %v9932, %v10013
    %v10073 = vmul.f32 %v9933, %v10017
    %v10074 = vmul.f32 %v9934, %v10013
    %v10075 = vmul.f32 %v9935, %v10017
    %v10076 = vmul.f32 %v9936, %v10013
    %v10077 = vmul.f32 %v9937, %v10017
    %v10078 = vmul.f32 %v9938, %v10013
    %v10079 = vmul.f32 %v9939, %v10017
    %v10080 = vmul.f32 %v9940, %v10013
    %v10081 = vmul.f32 %v9941, %v10017
    %v10082 = vmul.f32 %v9942, %v10013
    %v10083 = vmul.f32 %v9943, %v10017
    %v10084 = vmul.f32 %v9944, %v10013
    %v10085 = vmul.f32 %v9945, %v10017
    %v10086 = vmul.f32 %v9946, %v10013
    %v10087 = vmul.f32 %v9947, %v10017
    %v10088 = vmul.f32 %v9948, %v10013
    %v10089 = vmul.f32 %v9949, %v10017
    %v10090 = vmul.f32 %v9950, %v10013
    %v10091 = vmul.f32 %v9951, %v10017
    %v10092 = vmul.f32 %v9952, %v10013
    %v10093 = vmul.f32 %v9953, %v10017
    %v10094 = vmul.f32 %v9954, %v10013
    %v10095 = vmul.f32 %v9955, %v10017
    %v10096 = vmul.f32 %v9956, %v10013
    %v10097 = vmul.f32 %v9957, %v10017
    %v10098 = vmul.f32 %v9958, %v10013
    %v10099 = vmul.f32 %v9959, %v10017
    %v10100 = vmul.f32 %v9960, %v10013
    %v10101 = vmul.f32 %v9961, %v10017
    %v10102 = vmul.f32 %v9962, %v10013
    %v10103 = vmul.f32 %v9963, %v10017
    %v10104 = vmul.f32 %v9964, %v10013
    %v10105 = vmul.f32 %v9965, %v10017
    %v10106 = vmul.f32 %v9966, %v10013
    %v10107 = vmul.f32 %v9967, %v10017
    %v10108 = vmul.f32 %v9968, %v10013
    %v10109 = vmul.f32 %v9969, %v10017
    %v10110 = vmul.f32 %v9970, %v10013
    %v10111 = vmul.f32 %v9971, %v10017
    %v10112 = vmul.f32 %v9972, %v10013
    %v10113 = vmul.f32 %v9973, %v10017
    %v10114 = vmul.f32 %v9974, %v10013
    %v10115 = vmul.f32 %v9975, %v10017
    %v10116 = vmul.f32 %v9976, %v10013
    %v10117 = vmul.f32 %v9977, %v10017
    %v10118 = vmul.f32 %v9978, %v10013
    %v10119 = vmul.f32 %v9979, %v10017
    %v10120 = vmul.f32 %v9980, %v10013
    %v10121 = vmul.f32 %v9981, %v10017
    %v10122 = vmul.f32 %v9982, %v10013
    %v10123 = vmul.f32 %v9983, %v10017
    %v10124 = vmul.f32 %v9984, %v10013
    %v10125 = vmul.f32 %v9985, %v10017
    %v10126 = vmul.f32 %v9986, %v10013
    %v10127 = vmul.f32 %v9987, %v10017
    %v10128 = vmul.f32 %v9988, %v10013
    %v10129 = vmul.f32 %v9989, %v10017
    %v10130 = vmul.f32 %v9990, %v10013
    %v10131 = vmul.f32 %v9991, %v10017
    %v10132 = vmul.f32 %v9992, %v10013
    %v10133 = vmul.f32 %v9993, %v10017
    %v10134 = vmul.f32 %v9994, %v10013
    %v10135 = vmul.f32 %v9995, %v10017
    %v10136 = vmul.f32 %v9996, %v10013
    %v10137 = vmul.f32 %v9997, %v10017
    %v10138 = vmul.f32 %v9998, %v10013
    %v10139 = vmul.f32 %v9999, %v10017
    %v10140 = vmul.f32 %v10000, %v10013
    %v10141 = vmul.f32 %v10001, %v10017
    %v10142 = vmul.f32 %v10002, %v10013
    %v10143 = vmul.f32 %v10003, %v10017
    %v10144 = vmul.f32 %v10004, %v10013
    %v10145 = vmul.f32 %v10005, %v10017
    %v10146 = vmul.f32 %v10006, %v10013
    %v10147 = vmul.f32 %v10007, %v10017
    %v10148 = vld [vmem:[%s10] sm:$0x3]
    %v10150 = vlaneseq
    %v10151 = vshrl.u32 %v10150, 7
    %v10152 = vsub.s32 0, %v10151
    %v10153 = vrot.slane %v10148, %v10152
    %v10154 = vlaneseq
    %v10155 = vshrl.u32 %v10154, 7
    %v10156 = vsub.s32 1, %v10155
    %v10157 = vrot.slane %v10148, %v10156
    %v10160 = vadd.f32 %v10020, %v10153
    %v10161 = vadd.f32 %v10021, %v10157
    %v10162 = vadd.f32 %v10022, %v10153
    %v10163 = vadd.f32 %v10023, %v10157
    %v10164 = vadd.f32 %v10024, %v10153
    %v10165 = vadd.f32 %v10025, %v10157
    %v10166 = vadd.f32 %v10026, %v10153
    %v10167 = vadd.f32 %v10027, %v10157
    %v10168 = vadd.f32 %v10028, %v10153
    %v10169 = vadd.f32 %v10029, %v10157
    %v10170 = vadd.f32 %v10030, %v10153
    %v10171 = vadd.f32 %v10031, %v10157
    %v10172 = vadd.f32 %v10032, %v10153
    %v10173 = vadd.f32 %v10033, %v10157
    %v10174 = vadd.f32 %v10034, %v10153
    %v10175 = vadd.f32 %v10035, %v10157
    %v10176 = vadd.f32 %v10036, %v10153
    %v10177 = vadd.f32 %v10037, %v10157
    %v10178 = vadd.f32 %v10038, %v10153
    %v10179 = vadd.f32 %v10039, %v10157
    %v10180 = vadd.f32 %v10040, %v10153
    %v10181 = vadd.f32 %v10041, %v10157
    %v10182 = vadd.f32 %v10042, %v10153
    %v10183 = vadd.f32 %v10043, %v10157
    %v10184 = vadd.f32 %v10044, %v10153
    %v10185 = vadd.f32 %v10045, %v10157
    %v10186 = vadd.f32 %v10046, %v10153
    %v10187 = vadd.f32 %v10047, %v10157
    %v10188 = vadd.f32 %v10048, %v10153
    %v10189 = vadd.f32 %v10049, %v10157
    %v10190 = vadd.f32 %v10050, %v10153
    %v10191 = vadd.f32 %v10051, %v10157
    %v10192 = vadd.f32 %v10052, %v10153
    %v10193 = vadd.f32 %v10053, %v10157
    %v10194 = vadd.f32 %v10054, %v10153
    %v10195 = vadd.f32 %v10055, %v10157
    %v10196 = vadd.f32 %v10056, %v10153
    %v10197 = vadd.f32 %v10057, %v10157
    %v10198 = vadd.f32 %v10058, %v10153
    %v10199 = vadd.f32 %v10059, %v10157
    %v10200 = vadd.f32 %v10060, %v10153
    %v10201 = vadd.f32 %v10061, %v10157
    %v10202 = vadd.f32 %v10062, %v10153
    %v10203 = vadd.f32 %v10063, %v10157
    %v10204 = vadd.f32 %v10064, %v10153
    %v10205 = vadd.f32 %v10065, %v10157
    %v10206 = vadd.f32 %v10066, %v10153
    %v10207 = vadd.f32 %v10067, %v10157
    %v10208 = vadd.f32 %v10068, %v10153
    %v10209 = vadd.f32 %v10069, %v10157
    %v10210 = vadd.f32 %v10070, %v10153
    %v10211 = vadd.f32 %v10071, %v10157
    %v10212 = vadd.f32 %v10072, %v10153
    %v10213 = vadd.f32 %v10073, %v10157
    %v10214 = vadd.f32 %v10074, %v10153
    %v10215 = vadd.f32 %v10075, %v10157
    %v10216 = vadd.f32 %v10076, %v10153
    %v10217 = vadd.f32 %v10077, %v10157
    %v10218 = vadd.f32 %v10078, %v10153
    %v10219 = vadd.f32 %v10079, %v10157
    %v10220 = vadd.f32 %v10080, %v10153
    %v10221 = vadd.f32 %v10081, %v10157
    %v10222 = vadd.f32 %v10082, %v10153
    %v10223 = vadd.f32 %v10083, %v10157
    %v10224 = vadd.f32 %v10084, %v10153
    %v10225 = vadd.f32 %v10085, %v10157
    %v10226 = vadd.f32 %v10086, %v10153
    %v10227 = vadd.f32 %v10087, %v10157
    %v10228 = vadd.f32 %v10088, %v10153
    %v10229 = vadd.f32 %v10089, %v10157
    %v10230 = vadd.f32 %v10090, %v10153
    %v10231 = vadd.f32 %v10091, %v10157
    %v10232 = vadd.f32 %v10092, %v10153
    %v10233 = vadd.f32 %v10093, %v10157
    %v10234 = vadd.f32 %v10094, %v10153
    %v10235 = vadd.f32 %v10095, %v10157
    %v10236 = vadd.f32 %v10096, %v10153
    %v10237 = vadd.f32 %v10097, %v10157
    %v10238 = vadd.f32 %v10098, %v10153
    %v10239 = vadd.f32 %v10099, %v10157
    %v10240 = vadd.f32 %v10100, %v10153
    %v10241 = vadd.f32 %v10101, %v10157
    %v10242 = vadd.f32 %v10102, %v10153
    %v10243 = vadd.f32 %v10103, %v10157
    %v10244 = vadd.f32 %v10104, %v10153
    %v10245 = vadd.f32 %v10105, %v10157
    %v10246 = vadd.f32 %v10106, %v10153
    %v10247 = vadd.f32 %v10107, %v10157
    %v10248 = vadd.f32 %v10108, %v10153
    %v10249 = vadd.f32 %v10109, %v10157
    %v10250 = vadd.f32 %v10110, %v10153
    %v10251 = vadd.f32 %v10111, %v10157
    %v10252 = vadd.f32 %v10112, %v10153
    %v10253 = vadd.f32 %v10113, %v10157
    %v10254 = vadd.f32 %v10114, %v10153
    %v10255 = vadd.f32 %v10115, %v10157
    %v10256 = vadd.f32 %v10116, %v10153
    %v10257 = vadd.f32 %v10117, %v10157
    %v10258 = vadd.f32 %v10118, %v10153
    %v10259 = vadd.f32 %v10119, %v10157
    %v10260 = vadd.f32 %v10120, %v10153
    %v10261 = vadd.f32 %v10121, %v10157
    %v10262 = vadd.f32 %v10122, %v10153
    %v10263 = vadd.f32 %v10123, %v10157
    %v10264 = vadd.f32 %v10124, %v10153
    %v10265 = vadd.f32 %v10125, %v10157
    %v10266 = vadd.f32 %v10126, %v10153
    %v10267 = vadd.f32 %v10127, %v10157
    %v10268 = vadd.f32 %v10128, %v10153
    %v10269 = vadd.f32 %v10129, %v10157
    %v10270 = vadd.f32 %v10130, %v10153
    %v10271 = vadd.f32 %v10131, %v10157
    %v10272 = vadd.f32 %v10132, %v10153
    %v10273 = vadd.f32 %v10133, %v10157
    %v10274 = vadd.f32 %v10134, %v10153
    %v10275 = vadd.f32 %v10135, %v10157
    %v10276 = vadd.f32 %v10136, %v10153
    %v10277 = vadd.f32 %v10137, %v10157
    %v10278 = vadd.f32 %v10138, %v10153
    %v10279 = vadd.f32 %v10139, %v10157
    %v10280 = vadd.f32 %v10140, %v10153
    %v10281 = vadd.f32 %v10141, %v10157
    %v10282 = vadd.f32 %v10142, %v10153
    %v10283 = vadd.f32 %v10143, %v10157
    %v10284 = vadd.f32 %v10144, %v10153
    %v10285 = vadd.f32 %v10145, %v10157
    %v10286 = vadd.f32 %v10146, %v10153
    %v10287 = vadd.f32 %v10147, %v10157
    %10288 = vst [vmem:[#allocation8] sm:$0xff] %v10160
    %10289 = vst [vmem:[#allocation8 + $0x8] sm:$0xff] %v10161
    %10290 = vst [vmem:[#allocation8 + $0x10] sm:$0xff] %v10162
    %10291 = vst [vmem:[#allocation8 + $0x18] sm:$0xff] %v10163
    %10292 = vst [vmem:[#allocation8 + $0x20] sm:$0xff] %v10164
    %10293 = vst [vmem:[#allocation8 + $0x28] sm:$0xff] %v10165
    %10294 = vst [vmem:[#allocation8 + $0x30] sm:$0xff] %v10166
    %10295 = vst [vmem:[#allocation8 + $0x38] sm:$0xff] %v10167
    %10296 = vst [vmem:[#allocation8 + $0x40] sm:$0xff] %v10168
    %10297 = vst [vmem:[#allocation8 + $0x48] sm:$0xff] %v10169
    %10298 = vst [vmem:[#allocation8 + $0x50] sm:$0xff] %v10170
    %10299 = vst [vmem:[#allocation8 + $0x58] sm:$0xff] %v10171
    %10300 = vst [vmem:[#allocation8 + $0x60] sm:$0xff] %v10172
    %10301 = vst [vmem:[#allocation8 + $0x68] sm:$0xff] %v10173
    %10302 = vst [vmem:[#allocation8 + $0x70] sm:$0xff] %v10174
    %10303 = vst [vmem:[#allocation8 + $0x78] sm:$0xff] %v10175
    %10304 = vst [vmem:[#allocation8 + $0x80] sm:$0xff] %v10176
    %10305 = vst [vmem:[#allocation8 + $0x88] sm:$0xff] %v10177
    %10306 = vst [vmem:[#allocation8 + $0x90] sm:$0xff] %v10178
    %10307 = vst [vmem:[#allocation8 + $0x98] sm:$0xff] %v10179
    %10308 = vst [vmem:[#allocation8 + $0xa0] sm:$0xff] %v10180
    %10309 = vst [vmem:[#allocation8 + $0xa8] sm:$0xff] %v10181
    %10310 = vst [vmem:[#allocation8 + $0xb0] sm:$0xff] %v10182
    %10311 = vst [vmem:[#allocation8 + $0xb8] sm:$0xff] %v10183
    %10312 = vst [vmem:[#allocation8 + $0xc0] sm:$0xff] %v10184
    %10313 = vst [vmem:[#allocation8 + $0xc8] sm:$0xff] %v10185
    %10314 = vst [vmem:[#allocation8 + $0xd0] sm:$0xff] %v10186
    %10315 = vst [vmem:[#allocation8 + $0xd8] sm:$0xff] %v10187
    %10316 = vst [vmem:[#allocation8 + $0xe0] sm:$0xff] %v10188
    %10317 = vst [vmem:[#allocation8 + $0xe8] sm:$0xff] %v10189
    %10318 = vst [vmem:[#allocation8 + $0xf0] sm:$0xff] %v10190
    %10319 = vst [vmem:[#allocation8 + $0xf8] sm:$0xff] %v10191
    %10320 = vst [vmem:[#allocation8 + $0x100] sm:$0xff] %v10192
    %10321 = vst [vmem:[#allocation8 + $0x108] sm:$0xff] %v10193
    %10322 = vst [vmem:[#allocation8 + $0x110] sm:$0xff] %v10194
    %10323 = vst [vmem:[#allocation8 + $0x118] sm:$0xff] %v10195
    %10324 = vst [vmem:[#allocation8 + $0x120] sm:$0xff] %v10196
    %10325 = vst [vmem:[#allocation8 + $0x128] sm:$0xff] %v10197
    %10326 = vst [vmem:[#allocation8 + $0x130] sm:$0xff] %v10198
    %10327 = vst [vmem:[#allocation8 + $0x138] sm:$0xff] %v10199
    %10328 = vst [vmem:[#allocation8 + $0x140] sm:$0xff] %v10200
    %10329 = vst [vmem:[#allocation8 + $0x148] sm:$0xff] %v10201
    %10330 = vst [vmem:[#allocation8 + $0x150] sm:$0xff] %v10202
    %10331 = vst [vmem:[#allocation8 + $0x158] sm:$0xff] %v10203
    %10332 = vst [vmem:[#allocation8 + $0x160] sm:$0xff] %v10204
    %10333 = vst [vmem:[#allocation8 + $0x168] sm:$0xff] %v10205
    %10334 = vst [vmem:[#allocation8 + $0x170] sm:$0xff] %v10206
    %10335 = vst [vmem:[#allocation8 + $0x178] sm:$0xff] %v10207
    %10336 = vst [vmem:[#allocation8 + $0x180] sm:$0xff] %v10208
    %10337 = vst [vmem:[#allocation8 + $0x188] sm:$0xff] %v10209
    %10338 = vst [vmem:[#allocation8 + $0x190] sm:$0xff] %v10210
    %10339 = vst [vmem:[#allocation8 + $0x198] sm:$0xff] %v10211
    %10340 = vst [vmem:[#allocation8 + $0x1a0] sm:$0xff] %v10212
    %10341 = vst [vmem:[#allocation8 + $0x1a8] sm:$0xff] %v10213
    %10342 = vst [vmem:[#allocation8 + $0x1b0] sm:$0xff] %v10214
    %10343 = vst [vmem:[#allocation8 + $0x1b8] sm:$0xff] %v10215
    %10344 = vst [vmem:[#allocation8 + $0x1c0] sm:$0xff] %v10216
    %10345 = vst [vmem:[#allocation8 + $0x1c8] sm:$0xff] %v10217
    %10346 = vst [vmem:[#allocation8 + $0x1d0] sm:$0xff] %v10218
    %10347 = vst [vmem:[#allocation8 + $0x1d8] sm:$0xff] %v10219
    %10348 = vst [vmem:[#allocation8 + $0x1e0] sm:$0xff] %v10220
    %10349 = vst [vmem:[#allocation8 + $0x1e8] sm:$0xff] %v10221
    %10350 = vst [vmem:[#allocation8 + $0x1f0] sm:$0xff] %v10222
    %10351 = vst [vmem:[#allocation8 + $0x1f8] sm:$0xff] %v10223
    %10352 = vst [vmem:[#allocation8 + $0x200] sm:$0xff] %v10224
    %10353 = vst [vmem:[#allocation8 + $0x208] sm:$0xff] %v10225
    %10354 = vst [vmem:[#allocation8 + $0x210] sm:$0xff] %v10226
    %10355 = vst [vmem:[#allocation8 + $0x218] sm:$0xff] %v10227
    %10356 = vst [vmem:[#allocation8 + $0x220] sm:$0xff] %v10228
    %10357 = vst [vmem:[#allocation8 + $0x228] sm:$0xff] %v10229
    %10358 = vst [vmem:[#allocation8 + $0x230] sm:$0xff] %v10230
    %10359 = vst [vmem:[#allocation8 + $0x238] sm:$0xff] %v10231
    %10360 = vst [vmem:[#allocation8 + $0x240] sm:$0xff] %v10232
    %10361 = vst [vmem:[#allocation8 + $0x248] sm:$0xff] %v10233
    %10362 = vst [vmem:[#allocation8 + $0x250] sm:$0xff] %v10234
    %10363 = vst [vmem:[#allocation8 + $0x258] sm:$0xff] %v10235
    %10364 = vst [vmem:[#allocation8 + $0x260] sm:$0xff] %v10236
    %10365 = vst [vmem:[#allocation8 + $0x268] sm:$0xff] %v10237
    %10366 = vst [vmem:[#allocation8 + $0x270] sm:$0xff] %v10238
    %10367 = vst [vmem:[#allocation8 + $0x278] sm:$0xff] %v10239
    %10368 = vst [vmem:[#allocation8 + $0x280] sm:$0xff] %v10240
    %10369 = vst [vmem:[#allocation8 + $0x288] sm:$0xff] %v10241
    %10370 = vst [vmem:[#allocation8 + $0x290] sm:$0xff] %v10242
    %10371 = vst [vmem:[#allocation8 + $0x298] sm:$0xff] %v10243
    %10372 = vst [vmem:[#allocation8 + $0x2a0] sm:$0xff] %v10244
    %10373 = vst [vmem:[#allocation8 + $0x2a8] sm:$0xff] %v10245
    %10374 = vst [vmem:[#allocation8 + $0x2b0] sm:$0xff] %v10246
    %10375 = vst [vmem:[#allocation8 + $0x2b8] sm:$0xff] %v10247
    %10376 = vst [vmem:[#allocation8 + $0x2c0] sm:$0xff] %v10248
    %10377 = vst [vmem:[#allocation8 + $0x2c8] sm:$0xff] %v10249
    %10378 = vst [vmem:[#allocation8 + $0x2d0] sm:$0xff] %v10250
    %10379 = vst [vmem:[#allocation8 + $0x2d8] sm:$0xff] %v10251
    %10380 = vst [vmem:[#allocation8 + $0x2e0] sm:$0xff] %v10252
    %10381 = vst [vmem:[#allocation8 + $0x2e8] sm:$0xff] %v10253
    %10382 = vst [vmem:[#allocation8 + $0x2f0] sm:$0xff] %v10254
    %10383 = vst [vmem:[#allocation8 + $0x2f8] sm:$0xff] %v10255
    %10384 = vst [vmem:[#allocation8 + $0x300] sm:$0xff] %v10256
    %10385 = vst [vmem:[#allocation8 + $0x308] sm:$0xff] %v10257
    %10386 = vst [vmem:[#allocation8 + $0x310] sm:$0xff] %v10258
    %10387 = vst [vmem:[#allocation8 + $0x318] sm:$0xff] %v10259
    %10388 = vst [vmem:[#allocation8 + $0x320] sm:$0xff] %v10260
    %10389 = vst [vmem:[#allocation8 + $0x328] sm:$0xff] %v10261
    %10390 = vst [vmem:[#allocation8 + $0x330] sm:$0xff] %v10262
    %10391 = vst [vmem:[#allocation8 + $0x338] sm:$0xff] %v10263
    %10392 = vst [vmem:[#allocation8 + $0x340] sm:$0xff] %v10264
    %10393 = vst [vmem:[#allocation8 + $0x348] sm:$0xff] %v10265
    %10394 = vst [vmem:[#allocation8 + $0x350] sm:$0xff] %v10266
    %10395 = vst [vmem:[#allocation8 + $0x358] sm:$0xff] %v10267
    %10396 = vst [vmem:[#allocation8 + $0x360] sm:$0xff] %v10268
    %10397 = vst [vmem:[#allocation8 + $0x368] sm:$0xff] %v10269
    %10398 = vst [vmem:[#allocation8 + $0x370] sm:$0xff] %v10270
    %10399 = vst [vmem:[#allocation8 + $0x378] sm:$0xff] %v10271
    %10400 = vst [vmem:[#allocation8 + $0x380] sm:$0xff] %v10272
    %10401 = vst [vmem:[#allocation8 + $0x388] sm:$0xff] %v10273
    %10402 = vst [vmem:[#allocation8 + $0x390] sm:$0xff] %v10274
    %10403 = vst [vmem:[#allocation8 + $0x398] sm:$0xff] %v10275
    %10404 = vst [vmem:[#allocation8 + $0x3a0] sm:$0xff] %v10276
    %10405 = vst [vmem:[#allocation8 + $0x3a8] sm:$0xff] %v10277
    %10406 = vst [vmem:[#allocation8 + $0x3b0] sm:$0xff] %v10278
    %10407 = vst [vmem:[#allocation8 + $0x3b8] sm:$0xff] %v10279
    %10408 = vst [vmem:[#allocation8 + $0x3c0] sm:$0xff] %v10280
    %10409 = vst [vmem:[#allocation8 + $0x3c8] sm:$0xff] %v10281
    %10410 = vst [vmem:[#allocation8 + $0x3d0] sm:$0xff] %v10282
    %10411 = vst [vmem:[#allocation8 + $0x3d8] sm:$0xff] %v10283
    %10412 = vst [vmem:[#allocation8 + $0x3e0] sm:$0xff] %v10284
    %10413 = vst [vmem:[#allocation8 + $0x3e8] sm:$0xff] %v10285
    %10414 = vst [vmem:[#allocation8 + $0x3f0] sm:$0xff] %v10286
    %10415 = vst [vmem:[#allocation8 + $0x3f8] sm:$0xff] %v10287
    // Predicated region
    $region58: #{tpu_custom_call.1} parent=1 // pred_check
      _
    $region59: #{tpu_custom_call.1} parent=1 // pred_check_branch
      %10417 = sbr.rel (0) target = $region61
    $region60: #{tpu_custom_call.1} parent=1 // pred_region
      %s10419 = ssub.s32 16384, 16384
      %10420 = vsyncadd [#allocation4], %s10419
      %s10421 = sshll.u32 [#allocation8], 4
      %s10422 = int_to_ptr.vmem [resolvable:$true] %s10421
      %10427 = dma.vmem_to_hbm [thread:$0]  %s10422, 16384, %s11, [#allocation4], 256, 256, 16
    $region61: #{tpu_custom_call.1} parent=1 // pred_fallthru
      _
    // Predicated region
    $region62: #{tpu_custom_call.1} parent=1 // pred_check
      _
    $region63: #{tpu_custom_call.1} parent=1 // pred_check_branch
      %10429 = sbr.rel (0) target = $region65
    $region64: #{tpu_custom_call.1} parent=1 // pred_region
      %10430 = dma.done [#allocation4], 16384
    $region65: #{tpu_custom_call.1} parent=1 // pred_fallthru
      _
    %10431 = vsyncpa [#allocation3], 1
    %10432 = vsyncpa [#allocation6], 1
    %10433 = vsyncpa [#allocation4], 1

</llo_original>
